<compile_context>
chip_gen: v7x
topology: tpu7x:2x2x1
jax: 0.10.0
libtpu: 0.0.40
codegen_flags: <defaults>
</compile_context>

<pallas_src>
import jax
import jax.numpy as jnp
from jax.experimental import pallas as pl
from jax.experimental.pallas import tpu as pltpu

EPS = 1e-5
D_IN, D_H1, D_H2, D_OUT = 4096, 1024, 512, 11
N_PAD = 128          # lane-dense padded width for the final (512 -> 11) layer
TK = 2048            # K-tile for streaming W1 (2 grid steps, 4 MiB bf16 per tile)


def mlp_kernel(x_ref, w1_ref, b1_ref, w2_ref, b2_ref, w3_ref, b3_ref,
               o_ref, acc_ref):
    k = pl.program_id(0)

    @pl.when(k == 0)
    def _():
        acc_ref[...] = jnp.zeros_like(acc_ref)

    # ---- Layer 1 partial: stream W1 along K, accumulate x @ W1 in f32 scratch ----
    acc_ref[...] += jnp.dot(x_ref[...], w1_ref[...],
                            preferred_element_type=jnp.float32)

    @pl.when(k == pl.num_programs(0) - 1)
    def _():
        # Layer 1 epilogue: (BN-folded) bias + ReLU. Dropout = identity in eval.
        h1 = jnp.maximum(acc_ref[...] + b1_ref[...], 0.0)

        # ---- Layer 2: Linear (BN folded) + ReLU ----
        h2 = jnp.dot(h1.astype(jnp.bfloat16), w2_ref[...],
                     preferred_element_type=jnp.float32)
        h2 = jnp.maximum(h2 + b2_ref[...], 0.0)

        # ---- Layer 3: Linear (output padded to 128 lanes; sliced in wrapper) ----
        h3 = jnp.dot(h2.astype(jnp.bfloat16), w3_ref[...],
                     preferred_element_type=jnp.float32)
        o_ref[...] = (h3 + b3_ref[...]).astype(o_ref.dtype)


def cnn_classifier_forward(x, kernel_params):
    """x: (B, 4096) float32. Returns (B, 11) float32 logits."""
    w1, b1, w2, b2, w3p, b3p = kernel_params
    B = x.shape[0]
    xb = x.astype(jnp.bfloat16)
    n_k = D_IN // TK

    cost = pl.CostEstimate(
        flops=2 * B * (D_IN * D_H1 + D_H1 * D_H2 + D_H2 * N_PAD),
        transcendentals=0,
        bytes_accessed=(xb.size * 2 + w1.size * 2 + w2.size * 2 + w3p.size * 2
                        + (b1.size + b2.size + b3p.size) * 4 + B * N_PAD * 4),
    )

    out_padded = pl.pallas_call(
        mlp_kernel,
        out_shape=jax.ShapeDtypeStruct((B, N_PAD), jnp.float32),
        grid=(n_k,),
        in_specs=[
            pl.BlockSpec((B, TK), lambda k: (0, k)),        # x: streamed along K
            pl.BlockSpec((TK, D_H1), lambda k: (k, 0)),     # W1: streamed along K
            pl.BlockSpec((1, D_H1), lambda k: (0, 0)),      # b1 (resident)
            pl.BlockSpec((D_H1, D_H2), lambda k: (0, 0)),   # W2 (fetched once)
            pl.BlockSpec((1, D_H2), lambda k: (0, 0)),      # b2
            pl.BlockSpec((D_H2, N_PAD), lambda k: (0, 0)),  # W3 (padded, fetched once)
            pl.BlockSpec((1, N_PAD), lambda k: (0, 0)),     # b3 (padded)
        ],
        out_specs=pl.BlockSpec((B, N_PAD), lambda k: (0, 0)),
        scratch_shapes=[pltpu.VMEM((B, D_H1), jnp.float32)],
        compiler_params=pltpu.CompilerParams(
            dimension_semantics=("arbitrary",),   # K is a reduction axis
            vmem_limit_bytes=32 << 20,            # ~10.5 MiB peak; safe on v7x too
        ),
        cost_estimate=cost,
    )(xb, w1, b1, w2, b2, w3p, b3p)

    return out_padded[:, :D_OUT]


# ----------------------------- parameter helpers -----------------------------

def init_raw_params(key):
    """PyTorch-layout-equivalent params (weights stored (in, out)), with
    non-trivial BN stats so the fold is actually exercised."""
    ks = jax.random.split(key, 10)

    def linear(kw, kb, fi, fo):
        w = jax.random.normal(kw, (fi, fo), jnp.float32) * 0.02
        b = jax.random.normal(kb, (fo,), jnp.float32) * 0.01
        return w, b

    w1, b1 = linear(ks[0], ks[1], D_IN, D_H1)
    w2, b2 = linear(ks[2], ks[3], D_H1, D_H2)
    w3, b3 = linear(ks[4], ks[5], D_H2, D_OUT)

    def bn(kg, kb, n):
        gamma = 1.0 + 0.1 * jax.random.normal(kg, (n,), jnp.float32)
        beta = 0.05 * jax.random.normal(kb, (n,), jnp.float32)
        rmean = 0.1 * jax.random.normal(kg, (n,), jnp.float32)
        rvar = 1.0 + 0.1 * jax.random.uniform(kb, (n,), jnp.float32)
        return gamma, beta, rmean, rvar

    g1, be1, rm1, rv1 = bn(ks[6], ks[7], D_H1)
    g2, be2, rm2, rv2 = bn(ks[8], ks[9], D_H2)
    return (w1, b1, g1, be1, rm1, rv1, w2, b2, g2, be2, rm2, rv2, w3, b3)


def fold_and_pack(raw):
    """Fold eval-mode BN into W/b, cast weights to bf16, pad final layer to 128."""
    (w1, b1, g1, be1, rm1, rv1,
     w2, b2, g2, be2, rm2, rv2,
     w3, b3) = raw
    s1 = g1 / jnp.sqrt(rv1 + EPS)
    t1 = be1 - rm1 * s1
    s2 = g2 / jnp.sqrt(rv2 + EPS)
    t2 = be2 - rm2 * s2

    w1f = (w1 * s1[None, :]).astype(jnp.bfloat16)
    b1f = (b1 * s1 + t1).reshape(1, D_H1).astype(jnp.float32)
    w2f = (w2 * s2[None, :]).astype(jnp.bfloat16)
    b2f = (b2 * s2 + t2).reshape(1, D_H2).astype(jnp.float32)
    w3p = jnp.zeros((D_H2, N_PAD), jnp.float32).at[:, :D_OUT].set(w3).astype(jnp.bfloat16)
    b3p = jnp.zeros((1, N_PAD), jnp.float32).at[0, :D_OUT].set(b3)
    return (w1f, b1f, w2f, b2f, w3p, b3p)


# ------------------------------- references ---------------------------------

def reference_raw(x, raw):
    """Full f32 reference with explicit BN (eval mode) — the PyTorch semantics."""
    (w1, b1, g1, be1, rm1, rv1,
     w2, b2, g2, be2, rm2, rv2,
     w3, b3) = raw
    h = x @ w1 + b1
    h = (h - rm1) / jnp.sqrt(rv1 + EPS) * g1 + be1
    h = jnp.maximum(h, 0.0)
    h = h @ w2 + b2
    h = (h - rm2) / jnp.sqrt(rv2 + EPS) * g2 + be2
    h = jnp.maximum(h, 0.0)
    return h @ w3 + b3


def reference_folded(x, kernel_params):
    """f32 reference using the exact bf16-rounded folded params the kernel sees."""
    w1, b1, w2, b2, w3p, b3p = kernel_params
    xb = x.astype(jnp.bfloat16).astype(jnp.float32)
    h = jnp.maximum(xb @ w1.astype(jnp.float32) + b1, 0.0)
    h = jnp.maximum(h.astype(jnp.bfloat16).astype(jnp.float32)
                    @ w2.astype(jnp.float32) + b2, 0.0)
    out = (h.astype(jnp.bfloat16).astype(jnp.float32)
           @ w3p.astype(jnp.float32) + b3p)
    return out[:, :D_OUT]


if __name__ == "__main__":
    key = jax.random.PRNGKey(0)
    k_param, k_x = jax.random.split(key)

    raw = init_raw_params(k_param)
    kernel_params = fold_and_pack(raw)

    B = 8  # small batch of flattened 4096-d features (what in_features=4096 implies)
    x = jax.random.normal(k_x, (B, D_IN), jnp.float32)

    out = cnn_classifier_forward(x, kernel_params)
    out = jax.block_until_ready(out)
    assert out.shape == (B, D_OUT)

    # Tight check vs a reference using the identical (bf16-rounded, folded) params.
    ref_f = reference_folded(x, kernel_params)
    assert jnp.allclose(out, ref_f, atol=1e-2, rtol=1e-2), "mismatch vs folded ref"

    # Looser check vs the full-precision PyTorch-semantics reference (bf16 weights).
    ref_r = reference_raw(x, raw)
    assert jnp.allclose(out, ref_r, atol=5e-2, rtol=5e-2), "mismatch vs f32 ref"

    print("KERNEL_OK")
</pallas_src>

<mosaic_0001>
module attributes {stable_mosaic.version = 11 : i64} {
  func.func @mlp_kernel(%arg0: i32, %arg1: memref<8x2048xbf16, #tpu.memory_space<vmem>>, %arg2: memref<2048x1024xbf16, #tpu.memory_space<vmem>>, %arg3: memref<1x1024xf32, #tpu.memory_space<vmem>>, %arg4: memref<1024x512xbf16, #tpu.memory_space<vmem>>, %arg5: memref<1x512xf32, #tpu.memory_space<vmem>>, %arg6: memref<512x128xbf16, #tpu.memory_space<vmem>>, %arg7: memref<1x128xf32, #tpu.memory_space<vmem>>, %arg8: memref<8x128xf32, #tpu.memory_space<vmem>>, %arg9: memref<8x1024xf32, #tpu.memory_space<vmem>>) attributes {dimension_semantics = [#tpu.dimension_semantics<arbitrary>], iteration_bounds = array<i64: 2>, scalar_prefetch = 0 : i64, scratch_operands = 1 : i64, tpu.core_type = #tpu.core_type<tc>, window_params = [{transform_indices = @transform_0, window_bounds = array<i64: 8, 2048>}, {transform_indices = @transform_1, window_bounds = array<i64: 2048, 1024>}, {pipeline_mode = #tpu.pipeline_mode<synchronous>, transform_indices = @transform_2, window_bounds = array<i64: 1, 1024>}, {pipeline_mode = #tpu.pipeline_mode<synchronous>, transform_indices = @transform_3, window_bounds = array<i64: 1024, 512>}, {pipeline_mode = #tpu.pipeline_mode<synchronous>, transform_indices = @transform_4, window_bounds = array<i64: 1, 512>}, {pipeline_mode = #tpu.pipeline_mode<synchronous>, transform_indices = @transform_5, window_bounds = array<i64: 512, 128>}, {pipeline_mode = #tpu.pipeline_mode<synchronous>, transform_indices = @transform_6, window_bounds = array<i64: 1, 128>}, {pipeline_mode = #tpu.pipeline_mode<synchronous>, transform_indices = @transform_7, window_bounds = array<i64: 8, 128>}]} {
    %c0_i32 = arith.constant 0 : i32
    %0 = arith.cmpi eq, %arg0, %c0_i32 : i32
    %1 = arith.extui %0 : i1 to i32
    %c0_i32_0 = arith.constant 0 : i32
    %2 = arith.cmpi ne, %1, %c0_i32_0 : i32
    scf.if %2 {
      %cst_9 = arith.constant 0.000000e+00 : f32
      %12 = vector.broadcast %cst_9 : f32 to vector<8x1024xf32>
      %c0_10 = arith.constant 0 : index
      %c0_11 = arith.constant 0 : index
      %13 = vector.load %arg9[%c0_10, %c0_11] : memref<8x1024xf32, #tpu.memory_space<vmem>>, vector<8x1024xf32>
      tpu.vector_store %arg9[%c0_10, %c0_11], %12 {strides = array<i32>} : memref<8x1024xf32, #tpu.memory_space<vmem>>, vector<8x1024xf32>,
    } else {
    }
    %c0 = arith.constant 0 : index
    %c0_1 = arith.constant 0 : index
    %3 = vector.load %arg9[%c0, %c0_1] : memref<8x1024xf32, #tpu.memory_space<vmem>>, vector<8x1024xf32>
    %c0_2 = arith.constant 0 : index
    %c0_3 = arith.constant 0 : index
    %4 = vector.load %arg1[%c0_2, %c0_3] : memref<8x2048xbf16, #tpu.memory_space<vmem>>, vector<8x2048xbf16>
    %c0_4 = arith.constant 0 : index
    %c0_5 = arith.constant 0 : index
    %5 = vector.load %arg2[%c0_4, %c0_5] : memref<2048x1024xbf16, #tpu.memory_space<vmem>>, vector<2048x1024xbf16>
    %cst = arith.constant dense<0.000000e+00> : vector<8x1024xf32>
    %6 = tpu.matmul %4, %5, %cst {dimension_numbers = #tpu.dot_dimension_numbers<[1], [0], [0], [1], [0, 0, 1, 1], [], []>} : vector<8x2048xbf16>, vector<2048x1024xbf16>, vector<8x1024xf32> -> vector<8x1024xf32>
    %7 = arith.addf %3, %6 : vector<8x1024xf32>
    %c0_6 = arith.constant 0 : index
    %c0_7 = arith.constant 0 : index
    %8 = vector.load %arg9[%c0_6, %c0_7] : memref<8x1024xf32, #tpu.memory_space<vmem>>, vector<8x1024xf32>
    tpu.vector_store %arg9[%c0_6, %c0_7], %7 {strides = array<i32>} : memref<8x1024xf32, #tpu.memory_space<vmem>>, vector<8x1024xf32>,
    %c1_i32 = arith.constant 1 : i32
    %9 = arith.cmpi eq, %arg0, %c1_i32 : i32
    %10 = arith.extui %9 : i1 to i32
    %c0_i32_8 = arith.constant 0 : i32
    %11 = arith.cmpi ne, %10, %c0_i32_8 : i32
    scf.if %11 {
      %c0_9 = arith.constant 0 : index
      %c0_10 = arith.constant 0 : index
      %12 = vector.load %arg9[%c0_9, %c0_10] : memref<8x1024xf32, #tpu.memory_space<vmem>>, vector<8x1024xf32>
      %c0_11 = arith.constant 0 : index
      %c0_12 = arith.constant 0 : index
      %13 = vector.load %arg3[%c0_11, %c0_12] : memref<1x1024xf32, #tpu.memory_space<vmem>>, vector<1x1024xf32>
      %14 = vector.broadcast %13 : vector<1x1024xf32> to vector<8x1024xf32>
      %15 = arith.addf %12, %14 : vector<8x1024xf32>
      %cst_13 = arith.constant 0.000000e+00 : f32
      %16 = vector.broadcast %cst_13 : f32 to vector<8x1024xf32>
      %17 = arith.maximumf %15, %16 : vector<8x1024xf32>
      %18 = arith.truncf %17 : vector<8x1024xf32> to vector<8x1024xbf16>
      %c0_14 = arith.constant 0 : index
      %c0_15 = arith.constant 0 : index
      %19 = vector.load %arg4[%c0_14, %c0_15] : memref<1024x512xbf16, #tpu.memory_space<vmem>>, vector<1024x512xbf16>
      %cst_16 = arith.constant dense<0.000000e+00> : vector<8x512xf32>
      %20 = tpu.matmul %18, %19, %cst_16 {dimension_numbers = #tpu.dot_dimension_numbers<[1], [0], [0], [1], [0, 0, 1, 1], [], []>} : vector<8x1024xbf16>, vector<1024x512xbf16>, vector<8x512xf32> -> vector<8x512xf32>
      %c0_17 = arith.constant 0 : index
      %c0_18 = arith.constant 0 : index
      %21 = vector.load %arg5[%c0_17, %c0_18] : memref<1x512xf32, #tpu.memory_space<vmem>>, vector<1x512xf32>
      %22 = vector.broadcast %21 : vector<1x512xf32> to vector<8x512xf32>
      %23 = arith.addf %20, %22 : vector<8x512xf32>
      %cst_19 = arith.constant 0.000000e+00 : f32
      %24 = vector.broadcast %cst_19 : f32 to vector<8x512xf32>
      %25 = arith.maximumf %23, %24 : vector<8x512xf32>
      %26 = arith.truncf %25 : vector<8x512xf32> to vector<8x512xbf16>
      %c0_20 = arith.constant 0 : index
      %c0_21 = arith.constant 0 : index
      %27 = vector.load %arg6[%c0_20, %c0_21] : memref<512x128xbf16, #tpu.memory_space<vmem>>, vector<512x128xbf16>
      %cst_22 = arith.constant dense<0.000000e+00> : vector<8x128xf32>
      %28 = tpu.matmul %26, %27, %cst_22 {dimension_numbers = #tpu.dot_dimension_numbers<[1], [0], [0], [1], [0, 0, 1, 1], [], []>} : vector<8x512xbf16>, vector<512x128xbf16>, vector<8x128xf32> -> vector<8x128xf32>
      %c0_23 = arith.constant 0 : index
      %c0_24 = arith.constant 0 : index
      %29 = vector.load %arg7[%c0_23, %c0_24] : memref<1x128xf32, #tpu.memory_space<vmem>>, vector<1x128xf32>
      %30 = vector.broadcast %29 : vector<1x128xf32> to vector<8x128xf32>
      %31 = arith.addf %28, %30 : vector<8x128xf32>
      %c0_25 = arith.constant 0 : index
      %c0_26 = arith.constant 0 : index
      %32 = vector.load %arg8[%c0_25, %c0_26] : memref<8x128xf32, #tpu.memory_space<vmem>>, vector<8x128xf32>
      tpu.vector_store %arg8[%c0_25, %c0_26], %31 {strides = array<i32>} : memref<8x128xf32, #tpu.memory_space<vmem>>, vector<8x128xf32>,
    } else {
    }
    return
  }
  func.func @transform_0(%arg0: i32) -> (i32, i32) {
    %c0_i32 = arith.constant 0 : i32
    %c0_i32_0 = arith.constant 0 : i32
    return %c0_i32, %arg0 : i32, i32
  }
  func.func @transform_1(%arg0: i32) -> (i32, i32) {
    %c0_i32 = arith.constant 0 : i32
    %c0_i32_0 = arith.constant 0 : i32
    return %arg0, %c0_i32 : i32, i32
  }
  func.func @transform_2(%arg0: i32) -> (i32, i32) {
    %c0_i32 = arith.constant 0 : i32
    %c0_i32_0 = arith.constant 0 : i32
    %c0_i32_1 = arith.constant 0 : i32
    return %c0_i32, %c0_i32_0 : i32, i32
  }
  func.func @transform_3(%arg0: i32) -> (i32, i32) {
    %c0_i32 = arith.constant 0 : i32
    %c0_i32_0 = arith.constant 0 : i32
    %c0_i32_1 = arith.constant 0 : i32
    return %c0_i32, %c0_i32_0 : i32, i32
  }
  func.func @transform_4(%arg0: i32) -> (i32, i32) {
    %c0_i32 = arith.constant 0 : i32
    %c0_i32_0 = arith.constant 0 : i32
    %c0_i32_1 = arith.constant 0 : i32
    return %c0_i32, %c0_i32_0 : i32, i32
  }
  func.func @transform_5(%arg0: i32) -> (i32, i32) {
    %c0_i32 = arith.constant 0 : i32
    %c0_i32_0 = arith.constant 0 : i32
    %c0_i32_1 = arith.constant 0 : i32
    return %c0_i32, %c0_i32_0 : i32, i32
  }
  func.func @transform_6(%arg0: i32) -> (i32, i32) {
    %c0_i32 = arith.constant 0 : i32
    %c0_i32_0 = arith.constant 0 : i32
    %c0_i32_1 = arith.constant 0 : i32
    return %c0_i32, %c0_i32_0 : i32, i32
  }
  func.func @transform_7(%arg0: i32) -> (i32, i32) {
    %c0_i32 = arith.constant 0 : i32
    %c0_i32_0 = arith.constant 0 : i32
    %c0_i32_1 = arith.constant 0 : i32
    return %c0_i32, %c0_i32_0 : i32, i32
  }
}

</mosaic_0001>

<llo_original>
// kernel: tpu_custom_call.1
$region0: #{tpu_custom_call.1}
  #allocation0 [shape = 'u32[]', space=smem, size = 0x4, offset = 0x4, fixed_abs, tag = 'smem constant byte address 0x4 - core index']
  #allocation1 [shape = 'u32[144,128]{1,0:T(1,128)}', space=vmem, size = 0x12000, scoped, tag = 'internal scratch']
  #allocation2 [shape = 'f32[8,1024]{1,0:T(8,128)}', space=vmem, size = 0x8000, scoped, tag = 'scratch operand']
  %s0 = inlined_call_operand.hbm [shape: bf16[8,4096], index: 0, kind: input, shape index: {}]
  %s1 = inlined_call_operand.hbm [shape: bf16[4096,1024], index: 1, kind: input, shape index: {}]
  %s2 = inlined_call_operand.hbm [shape: f32[1,1024], index: 2, kind: input, shape index: {}]
  %s3 = inlined_call_operand.hbm [shape: bf16[1024,512], index: 3, kind: input, shape index: {}]
  %s4 = inlined_call_operand.hbm [shape: f32[1,512], index: 4, kind: input, shape index: {}]
  %s5 = inlined_call_operand.hbm [shape: bf16[512,128], index: 5, kind: input, shape index: {}]
  %s6 = inlined_call_operand.hbm [shape: f32[1,128], index: 6, kind: input, shape index: {}]
  %s7 = inlined_call_operand.hbm [shape: f32[8,128], index: 7, kind: output, shape index: {}]
  %s8 = sld [smem:[#allocation0]]
  $region97: #{tpu_custom_call.1} parent=0
    _
  %s10 = ssub.s32 1, %s8
  %s11 = scalar_select 0, %s10, %s8
  $region1: #{tpu_custom_call.1} parent=0
    #allocation3 [shape = 'u8[65536]{0}', space=vmem, size = 0x10000, scoped, tag = 'input window, operand 0']
    #allocation4 [shape = 's32[2]{0}', space=sflag, size = 0x8, scoped, tag = 'scoped memory for tpu_custom_call.1']
    #allocation5 [shape = 's32[2]{0}', space=sflag, size = 0x8, scoped, tag = 'scoped memory for tpu_custom_call.1']
    #allocation6 [shape = 'u8[8388608]{0}', space=vmem, size = 0x800000, scoped, tag = 'input window, operand 1']
    #allocation7 [shape = 's32[2]{0}', space=sflag, size = 0x8, scoped, tag = 'scoped memory for tpu_custom_call.1']
    #allocation8 [shape = 'u8[4096]{0}', space=vmem, size = 0x1000, scoped, tag = 'input window, operand 2, single buffered']
    #allocation9 [shape = 'u8[1048576]{0}', space=vmem, size = 0x100000, scoped, tag = 'input window, operand 3, single buffered']
    #allocation10 [shape = 's32[1]{0}', space=sflag, size = 0x4, scoped, tag = 'scoped memory for tpu_custom_call.1']
    #allocation11 [shape = 'u8[2048]{0}', space=vmem, size = 0x800, scoped, tag = 'input window, operand 4, single buffered']
    #allocation12 [shape = 'u8[131072]{0}', space=vmem, size = 0x20000, scoped, tag = 'input window, operand 5, single buffered']
    #allocation13 [shape = 's32[1]{0}', space=sflag, size = 0x4, scoped, tag = 'scoped memory for tpu_custom_call.1']
    #allocation14 [shape = 'u8[512]{0}', space=vmem, size = 0x400, scoped, tag = 'input window, operand 6, single buffered']
    #allocation15 [shape = 'u8[4096]{0}', space=vmem, size = 0x1000, scoped, tag = 'output window, operand 0, single buffered']
    %12 = vsyncpa [#allocation4], 0
    %s13 = scalar_lea.sflag [#allocation4], 1
    %14 = vsyncpa %s13, 0
    %15 = vsyncpa [#allocation7], 0
    %s16 = scalar_lea.sflag [#allocation7], 1
    %17 = vsyncpa %s16, 0
    %18 = vsyncpa [#allocation10], 0
    %19 = vsyncpa [#allocation13], 0
    %20 = vsyncpa [#allocation5], 0
    loop: start=0, step=1, limit=4
    $region2: #{tpu_custom_call.1} parent=1 // loop_pre_header
      _
    $region3: #{tpu_custom_call.1} parent=1 // loop_header
      %s22 = sphi 0, %s26
      %p23 = scmp.ge.s32.totalorder %s22, 4
      %s32 = sphi 0, %s34
      %s35 = sphi 0, %s32
      %s36 = sphi 0, %s35
      %s52 = sphi 0, %s36
      %s58 = sphi 0, %s60
      %s61 = sphi 0, %s58
      %s62 = sphi 0, %s61
      %s78 = sphi 0, %s62
      %s82 = sphi 0, %s82
      %s84 = sphi 0, %s82
      %s85 = sphi 0, %s84
      %s99 = sphi 0, %s85
      %s103 = sphi 0, %s103
      %s105 = sphi 0, %s103
      %s106 = sphi 0, %s105
      %s120 = sphi 0, %s106
      %s124 = sphi 0, %s124
      %s126 = sphi 0, %s124
      %s127 = sphi 0, %s126
      %s141 = sphi 0, %s127
      %s145 = sphi 0, %s145
      %s147 = sphi 0, %s145
      %s148 = sphi 0, %s147
      %s162 = sphi 0, %s148
      %s166 = sphi 0, %s166
      %s168 = sphi 0, %s166
      %s169 = sphi 0, %s168
      %s183 = sphi 0, %s169
      %s187 = sphi 0, %s187
      %s189 = sphi 0, %s187
      %s190 = sphi 0, %s189
      %s204 = sphi 0, %s190
    $region4: #{tpu_custom_call.1} parent=1 // loop_header_branch
      %25 = sbr.rel (%p23) target = $region8
    $region5: #{tpu_custom_call.1} parent=1 // loop_body
      %s27 = ssub.s32 %s22, 1
      %s28 = ssub.s32 %s22, 2
      %s29 = sadd.s32 %s22, 1
      %s30 = ssub.s32 %s22, %s29
      %p31 = scmp.eq.s32.totalorder %s30, 0
      %s33 = sadd.s32 %s32, 1
      %s34 = scalar_select %p31, %s32, %s33
      %p37 = pneg %p31
      %p38 = scmp.eq.s32.totalorder %s22, 1
      %p39 = por %p37, %p38
      %p40 = scmp.ne.s32.totalorder %s32, %s35
      %p41 = scmp.eq.s32.totalorder %s22, 0
      %p42 = por %p40, %p41
      %p43 = scmp.ne.s32.totalorder %s32, %s35
      %p44 = scmp.eq.s32.totalorder %s27, 1
      %p45 = por %p43, %p44
      %p46 = scmp.ne.s32.totalorder %s35, %s36
      %p47 = scmp.eq.s32.totalorder %s27, 0
      %p48 = por %p46, %p47
      %p49 = scmp.ne.s32.totalorder %s35, %s36
      %p50 = scmp.eq.s32.totalorder %s28, 1
      %p51 = por %p49, %p50
      %p53 = scmp.ne.s32.totalorder %s36, %s52
      %p54 = scmp.eq.s32.totalorder %s28, 0
      %p55 = por %p53, %p54
      %s56 = ssub.s32 %s22, %s29
      %p57 = scmp.eq.s32.totalorder %s56, 0
      %s59 = sadd.s32 %s58, 1
      %s60 = scalar_select %p57, %s58, %s59
      %p63 = pneg %p57
      %p64 = scmp.eq.s32.totalorder %s22, 1
      %p65 = por %p63, %p64
      %p66 = scmp.ne.s32.totalorder %s58, %s61
      %p67 = scmp.eq.s32.totalorder %s22, 0
      %p68 = por %p66, %p67
      %p69 = scmp.ne.s32.totalorder %s58, %s61
      %p70 = scmp.eq.s32.totalorder %s27, 1
      %p71 = por %p69, %p70
      %p72 = scmp.ne.s32.totalorder %s61, %s62
      %p73 = scmp.eq.s32.totalorder %s27, 0
      %p74 = por %p72, %p73
      %p75 = scmp.ne.s32.totalorder %s61, %s62
      %p76 = scmp.eq.s32.totalorder %s28, 1
      %p77 = por %p75, %p76
      %p79 = scmp.ne.s32.totalorder %s62, %s78
      %p80 = scmp.eq.s32.totalorder %s28, 0
      %p81 = por %p79, %p80
      %s83 = sadd.s32 %s82, 1
      %p86 = scmp.eq.s32.totalorder %s22, 1
      %p87 = scmp.ne.s32.totalorder %s82, %s84
      %p88 = scmp.eq.s32.totalorder %s22, 0
      %p89 = por %p87, %p88
      %p90 = scmp.ne.s32.totalorder %s82, %s84
      %p91 = scmp.eq.s32.totalorder %s27, 1
      %p92 = por %p90, %p91
      %p93 = scmp.ne.s32.totalorder %s84, %s85
      %p94 = scmp.eq.s32.totalorder %s27, 0
      %p95 = por %p93, %p94
      %p96 = scmp.ne.s32.totalorder %s84, %s85
      %p97 = scmp.eq.s32.totalorder %s28, 1
      %p98 = por %p96, %p97
      %p100 = scmp.ne.s32.totalorder %s85, %s99
      %p101 = scmp.eq.s32.totalorder %s28, 0
      %p102 = por %p100, %p101
      %s104 = sadd.s32 %s103, 1
      %p107 = scmp.eq.s32.totalorder %s22, 1
      %p108 = scmp.ne.s32.totalorder %s103, %s105
      %p109 = scmp.eq.s32.totalorder %s22, 0
      %p110 = por %p108, %p109
      %p111 = scmp.ne.s32.totalorder %s103, %s105
      %p112 = scmp.eq.s32.totalorder %s27, 1
      %p113 = por %p111, %p112
      %p114 = scmp.ne.s32.totalorder %s105, %s106
      %p115 = scmp.eq.s32.totalorder %s27, 0
      %p116 = por %p114, %p115
      %p117 = scmp.ne.s32.totalorder %s105, %s106
      %p118 = scmp.eq.s32.totalorder %s28, 1
      %p119 = por %p117, %p118
      %p121 = scmp.ne.s32.totalorder %s106, %s120
      %p122 = scmp.eq.s32.totalorder %s28, 0
      %p123 = por %p121, %p122
      %s125 = sadd.s32 %s124, 1
      %p128 = scmp.eq.s32.totalorder %s22, 1
      %p129 = scmp.ne.s32.totalorder %s124, %s126
      %p130 = scmp.eq.s32.totalorder %s22, 0
      %p131 = por %p129, %p130
      %p132 = scmp.ne.s32.totalorder %s124, %s126
      %p133 = scmp.eq.s32.totalorder %s27, 1
      %p134 = por %p132, %p133
      %p135 = scmp.ne.s32.totalorder %s126, %s127
      %p136 = scmp.eq.s32.totalorder %s27, 0
      %p137 = por %p135, %p136
      %p138 = scmp.ne.s32.totalorder %s126, %s127
      %p139 = scmp.eq.s32.totalorder %s28, 1
      %p140 = por %p138, %p139
      %p142 = scmp.ne.s32.totalorder %s127, %s141
      %p143 = scmp.eq.s32.totalorder %s28, 0
      %p144 = por %p142, %p143
      %s146 = sadd.s32 %s145, 1
      %p149 = scmp.eq.s32.totalorder %s22, 1
      %p150 = scmp.ne.s32.totalorder %s145, %s147
      %p151 = scmp.eq.s32.totalorder %s22, 0
      %p152 = por %p150, %p151
      %p153 = scmp.ne.s32.totalorder %s145, %s147
      %p154 = scmp.eq.s32.totalorder %s27, 1
      %p155 = por %p153, %p154
      %p156 = scmp.ne.s32.totalorder %s147, %s148
      %p157 = scmp.eq.s32.totalorder %s27, 0
      %p158 = por %p156, %p157
      %p159 = scmp.ne.s32.totalorder %s147, %s148
      %p160 = scmp.eq.s32.totalorder %s28, 1
      %p161 = por %p159, %p160
      %p163 = scmp.ne.s32.totalorder %s148, %s162
      %p164 = scmp.eq.s32.totalorder %s28, 0
      %p165 = por %p163, %p164
      %s167 = sadd.s32 %s166, 1
      %p170 = scmp.eq.s32.totalorder %s22, 1
      %p171 = scmp.ne.s32.totalorder %s166, %s168
      %p172 = scmp.eq.s32.totalorder %s22, 0
      %p173 = por %p171, %p172
      %p174 = scmp.ne.s32.totalorder %s166, %s168
      %p175 = scmp.eq.s32.totalorder %s27, 1
      %p176 = por %p174, %p175
      %p177 = scmp.ne.s32.totalorder %s168, %s169
      %p178 = scmp.eq.s32.totalorder %s27, 0
      %p179 = por %p177, %p178
      %p180 = scmp.ne.s32.totalorder %s168, %s169
      %p181 = scmp.eq.s32.totalorder %s28, 1
      %p182 = por %p180, %p181
      %p184 = scmp.ne.s32.totalorder %s169, %s183
      %p185 = scmp.eq.s32.totalorder %s28, 0
      %p186 = por %p184, %p185
      %s188 = sadd.s32 %s187, 1
      %p191 = scmp.eq.s32.totalorder %s22, 1
      %p192 = scmp.ne.s32.totalorder %s187, %s189
      %p193 = scmp.eq.s32.totalorder %s22, 0
      %p194 = por %p192, %p193
      %p195 = scmp.ne.s32.totalorder %s187, %s189
      %p196 = scmp.eq.s32.totalorder %s27, 1
      %p197 = por %p195, %p196
      %p198 = scmp.ne.s32.totalorder %s189, %s190
      %p199 = scmp.eq.s32.totalorder %s27, 0
      %p200 = por %p198, %p199
      %p201 = scmp.ne.s32.totalorder %s189, %s190
      %p202 = scmp.eq.s32.totalorder %s28, 1
      %p203 = por %p201, %p202
      %p205 = scmp.ne.s32.totalorder %s190, %s204
      %p206 = scmp.eq.s32.totalorder %s28, 0
      %p207 = por %p205, %p206
      %p208 = scmp.le.s32.totalorder 1, %s22
      %p209 = scmp.lt.s32.totalorder %s22, 3
      %p210 = pnand %p208, %p209
      %p211 = pneg %p210
      // Predicated region
      $region9: #{tpu_custom_call.1} parent=5 // pred_check
        _
      $region10: #{tpu_custom_call.1} parent=5 // pred_check_branch
        %213 = sbr.rel (%p210) target = $region12
      $region11: #{tpu_custom_call.1} parent=5 // pred_region
        %s214 = ssub.s32 %s22, 1
        // Predicated region
        $region13: #{tpu_custom_call.1} parent=11 // pred_check
          %p215 = pneg %p95
        $region14: #{tpu_custom_call.1} parent=11 // pred_check_branch
          %217 = sbr.rel (%p215) target = $region16
        $region15: #{tpu_custom_call.1} parent=11 // pred_region
          %s219 = ssub.s32 128, 128
          %220 = vsyncadd [#allocation7], %s219
          %s222 = sshll.u32 [#allocation8], 4
          %s223 = int_to_ptr.vmem [resolvable:$true] %s222
          %225 = dma.hbm_to_vmem [thread:$0]  %s2, 128, %s223, [#allocation7]
        $region16: #{tpu_custom_call.1} parent=11 // pred_fallthru
          _
        // Predicated region
        $region17: #{tpu_custom_call.1} parent=11 // pred_check
          %p226 = pneg %p116
        $region18: #{tpu_custom_call.1} parent=11 // pred_check_branch
          %228 = sbr.rel (%p226) target = $region20
        $region19: #{tpu_custom_call.1} parent=11 // pred_region
          %s230 = ssub.s32 32768, 32768
          %231 = vsyncadd [#allocation10], %s230
          %s232 = sshll.u32 [#allocation9], 4
          %s233 = int_to_ptr.vmem [resolvable:$true] %s232
          %238 = dma.hbm_to_vmem [thread:$0]  %s3, 32768, %s233, [#allocation10], 256, 256, 16
        $region20: #{tpu_custom_call.1} parent=11 // pred_fallthru
          _
        // Predicated region
        $region21: #{tpu_custom_call.1} parent=11 // pred_check
          %p239 = pneg %p137
        $region22: #{tpu_custom_call.1} parent=11 // pred_check_branch
          %241 = sbr.rel (%p239) target = $region24
        $region23: #{tpu_custom_call.1} parent=11 // pred_region
          %s243 = ssub.s32 64, 64
          %244 = vsyncadd [#allocation10], %s243
          %s246 = sshll.u32 [#allocation11], 4
          %s247 = int_to_ptr.vmem [resolvable:$true] %s246
          %249 = dma.hbm_to_vmem [thread:$0]  %s4, 64, %s247, [#allocation10]
        $region24: #{tpu_custom_call.1} parent=11 // pred_fallthru
          _
        // Predicated region
        $region25: #{tpu_custom_call.1} parent=11 // pred_check
          %p250 = pneg %p158
        $region26: #{tpu_custom_call.1} parent=11 // pred_check_branch
          %252 = sbr.rel (%p250) target = $region28
        $region27: #{tpu_custom_call.1} parent=11 // pred_region
          %s254 = ssub.s32 4096, 4096
          %255 = vsyncadd [#allocation13], %s254
          %s256 = sshll.u32 [#allocation12], 4
          %s257 = int_to_ptr.vmem [resolvable:$true] %s256
          %262 = dma.hbm_to_vmem [thread:$0]  %s5, 4096, %s257, [#allocation13], 64, 64, 4
        $region28: #{tpu_custom_call.1} parent=11 // pred_fallthru
          _
        // Predicated region
        $region29: #{tpu_custom_call.1} parent=11 // pred_check
          %p263 = pneg %p179
        $region30: #{tpu_custom_call.1} parent=11 // pred_check_branch
          %265 = sbr.rel (%p263) target = $region32
        $region31: #{tpu_custom_call.1} parent=11 // pred_region
          %s267 = ssub.s32 16, 16
          %268 = vsyncadd [#allocation13], %s267
          %s270 = sshll.u32 [#allocation14], 4
          %s271 = int_to_ptr.vmem [resolvable:$true] %s270
          %273 = dma.hbm_to_vmem [thread:$0]  %s6, 16, %s271, [#allocation13]
        $region32: #{tpu_custom_call.1} parent=11 // pred_fallthru
          _
      $region12: #{tpu_custom_call.1} parent=5 // pred_fallthru
        _
      %p274 = scmp.lt.s32.totalorder %s22, 2
      // Predicated region
      $region33: #{tpu_custom_call.1} parent=5 // pred_check
        %p275 = pneg %p274
      $region34: #{tpu_custom_call.1} parent=5 // pred_check_branch
        %277 = sbr.rel (%p275) target = $region36
      $region35: #{tpu_custom_call.1} parent=5 // pred_region
        // Predicated region
        $region37: #{tpu_custom_call.1} parent=35 // pred_check
          %p278 = pneg %p42
        $region38: #{tpu_custom_call.1} parent=35 // pred_check_branch
          %280 = sbr.rel (%p278) target = $region40
        $region39: #{tpu_custom_call.1} parent=35 // pred_region
          %s281 = sand.u32 %s32, 1
          %s282 = scalar_lea.sflag [#allocation4], %s281
          %s283 = sand.u32 %s32, 1
          %s284 = smul.addr %s283, 64
          %s285 = scalar_lea.vmem [#allocation3], %s284
          %s286 = smul.u32 16, %s22
          %s288 = ssub.s32 1024, 1024
          %289 = vsyncadd %s282, %s288
          %s290 = smul.addr %s286, 64
          %s291 = scalar_lea.hbm %s0, %s290
          %s293 = sshll.u32 %s285, 4
          %s294 = int_to_ptr.vmem [resolvable:$true] %s293
          %296 = dma.hbm_to_vmem [thread:$0]  %s291, 1024, %s294, %s282
        $region40: #{tpu_custom_call.1} parent=35 // pred_fallthru
          _
        // Predicated region
        $region41: #{tpu_custom_call.1} parent=35 // pred_check
          %p297 = pneg %p68
        $region42: #{tpu_custom_call.1} parent=35 // pred_check_branch
          %299 = sbr.rel (%p297) target = $region44
        $region43: #{tpu_custom_call.1} parent=35 // pred_region
          %s300 = sand.u32 %s22, 1
          %s301 = scalar_lea.sflag [#allocation7], %s300
          %s302 = sand.u32 %s58, 1
          %s303 = smul.addr %s302, 8192
          %s304 = scalar_lea.vmem [#allocation6], %s303
          %s305 = smul.u32 256, %s22
          %s307 = ssub.s32 131072, 131072
          %308 = vsyncadd %s301, %s307
          %s309 = smul.addr %s305, 8
          %s310 = smul.addr %s309, 64
          %s311 = scalar_lea.hbm %s1, %s310
          %s312 = sshll.u32 %s304, 4
          %s313 = int_to_ptr.vmem [resolvable:$true] %s312
          %318 = dma.hbm_to_vmem [thread:$0]  %s311, 131072, %s313, %s301, 512, 512, 32
        $region44: #{tpu_custom_call.1} parent=35 // pred_fallthru
          _
      $region36: #{tpu_custom_call.1} parent=5 // pred_fallthru
        _
      %p319 = scmp.le.s32.totalorder 1, %s22
      %p320 = scmp.lt.s32.totalorder %s22, 3
      %p321 = pnand %p319, %p320
      %p322 = pneg %p321
      // Predicated region
      $region45: #{tpu_custom_call.1} parent=5 // pred_check
        _
      $region46: #{tpu_custom_call.1} parent=5 // pred_check_branch
        %324 = sbr.rel (%p321) target = $region48
      $region47: #{tpu_custom_call.1} parent=5 // pred_region
        %s325 = ssub.s32 %s22, 1
        %s326 = sand.u32 %s35, 1
        %s327 = scalar_lea.sflag [#allocation4], %s326
        %s328 = sand.u32 %s35, 1
        %s329 = smul.addr %s328, 64
        %s330 = scalar_lea.vmem [#allocation3], %s329
        // Predicated region
        $region49: #{tpu_custom_call.1} parent=47 // pred_check
          %p331 = pneg %p48
        $region50: #{tpu_custom_call.1} parent=47 // pred_check_branch
          %333 = sbr.rel (%p331) target = $region52
        $region51: #{tpu_custom_call.1} parent=47 // pred_region
          %334 = dma.done %s327, 1024
        $region52: #{tpu_custom_call.1} parent=47 // pred_fallthru
          _
        %s335 = sand.u32 %s27, 1
        %s336 = scalar_lea.sflag [#allocation7], %s335
        %s337 = sand.u32 %s61, 1
        %s338 = smul.addr %s337, 8192
        %s339 = scalar_lea.vmem [#allocation6], %s338
        // Predicated region
        $region53: #{tpu_custom_call.1} parent=47 // pred_check
          %p340 = pneg %p74
        $region54: #{tpu_custom_call.1} parent=47 // pred_check_branch
          %342 = sbr.rel (%p340) target = $region56
        $region55: #{tpu_custom_call.1} parent=47 // pred_region
          %343 = dma.done %s336, 131072
        $region56: #{tpu_custom_call.1} parent=47 // pred_fallthru
          _
        // Predicated region
        $region57: #{tpu_custom_call.1} parent=47 // pred_check
          %p344 = pneg %p95
        $region58: #{tpu_custom_call.1} parent=47 // pred_check_branch
          %346 = sbr.rel (%p344) target = $region60
        $region59: #{tpu_custom_call.1} parent=47 // pred_region
          %347 = dma.done [#allocation7], 128
        $region60: #{tpu_custom_call.1} parent=47 // pred_fallthru
          _
        // Predicated region
        $region61: #{tpu_custom_call.1} parent=47 // pred_check
          %p348 = pneg %p116
        $region62: #{tpu_custom_call.1} parent=47 // pred_check_branch
          %350 = sbr.rel (%p348) target = $region64
        $region63: #{tpu_custom_call.1} parent=47 // pred_region
          %351 = dma.done [#allocation10], 32768
        $region64: #{tpu_custom_call.1} parent=47 // pred_fallthru
          _
        // Predicated region
        $region65: #{tpu_custom_call.1} parent=47 // pred_check
          %p352 = pneg %p137
        $region66: #{tpu_custom_call.1} parent=47 // pred_check_branch
          %354 = sbr.rel (%p352) target = $region68
        $region67: #{tpu_custom_call.1} parent=47 // pred_region
          %355 = dma.done [#allocation10], 64
        $region68: #{tpu_custom_call.1} parent=47 // pred_fallthru
          _
        // Predicated region
        $region69: #{tpu_custom_call.1} parent=47 // pred_check
          %p356 = pneg %p158
        $region70: #{tpu_custom_call.1} parent=47 // pred_check_branch
          %358 = sbr.rel (%p356) target = $region72
        $region71: #{tpu_custom_call.1} parent=47 // pred_region
          %359 = dma.done [#allocation13], 4096
        $region72: #{tpu_custom_call.1} parent=47 // pred_fallthru
          _
        // Predicated region
        $region73: #{tpu_custom_call.1} parent=47 // pred_check
          %p360 = pneg %p179
        $region74: #{tpu_custom_call.1} parent=47 // pred_check_branch
          %362 = sbr.rel (%p360) target = $region76
        $region75: #{tpu_custom_call.1} parent=47 // pred_region
          %363 = dma.done [#allocation13], 16
        $region76: #{tpu_custom_call.1} parent=47 // pred_fallthru
          _
        %s364 = sand.u32 %s35, 1
        %s365 = scalar_lea.sflag [#allocation4], %s364
        %s366 = sand.u32 %s35, 1
        %s367 = smul.addr %s366, 64
        %s368 = scalar_lea.vmem [#allocation3], %s367
        %p369 = pneg %p48
        %p370 = pneg %p45
        %s371 = sand.u32 %s27, 1
        %s372 = scalar_lea.sflag [#allocation7], %s371
        %s373 = sand.u32 %s61, 1
        %s374 = smul.addr %s373, 8192
        %s375 = scalar_lea.vmem [#allocation6], %s374
        %p376 = pneg %p74
        %p377 = pneg %p71
        %p378 = pneg %p95
        %p379 = pneg %p92
        %p380 = pneg %p116
        %p381 = pneg %p113
        %p382 = pneg %p137
        %p383 = pneg %p134
        %p384 = pneg %p158
        %p385 = pneg %p155
        %p386 = pneg %p179
        %p387 = pneg %p176
        %p388 = pneg %p200
        %p389 = pneg %p197
        %s390 = smul.u32 16, %s27
        %s391 = smul.u32 256, %s27
        %p393 = scmp.eq.s32.totalorder %s27, 0
        // Predicated region
        $region77: #{tpu_custom_call.1} parent=47 // pred_check
          %p394 = pneg %p393
        $region78: #{tpu_custom_call.1} parent=47 // pred_check_branch
          %396 = sbr.rel (%p394) target = $region80
        $region79: #{tpu_custom_call.1} parent=47 // pred_region
          %397 = vst [vmem:[#allocation2] sm:$0xff] 0.0
          %398 = vst [vmem:[#allocation2 + $0x8] sm:$0xff] 0.0
          %399 = vst [vmem:[#allocation2 + $0x10] sm:$0xff] 0.0
          %400 = vst [vmem:[#allocation2 + $0x18] sm:$0xff] 0.0
          %401 = vst [vmem:[#allocation2 + $0x20] sm:$0xff] 0.0
          %402 = vst [vmem:[#allocation2 + $0x28] sm:$0xff] 0.0
          %403 = vst [vmem:[#allocation2 + $0x30] sm:$0xff] 0.0
          %404 = vst [vmem:[#allocation2 + $0x38] sm:$0xff] 0.0
        $region80: #{tpu_custom_call.1} parent=47 // pred_fallthru
          _
        %v405 = vld [vmem:[#allocation2] sm:$0xff]
        %v406 = vld [vmem:[#allocation2 + $0x8] sm:$0xff]
        %v407 = vld [vmem:[#allocation2 + $0x10] sm:$0xff]
        %v408 = vld [vmem:[#allocation2 + $0x18] sm:$0xff]
        %v409 = vld [vmem:[#allocation2 + $0x20] sm:$0xff]
        %v410 = vld [vmem:[#allocation2 + $0x28] sm:$0xff]
        %v411 = vld [vmem:[#allocation2 + $0x30] sm:$0xff]
        %v412 = vld [vmem:[#allocation2 + $0x38] sm:$0xff]
        %v413 = vld [vmem:[%s330] sm:$0xff]
        %v414 = vld [vmem:[%s330 + $0x8] sm:$0xff]
        %v415 = vld [vmem:[%s330 + $0x10] sm:$0xff]
        %v416 = vld [vmem:[%s330 + $0x18] sm:$0xff]
        %v417 = vld [vmem:[%s330 + $0x20] sm:$0xff]
        %v418 = vld [vmem:[%s330 + $0x28] sm:$0xff]
        %v419 = vld [vmem:[%s330 + $0x30] sm:$0xff]
        %v420 = vld [vmem:[%s330 + $0x38] sm:$0xff]
        %v421 = vld [vmem:[%s339] sm:$0xff]
        %v422 = vld [vmem:[%s339 + $0x8] sm:$0xff]
        %v423 = vld [vmem:[%s339 + $0x10] sm:$0xff]
        %v424 = vld [vmem:[%s339 + $0x18] sm:$0xff]
        %v425 = vld [vmem:[%s339 + $0x20] sm:$0xff]
        %v426 = vld [vmem:[%s339 + $0x28] sm:$0xff]
        %v427 = vld [vmem:[%s339 + $0x30] sm:$0xff]
        %v428 = vld [vmem:[%s339 + $0x38] sm:$0xff]
        %v429 = vld [vmem:[%s339 + $0x40] sm:$0xff]
        %v430 = vld [vmem:[%s339 + $0x48] sm:$0xff]
        %v431 = vld [vmem:[%s339 + $0x50] sm:$0xff]
        %v432 = vld [vmem:[%s339 + $0x58] sm:$0xff]
        %v433 = vld [vmem:[%s339 + $0x60] sm:$0xff]
        %v434 = vld [vmem:[%s339 + $0x68] sm:$0xff]
        %v435 = vld [vmem:[%s339 + $0x70] sm:$0xff]
        %v436 = vld [vmem:[%s339 + $0x78] sm:$0xff]
        %v437 = vld [vmem:[%s339 + $0x80] sm:$0xff]
        %v438 = vld [vmem:[%s339 + $0x88] sm:$0xff]
        %v439 = vld [vmem:[%s339 + $0x90] sm:$0xff]
        %v440 = vld [vmem:[%s339 + $0x98] sm:$0xff]
        %v441 = vld [vmem:[%s339 + $0xa0] sm:$0xff]
        %v442 = vld [vmem:[%s339 + $0xa8] sm:$0xff]
        %v443 = vld [vmem:[%s339 + $0xb0] sm:$0xff]
        %v444 = vld [vmem:[%s339 + $0xb8] sm:$0xff]
        %v445 = vld [vmem:[%s339 + $0xc0] sm:$0xff]
        %v446 = vld [vmem:[%s339 + $0xc8] sm:$0xff]
        %v447 = vld [vmem:[%s339 + $0xd0] sm:$0xff]
        %v448 = vld [vmem:[%s339 + $0xd8] sm:$0xff]
        %v449 = vld [vmem:[%s339 + $0xe0] sm:$0xff]
        %v450 = vld [vmem:[%s339 + $0xe8] sm:$0xff]
        %v451 = vld [vmem:[%s339 + $0xf0] sm:$0xff]
        %v452 = vld [vmem:[%s339 + $0xf8] sm:$0xff]
        %v453 = vld [vmem:[%s339 + $0x100] sm:$0xff]
        %v454 = vld [vmem:[%s339 + $0x108] sm:$0xff]
        %v455 = vld [vmem:[%s339 + $0x110] sm:$0xff]
        %v456 = vld [vmem:[%s339 + $0x118] sm:$0xff]
        %v457 = vld [vmem:[%s339 + $0x120] sm:$0xff]
        %v458 = vld [vmem:[%s339 + $0x128] sm:$0xff]
        %v459 = vld [vmem:[%s339 + $0x130] sm:$0xff]
        %v460 = vld [vmem:[%s339 + $0x138] sm:$0xff]
        %v461 = vld [vmem:[%s339 + $0x140] sm:$0xff]
        %v462 = vld [vmem:[%s339 + $0x148] sm:$0xff]
        %v463 = vld [vmem:[%s339 + $0x150] sm:$0xff]
        %v464 = vld [vmem:[%s339 + $0x158] sm:$0xff]
        %v465 = vld [vmem:[%s339 + $0x160] sm:$0xff]
        %v466 = vld [vmem:[%s339 + $0x168] sm:$0xff]
        %v467 = vld [vmem:[%s339 + $0x170] sm:$0xff]
        %v468 = vld [vmem:[%s339 + $0x178] sm:$0xff]
        %v469 = vld [vmem:[%s339 + $0x180] sm:$0xff]
        %v470 = vld [vmem:[%s339 + $0x188] sm:$0xff]
        %v471 = vld [vmem:[%s339 + $0x190] sm:$0xff]
        %v472 = vld [vmem:[%s339 + $0x198] sm:$0xff]
        %v473 = vld [vmem:[%s339 + $0x1a0] sm:$0xff]
        %v474 = vld [vmem:[%s339 + $0x1a8] sm:$0xff]
        %v475 = vld [vmem:[%s339 + $0x1b0] sm:$0xff]
        %v476 = vld [vmem:[%s339 + $0x1b8] sm:$0xff]
        %v477 = vld [vmem:[%s339 + $0x1c0] sm:$0xff]
        %v478 = vld [vmem:[%s339 + $0x1c8] sm:$0xff]
        %v479 = vld [vmem:[%s339 + $0x1d0] sm:$0xff]
        %v480 = vld [vmem:[%s339 + $0x1d8] sm:$0xff]
        %v481 = vld [vmem:[%s339 + $0x1e0] sm:$0xff]
        %v482 = vld [vmem:[%s339 + $0x1e8] sm:$0xff]
        %v483 = vld [vmem:[%s339 + $0x1f0] sm:$0xff]
        %v484 = vld [vmem:[%s339 + $0x1f8] sm:$0xff]
        %v485 = vld [vmem:[%s339 + $0x200] sm:$0xff]
        %v486 = vld [vmem:[%s339 + $0x208] sm:$0xff]
        %v487 = vld [vmem:[%s339 + $0x210] sm:$0xff]
        %v488 = vld [vmem:[%s339 + $0x218] sm:$0xff]
        %v489 = vld [vmem:[%s339 + $0x220] sm:$0xff]
        %v490 = vld [vmem:[%s339 + $0x228] sm:$0xff]
        %v491 = vld [vmem:[%s339 + $0x230] sm:$0xff]
        %v492 = vld [vmem:[%s339 + $0x238] sm:$0xff]
        %v493 = vld [vmem:[%s339 + $0x240] sm:$0xff]
        %v494 = vld [vmem:[%s339 + $0x248] sm:$0xff]
        %v495 = vld [vmem:[%s339 + $0x250] sm:$0xff]
        %v496 = vld [vmem:[%s339 + $0x258] sm:$0xff]
        %v497 = vld [vmem:[%s339 + $0x260] sm:$0xff]
        %v498 = vld [vmem:[%s339 + $0x268] sm:$0xff]
        %v499 = vld [vmem:[%s339 + $0x270] sm:$0xff]
        %v500 = vld [vmem:[%s339 + $0x278] sm:$0xff]
        %v501 = vld [vmem:[%s339 + $0x280] sm:$0xff]
        %v502 = vld [vmem:[%s339 + $0x288] sm:$0xff]
        %v503 = vld [vmem:[%s339 + $0x290] sm:$0xff]
        %v504 = vld [vmem:[%s339 + $0x298] sm:$0xff]
        %v505 = vld [vmem:[%s339 + $0x2a0] sm:$0xff]
        %v506 = vld [vmem:[%s339 + $0x2a8] sm:$0xff]
        %v507 = vld [vmem:[%s339 + $0x2b0] sm:$0xff]
        %v508 = vld [vmem:[%s339 + $0x2b8] sm:$0xff]
        %v509 = vld [vmem:[%s339 + $0x2c0] sm:$0xff]
        %v510 = vld [vmem:[%s339 + $0x2c8] sm:$0xff]
        %v511 = vld [vmem:[%s339 + $0x2d0] sm:$0xff]
        %v512 = vld [vmem:[%s339 + $0x2d8] sm:$0xff]
        %v513 = vld [vmem:[%s339 + $0x2e0] sm:$0xff]
        %v514 = vld [vmem:[%s339 + $0x2e8] sm:$0xff]
        %v515 = vld [vmem:[%s339 + $0x2f0] sm:$0xff]
        %v516 = vld [vmem:[%s339 + $0x2f8] sm:$0xff]
        %v517 = vld [vmem:[%s339 + $0x300] sm:$0xff]
        %v518 = vld [vmem:[%s339 + $0x308] sm:$0xff]
        %v519 = vld [vmem:[%s339 + $0x310] sm:$0xff]
        %v520 = vld [vmem:[%s339 + $0x318] sm:$0xff]
        %v521 = vld [vmem:[%s339 + $0x320] sm:$0xff]
        %v522 = vld [vmem:[%s339 + $0x328] sm:$0xff]
        %v523 = vld [vmem:[%s339 + $0x330] sm:$0xff]
        %v524 = vld [vmem:[%s339 + $0x338] sm:$0xff]
        %v525 = vld [vmem:[%s339 + $0x340] sm:$0xff]
        %v526 = vld [vmem:[%s339 + $0x348] sm:$0xff]
        %v527 = vld [vmem:[%s339 + $0x350] sm:$0xff]
        %v528 = vld [vmem:[%s339 + $0x358] sm:$0xff]
        %v529 = vld [vmem:[%s339 + $0x360] sm:$0xff]
        %v530 = vld [vmem:[%s339 + $0x368] sm:$0xff]
        %v531 = vld [vmem:[%s339 + $0x370] sm:$0xff]
        %v532 = vld [vmem:[%s339 + $0x378] sm:$0xff]
        %v533 = vld [vmem:[%s339 + $0x380] sm:$0xff]
        %v534 = vld [vmem:[%s339 + $0x388] sm:$0xff]
        %v535 = vld [vmem:[%s339 + $0x390] sm:$0xff]
        %v536 = vld [vmem:[%s339 + $0x398] sm:$0xff]
        %v537 = vld [vmem:[%s339 + $0x3a0] sm:$0xff]
        %v538 = vld [vmem:[%s339 + $0x3a8] sm:$0xff]
        %v539 = vld [vmem:[%s339 + $0x3b0] sm:$0xff]
        %v540 = vld [vmem:[%s339 + $0x3b8] sm:$0xff]
        %v541 = vld [vmem:[%s339 + $0x3c0] sm:$0xff]
        %v542 = vld [vmem:[%s339 + $0x3c8] sm:$0xff]
        %v543 = vld [vmem:[%s339 + $0x3d0] sm:$0xff]
        %v544 = vld [vmem:[%s339 + $0x3d8] sm:$0xff]
        %v545 = vld [vmem:[%s339 + $0x3e0] sm:$0xff]
        %v546 = vld [vmem:[%s339 + $0x3e8] sm:$0xff]
        %v547 = vld [vmem:[%s339 + $0x3f0] sm:$0xff]
        %v548 = vld [vmem:[%s339 + $0x3f8] sm:$0xff]
        %v549 = vld [vmem:[%s339 + $0x400] sm:$0xff]
        %v550 = vld [vmem:[%s339 + $0x408] sm:$0xff]
        %v551 = vld [vmem:[%s339 + $0x410] sm:$0xff]
        %v552 = vld [vmem:[%s339 + $0x418] sm:$0xff]
        %v553 = vld [vmem:[%s339 + $0x420] sm:$0xff]
        %v554 = vld [vmem:[%s339 + $0x428] sm:$0xff]
        %v555 = vld [vmem:[%s339 + $0x430] sm:$0xff]
        %v556 = vld [vmem:[%s339 + $0x438] sm:$0xff]
        %v557 = vld [vmem:[%s339 + $0x440] sm:$0xff]
        %v558 = vld [vmem:[%s339 + $0x448] sm:$0xff]
        %v559 = vld [vmem:[%s339 + $0x450] sm:$0xff]
        %v560 = vld [vmem:[%s339 + $0x458] sm:$0xff]
        %v561 = vld [vmem:[%s339 + $0x460] sm:$0xff]
        %v562 = vld [vmem:[%s339 + $0x468] sm:$0xff]
        %v563 = vld [vmem:[%s339 + $0x470] sm:$0xff]
        %v564 = vld [vmem:[%s339 + $0x478] sm:$0xff]
        %v565 = vld [vmem:[%s339 + $0x480] sm:$0xff]
        %v566 = vld [vmem:[%s339 + $0x488] sm:$0xff]
        %v567 = vld [vmem:[%s339 + $0x490] sm:$0xff]
        %v568 = vld [vmem:[%s339 + $0x498] sm:$0xff]
        %v569 = vld [vmem:[%s339 + $0x4a0] sm:$0xff]
        %v570 = vld [vmem:[%s339 + $0x4a8] sm:$0xff]
        %v571 = vld [vmem:[%s339 + $0x4b0] sm:$0xff]
        %v572 = vld [vmem:[%s339 + $0x4b8] sm:$0xff]
        %v573 = vld [vmem:[%s339 + $0x4c0] sm:$0xff]
        %v574 = vld [vmem:[%s339 + $0x4c8] sm:$0xff]
        %v575 = vld [vmem:[%s339 + $0x4d0] sm:$0xff]
        %v576 = vld [vmem:[%s339 + $0x4d8] sm:$0xff]
        %v577 = vld [vmem:[%s339 + $0x4e0] sm:$0xff]
        %v578 = vld [vmem:[%s339 + $0x4e8] sm:$0xff]
        %v579 = vld [vmem:[%s339 + $0x4f0] sm:$0xff]
        %v580 = vld [vmem:[%s339 + $0x4f8] sm:$0xff]
        %v581 = vld [vmem:[%s339 + $0x500] sm:$0xff]
        %v582 = vld [vmem:[%s339 + $0x508] sm:$0xff]
        %v583 = vld [vmem:[%s339 + $0x510] sm:$0xff]
        %v584 = vld [vmem:[%s339 + $0x518] sm:$0xff]
        %v585 = vld [vmem:[%s339 + $0x520] sm:$0xff]
        %v586 = vld [vmem:[%s339 + $0x528] sm:$0xff]
        %v587 = vld [vmem:[%s339 + $0x530] sm:$0xff]
        %v588 = vld [vmem:[%s339 + $0x538] sm:$0xff]
        %v589 = vld [vmem:[%s339 + $0x540] sm:$0xff]
        %v590 = vld [vmem:[%s339 + $0x548] sm:$0xff]
        %v591 = vld [vmem:[%s339 + $0x550] sm:$0xff]
        %v592 = vld [vmem:[%s339 + $0x558] sm:$0xff]
        %v593 = vld [vmem:[%s339 + $0x560] sm:$0xff]
        %v594 = vld [vmem:[%s339 + $0x568] sm:$0xff]
        %v595 = vld [vmem:[%s339 + $0x570] sm:$0xff]
        %v596 = vld [vmem:[%s339 + $0x578] sm:$0xff]
        %v597 = vld [vmem:[%s339 + $0x580] sm:$0xff]
        %v598 = vld [vmem:[%s339 + $0x588] sm:$0xff]
        %v599 = vld [vmem:[%s339 + $0x590] sm:$0xff]
        %v600 = vld [vmem:[%s339 + $0x598] sm:$0xff]
        %v601 = vld [vmem:[%s339 + $0x5a0] sm:$0xff]
        %v602 = vld [vmem:[%s339 + $0x5a8] sm:$0xff]
        %v603 = vld [vmem:[%s339 + $0x5b0] sm:$0xff]
        %v604 = vld [vmem:[%s339 + $0x5b8] sm:$0xff]
        %v605 = vld [vmem:[%s339 + $0x5c0] sm:$0xff]
        %v606 = vld [vmem:[%s339 + $0x5c8] sm:$0xff]
        %v607 = vld [vmem:[%s339 + $0x5d0] sm:$0xff]
        %v608 = vld [vmem:[%s339 + $0x5d8] sm:$0xff]
        %v609 = vld [vmem:[%s339 + $0x5e0] sm:$0xff]
        %v610 = vld [vmem:[%s339 + $0x5e8] sm:$0xff]
        %v611 = vld [vmem:[%s339 + $0x5f0] sm:$0xff]
        %v612 = vld [vmem:[%s339 + $0x5f8] sm:$0xff]
        %v613 = vld [vmem:[%s339 + $0x600] sm:$0xff]
        %v614 = vld [vmem:[%s339 + $0x608] sm:$0xff]
        %v615 = vld [vmem:[%s339 + $0x610] sm:$0xff]
        %v616 = vld [vmem:[%s339 + $0x618] sm:$0xff]
        %v617 = vld [vmem:[%s339 + $0x620] sm:$0xff]
        %v618 = vld [vmem:[%s339 + $0x628] sm:$0xff]
        %v619 = vld [vmem:[%s339 + $0x630] sm:$0xff]
        %v620 = vld [vmem:[%s339 + $0x638] sm:$0xff]
        %v621 = vld [vmem:[%s339 + $0x640] sm:$0xff]
        %v622 = vld [vmem:[%s339 + $0x648] sm:$0xff]
        %v623 = vld [vmem:[%s339 + $0x650] sm:$0xff]
        %v624 = vld [vmem:[%s339 + $0x658] sm:$0xff]
        %v625 = vld [vmem:[%s339 + $0x660] sm:$0xff]
        %v626 = vld [vmem:[%s339 + $0x668] sm:$0xff]
        %v627 = vld [vmem:[%s339 + $0x670] sm:$0xff]
        %v628 = vld [vmem:[%s339 + $0x678] sm:$0xff]
        %v629 = vld [vmem:[%s339 + $0x680] sm:$0xff]
        %v630 = vld [vmem:[%s339 + $0x688] sm:$0xff]
        %v631 = vld [vmem:[%s339 + $0x690] sm:$0xff]
        %v632 = vld [vmem:[%s339 + $0x698] sm:$0xff]
        %v633 = vld [vmem:[%s339 + $0x6a0] sm:$0xff]
        %v634 = vld [vmem:[%s339 + $0x6a8] sm:$0xff]
        %v635 = vld [vmem:[%s339 + $0x6b0] sm:$0xff]
        %v636 = vld [vmem:[%s339 + $0x6b8] sm:$0xff]
        %v637 = vld [vmem:[%s339 + $0x6c0] sm:$0xff]
        %v638 = vld [vmem:[%s339 + $0x6c8] sm:$0xff]
        %v639 = vld [vmem:[%s339 + $0x6d0] sm:$0xff]
        %v640 = vld [vmem:[%s339 + $0x6d8] sm:$0xff]
        %v641 = vld [vmem:[%s339 + $0x6e0] sm:$0xff]
        %v642 = vld [vmem:[%s339 + $0x6e8] sm:$0xff]
        %v643 = vld [vmem:[%s339 + $0x6f0] sm:$0xff]
        %v644 = vld [vmem:[%s339 + $0x6f8] sm:$0xff]
        %v645 = vld [vmem:[%s339 + $0x700] sm:$0xff]
        %v646 = vld [vmem:[%s339 + $0x708] sm:$0xff]
        %v647 = vld [vmem:[%s339 + $0x710] sm:$0xff]
        %v648 = vld [vmem:[%s339 + $0x718] sm:$0xff]
        %v649 = vld [vmem:[%s339 + $0x720] sm:$0xff]
        %v650 = vld [vmem:[%s339 + $0x728] sm:$0xff]
        %v651 = vld [vmem:[%s339 + $0x730] sm:$0xff]
        %v652 = vld [vmem:[%s339 + $0x738] sm:$0xff]
        %v653 = vld [vmem:[%s339 + $0x740] sm:$0xff]
        %v654 = vld [vmem:[%s339 + $0x748] sm:$0xff]
        %v655 = vld [vmem:[%s339 + $0x750] sm:$0xff]
        %v656 = vld [vmem:[%s339 + $0x758] sm:$0xff]
        %v657 = vld [vmem:[%s339 + $0x760] sm:$0xff]
        %v658 = vld [vmem:[%s339 + $0x768] sm:$0xff]
        %v659 = vld [vmem:[%s339 + $0x770] sm:$0xff]
        %v660 = vld [vmem:[%s339 + $0x778] sm:$0xff]
        %v661 = vld [vmem:[%s339 + $0x780] sm:$0xff]
        %v662 = vld [vmem:[%s339 + $0x788] sm:$0xff]
        %v663 = vld [vmem:[%s339 + $0x790] sm:$0xff]
        %v664 = vld [vmem:[%s339 + $0x798] sm:$0xff]
        %v665 = vld [vmem:[%s339 + $0x7a0] sm:$0xff]
        %v666 = vld [vmem:[%s339 + $0x7a8] sm:$0xff]
        %v667 = vld [vmem:[%s339 + $0x7b0] sm:$0xff]
        %v668 = vld [vmem:[%s339 + $0x7b8] sm:$0xff]
        %v669 = vld [vmem:[%s339 + $0x7c0] sm:$0xff]
        %v670 = vld [vmem:[%s339 + $0x7c8] sm:$0xff]
        %v671 = vld [vmem:[%s339 + $0x7d0] sm:$0xff]
        %v672 = vld [vmem:[%s339 + $0x7d8] sm:$0xff]
        %v673 = vld [vmem:[%s339 + $0x7e0] sm:$0xff]
        %v674 = vld [vmem:[%s339 + $0x7e8] sm:$0xff]
        %v675 = vld [vmem:[%s339 + $0x7f0] sm:$0xff]
        %v676 = vld [vmem:[%s339 + $0x7f8] sm:$0xff]
        %v677 = vld [vmem:[%s339 + $0x800] sm:$0xff]
        %v678 = vld [vmem:[%s339 + $0x808] sm:$0xff]
        %v679 = vld [vmem:[%s339 + $0x810] sm:$0xff]
        %v680 = vld [vmem:[%s339 + $0x818] sm:$0xff]
        %v681 = vld [vmem:[%s339 + $0x820] sm:$0xff]
        %v682 = vld [vmem:[%s339 + $0x828] sm:$0xff]
        %v683 = vld [vmem:[%s339 + $0x830] sm:$0xff]
        %v684 = vld [vmem:[%s339 + $0x838] sm:$0xff]
        %v685 = vld [vmem:[%s339 + $0x840] sm:$0xff]
        %v686 = vld [vmem:[%s339 + $0x848] sm:$0xff]
        %v687 = vld [vmem:[%s339 + $0x850] sm:$0xff]
        %v688 = vld [vmem:[%s339 + $0x858] sm:$0xff]
        %v689 = vld [vmem:[%s339 + $0x860] sm:$0xff]
        %v690 = vld [vmem:[%s339 + $0x868] sm:$0xff]
        %v691 = vld [vmem:[%s339 + $0x870] sm:$0xff]
        %v692 = vld [vmem:[%s339 + $0x878] sm:$0xff]
        %v693 = vld [vmem:[%s339 + $0x880] sm:$0xff]
        %v694 = vld [vmem:[%s339 + $0x888] sm:$0xff]
        %v695 = vld [vmem:[%s339 + $0x890] sm:$0xff]
        %v696 = vld [vmem:[%s339 + $0x898] sm:$0xff]
        %v697 = vld [vmem:[%s339 + $0x8a0] sm:$0xff]
        %v698 = vld [vmem:[%s339 + $0x8a8] sm:$0xff]
        %v699 = vld [vmem:[%s339 + $0x8b0] sm:$0xff]
        %v700 = vld [vmem:[%s339 + $0x8b8] sm:$0xff]
        %v701 = vld [vmem:[%s339 + $0x8c0] sm:$0xff]
        %v702 = vld [vmem:[%s339 + $0x8c8] sm:$0xff]
        %v703 = vld [vmem:[%s339 + $0x8d0] sm:$0xff]
        %v704 = vld [vmem:[%s339 + $0x8d8] sm:$0xff]
        %v705 = vld [vmem:[%s339 + $0x8e0] sm:$0xff]
        %v706 = vld [vmem:[%s339 + $0x8e8] sm:$0xff]
        %v707 = vld [vmem:[%s339 + $0x8f0] sm:$0xff]
        %v708 = vld [vmem:[%s339 + $0x8f8] sm:$0xff]
        %v709 = vld [vmem:[%s339 + $0x900] sm:$0xff]
        %v710 = vld [vmem:[%s339 + $0x908] sm:$0xff]
        %v711 = vld [vmem:[%s339 + $0x910] sm:$0xff]
        %v712 = vld [vmem:[%s339 + $0x918] sm:$0xff]
        %v713 = vld [vmem:[%s339 + $0x920] sm:$0xff]
        %v714 = vld [vmem:[%s339 + $0x928] sm:$0xff]
        %v715 = vld [vmem:[%s339 + $0x930] sm:$0xff]
        %v716 = vld [vmem:[%s339 + $0x938] sm:$0xff]
        %v717 = vld [vmem:[%s339 + $0x940] sm:$0xff]
        %v718 = vld [vmem:[%s339 + $0x948] sm:$0xff]
        %v719 = vld [vmem:[%s339 + $0x950] sm:$0xff]
        %v720 = vld [vmem:[%s339 + $0x958] sm:$0xff]
        %v721 = vld [vmem:[%s339 + $0x960] sm:$0xff]
        %v722 = vld [vmem:[%s339 + $0x968] sm:$0xff]
        %v723 = vld [vmem:[%s339 + $0x970] sm:$0xff]
        %v724 = vld [vmem:[%s339 + $0x978] sm:$0xff]
        %v725 = vld [vmem:[%s339 + $0x980] sm:$0xff]
        %v726 = vld [vmem:[%s339 + $0x988] sm:$0xff]
        %v727 = vld [vmem:[%s339 + $0x990] sm:$0xff]
        %v728 = vld [vmem:[%s339 + $0x998] sm:$0xff]
        %v729 = vld [vmem:[%s339 + $0x9a0] sm:$0xff]
        %v730 = vld [vmem:[%s339 + $0x9a8] sm:$0xff]
        %v731 = vld [vmem:[%s339 + $0x9b0] sm:$0xff]
        %v732 = vld [vmem:[%s339 + $0x9b8] sm:$0xff]
        %v733 = vld [vmem:[%s339 + $0x9c0] sm:$0xff]
        %v734 = vld [vmem:[%s339 + $0x9c8] sm:$0xff]
        %v735 = vld [vmem:[%s339 + $0x9d0] sm:$0xff]
        %v736 = vld [vmem:[%s339 + $0x9d8] sm:$0xff]
        %v737 = vld [vmem:[%s339 + $0x9e0] sm:$0xff]
        %v738 = vld [vmem:[%s339 + $0x9e8] sm:$0xff]
        %v739 = vld [vmem:[%s339 + $0x9f0] sm:$0xff]
        %v740 = vld [vmem:[%s339 + $0x9f8] sm:$0xff]
        %v741 = vld [vmem:[%s339 + $0xa00] sm:$0xff]
        %v742 = vld [vmem:[%s339 + $0xa08] sm:$0xff]
        %v743 = vld [vmem:[%s339 + $0xa10] sm:$0xff]
        %v744 = vld [vmem:[%s339 + $0xa18] sm:$0xff]
        %v745 = vld [vmem:[%s339 + $0xa20] sm:$0xff]
        %v746 = vld [vmem:[%s339 + $0xa28] sm:$0xff]
        %v747 = vld [vmem:[%s339 + $0xa30] sm:$0xff]
        %v748 = vld [vmem:[%s339 + $0xa38] sm:$0xff]
        %v749 = vld [vmem:[%s339 + $0xa40] sm:$0xff]
        %v750 = vld [vmem:[%s339 + $0xa48] sm:$0xff]
        %v751 = vld [vmem:[%s339 + $0xa50] sm:$0xff]
        %v752 = vld [vmem:[%s339 + $0xa58] sm:$0xff]
        %v753 = vld [vmem:[%s339 + $0xa60] sm:$0xff]
        %v754 = vld [vmem:[%s339 + $0xa68] sm:$0xff]
        %v755 = vld [vmem:[%s339 + $0xa70] sm:$0xff]
        %v756 = vld [vmem:[%s339 + $0xa78] sm:$0xff]
        %v757 = vld [vmem:[%s339 + $0xa80] sm:$0xff]
        %v758 = vld [vmem:[%s339 + $0xa88] sm:$0xff]
        %v759 = vld [vmem:[%s339 + $0xa90] sm:$0xff]
        %v760 = vld [vmem:[%s339 + $0xa98] sm:$0xff]
        %v761 = vld [vmem:[%s339 + $0xaa0] sm:$0xff]
        %v762 = vld [vmem:[%s339 + $0xaa8] sm:$0xff]
        %v763 = vld [vmem:[%s339 + $0xab0] sm:$0xff]
        %v764 = vld [vmem:[%s339 + $0xab8] sm:$0xff]
        %v765 = vld [vmem:[%s339 + $0xac0] sm:$0xff]
        %v766 = vld [vmem:[%s339 + $0xac8] sm:$0xff]
        %v767 = vld [vmem:[%s339 + $0xad0] sm:$0xff]
        %v768 = vld [vmem:[%s339 + $0xad8] sm:$0xff]
        %v769 = vld [vmem:[%s339 + $0xae0] sm:$0xff]
        %v770 = vld [vmem:[%s339 + $0xae8] sm:$0xff]
        %v771 = vld [vmem:[%s339 + $0xaf0] sm:$0xff]
        %v772 = vld [vmem:[%s339 + $0xaf8] sm:$0xff]
        %v773 = vld [vmem:[%s339 + $0xb00] sm:$0xff]
        %v774 = vld [vmem:[%s339 + $0xb08] sm:$0xff]
        %v775 = vld [vmem:[%s339 + $0xb10] sm:$0xff]
        %v776 = vld [vmem:[%s339 + $0xb18] sm:$0xff]
        %v777 = vld [vmem:[%s339 + $0xb20] sm:$0xff]
        %v778 = vld [vmem:[%s339 + $0xb28] sm:$0xff]
        %v779 = vld [vmem:[%s339 + $0xb30] sm:$0xff]
        %v780 = vld [vmem:[%s339 + $0xb38] sm:$0xff]
        %v781 = vld [vmem:[%s339 + $0xb40] sm:$0xff]
        %v782 = vld [vmem:[%s339 + $0xb48] sm:$0xff]
        %v783 = vld [vmem:[%s339 + $0xb50] sm:$0xff]
        %v784 = vld [vmem:[%s339 + $0xb58] sm:$0xff]
        %v785 = vld [vmem:[%s339 + $0xb60] sm:$0xff]
        %v786 = vld [vmem:[%s339 + $0xb68] sm:$0xff]
        %v787 = vld [vmem:[%s339 + $0xb70] sm:$0xff]
        %v788 = vld [vmem:[%s339 + $0xb78] sm:$0xff]
        %v789 = vld [vmem:[%s339 + $0xb80] sm:$0xff]
        %v790 = vld [vmem:[%s339 + $0xb88] sm:$0xff]
        %v791 = vld [vmem:[%s339 + $0xb90] sm:$0xff]
        %v792 = vld [vmem:[%s339 + $0xb98] sm:$0xff]
        %v793 = vld [vmem:[%s339 + $0xba0] sm:$0xff]
        %v794 = vld [vmem:[%s339 + $0xba8] sm:$0xff]
        %v795 = vld [vmem:[%s339 + $0xbb0] sm:$0xff]
        %v796 = vld [vmem:[%s339 + $0xbb8] sm:$0xff]
        %v797 = vld [vmem:[%s339 + $0xbc0] sm:$0xff]
        %v798 = vld [vmem:[%s339 + $0xbc8] sm:$0xff]
        %v799 = vld [vmem:[%s339 + $0xbd0] sm:$0xff]
        %v800 = vld [vmem:[%s339 + $0xbd8] sm:$0xff]
        %v801 = vld [vmem:[%s339 + $0xbe0] sm:$0xff]
        %v802 = vld [vmem:[%s339 + $0xbe8] sm:$0xff]
        %v803 = vld [vmem:[%s339 + $0xbf0] sm:$0xff]
        %v804 = vld [vmem:[%s339 + $0xbf8] sm:$0xff]
        %v805 = vld [vmem:[%s339 + $0xc00] sm:$0xff]
        %v806 = vld [vmem:[%s339 + $0xc08] sm:$0xff]
        %v807 = vld [vmem:[%s339 + $0xc10] sm:$0xff]
        %v808 = vld [vmem:[%s339 + $0xc18] sm:$0xff]
        %v809 = vld [vmem:[%s339 + $0xc20] sm:$0xff]
        %v810 = vld [vmem:[%s339 + $0xc28] sm:$0xff]
        %v811 = vld [vmem:[%s339 + $0xc30] sm:$0xff]
        %v812 = vld [vmem:[%s339 + $0xc38] sm:$0xff]
        %v813 = vld [vmem:[%s339 + $0xc40] sm:$0xff]
        %v814 = vld [vmem:[%s339 + $0xc48] sm:$0xff]
        %v815 = vld [vmem:[%s339 + $0xc50] sm:$0xff]
        %v816 = vld [vmem:[%s339 + $0xc58] sm:$0xff]
        %v817 = vld [vmem:[%s339 + $0xc60] sm:$0xff]
        %v818 = vld [vmem:[%s339 + $0xc68] sm:$0xff]
        %v819 = vld [vmem:[%s339 + $0xc70] sm:$0xff]
        %v820 = vld [vmem:[%s339 + $0xc78] sm:$0xff]
        %v821 = vld [vmem:[%s339 + $0xc80] sm:$0xff]
        %v822 = vld [vmem:[%s339 + $0xc88] sm:$0xff]
        %v823 = vld [vmem:[%s339 + $0xc90] sm:$0xff]
        %v824 = vld [vmem:[%s339 + $0xc98] sm:$0xff]
        %v825 = vld [vmem:[%s339 + $0xca0] sm:$0xff]
        %v826 = vld [vmem:[%s339 + $0xca8] sm:$0xff]
        %v827 = vld [vmem:[%s339 + $0xcb0] sm:$0xff]
        %v828 = vld [vmem:[%s339 + $0xcb8] sm:$0xff]
        %v829 = vld [vmem:[%s339 + $0xcc0] sm:$0xff]
        %v830 = vld [vmem:[%s339 + $0xcc8] sm:$0xff]
        %v831 = vld [vmem:[%s339 + $0xcd0] sm:$0xff]
        %v832 = vld [vmem:[%s339 + $0xcd8] sm:$0xff]
        %v833 = vld [vmem:[%s339 + $0xce0] sm:$0xff]
        %v834 = vld [vmem:[%s339 + $0xce8] sm:$0xff]
        %v835 = vld [vmem:[%s339 + $0xcf0] sm:$0xff]
        %v836 = vld [vmem:[%s339 + $0xcf8] sm:$0xff]
        %v837 = vld [vmem:[%s339 + $0xd00] sm:$0xff]
        %v838 = vld [vmem:[%s339 + $0xd08] sm:$0xff]
        %v839 = vld [vmem:[%s339 + $0xd10] sm:$0xff]
        %v840 = vld [vmem:[%s339 + $0xd18] sm:$0xff]
        %v841 = vld [vmem:[%s339 + $0xd20] sm:$0xff]
        %v842 = vld [vmem:[%s339 + $0xd28] sm:$0xff]
        %v843 = vld [vmem:[%s339 + $0xd30] sm:$0xff]
        %v844 = vld [vmem:[%s339 + $0xd38] sm:$0xff]
        %v845 = vld [vmem:[%s339 + $0xd40] sm:$0xff]
        %v846 = vld [vmem:[%s339 + $0xd48] sm:$0xff]
        %v847 = vld [vmem:[%s339 + $0xd50] sm:$0xff]
        %v848 = vld [vmem:[%s339 + $0xd58] sm:$0xff]
        %v849 = vld [vmem:[%s339 + $0xd60] sm:$0xff]
        %v850 = vld [vmem:[%s339 + $0xd68] sm:$0xff]
        %v851 = vld [vmem:[%s339 + $0xd70] sm:$0xff]
        %v852 = vld [vmem:[%s339 + $0xd78] sm:$0xff]
        %v853 = vld [vmem:[%s339 + $0xd80] sm:$0xff]
        %v854 = vld [vmem:[%s339 + $0xd88] sm:$0xff]
        %v855 = vld [vmem:[%s339 + $0xd90] sm:$0xff]
        %v856 = vld [vmem:[%s339 + $0xd98] sm:$0xff]
        %v857 = vld [vmem:[%s339 + $0xda0] sm:$0xff]
        %v858 = vld [vmem:[%s339 + $0xda8] sm:$0xff]
        %v859 = vld [vmem:[%s339 + $0xdb0] sm:$0xff]
        %v860 = vld [vmem:[%s339 + $0xdb8] sm:$0xff]
        %v861 = vld [vmem:[%s339 + $0xdc0] sm:$0xff]
        %v862 = vld [vmem:[%s339 + $0xdc8] sm:$0xff]
        %v863 = vld [vmem:[%s339 + $0xdd0] sm:$0xff]
        %v864 = vld [vmem:[%s339 + $0xdd8] sm:$0xff]
        %v865 = vld [vmem:[%s339 + $0xde0] sm:$0xff]
        %v866 = vld [vmem:[%s339 + $0xde8] sm:$0xff]
        %v867 = vld [vmem:[%s339 + $0xdf0] sm:$0xff]
        %v868 = vld [vmem:[%s339 + $0xdf8] sm:$0xff]
        %v869 = vld [vmem:[%s339 + $0xe00] sm:$0xff]
        %v870 = vld [vmem:[%s339 + $0xe08] sm:$0xff]
        %v871 = vld [vmem:[%s339 + $0xe10] sm:$0xff]
        %v872 = vld [vmem:[%s339 + $0xe18] sm:$0xff]
        %v873 = vld [vmem:[%s339 + $0xe20] sm:$0xff]
        %v874 = vld [vmem:[%s339 + $0xe28] sm:$0xff]
        %v875 = vld [vmem:[%s339 + $0xe30] sm:$0xff]
        %v876 = vld [vmem:[%s339 + $0xe38] sm:$0xff]
        %v877 = vld [vmem:[%s339 + $0xe40] sm:$0xff]
        %v878 = vld [vmem:[%s339 + $0xe48] sm:$0xff]
        %v879 = vld [vmem:[%s339 + $0xe50] sm:$0xff]
        %v880 = vld [vmem:[%s339 + $0xe58] sm:$0xff]
        %v881 = vld [vmem:[%s339 + $0xe60] sm:$0xff]
        %v882 = vld [vmem:[%s339 + $0xe68] sm:$0xff]
        %v883 = vld [vmem:[%s339 + $0xe70] sm:$0xff]
        %v884 = vld [vmem:[%s339 + $0xe78] sm:$0xff]
        %v885 = vld [vmem:[%s339 + $0xe80] sm:$0xff]
        %v886 = vld [vmem:[%s339 + $0xe88] sm:$0xff]
        %v887 = vld [vmem:[%s339 + $0xe90] sm:$0xff]
        %v888 = vld [vmem:[%s339 + $0xe98] sm:$0xff]
        %v889 = vld [vmem:[%s339 + $0xea0] sm:$0xff]
        %v890 = vld [vmem:[%s339 + $0xea8] sm:$0xff]
        %v891 = vld [vmem:[%s339 + $0xeb0] sm:$0xff]
        %v892 = vld [vmem:[%s339 + $0xeb8] sm:$0xff]
        %v893 = vld [vmem:[%s339 + $0xec0] sm:$0xff]
        %v894 = vld [vmem:[%s339 + $0xec8] sm:$0xff]
        %v895 = vld [vmem:[%s339 + $0xed0] sm:$0xff]
        %v896 = vld [vmem:[%s339 + $0xed8] sm:$0xff]
        %v897 = vld [vmem:[%s339 + $0xee0] sm:$0xff]
        %v898 = vld [vmem:[%s339 + $0xee8] sm:$0xff]
        %v899 = vld [vmem:[%s339 + $0xef0] sm:$0xff]
        %v900 = vld [vmem:[%s339 + $0xef8] sm:$0xff]
        %v901 = vld [vmem:[%s339 + $0xf00] sm:$0xff]
        %v902 = vld [vmem:[%s339 + $0xf08] sm:$0xff]
        %v903 = vld [vmem:[%s339 + $0xf10] sm:$0xff]
        %v904 = vld [vmem:[%s339 + $0xf18] sm:$0xff]
        %v905 = vld [vmem:[%s339 + $0xf20] sm:$0xff]
        %v906 = vld [vmem:[%s339 + $0xf28] sm:$0xff]
        %v907 = vld [vmem:[%s339 + $0xf30] sm:$0xff]
        %v908 = vld [vmem:[%s339 + $0xf38] sm:$0xff]
        %v909 = vld [vmem:[%s339 + $0xf40] sm:$0xff]
        %v910 = vld [vmem:[%s339 + $0xf48] sm:$0xff]
        %v911 = vld [vmem:[%s339 + $0xf50] sm:$0xff]
        %v912 = vld [vmem:[%s339 + $0xf58] sm:$0xff]
        %v913 = vld [vmem:[%s339 + $0xf60] sm:$0xff]
        %v914 = vld [vmem:[%s339 + $0xf68] sm:$0xff]
        %v915 = vld [vmem:[%s339 + $0xf70] sm:$0xff]
        %v916 = vld [vmem:[%s339 + $0xf78] sm:$0xff]
        %v917 = vld [vmem:[%s339 + $0xf80] sm:$0xff]
        %v918 = vld [vmem:[%s339 + $0xf88] sm:$0xff]
        %v919 = vld [vmem:[%s339 + $0xf90] sm:$0xff]
        %v920 = vld [vmem:[%s339 + $0xf98] sm:$0xff]
        %v921 = vld [vmem:[%s339 + $0xfa0] sm:$0xff]
        %v922 = vld [vmem:[%s339 + $0xfa8] sm:$0xff]
        %v923 = vld [vmem:[%s339 + $0xfb0] sm:$0xff]
        %v924 = vld [vmem:[%s339 + $0xfb8] sm:$0xff]
        %v925 = vld [vmem:[%s339 + $0xfc0] sm:$0xff]
        %v926 = vld [vmem:[%s339 + $0xfc8] sm:$0xff]
        %v927 = vld [vmem:[%s339 + $0xfd0] sm:$0xff]
        %v928 = vld [vmem:[%s339 + $0xfd8] sm:$0xff]
        %v929 = vld [vmem:[%s339 + $0xfe0] sm:$0xff]
        %v930 = vld [vmem:[%s339 + $0xfe8] sm:$0xff]
        %v931 = vld [vmem:[%s339 + $0xff0] sm:$0xff]
        %v932 = vld [vmem:[%s339 + $0xff8] sm:$0xff]
        %v933 = vld [vmem:[%s339 + $0x1000] sm:$0xff]
        %v934 = vld [vmem:[%s339 + $0x1008] sm:$0xff]
        %v935 = vld [vmem:[%s339 + $0x1010] sm:$0xff]
        %v936 = vld [vmem:[%s339 + $0x1018] sm:$0xff]
        %v937 = vld [vmem:[%s339 + $0x1020] sm:$0xff]
        %v938 = vld [vmem:[%s339 + $0x1028] sm:$0xff]
        %v939 = vld [vmem:[%s339 + $0x1030] sm:$0xff]
        %v940 = vld [vmem:[%s339 + $0x1038] sm:$0xff]
        %v941 = vld [vmem:[%s339 + $0x1040] sm:$0xff]
        %v942 = vld [vmem:[%s339 + $0x1048] sm:$0xff]
        %v943 = vld [vmem:[%s339 + $0x1050] sm:$0xff]
        %v944 = vld [vmem:[%s339 + $0x1058] sm:$0xff]
        %v945 = vld [vmem:[%s339 + $0x1060] sm:$0xff]
        %v946 = vld [vmem:[%s339 + $0x1068] sm:$0xff]
        %v947 = vld [vmem:[%s339 + $0x1070] sm:$0xff]
        %v948 = vld [vmem:[%s339 + $0x1078] sm:$0xff]
        %v949 = vld [vmem:[%s339 + $0x1080] sm:$0xff]
        %v950 = vld [vmem:[%s339 + $0x1088] sm:$0xff]
        %v951 = vld [vmem:[%s339 + $0x1090] sm:$0xff]
        %v952 = vld [vmem:[%s339 + $0x1098] sm:$0xff]
        %v953 = vld [vmem:[%s339 + $0x10a0] sm:$0xff]
        %v954 = vld [vmem:[%s339 + $0x10a8] sm:$0xff]
        %v955 = vld [vmem:[%s339 + $0x10b0] sm:$0xff]
        %v956 = vld [vmem:[%s339 + $0x10b8] sm:$0xff]
        %v957 = vld [vmem:[%s339 + $0x10c0] sm:$0xff]
        %v958 = vld [vmem:[%s339 + $0x10c8] sm:$0xff]
        %v959 = vld [vmem:[%s339 + $0x10d0] sm:$0xff]
        %v960 = vld [vmem:[%s339 + $0x10d8] sm:$0xff]
        %v961 = vld [vmem:[%s339 + $0x10e0] sm:$0xff]
        %v962 = vld [vmem:[%s339 + $0x10e8] sm:$0xff]
        %v963 = vld [vmem:[%s339 + $0x10f0] sm:$0xff]
        %v964 = vld [vmem:[%s339 + $0x10f8] sm:$0xff]
        %v965 = vld [vmem:[%s339 + $0x1100] sm:$0xff]
        %v966 = vld [vmem:[%s339 + $0x1108] sm:$0xff]
        %v967 = vld [vmem:[%s339 + $0x1110] sm:$0xff]
        %v968 = vld [vmem:[%s339 + $0x1118] sm:$0xff]
        %v969 = vld [vmem:[%s339 + $0x1120] sm:$0xff]
        %v970 = vld [vmem:[%s339 + $0x1128] sm:$0xff]
        %v971 = vld [vmem:[%s339 + $0x1130] sm:$0xff]
        %v972 = vld [vmem:[%s339 + $0x1138] sm:$0xff]
        %v973 = vld [vmem:[%s339 + $0x1140] sm:$0xff]
        %v974 = vld [vmem:[%s339 + $0x1148] sm:$0xff]
        %v975 = vld [vmem:[%s339 + $0x1150] sm:$0xff]
        %v976 = vld [vmem:[%s339 + $0x1158] sm:$0xff]
        %v977 = vld [vmem:[%s339 + $0x1160] sm:$0xff]
        %v978 = vld [vmem:[%s339 + $0x1168] sm:$0xff]
        %v979 = vld [vmem:[%s339 + $0x1170] sm:$0xff]
        %v980 = vld [vmem:[%s339 + $0x1178] sm:$0xff]
        %v981 = vld [vmem:[%s339 + $0x1180] sm:$0xff]
        %v982 = vld [vmem:[%s339 + $0x1188] sm:$0xff]
        %v983 = vld [vmem:[%s339 + $0x1190] sm:$0xff]
        %v984 = vld [vmem:[%s339 + $0x1198] sm:$0xff]
        %v985 = vld [vmem:[%s339 + $0x11a0] sm:$0xff]
        %v986 = vld [vmem:[%s339 + $0x11a8] sm:$0xff]
        %v987 = vld [vmem:[%s339 + $0x11b0] sm:$0xff]
        %v988 = vld [vmem:[%s339 + $0x11b8] sm:$0xff]
        %v989 = vld [vmem:[%s339 + $0x11c0] sm:$0xff]
        %v990 = vld [vmem:[%s339 + $0x11c8] sm:$0xff]
        %v991 = vld [vmem:[%s339 + $0x11d0] sm:$0xff]
        %v992 = vld [vmem:[%s339 + $0x11d8] sm:$0xff]
        %v993 = vld [vmem:[%s339 + $0x11e0] sm:$0xff]
        %v994 = vld [vmem:[%s339 + $0x11e8] sm:$0xff]
        %v995 = vld [vmem:[%s339 + $0x11f0] sm:$0xff]
        %v996 = vld [vmem:[%s339 + $0x11f8] sm:$0xff]
        %v997 = vld [vmem:[%s339 + $0x1200] sm:$0xff]
        %v998 = vld [vmem:[%s339 + $0x1208] sm:$0xff]
        %v999 = vld [vmem:[%s339 + $0x1210] sm:$0xff]
        %v1000 = vld [vmem:[%s339 + $0x1218] sm:$0xff]
        %v1001 = vld [vmem:[%s339 + $0x1220] sm:$0xff]
        %v1002 = vld [vmem:[%s339 + $0x1228] sm:$0xff]
        %v1003 = vld [vmem:[%s339 + $0x1230] sm:$0xff]
        %v1004 = vld [vmem:[%s339 + $0x1238] sm:$0xff]
        %v1005 = vld [vmem:[%s339 + $0x1240] sm:$0xff]
        %v1006 = vld [vmem:[%s339 + $0x1248] sm:$0xff]
        %v1007 = vld [vmem:[%s339 + $0x1250] sm:$0xff]
        %v1008 = vld [vmem:[%s339 + $0x1258] sm:$0xff]
        %v1009 = vld [vmem:[%s339 + $0x1260] sm:$0xff]
        %v1010 = vld [vmem:[%s339 + $0x1268] sm:$0xff]
        %v1011 = vld [vmem:[%s339 + $0x1270] sm:$0xff]
        %v1012 = vld [vmem:[%s339 + $0x1278] sm:$0xff]
        %v1013 = vld [vmem:[%s339 + $0x1280] sm:$0xff]
        %v1014 = vld [vmem:[%s339 + $0x1288] sm:$0xff]
        %v1015 = vld [vmem:[%s339 + $0x1290] sm:$0xff]
        %v1016 = vld [vmem:[%s339 + $0x1298] sm:$0xff]
        %v1017 = vld [vmem:[%s339 + $0x12a0] sm:$0xff]
        %v1018 = vld [vmem:[%s339 + $0x12a8] sm:$0xff]
        %v1019 = vld [vmem:[%s339 + $0x12b0] sm:$0xff]
        %v1020 = vld [vmem:[%s339 + $0x12b8] sm:$0xff]
        %v1021 = vld [vmem:[%s339 + $0x12c0] sm:$0xff]
        %v1022 = vld [vmem:[%s339 + $0x12c8] sm:$0xff]
        %v1023 = vld [vmem:[%s339 + $0x12d0] sm:$0xff]
        %v1024 = vld [vmem:[%s339 + $0x12d8] sm:$0xff]
        %v1025 = vld [vmem:[%s339 + $0x12e0] sm:$0xff]
        %v1026 = vld [vmem:[%s339 + $0x12e8] sm:$0xff]
        %v1027 = vld [vmem:[%s339 + $0x12f0] sm:$0xff]
        %v1028 = vld [vmem:[%s339 + $0x12f8] sm:$0xff]
        %v1029 = vld [vmem:[%s339 + $0x1300] sm:$0xff]
        %v1030 = vld [vmem:[%s339 + $0x1308] sm:$0xff]
        %v1031 = vld [vmem:[%s339 + $0x1310] sm:$0xff]
        %v1032 = vld [vmem:[%s339 + $0x1318] sm:$0xff]
        %v1033 = vld [vmem:[%s339 + $0x1320] sm:$0xff]
        %v1034 = vld [vmem:[%s339 + $0x1328] sm:$0xff]
        %v1035 = vld [vmem:[%s339 + $0x1330] sm:$0xff]
        %v1036 = vld [vmem:[%s339 + $0x1338] sm:$0xff]
        %v1037 = vld [vmem:[%s339 + $0x1340] sm:$0xff]
        %v1038 = vld [vmem:[%s339 + $0x1348] sm:$0xff]
        %v1039 = vld [vmem:[%s339 + $0x1350] sm:$0xff]
        %v1040 = vld [vmem:[%s339 + $0x1358] sm:$0xff]
        %v1041 = vld [vmem:[%s339 + $0x1360] sm:$0xff]
        %v1042 = vld [vmem:[%s339 + $0x1368] sm:$0xff]
        %v1043 = vld [vmem:[%s339 + $0x1370] sm:$0xff]
        %v1044 = vld [vmem:[%s339 + $0x1378] sm:$0xff]
        %v1045 = vld [vmem:[%s339 + $0x1380] sm:$0xff]
        %v1046 = vld [vmem:[%s339 + $0x1388] sm:$0xff]
        %v1047 = vld [vmem:[%s339 + $0x1390] sm:$0xff]
        %v1048 = vld [vmem:[%s339 + $0x1398] sm:$0xff]
        %v1049 = vld [vmem:[%s339 + $0x13a0] sm:$0xff]
        %v1050 = vld [vmem:[%s339 + $0x13a8] sm:$0xff]
        %v1051 = vld [vmem:[%s339 + $0x13b0] sm:$0xff]
        %v1052 = vld [vmem:[%s339 + $0x13b8] sm:$0xff]
        %v1053 = vld [vmem:[%s339 + $0x13c0] sm:$0xff]
        %v1054 = vld [vmem:[%s339 + $0x13c8] sm:$0xff]
        %v1055 = vld [vmem:[%s339 + $0x13d0] sm:$0xff]
        %v1056 = vld [vmem:[%s339 + $0x13d8] sm:$0xff]
        %v1057 = vld [vmem:[%s339 + $0x13e0] sm:$0xff]
        %v1058 = vld [vmem:[%s339 + $0x13e8] sm:$0xff]
        %v1059 = vld [vmem:[%s339 + $0x13f0] sm:$0xff]
        %v1060 = vld [vmem:[%s339 + $0x13f8] sm:$0xff]
        %v1061 = vld [vmem:[%s339 + $0x1400] sm:$0xff]
        %v1062 = vld [vmem:[%s339 + $0x1408] sm:$0xff]
        %v1063 = vld [vmem:[%s339 + $0x1410] sm:$0xff]
        %v1064 = vld [vmem:[%s339 + $0x1418] sm:$0xff]
        %v1065 = vld [vmem:[%s339 + $0x1420] sm:$0xff]
        %v1066 = vld [vmem:[%s339 + $0x1428] sm:$0xff]
        %v1067 = vld [vmem:[%s339 + $0x1430] sm:$0xff]
        %v1068 = vld [vmem:[%s339 + $0x1438] sm:$0xff]
        %v1069 = vld [vmem:[%s339 + $0x1440] sm:$0xff]
        %v1070 = vld [vmem:[%s339 + $0x1448] sm:$0xff]
        %v1071 = vld [vmem:[%s339 + $0x1450] sm:$0xff]
        %v1072 = vld [vmem:[%s339 + $0x1458] sm:$0xff]
        %v1073 = vld [vmem:[%s339 + $0x1460] sm:$0xff]
        %v1074 = vld [vmem:[%s339 + $0x1468] sm:$0xff]
        %v1075 = vld [vmem:[%s339 + $0x1470] sm:$0xff]
        %v1076 = vld [vmem:[%s339 + $0x1478] sm:$0xff]
        %v1077 = vld [vmem:[%s339 + $0x1480] sm:$0xff]
        %v1078 = vld [vmem:[%s339 + $0x1488] sm:$0xff]
        %v1079 = vld [vmem:[%s339 + $0x1490] sm:$0xff]
        %v1080 = vld [vmem:[%s339 + $0x1498] sm:$0xff]
        %v1081 = vld [vmem:[%s339 + $0x14a0] sm:$0xff]
        %v1082 = vld [vmem:[%s339 + $0x14a8] sm:$0xff]
        %v1083 = vld [vmem:[%s339 + $0x14b0] sm:$0xff]
        %v1084 = vld [vmem:[%s339 + $0x14b8] sm:$0xff]
        %v1085 = vld [vmem:[%s339 + $0x14c0] sm:$0xff]
        %v1086 = vld [vmem:[%s339 + $0x14c8] sm:$0xff]
        %v1087 = vld [vmem:[%s339 + $0x14d0] sm:$0xff]
        %v1088 = vld [vmem:[%s339 + $0x14d8] sm:$0xff]
        %v1089 = vld [vmem:[%s339 + $0x14e0] sm:$0xff]
        %v1090 = vld [vmem:[%s339 + $0x14e8] sm:$0xff]
        %v1091 = vld [vmem:[%s339 + $0x14f0] sm:$0xff]
        %v1092 = vld [vmem:[%s339 + $0x14f8] sm:$0xff]
        %v1093 = vld [vmem:[%s339 + $0x1500] sm:$0xff]
        %v1094 = vld [vmem:[%s339 + $0x1508] sm:$0xff]
        %v1095 = vld [vmem:[%s339 + $0x1510] sm:$0xff]
        %v1096 = vld [vmem:[%s339 + $0x1518] sm:$0xff]
        %v1097 = vld [vmem:[%s339 + $0x1520] sm:$0xff]
        %v1098 = vld [vmem:[%s339 + $0x1528] sm:$0xff]
        %v1099 = vld [vmem:[%s339 + $0x1530] sm:$0xff]
        %v1100 = vld [vmem:[%s339 + $0x1538] sm:$0xff]
        %v1101 = vld [vmem:[%s339 + $0x1540] sm:$0xff]
        %v1102 = vld [vmem:[%s339 + $0x1548] sm:$0xff]
        %v1103 = vld [vmem:[%s339 + $0x1550] sm:$0xff]
        %v1104 = vld [vmem:[%s339 + $0x1558] sm:$0xff]
        %v1105 = vld [vmem:[%s339 + $0x1560] sm:$0xff]
        %v1106 = vld [vmem:[%s339 + $0x1568] sm:$0xff]
        %v1107 = vld [vmem:[%s339 + $0x1570] sm:$0xff]
        %v1108 = vld [vmem:[%s339 + $0x1578] sm:$0xff]
        %v1109 = vld [vmem:[%s339 + $0x1580] sm:$0xff]
        %v1110 = vld [vmem:[%s339 + $0x1588] sm:$0xff]
        %v1111 = vld [vmem:[%s339 + $0x1590] sm:$0xff]
        %v1112 = vld [vmem:[%s339 + $0x1598] sm:$0xff]
        %v1113 = vld [vmem:[%s339 + $0x15a0] sm:$0xff]
        %v1114 = vld [vmem:[%s339 + $0x15a8] sm:$0xff]
        %v1115 = vld [vmem:[%s339 + $0x15b0] sm:$0xff]
        %v1116 = vld [vmem:[%s339 + $0x15b8] sm:$0xff]
        %v1117 = vld [vmem:[%s339 + $0x15c0] sm:$0xff]
        %v1118 = vld [vmem:[%s339 + $0x15c8] sm:$0xff]
        %v1119 = vld [vmem:[%s339 + $0x15d0] sm:$0xff]
        %v1120 = vld [vmem:[%s339 + $0x15d8] sm:$0xff]
        %v1121 = vld [vmem:[%s339 + $0x15e0] sm:$0xff]
        %v1122 = vld [vmem:[%s339 + $0x15e8] sm:$0xff]
        %v1123 = vld [vmem:[%s339 + $0x15f0] sm:$0xff]
        %v1124 = vld [vmem:[%s339 + $0x15f8] sm:$0xff]
        %v1125 = vld [vmem:[%s339 + $0x1600] sm:$0xff]
        %v1126 = vld [vmem:[%s339 + $0x1608] sm:$0xff]
        %v1127 = vld [vmem:[%s339 + $0x1610] sm:$0xff]
        %v1128 = vld [vmem:[%s339 + $0x1618] sm:$0xff]
        %v1129 = vld [vmem:[%s339 + $0x1620] sm:$0xff]
        %v1130 = vld [vmem:[%s339 + $0x1628] sm:$0xff]
        %v1131 = vld [vmem:[%s339 + $0x1630] sm:$0xff]
        %v1132 = vld [vmem:[%s339 + $0x1638] sm:$0xff]
        %v1133 = vld [vmem:[%s339 + $0x1640] sm:$0xff]
        %v1134 = vld [vmem:[%s339 + $0x1648] sm:$0xff]
        %v1135 = vld [vmem:[%s339 + $0x1650] sm:$0xff]
        %v1136 = vld [vmem:[%s339 + $0x1658] sm:$0xff]
        %v1137 = vld [vmem:[%s339 + $0x1660] sm:$0xff]
        %v1138 = vld [vmem:[%s339 + $0x1668] sm:$0xff]
        %v1139 = vld [vmem:[%s339 + $0x1670] sm:$0xff]
        %v1140 = vld [vmem:[%s339 + $0x1678] sm:$0xff]
        %v1141 = vld [vmem:[%s339 + $0x1680] sm:$0xff]
        %v1142 = vld [vmem:[%s339 + $0x1688] sm:$0xff]
        %v1143 = vld [vmem:[%s339 + $0x1690] sm:$0xff]
        %v1144 = vld [vmem:[%s339 + $0x1698] sm:$0xff]
        %v1145 = vld [vmem:[%s339 + $0x16a0] sm:$0xff]
        %v1146 = vld [vmem:[%s339 + $0x16a8] sm:$0xff]
        %v1147 = vld [vmem:[%s339 + $0x16b0] sm:$0xff]
        %v1148 = vld [vmem:[%s339 + $0x16b8] sm:$0xff]
        %v1149 = vld [vmem:[%s339 + $0x16c0] sm:$0xff]
        %v1150 = vld [vmem:[%s339 + $0x16c8] sm:$0xff]
        %v1151 = vld [vmem:[%s339 + $0x16d0] sm:$0xff]
        %v1152 = vld [vmem:[%s339 + $0x16d8] sm:$0xff]
        %v1153 = vld [vmem:[%s339 + $0x16e0] sm:$0xff]
        %v1154 = vld [vmem:[%s339 + $0x16e8] sm:$0xff]
        %v1155 = vld [vmem:[%s339 + $0x16f0] sm:$0xff]
        %v1156 = vld [vmem:[%s339 + $0x16f8] sm:$0xff]
        %v1157 = vld [vmem:[%s339 + $0x1700] sm:$0xff]
        %v1158 = vld [vmem:[%s339 + $0x1708] sm:$0xff]
        %v1159 = vld [vmem:[%s339 + $0x1710] sm:$0xff]
        %v1160 = vld [vmem:[%s339 + $0x1718] sm:$0xff]
        %v1161 = vld [vmem:[%s339 + $0x1720] sm:$0xff]
        %v1162 = vld [vmem:[%s339 + $0x1728] sm:$0xff]
        %v1163 = vld [vmem:[%s339 + $0x1730] sm:$0xff]
        %v1164 = vld [vmem:[%s339 + $0x1738] sm:$0xff]
        %v1165 = vld [vmem:[%s339 + $0x1740] sm:$0xff]
        %v1166 = vld [vmem:[%s339 + $0x1748] sm:$0xff]
        %v1167 = vld [vmem:[%s339 + $0x1750] sm:$0xff]
        %v1168 = vld [vmem:[%s339 + $0x1758] sm:$0xff]
        %v1169 = vld [vmem:[%s339 + $0x1760] sm:$0xff]
        %v1170 = vld [vmem:[%s339 + $0x1768] sm:$0xff]
        %v1171 = vld [vmem:[%s339 + $0x1770] sm:$0xff]
        %v1172 = vld [vmem:[%s339 + $0x1778] sm:$0xff]
        %v1173 = vld [vmem:[%s339 + $0x1780] sm:$0xff]
        %v1174 = vld [vmem:[%s339 + $0x1788] sm:$0xff]
        %v1175 = vld [vmem:[%s339 + $0x1790] sm:$0xff]
        %v1176 = vld [vmem:[%s339 + $0x1798] sm:$0xff]
        %v1177 = vld [vmem:[%s339 + $0x17a0] sm:$0xff]
        %v1178 = vld [vmem:[%s339 + $0x17a8] sm:$0xff]
        %v1179 = vld [vmem:[%s339 + $0x17b0] sm:$0xff]
        %v1180 = vld [vmem:[%s339 + $0x17b8] sm:$0xff]
        %v1181 = vld [vmem:[%s339 + $0x17c0] sm:$0xff]
        %v1182 = vld [vmem:[%s339 + $0x17c8] sm:$0xff]
        %v1183 = vld [vmem:[%s339 + $0x17d0] sm:$0xff]
        %v1184 = vld [vmem:[%s339 + $0x17d8] sm:$0xff]
        %v1185 = vld [vmem:[%s339 + $0x17e0] sm:$0xff]
        %v1186 = vld [vmem:[%s339 + $0x17e8] sm:$0xff]
        %v1187 = vld [vmem:[%s339 + $0x17f0] sm:$0xff]
        %v1188 = vld [vmem:[%s339 + $0x17f8] sm:$0xff]
        %v1189 = vld [vmem:[%s339 + $0x1800] sm:$0xff]
        %v1190 = vld [vmem:[%s339 + $0x1808] sm:$0xff]
        %v1191 = vld [vmem:[%s339 + $0x1810] sm:$0xff]
        %v1192 = vld [vmem:[%s339 + $0x1818] sm:$0xff]
        %v1193 = vld [vmem:[%s339 + $0x1820] sm:$0xff]
        %v1194 = vld [vmem:[%s339 + $0x1828] sm:$0xff]
        %v1195 = vld [vmem:[%s339 + $0x1830] sm:$0xff]
        %v1196 = vld [vmem:[%s339 + $0x1838] sm:$0xff]
        %v1197 = vld [vmem:[%s339 + $0x1840] sm:$0xff]
        %v1198 = vld [vmem:[%s339 + $0x1848] sm:$0xff]
        %v1199 = vld [vmem:[%s339 + $0x1850] sm:$0xff]
        %v1200 = vld [vmem:[%s339 + $0x1858] sm:$0xff]
        %v1201 = vld [vmem:[%s339 + $0x1860] sm:$0xff]
        %v1202 = vld [vmem:[%s339 + $0x1868] sm:$0xff]
        %v1203 = vld [vmem:[%s339 + $0x1870] sm:$0xff]
        %v1204 = vld [vmem:[%s339 + $0x1878] sm:$0xff]
        %v1205 = vld [vmem:[%s339 + $0x1880] sm:$0xff]
        %v1206 = vld [vmem:[%s339 + $0x1888] sm:$0xff]
        %v1207 = vld [vmem:[%s339 + $0x1890] sm:$0xff]
        %v1208 = vld [vmem:[%s339 + $0x1898] sm:$0xff]
        %v1209 = vld [vmem:[%s339 + $0x18a0] sm:$0xff]
        %v1210 = vld [vmem:[%s339 + $0x18a8] sm:$0xff]
        %v1211 = vld [vmem:[%s339 + $0x18b0] sm:$0xff]
        %v1212 = vld [vmem:[%s339 + $0x18b8] sm:$0xff]
        %v1213 = vld [vmem:[%s339 + $0x18c0] sm:$0xff]
        %v1214 = vld [vmem:[%s339 + $0x18c8] sm:$0xff]
        %v1215 = vld [vmem:[%s339 + $0x18d0] sm:$0xff]
        %v1216 = vld [vmem:[%s339 + $0x18d8] sm:$0xff]
        %v1217 = vld [vmem:[%s339 + $0x18e0] sm:$0xff]
        %v1218 = vld [vmem:[%s339 + $0x18e8] sm:$0xff]
        %v1219 = vld [vmem:[%s339 + $0x18f0] sm:$0xff]
        %v1220 = vld [vmem:[%s339 + $0x18f8] sm:$0xff]
        %v1221 = vld [vmem:[%s339 + $0x1900] sm:$0xff]
        %v1222 = vld [vmem:[%s339 + $0x1908] sm:$0xff]
        %v1223 = vld [vmem:[%s339 + $0x1910] sm:$0xff]
        %v1224 = vld [vmem:[%s339 + $0x1918] sm:$0xff]
        %v1225 = vld [vmem:[%s339 + $0x1920] sm:$0xff]
        %v1226 = vld [vmem:[%s339 + $0x1928] sm:$0xff]
        %v1227 = vld [vmem:[%s339 + $0x1930] sm:$0xff]
        %v1228 = vld [vmem:[%s339 + $0x1938] sm:$0xff]
        %v1229 = vld [vmem:[%s339 + $0x1940] sm:$0xff]
        %v1230 = vld [vmem:[%s339 + $0x1948] sm:$0xff]
        %v1231 = vld [vmem:[%s339 + $0x1950] sm:$0xff]
        %v1232 = vld [vmem:[%s339 + $0x1958] sm:$0xff]
        %v1233 = vld [vmem:[%s339 + $0x1960] sm:$0xff]
        %v1234 = vld [vmem:[%s339 + $0x1968] sm:$0xff]
        %v1235 = vld [vmem:[%s339 + $0x1970] sm:$0xff]
        %v1236 = vld [vmem:[%s339 + $0x1978] sm:$0xff]
        %v1237 = vld [vmem:[%s339 + $0x1980] sm:$0xff]
        %v1238 = vld [vmem:[%s339 + $0x1988] sm:$0xff]
        %v1239 = vld [vmem:[%s339 + $0x1990] sm:$0xff]
        %v1240 = vld [vmem:[%s339 + $0x1998] sm:$0xff]
        %v1241 = vld [vmem:[%s339 + $0x19a0] sm:$0xff]
        %v1242 = vld [vmem:[%s339 + $0x19a8] sm:$0xff]
        %v1243 = vld [vmem:[%s339 + $0x19b0] sm:$0xff]
        %v1244 = vld [vmem:[%s339 + $0x19b8] sm:$0xff]
        %v1245 = vld [vmem:[%s339 + $0x19c0] sm:$0xff]
        %v1246 = vld [vmem:[%s339 + $0x19c8] sm:$0xff]
        %v1247 = vld [vmem:[%s339 + $0x19d0] sm:$0xff]
        %v1248 = vld [vmem:[%s339 + $0x19d8] sm:$0xff]
        %v1249 = vld [vmem:[%s339 + $0x19e0] sm:$0xff]
        %v1250 = vld [vmem:[%s339 + $0x19e8] sm:$0xff]
        %v1251 = vld [vmem:[%s339 + $0x19f0] sm:$0xff]
        %v1252 = vld [vmem:[%s339 + $0x19f8] sm:$0xff]
        %v1253 = vld [vmem:[%s339 + $0x1a00] sm:$0xff]
        %v1254 = vld [vmem:[%s339 + $0x1a08] sm:$0xff]
        %v1255 = vld [vmem:[%s339 + $0x1a10] sm:$0xff]
        %v1256 = vld [vmem:[%s339 + $0x1a18] sm:$0xff]
        %v1257 = vld [vmem:[%s339 + $0x1a20] sm:$0xff]
        %v1258 = vld [vmem:[%s339 + $0x1a28] sm:$0xff]
        %v1259 = vld [vmem:[%s339 + $0x1a30] sm:$0xff]
        %v1260 = vld [vmem:[%s339 + $0x1a38] sm:$0xff]
        %v1261 = vld [vmem:[%s339 + $0x1a40] sm:$0xff]
        %v1262 = vld [vmem:[%s339 + $0x1a48] sm:$0xff]
        %v1263 = vld [vmem:[%s339 + $0x1a50] sm:$0xff]
        %v1264 = vld [vmem:[%s339 + $0x1a58] sm:$0xff]
        %v1265 = vld [vmem:[%s339 + $0x1a60] sm:$0xff]
        %v1266 = vld [vmem:[%s339 + $0x1a68] sm:$0xff]
        %v1267 = vld [vmem:[%s339 + $0x1a70] sm:$0xff]
        %v1268 = vld [vmem:[%s339 + $0x1a78] sm:$0xff]
        %v1269 = vld [vmem:[%s339 + $0x1a80] sm:$0xff]
        %v1270 = vld [vmem:[%s339 + $0x1a88] sm:$0xff]
        %v1271 = vld [vmem:[%s339 + $0x1a90] sm:$0xff]
        %v1272 = vld [vmem:[%s339 + $0x1a98] sm:$0xff]
        %v1273 = vld [vmem:[%s339 + $0x1aa0] sm:$0xff]
        %v1274 = vld [vmem:[%s339 + $0x1aa8] sm:$0xff]
        %v1275 = vld [vmem:[%s339 + $0x1ab0] sm:$0xff]
        %v1276 = vld [vmem:[%s339 + $0x1ab8] sm:$0xff]
        %v1277 = vld [vmem:[%s339 + $0x1ac0] sm:$0xff]
        %v1278 = vld [vmem:[%s339 + $0x1ac8] sm:$0xff]
        %v1279 = vld [vmem:[%s339 + $0x1ad0] sm:$0xff]
        %v1280 = vld [vmem:[%s339 + $0x1ad8] sm:$0xff]
        %v1281 = vld [vmem:[%s339 + $0x1ae0] sm:$0xff]
        %v1282 = vld [vmem:[%s339 + $0x1ae8] sm:$0xff]
        %v1283 = vld [vmem:[%s339 + $0x1af0] sm:$0xff]
        %v1284 = vld [vmem:[%s339 + $0x1af8] sm:$0xff]
        %v1285 = vld [vmem:[%s339 + $0x1b00] sm:$0xff]
        %v1286 = vld [vmem:[%s339 + $0x1b08] sm:$0xff]
        %v1287 = vld [vmem:[%s339 + $0x1b10] sm:$0xff]
        %v1288 = vld [vmem:[%s339 + $0x1b18] sm:$0xff]
        %v1289 = vld [vmem:[%s339 + $0x1b20] sm:$0xff]
        %v1290 = vld [vmem:[%s339 + $0x1b28] sm:$0xff]
        %v1291 = vld [vmem:[%s339 + $0x1b30] sm:$0xff]
        %v1292 = vld [vmem:[%s339 + $0x1b38] sm:$0xff]
        %v1293 = vld [vmem:[%s339 + $0x1b40] sm:$0xff]
        %v1294 = vld [vmem:[%s339 + $0x1b48] sm:$0xff]
        %v1295 = vld [vmem:[%s339 + $0x1b50] sm:$0xff]
        %v1296 = vld [vmem:[%s339 + $0x1b58] sm:$0xff]
        %v1297 = vld [vmem:[%s339 + $0x1b60] sm:$0xff]
        %v1298 = vld [vmem:[%s339 + $0x1b68] sm:$0xff]
        %v1299 = vld [vmem:[%s339 + $0x1b70] sm:$0xff]
        %v1300 = vld [vmem:[%s339 + $0x1b78] sm:$0xff]
        %v1301 = vld [vmem:[%s339 + $0x1b80] sm:$0xff]
        %v1302 = vld [vmem:[%s339 + $0x1b88] sm:$0xff]
        %v1303 = vld [vmem:[%s339 + $0x1b90] sm:$0xff]
        %v1304 = vld [vmem:[%s339 + $0x1b98] sm:$0xff]
        %v1305 = vld [vmem:[%s339 + $0x1ba0] sm:$0xff]
        %v1306 = vld [vmem:[%s339 + $0x1ba8] sm:$0xff]
        %v1307 = vld [vmem:[%s339 + $0x1bb0] sm:$0xff]
        %v1308 = vld [vmem:[%s339 + $0x1bb8] sm:$0xff]
        %v1309 = vld [vmem:[%s339 + $0x1bc0] sm:$0xff]
        %v1310 = vld [vmem:[%s339 + $0x1bc8] sm:$0xff]
        %v1311 = vld [vmem:[%s339 + $0x1bd0] sm:$0xff]
        %v1312 = vld [vmem:[%s339 + $0x1bd8] sm:$0xff]
        %v1313 = vld [vmem:[%s339 + $0x1be0] sm:$0xff]
        %v1314 = vld [vmem:[%s339 + $0x1be8] sm:$0xff]
        %v1315 = vld [vmem:[%s339 + $0x1bf0] sm:$0xff]
        %v1316 = vld [vmem:[%s339 + $0x1bf8] sm:$0xff]
        %v1317 = vld [vmem:[%s339 + $0x1c00] sm:$0xff]
        %v1318 = vld [vmem:[%s339 + $0x1c08] sm:$0xff]
        %v1319 = vld [vmem:[%s339 + $0x1c10] sm:$0xff]
        %v1320 = vld [vmem:[%s339 + $0x1c18] sm:$0xff]
        %v1321 = vld [vmem:[%s339 + $0x1c20] sm:$0xff]
        %v1322 = vld [vmem:[%s339 + $0x1c28] sm:$0xff]
        %v1323 = vld [vmem:[%s339 + $0x1c30] sm:$0xff]
        %v1324 = vld [vmem:[%s339 + $0x1c38] sm:$0xff]
        %v1325 = vld [vmem:[%s339 + $0x1c40] sm:$0xff]
        %v1326 = vld [vmem:[%s339 + $0x1c48] sm:$0xff]
        %v1327 = vld [vmem:[%s339 + $0x1c50] sm:$0xff]
        %v1328 = vld [vmem:[%s339 + $0x1c58] sm:$0xff]
        %v1329 = vld [vmem:[%s339 + $0x1c60] sm:$0xff]
        %v1330 = vld [vmem:[%s339 + $0x1c68] sm:$0xff]
        %v1331 = vld [vmem:[%s339 + $0x1c70] sm:$0xff]
        %v1332 = vld [vmem:[%s339 + $0x1c78] sm:$0xff]
        %v1333 = vld [vmem:[%s339 + $0x1c80] sm:$0xff]
        %v1334 = vld [vmem:[%s339 + $0x1c88] sm:$0xff]
        %v1335 = vld [vmem:[%s339 + $0x1c90] sm:$0xff]
        %v1336 = vld [vmem:[%s339 + $0x1c98] sm:$0xff]
        %v1337 = vld [vmem:[%s339 + $0x1ca0] sm:$0xff]
        %v1338 = vld [vmem:[%s339 + $0x1ca8] sm:$0xff]
        %v1339 = vld [vmem:[%s339 + $0x1cb0] sm:$0xff]
        %v1340 = vld [vmem:[%s339 + $0x1cb8] sm:$0xff]
        %v1341 = vld [vmem:[%s339 + $0x1cc0] sm:$0xff]
        %v1342 = vld [vmem:[%s339 + $0x1cc8] sm:$0xff]
        %v1343 = vld [vmem:[%s339 + $0x1cd0] sm:$0xff]
        %v1344 = vld [vmem:[%s339 + $0x1cd8] sm:$0xff]
        %v1345 = vld [vmem:[%s339 + $0x1ce0] sm:$0xff]
        %v1346 = vld [vmem:[%s339 + $0x1ce8] sm:$0xff]
        %v1347 = vld [vmem:[%s339 + $0x1cf0] sm:$0xff]
        %v1348 = vld [vmem:[%s339 + $0x1cf8] sm:$0xff]
        %v1349 = vld [vmem:[%s339 + $0x1d00] sm:$0xff]
        %v1350 = vld [vmem:[%s339 + $0x1d08] sm:$0xff]
        %v1351 = vld [vmem:[%s339 + $0x1d10] sm:$0xff]
        %v1352 = vld [vmem:[%s339 + $0x1d18] sm:$0xff]
        %v1353 = vld [vmem:[%s339 + $0x1d20] sm:$0xff]
        %v1354 = vld [vmem:[%s339 + $0x1d28] sm:$0xff]
        %v1355 = vld [vmem:[%s339 + $0x1d30] sm:$0xff]
        %v1356 = vld [vmem:[%s339 + $0x1d38] sm:$0xff]
        %v1357 = vld [vmem:[%s339 + $0x1d40] sm:$0xff]
        %v1358 = vld [vmem:[%s339 + $0x1d48] sm:$0xff]
        %v1359 = vld [vmem:[%s339 + $0x1d50] sm:$0xff]
        %v1360 = vld [vmem:[%s339 + $0x1d58] sm:$0xff]
        %v1361 = vld [vmem:[%s339 + $0x1d60] sm:$0xff]
        %v1362 = vld [vmem:[%s339 + $0x1d68] sm:$0xff]
        %v1363 = vld [vmem:[%s339 + $0x1d70] sm:$0xff]
        %v1364 = vld [vmem:[%s339 + $0x1d78] sm:$0xff]
        %v1365 = vld [vmem:[%s339 + $0x1d80] sm:$0xff]
        %v1366 = vld [vmem:[%s339 + $0x1d88] sm:$0xff]
        %v1367 = vld [vmem:[%s339 + $0x1d90] sm:$0xff]
        %v1368 = vld [vmem:[%s339 + $0x1d98] sm:$0xff]
        %v1369 = vld [vmem:[%s339 + $0x1da0] sm:$0xff]
        %v1370 = vld [vmem:[%s339 + $0x1da8] sm:$0xff]
        %v1371 = vld [vmem:[%s339 + $0x1db0] sm:$0xff]
        %v1372 = vld [vmem:[%s339 + $0x1db8] sm:$0xff]
        %v1373 = vld [vmem:[%s339 + $0x1dc0] sm:$0xff]
        %v1374 = vld [vmem:[%s339 + $0x1dc8] sm:$0xff]
        %v1375 = vld [vmem:[%s339 + $0x1dd0] sm:$0xff]
        %v1376 = vld [vmem:[%s339 + $0x1dd8] sm:$0xff]
        %v1377 = vld [vmem:[%s339 + $0x1de0] sm:$0xff]
        %v1378 = vld [vmem:[%s339 + $0x1de8] sm:$0xff]
        %v1379 = vld [vmem:[%s339 + $0x1df0] sm:$0xff]
        %v1380 = vld [vmem:[%s339 + $0x1df8] sm:$0xff]
        %v1381 = vld [vmem:[%s339 + $0x1e00] sm:$0xff]
        %v1382 = vld [vmem:[%s339 + $0x1e08] sm:$0xff]
        %v1383 = vld [vmem:[%s339 + $0x1e10] sm:$0xff]
        %v1384 = vld [vmem:[%s339 + $0x1e18] sm:$0xff]
        %v1385 = vld [vmem:[%s339 + $0x1e20] sm:$0xff]
        %v1386 = vld [vmem:[%s339 + $0x1e28] sm:$0xff]
        %v1387 = vld [vmem:[%s339 + $0x1e30] sm:$0xff]
        %v1388 = vld [vmem:[%s339 + $0x1e38] sm:$0xff]
        %v1389 = vld [vmem:[%s339 + $0x1e40] sm:$0xff]
        %v1390 = vld [vmem:[%s339 + $0x1e48] sm:$0xff]
        %v1391 = vld [vmem:[%s339 + $0x1e50] sm:$0xff]
        %v1392 = vld [vmem:[%s339 + $0x1e58] sm:$0xff]
        %v1393 = vld [vmem:[%s339 + $0x1e60] sm:$0xff]
        %v1394 = vld [vmem:[%s339 + $0x1e68] sm:$0xff]
        %v1395 = vld [vmem:[%s339 + $0x1e70] sm:$0xff]
        %v1396 = vld [vmem:[%s339 + $0x1e78] sm:$0xff]
        %v1397 = vld [vmem:[%s339 + $0x1e80] sm:$0xff]
        %v1398 = vld [vmem:[%s339 + $0x1e88] sm:$0xff]
        %v1399 = vld [vmem:[%s339 + $0x1e90] sm:$0xff]
        %v1400 = vld [vmem:[%s339 + $0x1e98] sm:$0xff]
        %v1401 = vld [vmem:[%s339 + $0x1ea0] sm:$0xff]
        %v1402 = vld [vmem:[%s339 + $0x1ea8] sm:$0xff]
        %v1403 = vld [vmem:[%s339 + $0x1eb0] sm:$0xff]
        %v1404 = vld [vmem:[%s339 + $0x1eb8] sm:$0xff]
        %v1405 = vld [vmem:[%s339 + $0x1ec0] sm:$0xff]
        %v1406 = vld [vmem:[%s339 + $0x1ec8] sm:$0xff]
        %v1407 = vld [vmem:[%s339 + $0x1ed0] sm:$0xff]
        %v1408 = vld [vmem:[%s339 + $0x1ed8] sm:$0xff]
        %v1409 = vld [vmem:[%s339 + $0x1ee0] sm:$0xff]
        %v1410 = vld [vmem:[%s339 + $0x1ee8] sm:$0xff]
        %v1411 = vld [vmem:[%s339 + $0x1ef0] sm:$0xff]
        %v1412 = vld [vmem:[%s339 + $0x1ef8] sm:$0xff]
        %v1413 = vld [vmem:[%s339 + $0x1f00] sm:$0xff]
        %v1414 = vld [vmem:[%s339 + $0x1f08] sm:$0xff]
        %v1415 = vld [vmem:[%s339 + $0x1f10] sm:$0xff]
        %v1416 = vld [vmem:[%s339 + $0x1f18] sm:$0xff]
        %v1417 = vld [vmem:[%s339 + $0x1f20] sm:$0xff]
        %v1418 = vld [vmem:[%s339 + $0x1f28] sm:$0xff]
        %v1419 = vld [vmem:[%s339 + $0x1f30] sm:$0xff]
        %v1420 = vld [vmem:[%s339 + $0x1f38] sm:$0xff]
        %v1421 = vld [vmem:[%s339 + $0x1f40] sm:$0xff]
        %v1422 = vld [vmem:[%s339 + $0x1f48] sm:$0xff]
        %v1423 = vld [vmem:[%s339 + $0x1f50] sm:$0xff]
        %v1424 = vld [vmem:[%s339 + $0x1f58] sm:$0xff]
        %v1425 = vld [vmem:[%s339 + $0x1f60] sm:$0xff]
        %v1426 = vld [vmem:[%s339 + $0x1f68] sm:$0xff]
        %v1427 = vld [vmem:[%s339 + $0x1f70] sm:$0xff]
        %v1428 = vld [vmem:[%s339 + $0x1f78] sm:$0xff]
        %v1429 = vld [vmem:[%s339 + $0x1f80] sm:$0xff]
        %v1430 = vld [vmem:[%s339 + $0x1f88] sm:$0xff]
        %v1431 = vld [vmem:[%s339 + $0x1f90] sm:$0xff]
        %v1432 = vld [vmem:[%s339 + $0x1f98] sm:$0xff]
        %v1433 = vld [vmem:[%s339 + $0x1fa0] sm:$0xff]
        %v1434 = vld [vmem:[%s339 + $0x1fa8] sm:$0xff]
        %v1435 = vld [vmem:[%s339 + $0x1fb0] sm:$0xff]
        %v1436 = vld [vmem:[%s339 + $0x1fb8] sm:$0xff]
        %v1437 = vld [vmem:[%s339 + $0x1fc0] sm:$0xff]
        %v1438 = vld [vmem:[%s339 + $0x1fc8] sm:$0xff]
        %v1439 = vld [vmem:[%s339 + $0x1fd0] sm:$0xff]
        %v1440 = vld [vmem:[%s339 + $0x1fd8] sm:$0xff]
        %v1441 = vld [vmem:[%s339 + $0x1fe0] sm:$0xff]
        %v1442 = vld [vmem:[%s339 + $0x1fe8] sm:$0xff]
        %v1443 = vld [vmem:[%s339 + $0x1ff0] sm:$0xff]
        %v1444 = vld [vmem:[%s339 + $0x1ff8] sm:$0xff]
        %v1453 = vunpack.c.l.b16 %v413
        %v1454 = vunpack.c.h.b16 %v413
        %v1455 = vunpack.c.l.b16 %v414
        %v1456 = vunpack.c.h.b16 %v414
        %v1457 = vunpack.c.l.b16 %v415
        %v1458 = vunpack.c.h.b16 %v415
        %v1459 = vunpack.c.l.b16 %v416
        %v1460 = vunpack.c.h.b16 %v416
        %v1461 = vunpack.c.l.b16 %v417
        %v1462 = vunpack.c.h.b16 %v417
        %v1463 = vunpack.c.l.b16 %v418
        %v1464 = vunpack.c.h.b16 %v418
        %v1465 = vunpack.c.l.b16 %v419
        %v1466 = vunpack.c.h.b16 %v419
        %v1467 = vunpack.c.l.b16 %v420
        %v1468 = vunpack.c.h.b16 %v420
        %v1469 = vpack.c.b16 %v1453, %v1453
        %v1470 = vpack.c.b16 %v1454, %v1454
        %v1471 = vpack.c.b16 %v1455, %v1455
        %v1472 = vpack.c.b16 %v1456, %v1456
        %v1473 = vpack.c.b16 %v1457, %v1457
        %v1474 = vpack.c.b16 %v1458, %v1458
        %v1475 = vpack.c.b16 %v1459, %v1459
        %v1476 = vpack.c.b16 %v1460, %v1460
        %v1477 = vpack.c.b16 %v1461, %v1461
        %v1478 = vpack.c.b16 %v1462, %v1462
        %v1479 = vpack.c.b16 %v1463, %v1463
        %v1480 = vpack.c.b16 %v1464, %v1464
        %v1481 = vpack.c.b16 %v1465, %v1465
        %v1482 = vpack.c.b16 %v1466, %v1466
        %v1483 = vpack.c.b16 %v1467, %v1467
        %v1484 = vpack.c.b16 %v1468, %v1468
        %v2525 = vunpack.c.l.b16 %v421
        %v2526 = vunpack.c.h.b16 %v421
        %v2527 = vunpack.c.l.b16 %v422
        %v2528 = vunpack.c.h.b16 %v422
        %v2529 = vunpack.c.l.b16 %v423
        %v2530 = vunpack.c.h.b16 %v423
        %v2531 = vunpack.c.l.b16 %v424
        %v2532 = vunpack.c.h.b16 %v424
        %v2533 = vunpack.c.l.b16 %v425
        %v2534 = vunpack.c.h.b16 %v425
        %v2535 = vunpack.c.l.b16 %v426
        %v2536 = vunpack.c.h.b16 %v426
        %v2537 = vunpack.c.l.b16 %v427
        %v2538 = vunpack.c.h.b16 %v427
        %v2539 = vunpack.c.l.b16 %v428
        %v2540 = vunpack.c.h.b16 %v428
        %v2541 = vunpack.c.l.b16 %v429
        %v2542 = vunpack.c.h.b16 %v429
        %v2543 = vunpack.c.l.b16 %v430
        %v2544 = vunpack.c.h.b16 %v430
        %v2545 = vunpack.c.l.b16 %v431
        %v2546 = vunpack.c.h.b16 %v431
        %v2547 = vunpack.c.l.b16 %v432
        %v2548 = vunpack.c.h.b16 %v432
        %v2549 = vunpack.c.l.b16 %v433
        %v2550 = vunpack.c.h.b16 %v433
        %v2551 = vunpack.c.l.b16 %v434
        %v2552 = vunpack.c.h.b16 %v434
        %v2553 = vunpack.c.l.b16 %v435
        %v2554 = vunpack.c.h.b16 %v435
        %v2555 = vunpack.c.l.b16 %v436
        %v2556 = vunpack.c.h.b16 %v436
        %v2557 = vunpack.c.l.b16 %v437
        %v2558 = vunpack.c.h.b16 %v437
        %v2559 = vunpack.c.l.b16 %v438
        %v2560 = vunpack.c.h.b16 %v438
        %v2561 = vunpack.c.l.b16 %v439
        %v2562 = vunpack.c.h.b16 %v439
        %v2563 = vunpack.c.l.b16 %v440
        %v2564 = vunpack.c.h.b16 %v440
        %v2565 = vunpack.c.l.b16 %v441
        %v2566 = vunpack.c.h.b16 %v441
        %v2567 = vunpack.c.l.b16 %v442
        %v2568 = vunpack.c.h.b16 %v442
        %v2569 = vunpack.c.l.b16 %v443
        %v2570 = vunpack.c.h.b16 %v443
        %v2571 = vunpack.c.l.b16 %v444
        %v2572 = vunpack.c.h.b16 %v444
        %v2573 = vunpack.c.l.b16 %v445
        %v2574 = vunpack.c.h.b16 %v445
        %v2575 = vunpack.c.l.b16 %v446
        %v2576 = vunpack.c.h.b16 %v446
        %v2577 = vunpack.c.l.b16 %v447
        %v2578 = vunpack.c.h.b16 %v447
        %v2579 = vunpack.c.l.b16 %v448
        %v2580 = vunpack.c.h.b16 %v448
        %v2581 = vunpack.c.l.b16 %v449
        %v2582 = vunpack.c.h.b16 %v449
        %v2583 = vunpack.c.l.b16 %v450
        %v2584 = vunpack.c.h.b16 %v450
        %v2585 = vunpack.c.l.b16 %v451
        %v2586 = vunpack.c.h.b16 %v451
        %v2587 = vunpack.c.l.b16 %v452
        %v2588 = vunpack.c.h.b16 %v452
        %v2589 = vunpack.c.l.b16 %v453
        %v2590 = vunpack.c.h.b16 %v453
        %v2591 = vunpack.c.l.b16 %v454
        %v2592 = vunpack.c.h.b16 %v454
        %v2593 = vunpack.c.l.b16 %v455
        %v2594 = vunpack.c.h.b16 %v455
        %v2595 = vunpack.c.l.b16 %v456
        %v2596 = vunpack.c.h.b16 %v456
        %v2597 = vunpack.c.l.b16 %v457
        %v2598 = vunpack.c.h.b16 %v457
        %v2599 = vunpack.c.l.b16 %v458
        %v2600 = vunpack.c.h.b16 %v458
        %v2601 = vunpack.c.l.b16 %v459
        %v2602 = vunpack.c.h.b16 %v459
        %v2603 = vunpack.c.l.b16 %v460
        %v2604 = vunpack.c.h.b16 %v460
        %v2605 = vunpack.c.l.b16 %v461
        %v2606 = vunpack.c.h.b16 %v461
        %v2607 = vunpack.c.l.b16 %v462
        %v2608 = vunpack.c.h.b16 %v462
        %v2609 = vunpack.c.l.b16 %v463
        %v2610 = vunpack.c.h.b16 %v463
        %v2611 = vunpack.c.l.b16 %v464
        %v2612 = vunpack.c.h.b16 %v464
        %v2613 = vunpack.c.l.b16 %v465
        %v2614 = vunpack.c.h.b16 %v465
        %v2615 = vunpack.c.l.b16 %v466
        %v2616 = vunpack.c.h.b16 %v466
        %v2617 = vunpack.c.l.b16 %v467
        %v2618 = vunpack.c.h.b16 %v467
        %v2619 = vunpack.c.l.b16 %v468
        %v2620 = vunpack.c.h.b16 %v468
        %v2621 = vunpack.c.l.b16 %v469
        %v2622 = vunpack.c.h.b16 %v469
        %v2623 = vunpack.c.l.b16 %v470
        %v2624 = vunpack.c.h.b16 %v470
        %v2625 = vunpack.c.l.b16 %v471
        %v2626 = vunpack.c.h.b16 %v471
        %v2627 = vunpack.c.l.b16 %v472
        %v2628 = vunpack.c.h.b16 %v472
        %v2629 = vunpack.c.l.b16 %v473
        %v2630 = vunpack.c.h.b16 %v473
        %v2631 = vunpack.c.l.b16 %v474
        %v2632 = vunpack.c.h.b16 %v474
        %v2633 = vunpack.c.l.b16 %v475
        %v2634 = vunpack.c.h.b16 %v475
        %v2635 = vunpack.c.l.b16 %v476
        %v2636 = vunpack.c.h.b16 %v476
        %v2637 = vunpack.c.l.b16 %v477
        %v2638 = vunpack.c.h.b16 %v477
        %v2639 = vunpack.c.l.b16 %v478
        %v2640 = vunpack.c.h.b16 %v478
        %v2641 = vunpack.c.l.b16 %v479
        %v2642 = vunpack.c.h.b16 %v479
        %v2643 = vunpack.c.l.b16 %v480
        %v2644 = vunpack.c.h.b16 %v480
        %v2645 = vunpack.c.l.b16 %v481
        %v2646 = vunpack.c.h.b16 %v481
        %v2647 = vunpack.c.l.b16 %v482
        %v2648 = vunpack.c.h.b16 %v482
        %v2649 = vunpack.c.l.b16 %v483
        %v2650 = vunpack.c.h.b16 %v483
        %v2651 = vunpack.c.l.b16 %v484
        %v2652 = vunpack.c.h.b16 %v484
        %v2653 = vunpack.c.l.b16 %v485
        %v2654 = vunpack.c.h.b16 %v485
        %v2655 = vunpack.c.l.b16 %v486
        %v2656 = vunpack.c.h.b16 %v486
        %v2657 = vunpack.c.l.b16 %v487
        %v2658 = vunpack.c.h.b16 %v487
        %v2659 = vunpack.c.l.b16 %v488
        %v2660 = vunpack.c.h.b16 %v488
        %v2661 = vunpack.c.l.b16 %v489
        %v2662 = vunpack.c.h.b16 %v489
        %v2663 = vunpack.c.l.b16 %v490
        %v2664 = vunpack.c.h.b16 %v490
        %v2665 = vunpack.c.l.b16 %v491
        %v2666 = vunpack.c.h.b16 %v491
        %v2667 = vunpack.c.l.b16 %v492
        %v2668 = vunpack.c.h.b16 %v492
        %v2669 = vunpack.c.l.b16 %v493
        %v2670 = vunpack.c.h.b16 %v493
        %v2671 = vunpack.c.l.b16 %v494
        %v2672 = vunpack.c.h.b16 %v494
        %v2673 = vunpack.c.l.b16 %v495
        %v2674 = vunpack.c.h.b16 %v495
        %v2675 = vunpack.c.l.b16 %v496
        %v2676 = vunpack.c.h.b16 %v496
        %v2677 = vunpack.c.l.b16 %v497
        %v2678 = vunpack.c.h.b16 %v497
        %v2679 = vunpack.c.l.b16 %v498
        %v2680 = vunpack.c.h.b16 %v498
        %v2681 = vunpack.c.l.b16 %v499
        %v2682 = vunpack.c.h.b16 %v499
        %v2683 = vunpack.c.l.b16 %v500
        %v2684 = vunpack.c.h.b16 %v500
        %v2685 = vunpack.c.l.b16 %v501
        %v2686 = vunpack.c.h.b16 %v501
        %v2687 = vunpack.c.l.b16 %v502
        %v2688 = vunpack.c.h.b16 %v502
        %v2689 = vunpack.c.l.b16 %v503
        %v2690 = vunpack.c.h.b16 %v503
        %v2691 = vunpack.c.l.b16 %v504
        %v2692 = vunpack.c.h.b16 %v504
        %v2693 = vunpack.c.l.b16 %v505
        %v2694 = vunpack.c.h.b16 %v505
        %v2695 = vunpack.c.l.b16 %v506
        %v2696 = vunpack.c.h.b16 %v506
        %v2697 = vunpack.c.l.b16 %v507
        %v2698 = vunpack.c.h.b16 %v507
        %v2699 = vunpack.c.l.b16 %v508
        %v2700 = vunpack.c.h.b16 %v508
        %v2701 = vunpack.c.l.b16 %v509
        %v2702 = vunpack.c.h.b16 %v509
        %v2703 = vunpack.c.l.b16 %v510
        %v2704 = vunpack.c.h.b16 %v510
        %v2705 = vunpack.c.l.b16 %v511
        %v2706 = vunpack.c.h.b16 %v511
        %v2707 = vunpack.c.l.b16 %v512
        %v2708 = vunpack.c.h.b16 %v512
        %v2709 = vunpack.c.l.b16 %v513
        %v2710 = vunpack.c.h.b16 %v513
        %v2711 = vunpack.c.l.b16 %v514
        %v2712 = vunpack.c.h.b16 %v514
        %v2713 = vunpack.c.l.b16 %v515
        %v2714 = vunpack.c.h.b16 %v515
        %v2715 = vunpack.c.l.b16 %v516
        %v2716 = vunpack.c.h.b16 %v516
        %v2717 = vunpack.c.l.b16 %v517
        %v2718 = vunpack.c.h.b16 %v517
        %v2719 = vunpack.c.l.b16 %v518
        %v2720 = vunpack.c.h.b16 %v518
        %v2721 = vunpack.c.l.b16 %v519
        %v2722 = vunpack.c.h.b16 %v519
        %v2723 = vunpack.c.l.b16 %v520
        %v2724 = vunpack.c.h.b16 %v520
        %v2725 = vunpack.c.l.b16 %v521
        %v2726 = vunpack.c.h.b16 %v521
        %v2727 = vunpack.c.l.b16 %v522
        %v2728 = vunpack.c.h.b16 %v522
        %v2729 = vunpack.c.l.b16 %v523
        %v2730 = vunpack.c.h.b16 %v523
        %v2731 = vunpack.c.l.b16 %v524
        %v2732 = vunpack.c.h.b16 %v524
        %v2733 = vunpack.c.l.b16 %v525
        %v2734 = vunpack.c.h.b16 %v525
        %v2735 = vunpack.c.l.b16 %v526
        %v2736 = vunpack.c.h.b16 %v526
        %v2737 = vunpack.c.l.b16 %v527
        %v2738 = vunpack.c.h.b16 %v527
        %v2739 = vunpack.c.l.b16 %v528
        %v2740 = vunpack.c.h.b16 %v528
        %v2741 = vunpack.c.l.b16 %v529
        %v2742 = vunpack.c.h.b16 %v529
        %v2743 = vunpack.c.l.b16 %v530
        %v2744 = vunpack.c.h.b16 %v530
        %v2745 = vunpack.c.l.b16 %v531
        %v2746 = vunpack.c.h.b16 %v531
        %v2747 = vunpack.c.l.b16 %v532
        %v2748 = vunpack.c.h.b16 %v532
        %v2749 = vunpack.c.l.b16 %v533
        %v2750 = vunpack.c.h.b16 %v533
        %v2751 = vunpack.c.l.b16 %v534
        %v2752 = vunpack.c.h.b16 %v534
        %v2753 = vunpack.c.l.b16 %v535
        %v2754 = vunpack.c.h.b16 %v535
        %v2755 = vunpack.c.l.b16 %v536
        %v2756 = vunpack.c.h.b16 %v536
        %v2757 = vunpack.c.l.b16 %v537
        %v2758 = vunpack.c.h.b16 %v537
        %v2759 = vunpack.c.l.b16 %v538
        %v2760 = vunpack.c.h.b16 %v538
        %v2761 = vunpack.c.l.b16 %v539
        %v2762 = vunpack.c.h.b16 %v539
        %v2763 = vunpack.c.l.b16 %v540
        %v2764 = vunpack.c.h.b16 %v540
        %v2765 = vunpack.c.l.b16 %v541
        %v2766 = vunpack.c.h.b16 %v541
        %v2767 = vunpack.c.l.b16 %v542
        %v2768 = vunpack.c.h.b16 %v542
        %v2769 = vunpack.c.l.b16 %v543
        %v2770 = vunpack.c.h.b16 %v543
        %v2771 = vunpack.c.l.b16 %v544
        %v2772 = vunpack.c.h.b16 %v544
        %v2773 = vunpack.c.l.b16 %v545
        %v2774 = vunpack.c.h.b16 %v545
        %v2775 = vunpack.c.l.b16 %v546
        %v2776 = vunpack.c.h.b16 %v546
        %v2777 = vunpack.c.l.b16 %v547
        %v2778 = vunpack.c.h.b16 %v547
        %v2779 = vunpack.c.l.b16 %v548
        %v2780 = vunpack.c.h.b16 %v548
        %v2781 = vunpack.c.l.b16 %v549
        %v2782 = vunpack.c.h.b16 %v549
        %v2783 = vunpack.c.l.b16 %v550
        %v2784 = vunpack.c.h.b16 %v550
        %v2785 = vunpack.c.l.b16 %v551
        %v2786 = vunpack.c.h.b16 %v551
        %v2787 = vunpack.c.l.b16 %v552
        %v2788 = vunpack.c.h.b16 %v552
        %v2789 = vunpack.c.l.b16 %v553
        %v2790 = vunpack.c.h.b16 %v553
        %v2791 = vunpack.c.l.b16 %v554
        %v2792 = vunpack.c.h.b16 %v554
        %v2793 = vunpack.c.l.b16 %v555
        %v2794 = vunpack.c.h.b16 %v555
        %v2795 = vunpack.c.l.b16 %v556
        %v2796 = vunpack.c.h.b16 %v556
        %v2797 = vunpack.c.l.b16 %v557
        %v2798 = vunpack.c.h.b16 %v557
        %v2799 = vunpack.c.l.b16 %v558
        %v2800 = vunpack.c.h.b16 %v558
        %v2801 = vunpack.c.l.b16 %v559
        %v2802 = vunpack.c.h.b16 %v559
        %v2803 = vunpack.c.l.b16 %v560
        %v2804 = vunpack.c.h.b16 %v560
        %v2805 = vunpack.c.l.b16 %v561
        %v2806 = vunpack.c.h.b16 %v561
        %v2807 = vunpack.c.l.b16 %v562
        %v2808 = vunpack.c.h.b16 %v562
        %v2809 = vunpack.c.l.b16 %v563
        %v2810 = vunpack.c.h.b16 %v563
        %v2811 = vunpack.c.l.b16 %v564
        %v2812 = vunpack.c.h.b16 %v564
        %v2813 = vunpack.c.l.b16 %v565
        %v2814 = vunpack.c.h.b16 %v565
        %v2815 = vunpack.c.l.b16 %v566
        %v2816 = vunpack.c.h.b16 %v566
        %v2817 = vunpack.c.l.b16 %v567
        %v2818 = vunpack.c.h.b16 %v567
        %v2819 = vunpack.c.l.b16 %v568
        %v2820 = vunpack.c.h.b16 %v568
        %v2821 = vunpack.c.l.b16 %v569
        %v2822 = vunpack.c.h.b16 %v569
        %v2823 = vunpack.c.l.b16 %v570
        %v2824 = vunpack.c.h.b16 %v570
        %v2825 = vunpack.c.l.b16 %v571
        %v2826 = vunpack.c.h.b16 %v571
        %v2827 = vunpack.c.l.b16 %v572
        %v2828 = vunpack.c.h.b16 %v572
        %v2829 = vunpack.c.l.b16 %v573
        %v2830 = vunpack.c.h.b16 %v573
        %v2831 = vunpack.c.l.b16 %v574
        %v2832 = vunpack.c.h.b16 %v574
        %v2833 = vunpack.c.l.b16 %v575
        %v2834 = vunpack.c.h.b16 %v575
        %v2835 = vunpack.c.l.b16 %v576
        %v2836 = vunpack.c.h.b16 %v576
        %v2837 = vunpack.c.l.b16 %v577
        %v2838 = vunpack.c.h.b16 %v577
        %v2839 = vunpack.c.l.b16 %v578
        %v2840 = vunpack.c.h.b16 %v578
        %v2841 = vunpack.c.l.b16 %v579
        %v2842 = vunpack.c.h.b16 %v579
        %v2843 = vunpack.c.l.b16 %v580
        %v2844 = vunpack.c.h.b16 %v580
        %v2845 = vunpack.c.l.b16 %v581
        %v2846 = vunpack.c.h.b16 %v581
        %v2847 = vunpack.c.l.b16 %v582
        %v2848 = vunpack.c.h.b16 %v582
        %v2849 = vunpack.c.l.b16 %v583
        %v2850 = vunpack.c.h.b16 %v583
        %v2851 = vunpack.c.l.b16 %v584
        %v2852 = vunpack.c.h.b16 %v584
        %v2853 = vunpack.c.l.b16 %v585
        %v2854 = vunpack.c.h.b16 %v585
        %v2855 = vunpack.c.l.b16 %v586
        %v2856 = vunpack.c.h.b16 %v586
        %v2857 = vunpack.c.l.b16 %v587
        %v2858 = vunpack.c.h.b16 %v587
        %v2859 = vunpack.c.l.b16 %v588
        %v2860 = vunpack.c.h.b16 %v588
        %v2861 = vunpack.c.l.b16 %v589
        %v2862 = vunpack.c.h.b16 %v589
        %v2863 = vunpack.c.l.b16 %v590
        %v2864 = vunpack.c.h.b16 %v590
        %v2865 = vunpack.c.l.b16 %v591
        %v2866 = vunpack.c.h.b16 %v591
        %v2867 = vunpack.c.l.b16 %v592
        %v2868 = vunpack.c.h.b16 %v592
        %v2869 = vunpack.c.l.b16 %v593
        %v2870 = vunpack.c.h.b16 %v593
        %v2871 = vunpack.c.l.b16 %v594
        %v2872 = vunpack.c.h.b16 %v594
        %v2873 = vunpack.c.l.b16 %v595
        %v2874 = vunpack.c.h.b16 %v595
        %v2875 = vunpack.c.l.b16 %v596
        %v2876 = vunpack.c.h.b16 %v596
        %v2877 = vunpack.c.l.b16 %v597
        %v2878 = vunpack.c.h.b16 %v597
        %v2879 = vunpack.c.l.b16 %v598
        %v2880 = vunpack.c.h.b16 %v598
        %v2881 = vunpack.c.l.b16 %v599
        %v2882 = vunpack.c.h.b16 %v599
        %v2883 = vunpack.c.l.b16 %v600
        %v2884 = vunpack.c.h.b16 %v600
        %v2885 = vunpack.c.l.b16 %v601
        %v2886 = vunpack.c.h.b16 %v601
        %v2887 = vunpack.c.l.b16 %v602
        %v2888 = vunpack.c.h.b16 %v602
        %v2889 = vunpack.c.l.b16 %v603
        %v2890 = vunpack.c.h.b16 %v603
        %v2891 = vunpack.c.l.b16 %v604
        %v2892 = vunpack.c.h.b16 %v604
        %v2893 = vunpack.c.l.b16 %v605
        %v2894 = vunpack.c.h.b16 %v605
        %v2895 = vunpack.c.l.b16 %v606
        %v2896 = vunpack.c.h.b16 %v606
        %v2897 = vunpack.c.l.b16 %v607
        %v2898 = vunpack.c.h.b16 %v607
        %v2899 = vunpack.c.l.b16 %v608
        %v2900 = vunpack.c.h.b16 %v608
        %v2901 = vunpack.c.l.b16 %v609
        %v2902 = vunpack.c.h.b16 %v609
        %v2903 = vunpack.c.l.b16 %v610
        %v2904 = vunpack.c.h.b16 %v610
        %v2905 = vunpack.c.l.b16 %v611
        %v2906 = vunpack.c.h.b16 %v611
        %v2907 = vunpack.c.l.b16 %v612
        %v2908 = vunpack.c.h.b16 %v612
        %v2909 = vunpack.c.l.b16 %v613
        %v2910 = vunpack.c.h.b16 %v613
        %v2911 = vunpack.c.l.b16 %v614
        %v2912 = vunpack.c.h.b16 %v614
        %v2913 = vunpack.c.l.b16 %v615
        %v2914 = vunpack.c.h.b16 %v615
        %v2915 = vunpack.c.l.b16 %v616
        %v2916 = vunpack.c.h.b16 %v616
        %v2917 = vunpack.c.l.b16 %v617
        %v2918 = vunpack.c.h.b16 %v617
        %v2919 = vunpack.c.l.b16 %v618
        %v2920 = vunpack.c.h.b16 %v618
        %v2921 = vunpack.c.l.b16 %v619
        %v2922 = vunpack.c.h.b16 %v619
        %v2923 = vunpack.c.l.b16 %v620
        %v2924 = vunpack.c.h.b16 %v620
        %v2925 = vunpack.c.l.b16 %v621
        %v2926 = vunpack.c.h.b16 %v621
        %v2927 = vunpack.c.l.b16 %v622
        %v2928 = vunpack.c.h.b16 %v622
        %v2929 = vunpack.c.l.b16 %v623
        %v2930 = vunpack.c.h.b16 %v623
        %v2931 = vunpack.c.l.b16 %v624
        %v2932 = vunpack.c.h.b16 %v624
        %v2933 = vunpack.c.l.b16 %v625
        %v2934 = vunpack.c.h.b16 %v625
        %v2935 = vunpack.c.l.b16 %v626
        %v2936 = vunpack.c.h.b16 %v626
        %v2937 = vunpack.c.l.b16 %v627
        %v2938 = vunpack.c.h.b16 %v627
        %v2939 = vunpack.c.l.b16 %v628
        %v2940 = vunpack.c.h.b16 %v628
        %v2941 = vunpack.c.l.b16 %v629
        %v2942 = vunpack.c.h.b16 %v629
        %v2943 = vunpack.c.l.b16 %v630
        %v2944 = vunpack.c.h.b16 %v630
        %v2945 = vunpack.c.l.b16 %v631
        %v2946 = vunpack.c.h.b16 %v631
        %v2947 = vunpack.c.l.b16 %v632
        %v2948 = vunpack.c.h.b16 %v632
        %v2949 = vunpack.c.l.b16 %v633
        %v2950 = vunpack.c.h.b16 %v633
        %v2951 = vunpack.c.l.b16 %v634
        %v2952 = vunpack.c.h.b16 %v634
        %v2953 = vunpack.c.l.b16 %v635
        %v2954 = vunpack.c.h.b16 %v635
        %v2955 = vunpack.c.l.b16 %v636
        %v2956 = vunpack.c.h.b16 %v636
        %v2957 = vunpack.c.l.b16 %v637
        %v2958 = vunpack.c.h.b16 %v637
        %v2959 = vunpack.c.l.b16 %v638
        %v2960 = vunpack.c.h.b16 %v638
        %v2961 = vunpack.c.l.b16 %v639
        %v2962 = vunpack.c.h.b16 %v639
        %v2963 = vunpack.c.l.b16 %v640
        %v2964 = vunpack.c.h.b16 %v640
        %v2965 = vunpack.c.l.b16 %v641
        %v2966 = vunpack.c.h.b16 %v641
        %v2967 = vunpack.c.l.b16 %v642
        %v2968 = vunpack.c.h.b16 %v642
        %v2969 = vunpack.c.l.b16 %v643
        %v2970 = vunpack.c.h.b16 %v643
        %v2971 = vunpack.c.l.b16 %v644
        %v2972 = vunpack.c.h.b16 %v644
        %v2973 = vunpack.c.l.b16 %v645
        %v2974 = vunpack.c.h.b16 %v645
        %v2975 = vunpack.c.l.b16 %v646
        %v2976 = vunpack.c.h.b16 %v646
        %v2977 = vunpack.c.l.b16 %v647
        %v2978 = vunpack.c.h.b16 %v647
        %v2979 = vunpack.c.l.b16 %v648
        %v2980 = vunpack.c.h.b16 %v648
        %v2981 = vunpack.c.l.b16 %v649
        %v2982 = vunpack.c.h.b16 %v649
        %v2983 = vunpack.c.l.b16 %v650
        %v2984 = vunpack.c.h.b16 %v650
        %v2985 = vunpack.c.l.b16 %v651
        %v2986 = vunpack.c.h.b16 %v651
        %v2987 = vunpack.c.l.b16 %v652
        %v2988 = vunpack.c.h.b16 %v652
        %v2989 = vunpack.c.l.b16 %v653
        %v2990 = vunpack.c.h.b16 %v653
        %v2991 = vunpack.c.l.b16 %v654
        %v2992 = vunpack.c.h.b16 %v654
        %v2993 = vunpack.c.l.b16 %v655
        %v2994 = vunpack.c.h.b16 %v655
        %v2995 = vunpack.c.l.b16 %v656
        %v2996 = vunpack.c.h.b16 %v656
        %v2997 = vunpack.c.l.b16 %v657
        %v2998 = vunpack.c.h.b16 %v657
        %v2999 = vunpack.c.l.b16 %v658
        %v3000 = vunpack.c.h.b16 %v658
        %v3001 = vunpack.c.l.b16 %v659
        %v3002 = vunpack.c.h.b16 %v659
        %v3003 = vunpack.c.l.b16 %v660
        %v3004 = vunpack.c.h.b16 %v660
        %v3005 = vunpack.c.l.b16 %v661
        %v3006 = vunpack.c.h.b16 %v661
        %v3007 = vunpack.c.l.b16 %v662
        %v3008 = vunpack.c.h.b16 %v662
        %v3009 = vunpack.c.l.b16 %v663
        %v3010 = vunpack.c.h.b16 %v663
        %v3011 = vunpack.c.l.b16 %v664
        %v3012 = vunpack.c.h.b16 %v664
        %v3013 = vunpack.c.l.b16 %v665
        %v3014 = vunpack.c.h.b16 %v665
        %v3015 = vunpack.c.l.b16 %v666
        %v3016 = vunpack.c.h.b16 %v666
        %v3017 = vunpack.c.l.b16 %v667
        %v3018 = vunpack.c.h.b16 %v667
        %v3019 = vunpack.c.l.b16 %v668
        %v3020 = vunpack.c.h.b16 %v668
        %v3021 = vunpack.c.l.b16 %v669
        %v3022 = vunpack.c.h.b16 %v669
        %v3023 = vunpack.c.l.b16 %v670
        %v3024 = vunpack.c.h.b16 %v670
        %v3025 = vunpack.c.l.b16 %v671
        %v3026 = vunpack.c.h.b16 %v671
        %v3027 = vunpack.c.l.b16 %v672
        %v3028 = vunpack.c.h.b16 %v672
        %v3029 = vunpack.c.l.b16 %v673
        %v3030 = vunpack.c.h.b16 %v673
        %v3031 = vunpack.c.l.b16 %v674
        %v3032 = vunpack.c.h.b16 %v674
        %v3033 = vunpack.c.l.b16 %v675
        %v3034 = vunpack.c.h.b16 %v675
        %v3035 = vunpack.c.l.b16 %v676
        %v3036 = vunpack.c.h.b16 %v676
        %v3037 = vunpack.c.l.b16 %v677
        %v3038 = vunpack.c.h.b16 %v677
        %v3039 = vunpack.c.l.b16 %v678
        %v3040 = vunpack.c.h.b16 %v678
        %v3041 = vunpack.c.l.b16 %v679
        %v3042 = vunpack.c.h.b16 %v679
        %v3043 = vunpack.c.l.b16 %v680
        %v3044 = vunpack.c.h.b16 %v680
        %v3045 = vunpack.c.l.b16 %v681
        %v3046 = vunpack.c.h.b16 %v681
        %v3047 = vunpack.c.l.b16 %v682
        %v3048 = vunpack.c.h.b16 %v682
        %v3049 = vunpack.c.l.b16 %v683
        %v3050 = vunpack.c.h.b16 %v683
        %v3051 = vunpack.c.l.b16 %v684
        %v3052 = vunpack.c.h.b16 %v684
        %v3053 = vunpack.c.l.b16 %v685
        %v3054 = vunpack.c.h.b16 %v685
        %v3055 = vunpack.c.l.b16 %v686
        %v3056 = vunpack.c.h.b16 %v686
        %v3057 = vunpack.c.l.b16 %v687
        %v3058 = vunpack.c.h.b16 %v687
        %v3059 = vunpack.c.l.b16 %v688
        %v3060 = vunpack.c.h.b16 %v688
        %v3061 = vunpack.c.l.b16 %v689
        %v3062 = vunpack.c.h.b16 %v689
        %v3063 = vunpack.c.l.b16 %v690
        %v3064 = vunpack.c.h.b16 %v690
        %v3065 = vunpack.c.l.b16 %v691
        %v3066 = vunpack.c.h.b16 %v691
        %v3067 = vunpack.c.l.b16 %v692
        %v3068 = vunpack.c.h.b16 %v692
        %v3069 = vunpack.c.l.b16 %v693
        %v3070 = vunpack.c.h.b16 %v693
        %v3071 = vunpack.c.l.b16 %v694
        %v3072 = vunpack.c.h.b16 %v694
        %v3073 = vunpack.c.l.b16 %v695
        %v3074 = vunpack.c.h.b16 %v695
        %v3075 = vunpack.c.l.b16 %v696
        %v3076 = vunpack.c.h.b16 %v696
        %v3077 = vunpack.c.l.b16 %v697
        %v3078 = vunpack.c.h.b16 %v697
        %v3079 = vunpack.c.l.b16 %v698
        %v3080 = vunpack.c.h.b16 %v698
        %v3081 = vunpack.c.l.b16 %v699
        %v3082 = vunpack.c.h.b16 %v699
        %v3083 = vunpack.c.l.b16 %v700
        %v3084 = vunpack.c.h.b16 %v700
        %v3085 = vunpack.c.l.b16 %v701
        %v3086 = vunpack.c.h.b16 %v701
        %v3087 = vunpack.c.l.b16 %v702
        %v3088 = vunpack.c.h.b16 %v702
        %v3089 = vunpack.c.l.b16 %v703
        %v3090 = vunpack.c.h.b16 %v703
        %v3091 = vunpack.c.l.b16 %v704
        %v3092 = vunpack.c.h.b16 %v704
        %v3093 = vunpack.c.l.b16 %v705
        %v3094 = vunpack.c.h.b16 %v705
        %v3095 = vunpack.c.l.b16 %v706
        %v3096 = vunpack.c.h.b16 %v706
        %v3097 = vunpack.c.l.b16 %v707
        %v3098 = vunpack.c.h.b16 %v707
        %v3099 = vunpack.c.l.b16 %v708
        %v3100 = vunpack.c.h.b16 %v708
        %v3101 = vunpack.c.l.b16 %v709
        %v3102 = vunpack.c.h.b16 %v709
        %v3103 = vunpack.c.l.b16 %v710
        %v3104 = vunpack.c.h.b16 %v710
        %v3105 = vunpack.c.l.b16 %v711
        %v3106 = vunpack.c.h.b16 %v711
        %v3107 = vunpack.c.l.b16 %v712
        %v3108 = vunpack.c.h.b16 %v712
        %v3109 = vunpack.c.l.b16 %v713
        %v3110 = vunpack.c.h.b16 %v713
        %v3111 = vunpack.c.l.b16 %v714
        %v3112 = vunpack.c.h.b16 %v714
        %v3113 = vunpack.c.l.b16 %v715
        %v3114 = vunpack.c.h.b16 %v715
        %v3115 = vunpack.c.l.b16 %v716
        %v3116 = vunpack.c.h.b16 %v716
        %v3117 = vunpack.c.l.b16 %v717
        %v3118 = vunpack.c.h.b16 %v717
        %v3119 = vunpack.c.l.b16 %v718
        %v3120 = vunpack.c.h.b16 %v718
        %v3121 = vunpack.c.l.b16 %v719
        %v3122 = vunpack.c.h.b16 %v719
        %v3123 = vunpack.c.l.b16 %v720
        %v3124 = vunpack.c.h.b16 %v720
        %v3125 = vunpack.c.l.b16 %v721
        %v3126 = vunpack.c.h.b16 %v721
        %v3127 = vunpack.c.l.b16 %v722
        %v3128 = vunpack.c.h.b16 %v722
        %v3129 = vunpack.c.l.b16 %v723
        %v3130 = vunpack.c.h.b16 %v723
        %v3131 = vunpack.c.l.b16 %v724
        %v3132 = vunpack.c.h.b16 %v724
        %v3133 = vunpack.c.l.b16 %v725
        %v3134 = vunpack.c.h.b16 %v725
        %v3135 = vunpack.c.l.b16 %v726
        %v3136 = vunpack.c.h.b16 %v726
        %v3137 = vunpack.c.l.b16 %v727
        %v3138 = vunpack.c.h.b16 %v727
        %v3139 = vunpack.c.l.b16 %v728
        %v3140 = vunpack.c.h.b16 %v728
        %v3141 = vunpack.c.l.b16 %v729
        %v3142 = vunpack.c.h.b16 %v729
        %v3143 = vunpack.c.l.b16 %v730
        %v3144 = vunpack.c.h.b16 %v730
        %v3145 = vunpack.c.l.b16 %v731
        %v3146 = vunpack.c.h.b16 %v731
        %v3147 = vunpack.c.l.b16 %v732
        %v3148 = vunpack.c.h.b16 %v732
        %v3149 = vunpack.c.l.b16 %v733
        %v3150 = vunpack.c.h.b16 %v733
        %v3151 = vunpack.c.l.b16 %v734
        %v3152 = vunpack.c.h.b16 %v734
        %v3153 = vunpack.c.l.b16 %v735
        %v3154 = vunpack.c.h.b16 %v735
        %v3155 = vunpack.c.l.b16 %v736
        %v3156 = vunpack.c.h.b16 %v736
        %v3157 = vunpack.c.l.b16 %v737
        %v3158 = vunpack.c.h.b16 %v737
        %v3159 = vunpack.c.l.b16 %v738
        %v3160 = vunpack.c.h.b16 %v738
        %v3161 = vunpack.c.l.b16 %v739
        %v3162 = vunpack.c.h.b16 %v739
        %v3163 = vunpack.c.l.b16 %v740
        %v3164 = vunpack.c.h.b16 %v740
        %v3165 = vunpack.c.l.b16 %v741
        %v3166 = vunpack.c.h.b16 %v741
        %v3167 = vunpack.c.l.b16 %v742
        %v3168 = vunpack.c.h.b16 %v742
        %v3169 = vunpack.c.l.b16 %v743
        %v3170 = vunpack.c.h.b16 %v743
        %v3171 = vunpack.c.l.b16 %v744
        %v3172 = vunpack.c.h.b16 %v744
        %v3173 = vunpack.c.l.b16 %v745
        %v3174 = vunpack.c.h.b16 %v745
        %v3175 = vunpack.c.l.b16 %v746
        %v3176 = vunpack.c.h.b16 %v746
        %v3177 = vunpack.c.l.b16 %v747
        %v3178 = vunpack.c.h.b16 %v747
        %v3179 = vunpack.c.l.b16 %v748
        %v3180 = vunpack.c.h.b16 %v748
        %v3181 = vunpack.c.l.b16 %v749
        %v3182 = vunpack.c.h.b16 %v749
        %v3183 = vunpack.c.l.b16 %v750
        %v3184 = vunpack.c.h.b16 %v750
        %v3185 = vunpack.c.l.b16 %v751
        %v3186 = vunpack.c.h.b16 %v751
        %v3187 = vunpack.c.l.b16 %v752
        %v3188 = vunpack.c.h.b16 %v752
        %v3189 = vunpack.c.l.b16 %v753
        %v3190 = vunpack.c.h.b16 %v753
        %v3191 = vunpack.c.l.b16 %v754
        %v3192 = vunpack.c.h.b16 %v754
        %v3193 = vunpack.c.l.b16 %v755
        %v3194 = vunpack.c.h.b16 %v755
        %v3195 = vunpack.c.l.b16 %v756
        %v3196 = vunpack.c.h.b16 %v756
        %v3197 = vunpack.c.l.b16 %v757
        %v3198 = vunpack.c.h.b16 %v757
        %v3199 = vunpack.c.l.b16 %v758
        %v3200 = vunpack.c.h.b16 %v758
        %v3201 = vunpack.c.l.b16 %v759
        %v3202 = vunpack.c.h.b16 %v759
        %v3203 = vunpack.c.l.b16 %v760
        %v3204 = vunpack.c.h.b16 %v760
        %v3205 = vunpack.c.l.b16 %v761
        %v3206 = vunpack.c.h.b16 %v761
        %v3207 = vunpack.c.l.b16 %v762
        %v3208 = vunpack.c.h.b16 %v762
        %v3209 = vunpack.c.l.b16 %v763
        %v3210 = vunpack.c.h.b16 %v763
        %v3211 = vunpack.c.l.b16 %v764
        %v3212 = vunpack.c.h.b16 %v764
        %v3213 = vunpack.c.l.b16 %v765
        %v3214 = vunpack.c.h.b16 %v765
        %v3215 = vunpack.c.l.b16 %v766
        %v3216 = vunpack.c.h.b16 %v766
        %v3217 = vunpack.c.l.b16 %v767
        %v3218 = vunpack.c.h.b16 %v767
        %v3219 = vunpack.c.l.b16 %v768
        %v3220 = vunpack.c.h.b16 %v768
        %v3221 = vunpack.c.l.b16 %v769
        %v3222 = vunpack.c.h.b16 %v769
        %v3223 = vunpack.c.l.b16 %v770
        %v3224 = vunpack.c.h.b16 %v770
        %v3225 = vunpack.c.l.b16 %v771
        %v3226 = vunpack.c.h.b16 %v771
        %v3227 = vunpack.c.l.b16 %v772
        %v3228 = vunpack.c.h.b16 %v772
        %v3229 = vunpack.c.l.b16 %v773
        %v3230 = vunpack.c.h.b16 %v773
        %v3231 = vunpack.c.l.b16 %v774
        %v3232 = vunpack.c.h.b16 %v774
        %v3233 = vunpack.c.l.b16 %v775
        %v3234 = vunpack.c.h.b16 %v775
        %v3235 = vunpack.c.l.b16 %v776
        %v3236 = vunpack.c.h.b16 %v776
        %v3237 = vunpack.c.l.b16 %v777
        %v3238 = vunpack.c.h.b16 %v777
        %v3239 = vunpack.c.l.b16 %v778
        %v3240 = vunpack.c.h.b16 %v778
        %v3241 = vunpack.c.l.b16 %v779
        %v3242 = vunpack.c.h.b16 %v779
        %v3243 = vunpack.c.l.b16 %v780
        %v3244 = vunpack.c.h.b16 %v780
        %v3245 = vunpack.c.l.b16 %v781
        %v3246 = vunpack.c.h.b16 %v781
        %v3247 = vunpack.c.l.b16 %v782
        %v3248 = vunpack.c.h.b16 %v782
        %v3249 = vunpack.c.l.b16 %v783
        %v3250 = vunpack.c.h.b16 %v783
        %v3251 = vunpack.c.l.b16 %v784
        %v3252 = vunpack.c.h.b16 %v784
        %v3253 = vunpack.c.l.b16 %v785
        %v3254 = vunpack.c.h.b16 %v785
        %v3255 = vunpack.c.l.b16 %v786
        %v3256 = vunpack.c.h.b16 %v786
        %v3257 = vunpack.c.l.b16 %v787
        %v3258 = vunpack.c.h.b16 %v787
        %v3259 = vunpack.c.l.b16 %v788
        %v3260 = vunpack.c.h.b16 %v788
        %v3261 = vunpack.c.l.b16 %v789
        %v3262 = vunpack.c.h.b16 %v789
        %v3263 = vunpack.c.l.b16 %v790
        %v3264 = vunpack.c.h.b16 %v790
        %v3265 = vunpack.c.l.b16 %v791
        %v3266 = vunpack.c.h.b16 %v791
        %v3267 = vunpack.c.l.b16 %v792
        %v3268 = vunpack.c.h.b16 %v792
        %v3269 = vunpack.c.l.b16 %v793
        %v3270 = vunpack.c.h.b16 %v793
        %v3271 = vunpack.c.l.b16 %v794
        %v3272 = vunpack.c.h.b16 %v794
        %v3273 = vunpack.c.l.b16 %v795
        %v3274 = vunpack.c.h.b16 %v795
        %v3275 = vunpack.c.l.b16 %v796
        %v3276 = vunpack.c.h.b16 %v796
        %v3277 = vunpack.c.l.b16 %v797
        %v3278 = vunpack.c.h.b16 %v797
        %v3279 = vunpack.c.l.b16 %v798
        %v3280 = vunpack.c.h.b16 %v798
        %v3281 = vunpack.c.l.b16 %v799
        %v3282 = vunpack.c.h.b16 %v799
        %v3283 = vunpack.c.l.b16 %v800
        %v3284 = vunpack.c.h.b16 %v800
        %v3285 = vunpack.c.l.b16 %v801
        %v3286 = vunpack.c.h.b16 %v801
        %v3287 = vunpack.c.l.b16 %v802
        %v3288 = vunpack.c.h.b16 %v802
        %v3289 = vunpack.c.l.b16 %v803
        %v3290 = vunpack.c.h.b16 %v803
        %v3291 = vunpack.c.l.b16 %v804
        %v3292 = vunpack.c.h.b16 %v804
        %v3293 = vunpack.c.l.b16 %v805
        %v3294 = vunpack.c.h.b16 %v805
        %v3295 = vunpack.c.l.b16 %v806
        %v3296 = vunpack.c.h.b16 %v806
        %v3297 = vunpack.c.l.b16 %v807
        %v3298 = vunpack.c.h.b16 %v807
        %v3299 = vunpack.c.l.b16 %v808
        %v3300 = vunpack.c.h.b16 %v808
        %v3301 = vunpack.c.l.b16 %v809
        %v3302 = vunpack.c.h.b16 %v809
        %v3303 = vunpack.c.l.b16 %v810
        %v3304 = vunpack.c.h.b16 %v810
        %v3305 = vunpack.c.l.b16 %v811
        %v3306 = vunpack.c.h.b16 %v811
        %v3307 = vunpack.c.l.b16 %v812
        %v3308 = vunpack.c.h.b16 %v812
        %v3309 = vunpack.c.l.b16 %v813
        %v3310 = vunpack.c.h.b16 %v813
        %v3311 = vunpack.c.l.b16 %v814
        %v3312 = vunpack.c.h.b16 %v814
        %v3313 = vunpack.c.l.b16 %v815
        %v3314 = vunpack.c.h.b16 %v815
        %v3315 = vunpack.c.l.b16 %v816
        %v3316 = vunpack.c.h.b16 %v816
        %v3317 = vunpack.c.l.b16 %v817
        %v3318 = vunpack.c.h.b16 %v817
        %v3319 = vunpack.c.l.b16 %v818
        %v3320 = vunpack.c.h.b16 %v818
        %v3321 = vunpack.c.l.b16 %v819
        %v3322 = vunpack.c.h.b16 %v819
        %v3323 = vunpack.c.l.b16 %v820
        %v3324 = vunpack.c.h.b16 %v820
        %v3325 = vunpack.c.l.b16 %v821
        %v3326 = vunpack.c.h.b16 %v821
        %v3327 = vunpack.c.l.b16 %v822
        %v3328 = vunpack.c.h.b16 %v822
        %v3329 = vunpack.c.l.b16 %v823
        %v3330 = vunpack.c.h.b16 %v823
        %v3331 = vunpack.c.l.b16 %v824
        %v3332 = vunpack.c.h.b16 %v824
        %v3333 = vunpack.c.l.b16 %v825
        %v3334 = vunpack.c.h.b16 %v825
        %v3335 = vunpack.c.l.b16 %v826
        %v3336 = vunpack.c.h.b16 %v826
        %v3337 = vunpack.c.l.b16 %v827
        %v3338 = vunpack.c.h.b16 %v827
        %v3339 = vunpack.c.l.b16 %v828
        %v3340 = vunpack.c.h.b16 %v828
        %v3341 = vunpack.c.l.b16 %v829
        %v3342 = vunpack.c.h.b16 %v829
        %v3343 = vunpack.c.l.b16 %v830
        %v3344 = vunpack.c.h.b16 %v830
        %v3345 = vunpack.c.l.b16 %v831
        %v3346 = vunpack.c.h.b16 %v831
        %v3347 = vunpack.c.l.b16 %v832
        %v3348 = vunpack.c.h.b16 %v832
        %v3349 = vunpack.c.l.b16 %v833
        %v3350 = vunpack.c.h.b16 %v833
        %v3351 = vunpack.c.l.b16 %v834
        %v3352 = vunpack.c.h.b16 %v834
        %v3353 = vunpack.c.l.b16 %v835
        %v3354 = vunpack.c.h.b16 %v835
        %v3355 = vunpack.c.l.b16 %v836
        %v3356 = vunpack.c.h.b16 %v836
        %v3357 = vunpack.c.l.b16 %v837
        %v3358 = vunpack.c.h.b16 %v837
        %v3359 = vunpack.c.l.b16 %v838
        %v3360 = vunpack.c.h.b16 %v838
        %v3361 = vunpack.c.l.b16 %v839
        %v3362 = vunpack.c.h.b16 %v839
        %v3363 = vunpack.c.l.b16 %v840
        %v3364 = vunpack.c.h.b16 %v840
        %v3365 = vunpack.c.l.b16 %v841
        %v3366 = vunpack.c.h.b16 %v841
        %v3367 = vunpack.c.l.b16 %v842
        %v3368 = vunpack.c.h.b16 %v842
        %v3369 = vunpack.c.l.b16 %v843
        %v3370 = vunpack.c.h.b16 %v843
        %v3371 = vunpack.c.l.b16 %v844
        %v3372 = vunpack.c.h.b16 %v844
        %v3373 = vunpack.c.l.b16 %v845
        %v3374 = vunpack.c.h.b16 %v845
        %v3375 = vunpack.c.l.b16 %v846
        %v3376 = vunpack.c.h.b16 %v846
        %v3377 = vunpack.c.l.b16 %v847
        %v3378 = vunpack.c.h.b16 %v847
        %v3379 = vunpack.c.l.b16 %v848
        %v3380 = vunpack.c.h.b16 %v848
        %v3381 = vunpack.c.l.b16 %v849
        %v3382 = vunpack.c.h.b16 %v849
        %v3383 = vunpack.c.l.b16 %v850
        %v3384 = vunpack.c.h.b16 %v850
        %v3385 = vunpack.c.l.b16 %v851
        %v3386 = vunpack.c.h.b16 %v851
        %v3387 = vunpack.c.l.b16 %v852
        %v3388 = vunpack.c.h.b16 %v852
        %v3389 = vunpack.c.l.b16 %v853
        %v3390 = vunpack.c.h.b16 %v853
        %v3391 = vunpack.c.l.b16 %v854
        %v3392 = vunpack.c.h.b16 %v854
        %v3393 = vunpack.c.l.b16 %v855
        %v3394 = vunpack.c.h.b16 %v855
        %v3395 = vunpack.c.l.b16 %v856
        %v3396 = vunpack.c.h.b16 %v856
        %v3397 = vunpack.c.l.b16 %v857
        %v3398 = vunpack.c.h.b16 %v857
        %v3399 = vunpack.c.l.b16 %v858
        %v3400 = vunpack.c.h.b16 %v858
        %v3401 = vunpack.c.l.b16 %v859
        %v3402 = vunpack.c.h.b16 %v859
        %v3403 = vunpack.c.l.b16 %v860
        %v3404 = vunpack.c.h.b16 %v860
        %v3405 = vunpack.c.l.b16 %v861
        %v3406 = vunpack.c.h.b16 %v861
        %v3407 = vunpack.c.l.b16 %v862
        %v3408 = vunpack.c.h.b16 %v862
        %v3409 = vunpack.c.l.b16 %v863
        %v3410 = vunpack.c.h.b16 %v863
        %v3411 = vunpack.c.l.b16 %v864
        %v3412 = vunpack.c.h.b16 %v864
        %v3413 = vunpack.c.l.b16 %v865
        %v3414 = vunpack.c.h.b16 %v865
        %v3415 = vunpack.c.l.b16 %v866
        %v3416 = vunpack.c.h.b16 %v866
        %v3417 = vunpack.c.l.b16 %v867
        %v3418 = vunpack.c.h.b16 %v867
        %v3419 = vunpack.c.l.b16 %v868
        %v3420 = vunpack.c.h.b16 %v868
        %v3421 = vunpack.c.l.b16 %v869
        %v3422 = vunpack.c.h.b16 %v869
        %v3423 = vunpack.c.l.b16 %v870
        %v3424 = vunpack.c.h.b16 %v870
        %v3425 = vunpack.c.l.b16 %v871
        %v3426 = vunpack.c.h.b16 %v871
        %v3427 = vunpack.c.l.b16 %v872
        %v3428 = vunpack.c.h.b16 %v872
        %v3429 = vunpack.c.l.b16 %v873
        %v3430 = vunpack.c.h.b16 %v873
        %v3431 = vunpack.c.l.b16 %v874
        %v3432 = vunpack.c.h.b16 %v874
        %v3433 = vunpack.c.l.b16 %v875
        %v3434 = vunpack.c.h.b16 %v875
        %v3435 = vunpack.c.l.b16 %v876
        %v3436 = vunpack.c.h.b16 %v876
        %v3437 = vunpack.c.l.b16 %v877
        %v3438 = vunpack.c.h.b16 %v877
        %v3439 = vunpack.c.l.b16 %v878
        %v3440 = vunpack.c.h.b16 %v878
        %v3441 = vunpack.c.l.b16 %v879
        %v3442 = vunpack.c.h.b16 %v879
        %v3443 = vunpack.c.l.b16 %v880
        %v3444 = vunpack.c.h.b16 %v880
        %v3445 = vunpack.c.l.b16 %v881
        %v3446 = vunpack.c.h.b16 %v881
        %v3447 = vunpack.c.l.b16 %v882
        %v3448 = vunpack.c.h.b16 %v882
        %v3449 = vunpack.c.l.b16 %v883
        %v3450 = vunpack.c.h.b16 %v883
        %v3451 = vunpack.c.l.b16 %v884
        %v3452 = vunpack.c.h.b16 %v884
        %v3453 = vunpack.c.l.b16 %v885
        %v3454 = vunpack.c.h.b16 %v885
        %v3455 = vunpack.c.l.b16 %v886
        %v3456 = vunpack.c.h.b16 %v886
        %v3457 = vunpack.c.l.b16 %v887
        %v3458 = vunpack.c.h.b16 %v887
        %v3459 = vunpack.c.l.b16 %v888
        %v3460 = vunpack.c.h.b16 %v888
        %v3461 = vunpack.c.l.b16 %v889
        %v3462 = vunpack.c.h.b16 %v889
        %v3463 = vunpack.c.l.b16 %v890
        %v3464 = vunpack.c.h.b16 %v890
        %v3465 = vunpack.c.l.b16 %v891
        %v3466 = vunpack.c.h.b16 %v891
        %v3467 = vunpack.c.l.b16 %v892
        %v3468 = vunpack.c.h.b16 %v892
        %v3469 = vunpack.c.l.b16 %v893
        %v3470 = vunpack.c.h.b16 %v893
        %v3471 = vunpack.c.l.b16 %v894
        %v3472 = vunpack.c.h.b16 %v894
        %v3473 = vunpack.c.l.b16 %v895
        %v3474 = vunpack.c.h.b16 %v895
        %v3475 = vunpack.c.l.b16 %v896
        %v3476 = vunpack.c.h.b16 %v896
        %v3477 = vunpack.c.l.b16 %v897
        %v3478 = vunpack.c.h.b16 %v897
        %v3479 = vunpack.c.l.b16 %v898
        %v3480 = vunpack.c.h.b16 %v898
        %v3481 = vunpack.c.l.b16 %v899
        %v3482 = vunpack.c.h.b16 %v899
        %v3483 = vunpack.c.l.b16 %v900
        %v3484 = vunpack.c.h.b16 %v900
        %v3485 = vunpack.c.l.b16 %v901
        %v3486 = vunpack.c.h.b16 %v901
        %v3487 = vunpack.c.l.b16 %v902
        %v3488 = vunpack.c.h.b16 %v902
        %v3489 = vunpack.c.l.b16 %v903
        %v3490 = vunpack.c.h.b16 %v903
        %v3491 = vunpack.c.l.b16 %v904
        %v3492 = vunpack.c.h.b16 %v904
        %v3493 = vunpack.c.l.b16 %v905
        %v3494 = vunpack.c.h.b16 %v905
        %v3495 = vunpack.c.l.b16 %v906
        %v3496 = vunpack.c.h.b16 %v906
        %v3497 = vunpack.c.l.b16 %v907
        %v3498 = vunpack.c.h.b16 %v907
        %v3499 = vunpack.c.l.b16 %v908
        %v3500 = vunpack.c.h.b16 %v908
        %v3501 = vunpack.c.l.b16 %v909
        %v3502 = vunpack.c.h.b16 %v909
        %v3503 = vunpack.c.l.b16 %v910
        %v3504 = vunpack.c.h.b16 %v910
        %v3505 = vunpack.c.l.b16 %v911
        %v3506 = vunpack.c.h.b16 %v911
        %v3507 = vunpack.c.l.b16 %v912
        %v3508 = vunpack.c.h.b16 %v912
        %v3509 = vunpack.c.l.b16 %v913
        %v3510 = vunpack.c.h.b16 %v913
        %v3511 = vunpack.c.l.b16 %v914
        %v3512 = vunpack.c.h.b16 %v914
        %v3513 = vunpack.c.l.b16 %v915
        %v3514 = vunpack.c.h.b16 %v915
        %v3515 = vunpack.c.l.b16 %v916
        %v3516 = vunpack.c.h.b16 %v916
        %v3517 = vunpack.c.l.b16 %v917
        %v3518 = vunpack.c.h.b16 %v917
        %v3519 = vunpack.c.l.b16 %v918
        %v3520 = vunpack.c.h.b16 %v918
        %v3521 = vunpack.c.l.b16 %v919
        %v3522 = vunpack.c.h.b16 %v919
        %v3523 = vunpack.c.l.b16 %v920
        %v3524 = vunpack.c.h.b16 %v920
        %v3525 = vunpack.c.l.b16 %v921
        %v3526 = vunpack.c.h.b16 %v921
        %v3527 = vunpack.c.l.b16 %v922
        %v3528 = vunpack.c.h.b16 %v922
        %v3529 = vunpack.c.l.b16 %v923
        %v3530 = vunpack.c.h.b16 %v923
        %v3531 = vunpack.c.l.b16 %v924
        %v3532 = vunpack.c.h.b16 %v924
        %v3533 = vunpack.c.l.b16 %v925
        %v3534 = vunpack.c.h.b16 %v925
        %v3535 = vunpack.c.l.b16 %v926
        %v3536 = vunpack.c.h.b16 %v926
        %v3537 = vunpack.c.l.b16 %v927
        %v3538 = vunpack.c.h.b16 %v927
        %v3539 = vunpack.c.l.b16 %v928
        %v3540 = vunpack.c.h.b16 %v928
        %v3541 = vunpack.c.l.b16 %v929
        %v3542 = vunpack.c.h.b16 %v929
        %v3543 = vunpack.c.l.b16 %v930
        %v3544 = vunpack.c.h.b16 %v930
        %v3545 = vunpack.c.l.b16 %v931
        %v3546 = vunpack.c.h.b16 %v931
        %v3547 = vunpack.c.l.b16 %v932
        %v3548 = vunpack.c.h.b16 %v932
        %v3549 = vunpack.c.l.b16 %v933
        %v3550 = vunpack.c.h.b16 %v933
        %v3551 = vunpack.c.l.b16 %v934
        %v3552 = vunpack.c.h.b16 %v934
        %v3553 = vunpack.c.l.b16 %v935
        %v3554 = vunpack.c.h.b16 %v935
        %v3555 = vunpack.c.l.b16 %v936
        %v3556 = vunpack.c.h.b16 %v936
        %v3557 = vunpack.c.l.b16 %v937
        %v3558 = vunpack.c.h.b16 %v937
        %v3559 = vunpack.c.l.b16 %v938
        %v3560 = vunpack.c.h.b16 %v938
        %v3561 = vunpack.c.l.b16 %v939
        %v3562 = vunpack.c.h.b16 %v939
        %v3563 = vunpack.c.l.b16 %v940
        %v3564 = vunpack.c.h.b16 %v940
        %v3565 = vunpack.c.l.b16 %v941
        %v3566 = vunpack.c.h.b16 %v941
        %v3567 = vunpack.c.l.b16 %v942
        %v3568 = vunpack.c.h.b16 %v942
        %v3569 = vunpack.c.l.b16 %v943
        %v3570 = vunpack.c.h.b16 %v943
        %v3571 = vunpack.c.l.b16 %v944
        %v3572 = vunpack.c.h.b16 %v944
        %v3573 = vunpack.c.l.b16 %v945
        %v3574 = vunpack.c.h.b16 %v945
        %v3575 = vunpack.c.l.b16 %v946
        %v3576 = vunpack.c.h.b16 %v946
        %v3577 = vunpack.c.l.b16 %v947
        %v3578 = vunpack.c.h.b16 %v947
        %v3579 = vunpack.c.l.b16 %v948
        %v3580 = vunpack.c.h.b16 %v948
        %v3581 = vunpack.c.l.b16 %v949
        %v3582 = vunpack.c.h.b16 %v949
        %v3583 = vunpack.c.l.b16 %v950
        %v3584 = vunpack.c.h.b16 %v950
        %v3585 = vunpack.c.l.b16 %v951
        %v3586 = vunpack.c.h.b16 %v951
        %v3587 = vunpack.c.l.b16 %v952
        %v3588 = vunpack.c.h.b16 %v952
        %v3589 = vunpack.c.l.b16 %v953
        %v3590 = vunpack.c.h.b16 %v953
        %v3591 = vunpack.c.l.b16 %v954
        %v3592 = vunpack.c.h.b16 %v954
        %v3593 = vunpack.c.l.b16 %v955
        %v3594 = vunpack.c.h.b16 %v955
        %v3595 = vunpack.c.l.b16 %v956
        %v3596 = vunpack.c.h.b16 %v956
        %v3597 = vunpack.c.l.b16 %v957
        %v3598 = vunpack.c.h.b16 %v957
        %v3599 = vunpack.c.l.b16 %v958
        %v3600 = vunpack.c.h.b16 %v958
        %v3601 = vunpack.c.l.b16 %v959
        %v3602 = vunpack.c.h.b16 %v959
        %v3603 = vunpack.c.l.b16 %v960
        %v3604 = vunpack.c.h.b16 %v960
        %v3605 = vunpack.c.l.b16 %v961
        %v3606 = vunpack.c.h.b16 %v961
        %v3607 = vunpack.c.l.b16 %v962
        %v3608 = vunpack.c.h.b16 %v962
        %v3609 = vunpack.c.l.b16 %v963
        %v3610 = vunpack.c.h.b16 %v963
        %v3611 = vunpack.c.l.b16 %v964
        %v3612 = vunpack.c.h.b16 %v964
        %v3613 = vunpack.c.l.b16 %v965
        %v3614 = vunpack.c.h.b16 %v965
        %v3615 = vunpack.c.l.b16 %v966
        %v3616 = vunpack.c.h.b16 %v966
        %v3617 = vunpack.c.l.b16 %v967
        %v3618 = vunpack.c.h.b16 %v967
        %v3619 = vunpack.c.l.b16 %v968
        %v3620 = vunpack.c.h.b16 %v968
        %v3621 = vunpack.c.l.b16 %v969
        %v3622 = vunpack.c.h.b16 %v969
        %v3623 = vunpack.c.l.b16 %v970
        %v3624 = vunpack.c.h.b16 %v970
        %v3625 = vunpack.c.l.b16 %v971
        %v3626 = vunpack.c.h.b16 %v971
        %v3627 = vunpack.c.l.b16 %v972
        %v3628 = vunpack.c.h.b16 %v972
        %v3629 = vunpack.c.l.b16 %v973
        %v3630 = vunpack.c.h.b16 %v973
        %v3631 = vunpack.c.l.b16 %v974
        %v3632 = vunpack.c.h.b16 %v974
        %v3633 = vunpack.c.l.b16 %v975
        %v3634 = vunpack.c.h.b16 %v975
        %v3635 = vunpack.c.l.b16 %v976
        %v3636 = vunpack.c.h.b16 %v976
        %v3637 = vunpack.c.l.b16 %v977
        %v3638 = vunpack.c.h.b16 %v977
        %v3639 = vunpack.c.l.b16 %v978
        %v3640 = vunpack.c.h.b16 %v978
        %v3641 = vunpack.c.l.b16 %v979
        %v3642 = vunpack.c.h.b16 %v979
        %v3643 = vunpack.c.l.b16 %v980
        %v3644 = vunpack.c.h.b16 %v980
        %v3645 = vunpack.c.l.b16 %v981
        %v3646 = vunpack.c.h.b16 %v981
        %v3647 = vunpack.c.l.b16 %v982
        %v3648 = vunpack.c.h.b16 %v982
        %v3649 = vunpack.c.l.b16 %v983
        %v3650 = vunpack.c.h.b16 %v983
        %v3651 = vunpack.c.l.b16 %v984
        %v3652 = vunpack.c.h.b16 %v984
        %v3653 = vunpack.c.l.b16 %v985
        %v3654 = vunpack.c.h.b16 %v985
        %v3655 = vunpack.c.l.b16 %v986
        %v3656 = vunpack.c.h.b16 %v986
        %v3657 = vunpack.c.l.b16 %v987
        %v3658 = vunpack.c.h.b16 %v987
        %v3659 = vunpack.c.l.b16 %v988
        %v3660 = vunpack.c.h.b16 %v988
        %v3661 = vunpack.c.l.b16 %v989
        %v3662 = vunpack.c.h.b16 %v989
        %v3663 = vunpack.c.l.b16 %v990
        %v3664 = vunpack.c.h.b16 %v990
        %v3665 = vunpack.c.l.b16 %v991
        %v3666 = vunpack.c.h.b16 %v991
        %v3667 = vunpack.c.l.b16 %v992
        %v3668 = vunpack.c.h.b16 %v992
        %v3669 = vunpack.c.l.b16 %v993
        %v3670 = vunpack.c.h.b16 %v993
        %v3671 = vunpack.c.l.b16 %v994
        %v3672 = vunpack.c.h.b16 %v994
        %v3673 = vunpack.c.l.b16 %v995
        %v3674 = vunpack.c.h.b16 %v995
        %v3675 = vunpack.c.l.b16 %v996
        %v3676 = vunpack.c.h.b16 %v996
        %v3677 = vunpack.c.l.b16 %v997
        %v3678 = vunpack.c.h.b16 %v997
        %v3679 = vunpack.c.l.b16 %v998
        %v3680 = vunpack.c.h.b16 %v998
        %v3681 = vunpack.c.l.b16 %v999
        %v3682 = vunpack.c.h.b16 %v999
        %v3683 = vunpack.c.l.b16 %v1000
        %v3684 = vunpack.c.h.b16 %v1000
        %v3685 = vunpack.c.l.b16 %v1001
        %v3686 = vunpack.c.h.b16 %v1001
        %v3687 = vunpack.c.l.b16 %v1002
        %v3688 = vunpack.c.h.b16 %v1002
        %v3689 = vunpack.c.l.b16 %v1003
        %v3690 = vunpack.c.h.b16 %v1003
        %v3691 = vunpack.c.l.b16 %v1004
        %v3692 = vunpack.c.h.b16 %v1004
        %v3693 = vunpack.c.l.b16 %v1005
        %v3694 = vunpack.c.h.b16 %v1005
        %v3695 = vunpack.c.l.b16 %v1006
        %v3696 = vunpack.c.h.b16 %v1006
        %v3697 = vunpack.c.l.b16 %v1007
        %v3698 = vunpack.c.h.b16 %v1007
        %v3699 = vunpack.c.l.b16 %v1008
        %v3700 = vunpack.c.h.b16 %v1008
        %v3701 = vunpack.c.l.b16 %v1009
        %v3702 = vunpack.c.h.b16 %v1009
        %v3703 = vunpack.c.l.b16 %v1010
        %v3704 = vunpack.c.h.b16 %v1010
        %v3705 = vunpack.c.l.b16 %v1011
        %v3706 = vunpack.c.h.b16 %v1011
        %v3707 = vunpack.c.l.b16 %v1012
        %v3708 = vunpack.c.h.b16 %v1012
        %v3709 = vunpack.c.l.b16 %v1013
        %v3710 = vunpack.c.h.b16 %v1013
        %v3711 = vunpack.c.l.b16 %v1014
        %v3712 = vunpack.c.h.b16 %v1014
        %v3713 = vunpack.c.l.b16 %v1015
        %v3714 = vunpack.c.h.b16 %v1015
        %v3715 = vunpack.c.l.b16 %v1016
        %v3716 = vunpack.c.h.b16 %v1016
        %v3717 = vunpack.c.l.b16 %v1017
        %v3718 = vunpack.c.h.b16 %v1017
        %v3719 = vunpack.c.l.b16 %v1018
        %v3720 = vunpack.c.h.b16 %v1018
        %v3721 = vunpack.c.l.b16 %v1019
        %v3722 = vunpack.c.h.b16 %v1019
        %v3723 = vunpack.c.l.b16 %v1020
        %v3724 = vunpack.c.h.b16 %v1020
        %v3725 = vunpack.c.l.b16 %v1021
        %v3726 = vunpack.c.h.b16 %v1021
        %v3727 = vunpack.c.l.b16 %v1022
        %v3728 = vunpack.c.h.b16 %v1022
        %v3729 = vunpack.c.l.b16 %v1023
        %v3730 = vunpack.c.h.b16 %v1023
        %v3731 = vunpack.c.l.b16 %v1024
        %v3732 = vunpack.c.h.b16 %v1024
        %v3733 = vunpack.c.l.b16 %v1025
        %v3734 = vunpack.c.h.b16 %v1025
        %v3735 = vunpack.c.l.b16 %v1026
        %v3736 = vunpack.c.h.b16 %v1026
        %v3737 = vunpack.c.l.b16 %v1027
        %v3738 = vunpack.c.h.b16 %v1027
        %v3739 = vunpack.c.l.b16 %v1028
        %v3740 = vunpack.c.h.b16 %v1028
        %v3741 = vunpack.c.l.b16 %v1029
        %v3742 = vunpack.c.h.b16 %v1029
        %v3743 = vunpack.c.l.b16 %v1030
        %v3744 = vunpack.c.h.b16 %v1030
        %v3745 = vunpack.c.l.b16 %v1031
        %v3746 = vunpack.c.h.b16 %v1031
        %v3747 = vunpack.c.l.b16 %v1032
        %v3748 = vunpack.c.h.b16 %v1032
        %v3749 = vunpack.c.l.b16 %v1033
        %v3750 = vunpack.c.h.b16 %v1033
        %v3751 = vunpack.c.l.b16 %v1034
        %v3752 = vunpack.c.h.b16 %v1034
        %v3753 = vunpack.c.l.b16 %v1035
        %v3754 = vunpack.c.h.b16 %v1035
        %v3755 = vunpack.c.l.b16 %v1036
        %v3756 = vunpack.c.h.b16 %v1036
        %v3757 = vunpack.c.l.b16 %v1037
        %v3758 = vunpack.c.h.b16 %v1037
        %v3759 = vunpack.c.l.b16 %v1038
        %v3760 = vunpack.c.h.b16 %v1038
        %v3761 = vunpack.c.l.b16 %v1039
        %v3762 = vunpack.c.h.b16 %v1039
        %v3763 = vunpack.c.l.b16 %v1040
        %v3764 = vunpack.c.h.b16 %v1040
        %v3765 = vunpack.c.l.b16 %v1041
        %v3766 = vunpack.c.h.b16 %v1041
        %v3767 = vunpack.c.l.b16 %v1042
        %v3768 = vunpack.c.h.b16 %v1042
        %v3769 = vunpack.c.l.b16 %v1043
        %v3770 = vunpack.c.h.b16 %v1043
        %v3771 = vunpack.c.l.b16 %v1044
        %v3772 = vunpack.c.h.b16 %v1044
        %v3773 = vunpack.c.l.b16 %v1045
        %v3774 = vunpack.c.h.b16 %v1045
        %v3775 = vunpack.c.l.b16 %v1046
        %v3776 = vunpack.c.h.b16 %v1046
        %v3777 = vunpack.c.l.b16 %v1047
        %v3778 = vunpack.c.h.b16 %v1047
        %v3779 = vunpack.c.l.b16 %v1048
        %v3780 = vunpack.c.h.b16 %v1048
        %v3781 = vunpack.c.l.b16 %v1049
        %v3782 = vunpack.c.h.b16 %v1049
        %v3783 = vunpack.c.l.b16 %v1050
        %v3784 = vunpack.c.h.b16 %v1050
        %v3785 = vunpack.c.l.b16 %v1051
        %v3786 = vunpack.c.h.b16 %v1051
        %v3787 = vunpack.c.l.b16 %v1052
        %v3788 = vunpack.c.h.b16 %v1052
        %v3789 = vunpack.c.l.b16 %v1053
        %v3790 = vunpack.c.h.b16 %v1053
        %v3791 = vunpack.c.l.b16 %v1054
        %v3792 = vunpack.c.h.b16 %v1054
        %v3793 = vunpack.c.l.b16 %v1055
        %v3794 = vunpack.c.h.b16 %v1055
        %v3795 = vunpack.c.l.b16 %v1056
        %v3796 = vunpack.c.h.b16 %v1056
        %v3797 = vunpack.c.l.b16 %v1057
        %v3798 = vunpack.c.h.b16 %v1057
        %v3799 = vunpack.c.l.b16 %v1058
        %v3800 = vunpack.c.h.b16 %v1058
        %v3801 = vunpack.c.l.b16 %v1059
        %v3802 = vunpack.c.h.b16 %v1059
        %v3803 = vunpack.c.l.b16 %v1060
        %v3804 = vunpack.c.h.b16 %v1060
        %v3805 = vunpack.c.l.b16 %v1061
        %v3806 = vunpack.c.h.b16 %v1061
        %v3807 = vunpack.c.l.b16 %v1062
        %v3808 = vunpack.c.h.b16 %v1062
        %v3809 = vunpack.c.l.b16 %v1063
        %v3810 = vunpack.c.h.b16 %v1063
        %v3811 = vunpack.c.l.b16 %v1064
        %v3812 = vunpack.c.h.b16 %v1064
        %v3813 = vunpack.c.l.b16 %v1065
        %v3814 = vunpack.c.h.b16 %v1065
        %v3815 = vunpack.c.l.b16 %v1066
        %v3816 = vunpack.c.h.b16 %v1066
        %v3817 = vunpack.c.l.b16 %v1067
        %v3818 = vunpack.c.h.b16 %v1067
        %v3819 = vunpack.c.l.b16 %v1068
        %v3820 = vunpack.c.h.b16 %v1068
        %v3821 = vunpack.c.l.b16 %v1069
        %v3822 = vunpack.c.h.b16 %v1069
        %v3823 = vunpack.c.l.b16 %v1070
        %v3824 = vunpack.c.h.b16 %v1070
        %v3825 = vunpack.c.l.b16 %v1071
        %v3826 = vunpack.c.h.b16 %v1071
        %v3827 = vunpack.c.l.b16 %v1072
        %v3828 = vunpack.c.h.b16 %v1072
        %v3829 = vunpack.c.l.b16 %v1073
        %v3830 = vunpack.c.h.b16 %v1073
        %v3831 = vunpack.c.l.b16 %v1074
        %v3832 = vunpack.c.h.b16 %v1074
        %v3833 = vunpack.c.l.b16 %v1075
        %v3834 = vunpack.c.h.b16 %v1075
        %v3835 = vunpack.c.l.b16 %v1076
        %v3836 = vunpack.c.h.b16 %v1076
        %v3837 = vunpack.c.l.b16 %v1077
        %v3838 = vunpack.c.h.b16 %v1077
        %v3839 = vunpack.c.l.b16 %v1078
        %v3840 = vunpack.c.h.b16 %v1078
        %v3841 = vunpack.c.l.b16 %v1079
        %v3842 = vunpack.c.h.b16 %v1079
        %v3843 = vunpack.c.l.b16 %v1080
        %v3844 = vunpack.c.h.b16 %v1080
        %v3845 = vunpack.c.l.b16 %v1081
        %v3846 = vunpack.c.h.b16 %v1081
        %v3847 = vunpack.c.l.b16 %v1082
        %v3848 = vunpack.c.h.b16 %v1082
        %v3849 = vunpack.c.l.b16 %v1083
        %v3850 = vunpack.c.h.b16 %v1083
        %v3851 = vunpack.c.l.b16 %v1084
        %v3852 = vunpack.c.h.b16 %v1084
        %v3853 = vunpack.c.l.b16 %v1085
        %v3854 = vunpack.c.h.b16 %v1085
        %v3855 = vunpack.c.l.b16 %v1086
        %v3856 = vunpack.c.h.b16 %v1086
        %v3857 = vunpack.c.l.b16 %v1087
        %v3858 = vunpack.c.h.b16 %v1087
        %v3859 = vunpack.c.l.b16 %v1088
        %v3860 = vunpack.c.h.b16 %v1088
        %v3861 = vunpack.c.l.b16 %v1089
        %v3862 = vunpack.c.h.b16 %v1089
        %v3863 = vunpack.c.l.b16 %v1090
        %v3864 = vunpack.c.h.b16 %v1090
        %v3865 = vunpack.c.l.b16 %v1091
        %v3866 = vunpack.c.h.b16 %v1091
        %v3867 = vunpack.c.l.b16 %v1092
        %v3868 = vunpack.c.h.b16 %v1092
        %v3869 = vunpack.c.l.b16 %v1093
        %v3870 = vunpack.c.h.b16 %v1093
        %v3871 = vunpack.c.l.b16 %v1094
        %v3872 = vunpack.c.h.b16 %v1094
        %v3873 = vunpack.c.l.b16 %v1095
        %v3874 = vunpack.c.h.b16 %v1095
        %v3875 = vunpack.c.l.b16 %v1096
        %v3876 = vunpack.c.h.b16 %v1096
        %v3877 = vunpack.c.l.b16 %v1097
        %v3878 = vunpack.c.h.b16 %v1097
        %v3879 = vunpack.c.l.b16 %v1098
        %v3880 = vunpack.c.h.b16 %v1098
        %v3881 = vunpack.c.l.b16 %v1099
        %v3882 = vunpack.c.h.b16 %v1099
        %v3883 = vunpack.c.l.b16 %v1100
        %v3884 = vunpack.c.h.b16 %v1100
        %v3885 = vunpack.c.l.b16 %v1101
        %v3886 = vunpack.c.h.b16 %v1101
        %v3887 = vunpack.c.l.b16 %v1102
        %v3888 = vunpack.c.h.b16 %v1102
        %v3889 = vunpack.c.l.b16 %v1103
        %v3890 = vunpack.c.h.b16 %v1103
        %v3891 = vunpack.c.l.b16 %v1104
        %v3892 = vunpack.c.h.b16 %v1104
        %v3893 = vunpack.c.l.b16 %v1105
        %v3894 = vunpack.c.h.b16 %v1105
        %v3895 = vunpack.c.l.b16 %v1106
        %v3896 = vunpack.c.h.b16 %v1106
        %v3897 = vunpack.c.l.b16 %v1107
        %v3898 = vunpack.c.h.b16 %v1107
        %v3899 = vunpack.c.l.b16 %v1108
        %v3900 = vunpack.c.h.b16 %v1108
        %v3901 = vunpack.c.l.b16 %v1109
        %v3902 = vunpack.c.h.b16 %v1109
        %v3903 = vunpack.c.l.b16 %v1110
        %v3904 = vunpack.c.h.b16 %v1110
        %v3905 = vunpack.c.l.b16 %v1111
        %v3906 = vunpack.c.h.b16 %v1111
        %v3907 = vunpack.c.l.b16 %v1112
        %v3908 = vunpack.c.h.b16 %v1112
        %v3909 = vunpack.c.l.b16 %v1113
        %v3910 = vunpack.c.h.b16 %v1113
        %v3911 = vunpack.c.l.b16 %v1114
        %v3912 = vunpack.c.h.b16 %v1114
        %v3913 = vunpack.c.l.b16 %v1115
        %v3914 = vunpack.c.h.b16 %v1115
        %v3915 = vunpack.c.l.b16 %v1116
        %v3916 = vunpack.c.h.b16 %v1116
        %v3917 = vunpack.c.l.b16 %v1117
        %v3918 = vunpack.c.h.b16 %v1117
        %v3919 = vunpack.c.l.b16 %v1118
        %v3920 = vunpack.c.h.b16 %v1118
        %v3921 = vunpack.c.l.b16 %v1119
        %v3922 = vunpack.c.h.b16 %v1119
        %v3923 = vunpack.c.l.b16 %v1120
        %v3924 = vunpack.c.h.b16 %v1120
        %v3925 = vunpack.c.l.b16 %v1121
        %v3926 = vunpack.c.h.b16 %v1121
        %v3927 = vunpack.c.l.b16 %v1122
        %v3928 = vunpack.c.h.b16 %v1122
        %v3929 = vunpack.c.l.b16 %v1123
        %v3930 = vunpack.c.h.b16 %v1123
        %v3931 = vunpack.c.l.b16 %v1124
        %v3932 = vunpack.c.h.b16 %v1124
        %v3933 = vunpack.c.l.b16 %v1125
        %v3934 = vunpack.c.h.b16 %v1125
        %v3935 = vunpack.c.l.b16 %v1126
        %v3936 = vunpack.c.h.b16 %v1126
        %v3937 = vunpack.c.l.b16 %v1127
        %v3938 = vunpack.c.h.b16 %v1127
        %v3939 = vunpack.c.l.b16 %v1128
        %v3940 = vunpack.c.h.b16 %v1128
        %v3941 = vunpack.c.l.b16 %v1129
        %v3942 = vunpack.c.h.b16 %v1129
        %v3943 = vunpack.c.l.b16 %v1130
        %v3944 = vunpack.c.h.b16 %v1130
        %v3945 = vunpack.c.l.b16 %v1131
        %v3946 = vunpack.c.h.b16 %v1131
        %v3947 = vunpack.c.l.b16 %v1132
        %v3948 = vunpack.c.h.b16 %v1132
        %v3949 = vunpack.c.l.b16 %v1133
        %v3950 = vunpack.c.h.b16 %v1133
        %v3951 = vunpack.c.l.b16 %v1134
        %v3952 = vunpack.c.h.b16 %v1134
        %v3953 = vunpack.c.l.b16 %v1135
        %v3954 = vunpack.c.h.b16 %v1135
        %v3955 = vunpack.c.l.b16 %v1136
        %v3956 = vunpack.c.h.b16 %v1136
        %v3957 = vunpack.c.l.b16 %v1137
        %v3958 = vunpack.c.h.b16 %v1137
        %v3959 = vunpack.c.l.b16 %v1138
        %v3960 = vunpack.c.h.b16 %v1138
        %v3961 = vunpack.c.l.b16 %v1139
        %v3962 = vunpack.c.h.b16 %v1139
        %v3963 = vunpack.c.l.b16 %v1140
        %v3964 = vunpack.c.h.b16 %v1140
        %v3965 = vunpack.c.l.b16 %v1141
        %v3966 = vunpack.c.h.b16 %v1141
        %v3967 = vunpack.c.l.b16 %v1142
        %v3968 = vunpack.c.h.b16 %v1142
        %v3969 = vunpack.c.l.b16 %v1143
        %v3970 = vunpack.c.h.b16 %v1143
        %v3971 = vunpack.c.l.b16 %v1144
        %v3972 = vunpack.c.h.b16 %v1144
        %v3973 = vunpack.c.l.b16 %v1145
        %v3974 = vunpack.c.h.b16 %v1145
        %v3975 = vunpack.c.l.b16 %v1146
        %v3976 = vunpack.c.h.b16 %v1146
        %v3977 = vunpack.c.l.b16 %v1147
        %v3978 = vunpack.c.h.b16 %v1147
        %v3979 = vunpack.c.l.b16 %v1148
        %v3980 = vunpack.c.h.b16 %v1148
        %v3981 = vunpack.c.l.b16 %v1149
        %v3982 = vunpack.c.h.b16 %v1149
        %v3983 = vunpack.c.l.b16 %v1150
        %v3984 = vunpack.c.h.b16 %v1150
        %v3985 = vunpack.c.l.b16 %v1151
        %v3986 = vunpack.c.h.b16 %v1151
        %v3987 = vunpack.c.l.b16 %v1152
        %v3988 = vunpack.c.h.b16 %v1152
        %v3989 = vunpack.c.l.b16 %v1153
        %v3990 = vunpack.c.h.b16 %v1153
        %v3991 = vunpack.c.l.b16 %v1154
        %v3992 = vunpack.c.h.b16 %v1154
        %v3993 = vunpack.c.l.b16 %v1155
        %v3994 = vunpack.c.h.b16 %v1155
        %v3995 = vunpack.c.l.b16 %v1156
        %v3996 = vunpack.c.h.b16 %v1156
        %v3997 = vunpack.c.l.b16 %v1157
        %v3998 = vunpack.c.h.b16 %v1157
        %v3999 = vunpack.c.l.b16 %v1158
        %v4000 = vunpack.c.h.b16 %v1158
        %v4001 = vunpack.c.l.b16 %v1159
        %v4002 = vunpack.c.h.b16 %v1159
        %v4003 = vunpack.c.l.b16 %v1160
        %v4004 = vunpack.c.h.b16 %v1160
        %v4005 = vunpack.c.l.b16 %v1161
        %v4006 = vunpack.c.h.b16 %v1161
        %v4007 = vunpack.c.l.b16 %v1162
        %v4008 = vunpack.c.h.b16 %v1162
        %v4009 = vunpack.c.l.b16 %v1163
        %v4010 = vunpack.c.h.b16 %v1163
        %v4011 = vunpack.c.l.b16 %v1164
        %v4012 = vunpack.c.h.b16 %v1164
        %v4013 = vunpack.c.l.b16 %v1165
        %v4014 = vunpack.c.h.b16 %v1165
        %v4015 = vunpack.c.l.b16 %v1166
        %v4016 = vunpack.c.h.b16 %v1166
        %v4017 = vunpack.c.l.b16 %v1167
        %v4018 = vunpack.c.h.b16 %v1167
        %v4019 = vunpack.c.l.b16 %v1168
        %v4020 = vunpack.c.h.b16 %v1168
        %v4021 = vunpack.c.l.b16 %v1169
        %v4022 = vunpack.c.h.b16 %v1169
        %v4023 = vunpack.c.l.b16 %v1170
        %v4024 = vunpack.c.h.b16 %v1170
        %v4025 = vunpack.c.l.b16 %v1171
        %v4026 = vunpack.c.h.b16 %v1171
        %v4027 = vunpack.c.l.b16 %v1172
        %v4028 = vunpack.c.h.b16 %v1172
        %v4029 = vunpack.c.l.b16 %v1173
        %v4030 = vunpack.c.h.b16 %v1173
        %v4031 = vunpack.c.l.b16 %v1174
        %v4032 = vunpack.c.h.b16 %v1174
        %v4033 = vunpack.c.l.b16 %v1175
        %v4034 = vunpack.c.h.b16 %v1175
        %v4035 = vunpack.c.l.b16 %v1176
        %v4036 = vunpack.c.h.b16 %v1176
        %v4037 = vunpack.c.l.b16 %v1177
        %v4038 = vunpack.c.h.b16 %v1177
        %v4039 = vunpack.c.l.b16 %v1178
        %v4040 = vunpack.c.h.b16 %v1178
        %v4041 = vunpack.c.l.b16 %v1179
        %v4042 = vunpack.c.h.b16 %v1179
        %v4043 = vunpack.c.l.b16 %v1180
        %v4044 = vunpack.c.h.b16 %v1180
        %v4045 = vunpack.c.l.b16 %v1181
        %v4046 = vunpack.c.h.b16 %v1181
        %v4047 = vunpack.c.l.b16 %v1182
        %v4048 = vunpack.c.h.b16 %v1182
        %v4049 = vunpack.c.l.b16 %v1183
        %v4050 = vunpack.c.h.b16 %v1183
        %v4051 = vunpack.c.l.b16 %v1184
        %v4052 = vunpack.c.h.b16 %v1184
        %v4053 = vunpack.c.l.b16 %v1185
        %v4054 = vunpack.c.h.b16 %v1185
        %v4055 = vunpack.c.l.b16 %v1186
        %v4056 = vunpack.c.h.b16 %v1186
        %v4057 = vunpack.c.l.b16 %v1187
        %v4058 = vunpack.c.h.b16 %v1187
        %v4059 = vunpack.c.l.b16 %v1188
        %v4060 = vunpack.c.h.b16 %v1188
        %v4061 = vunpack.c.l.b16 %v1189
        %v4062 = vunpack.c.h.b16 %v1189
        %v4063 = vunpack.c.l.b16 %v1190
        %v4064 = vunpack.c.h.b16 %v1190
        %v4065 = vunpack.c.l.b16 %v1191
        %v4066 = vunpack.c.h.b16 %v1191
        %v4067 = vunpack.c.l.b16 %v1192
        %v4068 = vunpack.c.h.b16 %v1192
        %v4069 = vunpack.c.l.b16 %v1193
        %v4070 = vunpack.c.h.b16 %v1193
        %v4071 = vunpack.c.l.b16 %v1194
        %v4072 = vunpack.c.h.b16 %v1194
        %v4073 = vunpack.c.l.b16 %v1195
        %v4074 = vunpack.c.h.b16 %v1195
        %v4075 = vunpack.c.l.b16 %v1196
        %v4076 = vunpack.c.h.b16 %v1196
        %v4077 = vunpack.c.l.b16 %v1197
        %v4078 = vunpack.c.h.b16 %v1197
        %v4079 = vunpack.c.l.b16 %v1198
        %v4080 = vunpack.c.h.b16 %v1198
        %v4081 = vunpack.c.l.b16 %v1199
        %v4082 = vunpack.c.h.b16 %v1199
        %v4083 = vunpack.c.l.b16 %v1200
        %v4084 = vunpack.c.h.b16 %v1200
        %v4085 = vunpack.c.l.b16 %v1201
        %v4086 = vunpack.c.h.b16 %v1201
        %v4087 = vunpack.c.l.b16 %v1202
        %v4088 = vunpack.c.h.b16 %v1202
        %v4089 = vunpack.c.l.b16 %v1203
        %v4090 = vunpack.c.h.b16 %v1203
        %v4091 = vunpack.c.l.b16 %v1204
        %v4092 = vunpack.c.h.b16 %v1204
        %v4093 = vunpack.c.l.b16 %v1205
        %v4094 = vunpack.c.h.b16 %v1205
        %v4095 = vunpack.c.l.b16 %v1206
        %v4096 = vunpack.c.h.b16 %v1206
        %v4097 = vunpack.c.l.b16 %v1207
        %v4098 = vunpack.c.h.b16 %v1207
        %v4099 = vunpack.c.l.b16 %v1208
        %v4100 = vunpack.c.h.b16 %v1208
        %v4101 = vunpack.c.l.b16 %v1209
        %v4102 = vunpack.c.h.b16 %v1209
        %v4103 = vunpack.c.l.b16 %v1210
        %v4104 = vunpack.c.h.b16 %v1210
        %v4105 = vunpack.c.l.b16 %v1211
        %v4106 = vunpack.c.h.b16 %v1211
        %v4107 = vunpack.c.l.b16 %v1212
        %v4108 = vunpack.c.h.b16 %v1212
        %v4109 = vunpack.c.l.b16 %v1213
        %v4110 = vunpack.c.h.b16 %v1213
        %v4111 = vunpack.c.l.b16 %v1214
        %v4112 = vunpack.c.h.b16 %v1214
        %v4113 = vunpack.c.l.b16 %v1215
        %v4114 = vunpack.c.h.b16 %v1215
        %v4115 = vunpack.c.l.b16 %v1216
        %v4116 = vunpack.c.h.b16 %v1216
        %v4117 = vunpack.c.l.b16 %v1217
        %v4118 = vunpack.c.h.b16 %v1217
        %v4119 = vunpack.c.l.b16 %v1218
        %v4120 = vunpack.c.h.b16 %v1218
        %v4121 = vunpack.c.l.b16 %v1219
        %v4122 = vunpack.c.h.b16 %v1219
        %v4123 = vunpack.c.l.b16 %v1220
        %v4124 = vunpack.c.h.b16 %v1220
        %v4125 = vunpack.c.l.b16 %v1221
        %v4126 = vunpack.c.h.b16 %v1221
        %v4127 = vunpack.c.l.b16 %v1222
        %v4128 = vunpack.c.h.b16 %v1222
        %v4129 = vunpack.c.l.b16 %v1223
        %v4130 = vunpack.c.h.b16 %v1223
        %v4131 = vunpack.c.l.b16 %v1224
        %v4132 = vunpack.c.h.b16 %v1224
        %v4133 = vunpack.c.l.b16 %v1225
        %v4134 = vunpack.c.h.b16 %v1225
        %v4135 = vunpack.c.l.b16 %v1226
        %v4136 = vunpack.c.h.b16 %v1226
        %v4137 = vunpack.c.l.b16 %v1227
        %v4138 = vunpack.c.h.b16 %v1227
        %v4139 = vunpack.c.l.b16 %v1228
        %v4140 = vunpack.c.h.b16 %v1228
        %v4141 = vunpack.c.l.b16 %v1229
        %v4142 = vunpack.c.h.b16 %v1229
        %v4143 = vunpack.c.l.b16 %v1230
        %v4144 = vunpack.c.h.b16 %v1230
        %v4145 = vunpack.c.l.b16 %v1231
        %v4146 = vunpack.c.h.b16 %v1231
        %v4147 = vunpack.c.l.b16 %v1232
        %v4148 = vunpack.c.h.b16 %v1232
        %v4149 = vunpack.c.l.b16 %v1233
        %v4150 = vunpack.c.h.b16 %v1233
        %v4151 = vunpack.c.l.b16 %v1234
        %v4152 = vunpack.c.h.b16 %v1234
        %v4153 = vunpack.c.l.b16 %v1235
        %v4154 = vunpack.c.h.b16 %v1235
        %v4155 = vunpack.c.l.b16 %v1236
        %v4156 = vunpack.c.h.b16 %v1236
        %v4157 = vunpack.c.l.b16 %v1237
        %v4158 = vunpack.c.h.b16 %v1237
        %v4159 = vunpack.c.l.b16 %v1238
        %v4160 = vunpack.c.h.b16 %v1238
        %v4161 = vunpack.c.l.b16 %v1239
        %v4162 = vunpack.c.h.b16 %v1239
        %v4163 = vunpack.c.l.b16 %v1240
        %v4164 = vunpack.c.h.b16 %v1240
        %v4165 = vunpack.c.l.b16 %v1241
        %v4166 = vunpack.c.h.b16 %v1241
        %v4167 = vunpack.c.l.b16 %v1242
        %v4168 = vunpack.c.h.b16 %v1242
        %v4169 = vunpack.c.l.b16 %v1243
        %v4170 = vunpack.c.h.b16 %v1243
        %v4171 = vunpack.c.l.b16 %v1244
        %v4172 = vunpack.c.h.b16 %v1244
        %v4173 = vunpack.c.l.b16 %v1245
        %v4174 = vunpack.c.h.b16 %v1245
        %v4175 = vunpack.c.l.b16 %v1246
        %v4176 = vunpack.c.h.b16 %v1246
        %v4177 = vunpack.c.l.b16 %v1247
        %v4178 = vunpack.c.h.b16 %v1247
        %v4179 = vunpack.c.l.b16 %v1248
        %v4180 = vunpack.c.h.b16 %v1248
        %v4181 = vunpack.c.l.b16 %v1249
        %v4182 = vunpack.c.h.b16 %v1249
        %v4183 = vunpack.c.l.b16 %v1250
        %v4184 = vunpack.c.h.b16 %v1250
        %v4185 = vunpack.c.l.b16 %v1251
        %v4186 = vunpack.c.h.b16 %v1251
        %v4187 = vunpack.c.l.b16 %v1252
        %v4188 = vunpack.c.h.b16 %v1252
        %v4189 = vunpack.c.l.b16 %v1253
        %v4190 = vunpack.c.h.b16 %v1253
        %v4191 = vunpack.c.l.b16 %v1254
        %v4192 = vunpack.c.h.b16 %v1254
        %v4193 = vunpack.c.l.b16 %v1255
        %v4194 = vunpack.c.h.b16 %v1255
        %v4195 = vunpack.c.l.b16 %v1256
        %v4196 = vunpack.c.h.b16 %v1256
        %v4197 = vunpack.c.l.b16 %v1257
        %v4198 = vunpack.c.h.b16 %v1257
        %v4199 = vunpack.c.l.b16 %v1258
        %v4200 = vunpack.c.h.b16 %v1258
        %v4201 = vunpack.c.l.b16 %v1259
        %v4202 = vunpack.c.h.b16 %v1259
        %v4203 = vunpack.c.l.b16 %v1260
        %v4204 = vunpack.c.h.b16 %v1260
        %v4205 = vunpack.c.l.b16 %v1261
        %v4206 = vunpack.c.h.b16 %v1261
        %v4207 = vunpack.c.l.b16 %v1262
        %v4208 = vunpack.c.h.b16 %v1262
        %v4209 = vunpack.c.l.b16 %v1263
        %v4210 = vunpack.c.h.b16 %v1263
        %v4211 = vunpack.c.l.b16 %v1264
        %v4212 = vunpack.c.h.b16 %v1264
        %v4213 = vunpack.c.l.b16 %v1265
        %v4214 = vunpack.c.h.b16 %v1265
        %v4215 = vunpack.c.l.b16 %v1266
        %v4216 = vunpack.c.h.b16 %v1266
        %v4217 = vunpack.c.l.b16 %v1267
        %v4218 = vunpack.c.h.b16 %v1267
        %v4219 = vunpack.c.l.b16 %v1268
        %v4220 = vunpack.c.h.b16 %v1268
        %v4221 = vunpack.c.l.b16 %v1269
        %v4222 = vunpack.c.h.b16 %v1269
        %v4223 = vunpack.c.l.b16 %v1270
        %v4224 = vunpack.c.h.b16 %v1270
        %v4225 = vunpack.c.l.b16 %v1271
        %v4226 = vunpack.c.h.b16 %v1271
        %v4227 = vunpack.c.l.b16 %v1272
        %v4228 = vunpack.c.h.b16 %v1272
        %v4229 = vunpack.c.l.b16 %v1273
        %v4230 = vunpack.c.h.b16 %v1273
        %v4231 = vunpack.c.l.b16 %v1274
        %v4232 = vunpack.c.h.b16 %v1274
        %v4233 = vunpack.c.l.b16 %v1275
        %v4234 = vunpack.c.h.b16 %v1275
        %v4235 = vunpack.c.l.b16 %v1276
        %v4236 = vunpack.c.h.b16 %v1276
        %v4237 = vunpack.c.l.b16 %v1277
        %v4238 = vunpack.c.h.b16 %v1277
        %v4239 = vunpack.c.l.b16 %v1278
        %v4240 = vunpack.c.h.b16 %v1278
        %v4241 = vunpack.c.l.b16 %v1279
        %v4242 = vunpack.c.h.b16 %v1279
        %v4243 = vunpack.c.l.b16 %v1280
        %v4244 = vunpack.c.h.b16 %v1280
        %v4245 = vunpack.c.l.b16 %v1281
        %v4246 = vunpack.c.h.b16 %v1281
        %v4247 = vunpack.c.l.b16 %v1282
        %v4248 = vunpack.c.h.b16 %v1282
        %v4249 = vunpack.c.l.b16 %v1283
        %v4250 = vunpack.c.h.b16 %v1283
        %v4251 = vunpack.c.l.b16 %v1284
        %v4252 = vunpack.c.h.b16 %v1284
        %v4253 = vunpack.c.l.b16 %v1285
        %v4254 = vunpack.c.h.b16 %v1285
        %v4255 = vunpack.c.l.b16 %v1286
        %v4256 = vunpack.c.h.b16 %v1286
        %v4257 = vunpack.c.l.b16 %v1287
        %v4258 = vunpack.c.h.b16 %v1287
        %v4259 = vunpack.c.l.b16 %v1288
        %v4260 = vunpack.c.h.b16 %v1288
        %v4261 = vunpack.c.l.b16 %v1289
        %v4262 = vunpack.c.h.b16 %v1289
        %v4263 = vunpack.c.l.b16 %v1290
        %v4264 = vunpack.c.h.b16 %v1290
        %v4265 = vunpack.c.l.b16 %v1291
        %v4266 = vunpack.c.h.b16 %v1291
        %v4267 = vunpack.c.l.b16 %v1292
        %v4268 = vunpack.c.h.b16 %v1292
        %v4269 = vunpack.c.l.b16 %v1293
        %v4270 = vunpack.c.h.b16 %v1293
        %v4271 = vunpack.c.l.b16 %v1294
        %v4272 = vunpack.c.h.b16 %v1294
        %v4273 = vunpack.c.l.b16 %v1295
        %v4274 = vunpack.c.h.b16 %v1295
        %v4275 = vunpack.c.l.b16 %v1296
        %v4276 = vunpack.c.h.b16 %v1296
        %v4277 = vunpack.c.l.b16 %v1297
        %v4278 = vunpack.c.h.b16 %v1297
        %v4279 = vunpack.c.l.b16 %v1298
        %v4280 = vunpack.c.h.b16 %v1298
        %v4281 = vunpack.c.l.b16 %v1299
        %v4282 = vunpack.c.h.b16 %v1299
        %v4283 = vunpack.c.l.b16 %v1300
        %v4284 = vunpack.c.h.b16 %v1300
        %v4285 = vunpack.c.l.b16 %v1301
        %v4286 = vunpack.c.h.b16 %v1301
        %v4287 = vunpack.c.l.b16 %v1302
        %v4288 = vunpack.c.h.b16 %v1302
        %v4289 = vunpack.c.l.b16 %v1303
        %v4290 = vunpack.c.h.b16 %v1303
        %v4291 = vunpack.c.l.b16 %v1304
        %v4292 = vunpack.c.h.b16 %v1304
        %v4293 = vunpack.c.l.b16 %v1305
        %v4294 = vunpack.c.h.b16 %v1305
        %v4295 = vunpack.c.l.b16 %v1306
        %v4296 = vunpack.c.h.b16 %v1306
        %v4297 = vunpack.c.l.b16 %v1307
        %v4298 = vunpack.c.h.b16 %v1307
        %v4299 = vunpack.c.l.b16 %v1308
        %v4300 = vunpack.c.h.b16 %v1308
        %v4301 = vunpack.c.l.b16 %v1309
        %v4302 = vunpack.c.h.b16 %v1309
        %v4303 = vunpack.c.l.b16 %v1310
        %v4304 = vunpack.c.h.b16 %v1310
        %v4305 = vunpack.c.l.b16 %v1311
        %v4306 = vunpack.c.h.b16 %v1311
        %v4307 = vunpack.c.l.b16 %v1312
        %v4308 = vunpack.c.h.b16 %v1312
        %v4309 = vunpack.c.l.b16 %v1313
        %v4310 = vunpack.c.h.b16 %v1313
        %v4311 = vunpack.c.l.b16 %v1314
        %v4312 = vunpack.c.h.b16 %v1314
        %v4313 = vunpack.c.l.b16 %v1315
        %v4314 = vunpack.c.h.b16 %v1315
        %v4315 = vunpack.c.l.b16 %v1316
        %v4316 = vunpack.c.h.b16 %v1316
        %v4317 = vunpack.c.l.b16 %v1317
        %v4318 = vunpack.c.h.b16 %v1317
        %v4319 = vunpack.c.l.b16 %v1318
        %v4320 = vunpack.c.h.b16 %v1318
        %v4321 = vunpack.c.l.b16 %v1319
        %v4322 = vunpack.c.h.b16 %v1319
        %v4323 = vunpack.c.l.b16 %v1320
        %v4324 = vunpack.c.h.b16 %v1320
        %v4325 = vunpack.c.l.b16 %v1321
        %v4326 = vunpack.c.h.b16 %v1321
        %v4327 = vunpack.c.l.b16 %v1322
        %v4328 = vunpack.c.h.b16 %v1322
        %v4329 = vunpack.c.l.b16 %v1323
        %v4330 = vunpack.c.h.b16 %v1323
        %v4331 = vunpack.c.l.b16 %v1324
        %v4332 = vunpack.c.h.b16 %v1324
        %v4333 = vunpack.c.l.b16 %v1325
        %v4334 = vunpack.c.h.b16 %v1325
        %v4335 = vunpack.c.l.b16 %v1326
        %v4336 = vunpack.c.h.b16 %v1326
        %v4337 = vunpack.c.l.b16 %v1327
        %v4338 = vunpack.c.h.b16 %v1327
        %v4339 = vunpack.c.l.b16 %v1328
        %v4340 = vunpack.c.h.b16 %v1328
        %v4341 = vunpack.c.l.b16 %v1329
        %v4342 = vunpack.c.h.b16 %v1329
        %v4343 = vunpack.c.l.b16 %v1330
        %v4344 = vunpack.c.h.b16 %v1330
        %v4345 = vunpack.c.l.b16 %v1331
        %v4346 = vunpack.c.h.b16 %v1331
        %v4347 = vunpack.c.l.b16 %v1332
        %v4348 = vunpack.c.h.b16 %v1332
        %v4349 = vunpack.c.l.b16 %v1333
        %v4350 = vunpack.c.h.b16 %v1333
        %v4351 = vunpack.c.l.b16 %v1334
        %v4352 = vunpack.c.h.b16 %v1334
        %v4353 = vunpack.c.l.b16 %v1335
        %v4354 = vunpack.c.h.b16 %v1335
        %v4355 = vunpack.c.l.b16 %v1336
        %v4356 = vunpack.c.h.b16 %v1336
        %v4357 = vunpack.c.l.b16 %v1337
        %v4358 = vunpack.c.h.b16 %v1337
        %v4359 = vunpack.c.l.b16 %v1338
        %v4360 = vunpack.c.h.b16 %v1338
        %v4361 = vunpack.c.l.b16 %v1339
        %v4362 = vunpack.c.h.b16 %v1339
        %v4363 = vunpack.c.l.b16 %v1340
        %v4364 = vunpack.c.h.b16 %v1340
        %v4365 = vunpack.c.l.b16 %v1341
        %v4366 = vunpack.c.h.b16 %v1341
        %v4367 = vunpack.c.l.b16 %v1342
        %v4368 = vunpack.c.h.b16 %v1342
        %v4369 = vunpack.c.l.b16 %v1343
        %v4370 = vunpack.c.h.b16 %v1343
        %v4371 = vunpack.c.l.b16 %v1344
        %v4372 = vunpack.c.h.b16 %v1344
        %v4373 = vunpack.c.l.b16 %v1345
        %v4374 = vunpack.c.h.b16 %v1345
        %v4375 = vunpack.c.l.b16 %v1346
        %v4376 = vunpack.c.h.b16 %v1346
        %v4377 = vunpack.c.l.b16 %v1347
        %v4378 = vunpack.c.h.b16 %v1347
        %v4379 = vunpack.c.l.b16 %v1348
        %v4380 = vunpack.c.h.b16 %v1348
        %v4381 = vunpack.c.l.b16 %v1349
        %v4382 = vunpack.c.h.b16 %v1349
        %v4383 = vunpack.c.l.b16 %v1350
        %v4384 = vunpack.c.h.b16 %v1350
        %v4385 = vunpack.c.l.b16 %v1351
        %v4386 = vunpack.c.h.b16 %v1351
        %v4387 = vunpack.c.l.b16 %v1352
        %v4388 = vunpack.c.h.b16 %v1352
        %v4389 = vunpack.c.l.b16 %v1353
        %v4390 = vunpack.c.h.b16 %v1353
        %v4391 = vunpack.c.l.b16 %v1354
        %v4392 = vunpack.c.h.b16 %v1354
        %v4393 = vunpack.c.l.b16 %v1355
        %v4394 = vunpack.c.h.b16 %v1355
        %v4395 = vunpack.c.l.b16 %v1356
        %v4396 = vunpack.c.h.b16 %v1356
        %v4397 = vunpack.c.l.b16 %v1357
        %v4398 = vunpack.c.h.b16 %v1357
        %v4399 = vunpack.c.l.b16 %v1358
        %v4400 = vunpack.c.h.b16 %v1358
        %v4401 = vunpack.c.l.b16 %v1359
        %v4402 = vunpack.c.h.b16 %v1359
        %v4403 = vunpack.c.l.b16 %v1360
        %v4404 = vunpack.c.h.b16 %v1360
        %v4405 = vunpack.c.l.b16 %v1361
        %v4406 = vunpack.c.h.b16 %v1361
        %v4407 = vunpack.c.l.b16 %v1362
        %v4408 = vunpack.c.h.b16 %v1362
        %v4409 = vunpack.c.l.b16 %v1363
        %v4410 = vunpack.c.h.b16 %v1363
        %v4411 = vunpack.c.l.b16 %v1364
        %v4412 = vunpack.c.h.b16 %v1364
        %v4413 = vunpack.c.l.b16 %v1365
        %v4414 = vunpack.c.h.b16 %v1365
        %v4415 = vunpack.c.l.b16 %v1366
        %v4416 = vunpack.c.h.b16 %v1366
        %v4417 = vunpack.c.l.b16 %v1367
        %v4418 = vunpack.c.h.b16 %v1367
        %v4419 = vunpack.c.l.b16 %v1368
        %v4420 = vunpack.c.h.b16 %v1368
        %v4421 = vunpack.c.l.b16 %v1369
        %v4422 = vunpack.c.h.b16 %v1369
        %v4423 = vunpack.c.l.b16 %v1370
        %v4424 = vunpack.c.h.b16 %v1370
        %v4425 = vunpack.c.l.b16 %v1371
        %v4426 = vunpack.c.h.b16 %v1371
        %v4427 = vunpack.c.l.b16 %v1372
        %v4428 = vunpack.c.h.b16 %v1372
        %v4429 = vunpack.c.l.b16 %v1373
        %v4430 = vunpack.c.h.b16 %v1373
        %v4431 = vunpack.c.l.b16 %v1374
        %v4432 = vunpack.c.h.b16 %v1374
        %v4433 = vunpack.c.l.b16 %v1375
        %v4434 = vunpack.c.h.b16 %v1375
        %v4435 = vunpack.c.l.b16 %v1376
        %v4436 = vunpack.c.h.b16 %v1376
        %v4437 = vunpack.c.l.b16 %v1377
        %v4438 = vunpack.c.h.b16 %v1377
        %v4439 = vunpack.c.l.b16 %v1378
        %v4440 = vunpack.c.h.b16 %v1378
        %v4441 = vunpack.c.l.b16 %v1379
        %v4442 = vunpack.c.h.b16 %v1379
        %v4443 = vunpack.c.l.b16 %v1380
        %v4444 = vunpack.c.h.b16 %v1380
        %v4445 = vunpack.c.l.b16 %v1381
        %v4446 = vunpack.c.h.b16 %v1381
        %v4447 = vunpack.c.l.b16 %v1382
        %v4448 = vunpack.c.h.b16 %v1382
        %v4449 = vunpack.c.l.b16 %v1383
        %v4450 = vunpack.c.h.b16 %v1383
        %v4451 = vunpack.c.l.b16 %v1384
        %v4452 = vunpack.c.h.b16 %v1384
        %v4453 = vunpack.c.l.b16 %v1385
        %v4454 = vunpack.c.h.b16 %v1385
        %v4455 = vunpack.c.l.b16 %v1386
        %v4456 = vunpack.c.h.b16 %v1386
        %v4457 = vunpack.c.l.b16 %v1387
        %v4458 = vunpack.c.h.b16 %v1387
        %v4459 = vunpack.c.l.b16 %v1388
        %v4460 = vunpack.c.h.b16 %v1388
        %v4461 = vunpack.c.l.b16 %v1389
        %v4462 = vunpack.c.h.b16 %v1389
        %v4463 = vunpack.c.l.b16 %v1390
        %v4464 = vunpack.c.h.b16 %v1390
        %v4465 = vunpack.c.l.b16 %v1391
        %v4466 = vunpack.c.h.b16 %v1391
        %v4467 = vunpack.c.l.b16 %v1392
        %v4468 = vunpack.c.h.b16 %v1392
        %v4469 = vunpack.c.l.b16 %v1393
        %v4470 = vunpack.c.h.b16 %v1393
        %v4471 = vunpack.c.l.b16 %v1394
        %v4472 = vunpack.c.h.b16 %v1394
        %v4473 = vunpack.c.l.b16 %v1395
        %v4474 = vunpack.c.h.b16 %v1395
        %v4475 = vunpack.c.l.b16 %v1396
        %v4476 = vunpack.c.h.b16 %v1396
        %v4477 = vunpack.c.l.b16 %v1397
        %v4478 = vunpack.c.h.b16 %v1397
        %v4479 = vunpack.c.l.b16 %v1398
        %v4480 = vunpack.c.h.b16 %v1398
        %v4481 = vunpack.c.l.b16 %v1399
        %v4482 = vunpack.c.h.b16 %v1399
        %v4483 = vunpack.c.l.b16 %v1400
        %v4484 = vunpack.c.h.b16 %v1400
        %v4485 = vunpack.c.l.b16 %v1401
        %v4486 = vunpack.c.h.b16 %v1401
        %v4487 = vunpack.c.l.b16 %v1402
        %v4488 = vunpack.c.h.b16 %v1402
        %v4489 = vunpack.c.l.b16 %v1403
        %v4490 = vunpack.c.h.b16 %v1403
        %v4491 = vunpack.c.l.b16 %v1404
        %v4492 = vunpack.c.h.b16 %v1404
        %v4493 = vunpack.c.l.b16 %v1405
        %v4494 = vunpack.c.h.b16 %v1405
        %v4495 = vunpack.c.l.b16 %v1406
        %v4496 = vunpack.c.h.b16 %v1406
        %v4497 = vunpack.c.l.b16 %v1407
        %v4498 = vunpack.c.h.b16 %v1407
        %v4499 = vunpack.c.l.b16 %v1408
        %v4500 = vunpack.c.h.b16 %v1408
        %v4501 = vunpack.c.l.b16 %v1409
        %v4502 = vunpack.c.h.b16 %v1409
        %v4503 = vunpack.c.l.b16 %v1410
        %v4504 = vunpack.c.h.b16 %v1410
        %v4505 = vunpack.c.l.b16 %v1411
        %v4506 = vunpack.c.h.b16 %v1411
        %v4507 = vunpack.c.l.b16 %v1412
        %v4508 = vunpack.c.h.b16 %v1412
        %v4509 = vunpack.c.l.b16 %v1413
        %v4510 = vunpack.c.h.b16 %v1413
        %v4511 = vunpack.c.l.b16 %v1414
        %v4512 = vunpack.c.h.b16 %v1414
        %v4513 = vunpack.c.l.b16 %v1415
        %v4514 = vunpack.c.h.b16 %v1415
        %v4515 = vunpack.c.l.b16 %v1416
        %v4516 = vunpack.c.h.b16 %v1416
        %v4517 = vunpack.c.l.b16 %v1417
        %v4518 = vunpack.c.h.b16 %v1417
        %v4519 = vunpack.c.l.b16 %v1418
        %v4520 = vunpack.c.h.b16 %v1418
        %v4521 = vunpack.c.l.b16 %v1419
        %v4522 = vunpack.c.h.b16 %v1419
        %v4523 = vunpack.c.l.b16 %v1420
        %v4524 = vunpack.c.h.b16 %v1420
        %v4525 = vunpack.c.l.b16 %v1421
        %v4526 = vunpack.c.h.b16 %v1421
        %v4527 = vunpack.c.l.b16 %v1422
        %v4528 = vunpack.c.h.b16 %v1422
        %v4529 = vunpack.c.l.b16 %v1423
        %v4530 = vunpack.c.h.b16 %v1423
        %v4531 = vunpack.c.l.b16 %v1424
        %v4532 = vunpack.c.h.b16 %v1424
        %v4533 = vunpack.c.l.b16 %v1425
        %v4534 = vunpack.c.h.b16 %v1425
        %v4535 = vunpack.c.l.b16 %v1426
        %v4536 = vunpack.c.h.b16 %v1426
        %v4537 = vunpack.c.l.b16 %v1427
        %v4538 = vunpack.c.h.b16 %v1427
        %v4539 = vunpack.c.l.b16 %v1428
        %v4540 = vunpack.c.h.b16 %v1428
        %v4541 = vunpack.c.l.b16 %v1429
        %v4542 = vunpack.c.h.b16 %v1429
        %v4543 = vunpack.c.l.b16 %v1430
        %v4544 = vunpack.c.h.b16 %v1430
        %v4545 = vunpack.c.l.b16 %v1431
        %v4546 = vunpack.c.h.b16 %v1431
        %v4547 = vunpack.c.l.b16 %v1432
        %v4548 = vunpack.c.h.b16 %v1432
        %v4549 = vunpack.c.l.b16 %v1433
        %v4550 = vunpack.c.h.b16 %v1433
        %v4551 = vunpack.c.l.b16 %v1434
        %v4552 = vunpack.c.h.b16 %v1434
        %v4553 = vunpack.c.l.b16 %v1435
        %v4554 = vunpack.c.h.b16 %v1435
        %v4555 = vunpack.c.l.b16 %v1436
        %v4556 = vunpack.c.h.b16 %v1436
        %v4557 = vunpack.c.l.b16 %v1437
        %v4558 = vunpack.c.h.b16 %v1437
        %v4559 = vunpack.c.l.b16 %v1438
        %v4560 = vunpack.c.h.b16 %v1438
        %v4561 = vunpack.c.l.b16 %v1439
        %v4562 = vunpack.c.h.b16 %v1439
        %v4563 = vunpack.c.l.b16 %v1440
        %v4564 = vunpack.c.h.b16 %v1440
        %v4565 = vunpack.c.l.b16 %v1441
        %v4566 = vunpack.c.h.b16 %v1441
        %v4567 = vunpack.c.l.b16 %v1442
        %v4568 = vunpack.c.h.b16 %v1442
        %v4569 = vunpack.c.l.b16 %v1443
        %v4570 = vunpack.c.h.b16 %v1443
        %v4571 = vunpack.c.l.b16 %v1444
        %v4572 = vunpack.c.h.b16 %v1444
        %v4573 = vpack.c.b16 %v2533, %v2525
        %v4574 = vpack.c.b16 %v2534, %v2526
        %v4575 = vpack.c.b16 %v2535, %v2527
        %v4576 = vpack.c.b16 %v2536, %v2528
        %v4577 = vpack.c.b16 %v2537, %v2529
        %v4578 = vpack.c.b16 %v2538, %v2530
        %v4579 = vpack.c.b16 %v2539, %v2531
        %v4580 = vpack.c.b16 %v2540, %v2532
        %v4581 = vpack.c.b16 %v2549, %v2541
        %v4582 = vpack.c.b16 %v2550, %v2542
        %v4583 = vpack.c.b16 %v2551, %v2543
        %v4584 = vpack.c.b16 %v2552, %v2544
        %v4585 = vpack.c.b16 %v2553, %v2545
        %v4586 = vpack.c.b16 %v2554, %v2546
        %v4587 = vpack.c.b16 %v2555, %v2547
        %v4588 = vpack.c.b16 %v2556, %v2548
        %v4589 = vpack.c.b16 %v2565, %v2557
        %v4590 = vpack.c.b16 %v2566, %v2558
        %v4591 = vpack.c.b16 %v2567, %v2559
        %v4592 = vpack.c.b16 %v2568, %v2560
        %v4593 = vpack.c.b16 %v2569, %v2561
        %v4594 = vpack.c.b16 %v2570, %v2562
        %v4595 = vpack.c.b16 %v2571, %v2563
        %v4596 = vpack.c.b16 %v2572, %v2564
        %v4597 = vpack.c.b16 %v2581, %v2573
        %v4598 = vpack.c.b16 %v2582, %v2574
        %v4599 = vpack.c.b16 %v2583, %v2575
        %v4600 = vpack.c.b16 %v2584, %v2576
        %v4601 = vpack.c.b16 %v2585, %v2577
        %v4602 = vpack.c.b16 %v2586, %v2578
        %v4603 = vpack.c.b16 %v2587, %v2579
        %v4604 = vpack.c.b16 %v2588, %v2580
        %v4605 = vpack.c.b16 %v2597, %v2589
        %v4606 = vpack.c.b16 %v2598, %v2590
        %v4607 = vpack.c.b16 %v2599, %v2591
        %v4608 = vpack.c.b16 %v2600, %v2592
        %v4609 = vpack.c.b16 %v2601, %v2593
        %v4610 = vpack.c.b16 %v2602, %v2594
        %v4611 = vpack.c.b16 %v2603, %v2595
        %v4612 = vpack.c.b16 %v2604, %v2596
        %v4613 = vpack.c.b16 %v2613, %v2605
        %v4614 = vpack.c.b16 %v2614, %v2606
        %v4615 = vpack.c.b16 %v2615, %v2607
        %v4616 = vpack.c.b16 %v2616, %v2608
        %v4617 = vpack.c.b16 %v2617, %v2609
        %v4618 = vpack.c.b16 %v2618, %v2610
        %v4619 = vpack.c.b16 %v2619, %v2611
        %v4620 = vpack.c.b16 %v2620, %v2612
        %v4621 = vpack.c.b16 %v2629, %v2621
        %v4622 = vpack.c.b16 %v2630, %v2622
        %v4623 = vpack.c.b16 %v2631, %v2623
        %v4624 = vpack.c.b16 %v2632, %v2624
        %v4625 = vpack.c.b16 %v2633, %v2625
        %v4626 = vpack.c.b16 %v2634, %v2626
        %v4627 = vpack.c.b16 %v2635, %v2627
        %v4628 = vpack.c.b16 %v2636, %v2628
        %v4629 = vpack.c.b16 %v2645, %v2637
        %v4630 = vpack.c.b16 %v2646, %v2638
        %v4631 = vpack.c.b16 %v2647, %v2639
        %v4632 = vpack.c.b16 %v2648, %v2640
        %v4633 = vpack.c.b16 %v2649, %v2641
        %v4634 = vpack.c.b16 %v2650, %v2642
        %v4635 = vpack.c.b16 %v2651, %v2643
        %v4636 = vpack.c.b16 %v2652, %v2644
        %v4637 = vpack.c.b16 %v2661, %v2653
        %v4638 = vpack.c.b16 %v2662, %v2654
        %v4639 = vpack.c.b16 %v2663, %v2655
        %v4640 = vpack.c.b16 %v2664, %v2656
        %v4641 = vpack.c.b16 %v2665, %v2657
        %v4642 = vpack.c.b16 %v2666, %v2658
        %v4643 = vpack.c.b16 %v2667, %v2659
        %v4644 = vpack.c.b16 %v2668, %v2660
        %v4645 = vpack.c.b16 %v2677, %v2669
        %v4646 = vpack.c.b16 %v2678, %v2670
        %v4647 = vpack.c.b16 %v2679, %v2671
        %v4648 = vpack.c.b16 %v2680, %v2672
        %v4649 = vpack.c.b16 %v2681, %v2673
        %v4650 = vpack.c.b16 %v2682, %v2674
        %v4651 = vpack.c.b16 %v2683, %v2675
        %v4652 = vpack.c.b16 %v2684, %v2676
        %v4653 = vpack.c.b16 %v2693, %v2685
        %v4654 = vpack.c.b16 %v2694, %v2686
        %v4655 = vpack.c.b16 %v2695, %v2687
        %v4656 = vpack.c.b16 %v2696, %v2688
        %v4657 = vpack.c.b16 %v2697, %v2689
        %v4658 = vpack.c.b16 %v2698, %v2690
        %v4659 = vpack.c.b16 %v2699, %v2691
        %v4660 = vpack.c.b16 %v2700, %v2692
        %v4661 = vpack.c.b16 %v2709, %v2701
        %v4662 = vpack.c.b16 %v2710, %v2702
        %v4663 = vpack.c.b16 %v2711, %v2703
        %v4664 = vpack.c.b16 %v2712, %v2704
        %v4665 = vpack.c.b16 %v2713, %v2705
        %v4666 = vpack.c.b16 %v2714, %v2706
        %v4667 = vpack.c.b16 %v2715, %v2707
        %v4668 = vpack.c.b16 %v2716, %v2708
        %v4669 = vpack.c.b16 %v2725, %v2717
        %v4670 = vpack.c.b16 %v2726, %v2718
        %v4671 = vpack.c.b16 %v2727, %v2719
        %v4672 = vpack.c.b16 %v2728, %v2720
        %v4673 = vpack.c.b16 %v2729, %v2721
        %v4674 = vpack.c.b16 %v2730, %v2722
        %v4675 = vpack.c.b16 %v2731, %v2723
        %v4676 = vpack.c.b16 %v2732, %v2724
        %v4677 = vpack.c.b16 %v2741, %v2733
        %v4678 = vpack.c.b16 %v2742, %v2734
        %v4679 = vpack.c.b16 %v2743, %v2735
        %v4680 = vpack.c.b16 %v2744, %v2736
        %v4681 = vpack.c.b16 %v2745, %v2737
        %v4682 = vpack.c.b16 %v2746, %v2738
        %v4683 = vpack.c.b16 %v2747, %v2739
        %v4684 = vpack.c.b16 %v2748, %v2740
        %v4685 = vpack.c.b16 %v2757, %v2749
        %v4686 = vpack.c.b16 %v2758, %v2750
        %v4687 = vpack.c.b16 %v2759, %v2751
        %v4688 = vpack.c.b16 %v2760, %v2752
        %v4689 = vpack.c.b16 %v2761, %v2753
        %v4690 = vpack.c.b16 %v2762, %v2754
        %v4691 = vpack.c.b16 %v2763, %v2755
        %v4692 = vpack.c.b16 %v2764, %v2756
        %v4693 = vpack.c.b16 %v2773, %v2765
        %v4694 = vpack.c.b16 %v2774, %v2766
        %v4695 = vpack.c.b16 %v2775, %v2767
        %v4696 = vpack.c.b16 %v2776, %v2768
        %v4697 = vpack.c.b16 %v2777, %v2769
        %v4698 = vpack.c.b16 %v2778, %v2770
        %v4699 = vpack.c.b16 %v2779, %v2771
        %v4700 = vpack.c.b16 %v2780, %v2772
        %v4701 = vpack.c.b16 %v2789, %v2781
        %v4702 = vpack.c.b16 %v2790, %v2782
        %v4703 = vpack.c.b16 %v2791, %v2783
        %v4704 = vpack.c.b16 %v2792, %v2784
        %v4705 = vpack.c.b16 %v2793, %v2785
        %v4706 = vpack.c.b16 %v2794, %v2786
        %v4707 = vpack.c.b16 %v2795, %v2787
        %v4708 = vpack.c.b16 %v2796, %v2788
        %v4709 = vpack.c.b16 %v2805, %v2797
        %v4710 = vpack.c.b16 %v2806, %v2798
        %v4711 = vpack.c.b16 %v2807, %v2799
        %v4712 = vpack.c.b16 %v2808, %v2800
        %v4713 = vpack.c.b16 %v2809, %v2801
        %v4714 = vpack.c.b16 %v2810, %v2802
        %v4715 = vpack.c.b16 %v2811, %v2803
        %v4716 = vpack.c.b16 %v2812, %v2804
        %v4717 = vpack.c.b16 %v2821, %v2813
        %v4718 = vpack.c.b16 %v2822, %v2814
        %v4719 = vpack.c.b16 %v2823, %v2815
        %v4720 = vpack.c.b16 %v2824, %v2816
        %v4721 = vpack.c.b16 %v2825, %v2817
        %v4722 = vpack.c.b16 %v2826, %v2818
        %v4723 = vpack.c.b16 %v2827, %v2819
        %v4724 = vpack.c.b16 %v2828, %v2820
        %v4725 = vpack.c.b16 %v2837, %v2829
        %v4726 = vpack.c.b16 %v2838, %v2830
        %v4727 = vpack.c.b16 %v2839, %v2831
        %v4728 = vpack.c.b16 %v2840, %v2832
        %v4729 = vpack.c.b16 %v2841, %v2833
        %v4730 = vpack.c.b16 %v2842, %v2834
        %v4731 = vpack.c.b16 %v2843, %v2835
        %v4732 = vpack.c.b16 %v2844, %v2836
        %v4733 = vpack.c.b16 %v2853, %v2845
        %v4734 = vpack.c.b16 %v2854, %v2846
        %v4735 = vpack.c.b16 %v2855, %v2847
        %v4736 = vpack.c.b16 %v2856, %v2848
        %v4737 = vpack.c.b16 %v2857, %v2849
        %v4738 = vpack.c.b16 %v2858, %v2850
        %v4739 = vpack.c.b16 %v2859, %v2851
        %v4740 = vpack.c.b16 %v2860, %v2852
        %v4741 = vpack.c.b16 %v2869, %v2861
        %v4742 = vpack.c.b16 %v2870, %v2862
        %v4743 = vpack.c.b16 %v2871, %v2863
        %v4744 = vpack.c.b16 %v2872, %v2864
        %v4745 = vpack.c.b16 %v2873, %v2865
        %v4746 = vpack.c.b16 %v2874, %v2866
        %v4747 = vpack.c.b16 %v2875, %v2867
        %v4748 = vpack.c.b16 %v2876, %v2868
        %v4749 = vpack.c.b16 %v2885, %v2877
        %v4750 = vpack.c.b16 %v2886, %v2878
        %v4751 = vpack.c.b16 %v2887, %v2879
        %v4752 = vpack.c.b16 %v2888, %v2880
        %v4753 = vpack.c.b16 %v2889, %v2881
        %v4754 = vpack.c.b16 %v2890, %v2882
        %v4755 = vpack.c.b16 %v2891, %v2883
        %v4756 = vpack.c.b16 %v2892, %v2884
        %v4757 = vpack.c.b16 %v2901, %v2893
        %v4758 = vpack.c.b16 %v2902, %v2894
        %v4759 = vpack.c.b16 %v2903, %v2895
        %v4760 = vpack.c.b16 %v2904, %v2896
        %v4761 = vpack.c.b16 %v2905, %v2897
        %v4762 = vpack.c.b16 %v2906, %v2898
        %v4763 = vpack.c.b16 %v2907, %v2899
        %v4764 = vpack.c.b16 %v2908, %v2900
        %v4765 = vpack.c.b16 %v2917, %v2909
        %v4766 = vpack.c.b16 %v2918, %v2910
        %v4767 = vpack.c.b16 %v2919, %v2911
        %v4768 = vpack.c.b16 %v2920, %v2912
        %v4769 = vpack.c.b16 %v2921, %v2913
        %v4770 = vpack.c.b16 %v2922, %v2914
        %v4771 = vpack.c.b16 %v2923, %v2915
        %v4772 = vpack.c.b16 %v2924, %v2916
        %v4773 = vpack.c.b16 %v2933, %v2925
        %v4774 = vpack.c.b16 %v2934, %v2926
        %v4775 = vpack.c.b16 %v2935, %v2927
        %v4776 = vpack.c.b16 %v2936, %v2928
        %v4777 = vpack.c.b16 %v2937, %v2929
        %v4778 = vpack.c.b16 %v2938, %v2930
        %v4779 = vpack.c.b16 %v2939, %v2931
        %v4780 = vpack.c.b16 %v2940, %v2932
        %v4781 = vpack.c.b16 %v2949, %v2941
        %v4782 = vpack.c.b16 %v2950, %v2942
        %v4783 = vpack.c.b16 %v2951, %v2943
        %v4784 = vpack.c.b16 %v2952, %v2944
        %v4785 = vpack.c.b16 %v2953, %v2945
        %v4786 = vpack.c.b16 %v2954, %v2946
        %v4787 = vpack.c.b16 %v2955, %v2947
        %v4788 = vpack.c.b16 %v2956, %v2948
        %v4789 = vpack.c.b16 %v2965, %v2957
        %v4790 = vpack.c.b16 %v2966, %v2958
        %v4791 = vpack.c.b16 %v2967, %v2959
        %v4792 = vpack.c.b16 %v2968, %v2960
        %v4793 = vpack.c.b16 %v2969, %v2961
        %v4794 = vpack.c.b16 %v2970, %v2962
        %v4795 = vpack.c.b16 %v2971, %v2963
        %v4796 = vpack.c.b16 %v2972, %v2964
        %v4797 = vpack.c.b16 %v2981, %v2973
        %v4798 = vpack.c.b16 %v2982, %v2974
        %v4799 = vpack.c.b16 %v2983, %v2975
        %v4800 = vpack.c.b16 %v2984, %v2976
        %v4801 = vpack.c.b16 %v2985, %v2977
        %v4802 = vpack.c.b16 %v2986, %v2978
        %v4803 = vpack.c.b16 %v2987, %v2979
        %v4804 = vpack.c.b16 %v2988, %v2980
        %v4805 = vpack.c.b16 %v2997, %v2989
        %v4806 = vpack.c.b16 %v2998, %v2990
        %v4807 = vpack.c.b16 %v2999, %v2991
        %v4808 = vpack.c.b16 %v3000, %v2992
        %v4809 = vpack.c.b16 %v3001, %v2993
        %v4810 = vpack.c.b16 %v3002, %v2994
        %v4811 = vpack.c.b16 %v3003, %v2995
        %v4812 = vpack.c.b16 %v3004, %v2996
        %v4813 = vpack.c.b16 %v3013, %v3005
        %v4814 = vpack.c.b16 %v3014, %v3006
        %v4815 = vpack.c.b16 %v3015, %v3007
        %v4816 = vpack.c.b16 %v3016, %v3008
        %v4817 = vpack.c.b16 %v3017, %v3009
        %v4818 = vpack.c.b16 %v3018, %v3010
        %v4819 = vpack.c.b16 %v3019, %v3011
        %v4820 = vpack.c.b16 %v3020, %v3012
        %v4821 = vpack.c.b16 %v3029, %v3021
        %v4822 = vpack.c.b16 %v3030, %v3022
        %v4823 = vpack.c.b16 %v3031, %v3023
        %v4824 = vpack.c.b16 %v3032, %v3024
        %v4825 = vpack.c.b16 %v3033, %v3025
        %v4826 = vpack.c.b16 %v3034, %v3026
        %v4827 = vpack.c.b16 %v3035, %v3027
        %v4828 = vpack.c.b16 %v3036, %v3028
        %v4829 = vpack.c.b16 %v3045, %v3037
        %v4830 = vpack.c.b16 %v3046, %v3038
        %v4831 = vpack.c.b16 %v3047, %v3039
        %v4832 = vpack.c.b16 %v3048, %v3040
        %v4833 = vpack.c.b16 %v3049, %v3041
        %v4834 = vpack.c.b16 %v3050, %v3042
        %v4835 = vpack.c.b16 %v3051, %v3043
        %v4836 = vpack.c.b16 %v3052, %v3044
        %v4837 = vpack.c.b16 %v3061, %v3053
        %v4838 = vpack.c.b16 %v3062, %v3054
        %v4839 = vpack.c.b16 %v3063, %v3055
        %v4840 = vpack.c.b16 %v3064, %v3056
        %v4841 = vpack.c.b16 %v3065, %v3057
        %v4842 = vpack.c.b16 %v3066, %v3058
        %v4843 = vpack.c.b16 %v3067, %v3059
        %v4844 = vpack.c.b16 %v3068, %v3060
        %v4845 = vpack.c.b16 %v3077, %v3069
        %v4846 = vpack.c.b16 %v3078, %v3070
        %v4847 = vpack.c.b16 %v3079, %v3071
        %v4848 = vpack.c.b16 %v3080, %v3072
        %v4849 = vpack.c.b16 %v3081, %v3073
        %v4850 = vpack.c.b16 %v3082, %v3074
        %v4851 = vpack.c.b16 %v3083, %v3075
        %v4852 = vpack.c.b16 %v3084, %v3076
        %v4853 = vpack.c.b16 %v3093, %v3085
        %v4854 = vpack.c.b16 %v3094, %v3086
        %v4855 = vpack.c.b16 %v3095, %v3087
        %v4856 = vpack.c.b16 %v3096, %v3088
        %v4857 = vpack.c.b16 %v3097, %v3089
        %v4858 = vpack.c.b16 %v3098, %v3090
        %v4859 = vpack.c.b16 %v3099, %v3091
        %v4860 = vpack.c.b16 %v3100, %v3092
        %v4861 = vpack.c.b16 %v3109, %v3101
        %v4862 = vpack.c.b16 %v3110, %v3102
        %v4863 = vpack.c.b16 %v3111, %v3103
        %v4864 = vpack.c.b16 %v3112, %v3104
        %v4865 = vpack.c.b16 %v3113, %v3105
        %v4866 = vpack.c.b16 %v3114, %v3106
        %v4867 = vpack.c.b16 %v3115, %v3107
        %v4868 = vpack.c.b16 %v3116, %v3108
        %v4869 = vpack.c.b16 %v3125, %v3117
        %v4870 = vpack.c.b16 %v3126, %v3118
        %v4871 = vpack.c.b16 %v3127, %v3119
        %v4872 = vpack.c.b16 %v3128, %v3120
        %v4873 = vpack.c.b16 %v3129, %v3121
        %v4874 = vpack.c.b16 %v3130, %v3122
        %v4875 = vpack.c.b16 %v3131, %v3123
        %v4876 = vpack.c.b16 %v3132, %v3124
        %v4877 = vpack.c.b16 %v3141, %v3133
        %v4878 = vpack.c.b16 %v3142, %v3134
        %v4879 = vpack.c.b16 %v3143, %v3135
        %v4880 = vpack.c.b16 %v3144, %v3136
        %v4881 = vpack.c.b16 %v3145, %v3137
        %v4882 = vpack.c.b16 %v3146, %v3138
        %v4883 = vpack.c.b16 %v3147, %v3139
        %v4884 = vpack.c.b16 %v3148, %v3140
        %v4885 = vpack.c.b16 %v3157, %v3149
        %v4886 = vpack.c.b16 %v3158, %v3150
        %v4887 = vpack.c.b16 %v3159, %v3151
        %v4888 = vpack.c.b16 %v3160, %v3152
        %v4889 = vpack.c.b16 %v3161, %v3153
        %v4890 = vpack.c.b16 %v3162, %v3154
        %v4891 = vpack.c.b16 %v3163, %v3155
        %v4892 = vpack.c.b16 %v3164, %v3156
        %v4893 = vpack.c.b16 %v3173, %v3165
        %v4894 = vpack.c.b16 %v3174, %v3166
        %v4895 = vpack.c.b16 %v3175, %v3167
        %v4896 = vpack.c.b16 %v3176, %v3168
        %v4897 = vpack.c.b16 %v3177, %v3169
        %v4898 = vpack.c.b16 %v3178, %v3170
        %v4899 = vpack.c.b16 %v3179, %v3171
        %v4900 = vpack.c.b16 %v3180, %v3172
        %v4901 = vpack.c.b16 %v3189, %v3181
        %v4902 = vpack.c.b16 %v3190, %v3182
        %v4903 = vpack.c.b16 %v3191, %v3183
        %v4904 = vpack.c.b16 %v3192, %v3184
        %v4905 = vpack.c.b16 %v3193, %v3185
        %v4906 = vpack.c.b16 %v3194, %v3186
        %v4907 = vpack.c.b16 %v3195, %v3187
        %v4908 = vpack.c.b16 %v3196, %v3188
        %v4909 = vpack.c.b16 %v3205, %v3197
        %v4910 = vpack.c.b16 %v3206, %v3198
        %v4911 = vpack.c.b16 %v3207, %v3199
        %v4912 = vpack.c.b16 %v3208, %v3200
        %v4913 = vpack.c.b16 %v3209, %v3201
        %v4914 = vpack.c.b16 %v3210, %v3202
        %v4915 = vpack.c.b16 %v3211, %v3203
        %v4916 = vpack.c.b16 %v3212, %v3204
        %v4917 = vpack.c.b16 %v3221, %v3213
        %v4918 = vpack.c.b16 %v3222, %v3214
        %v4919 = vpack.c.b16 %v3223, %v3215
        %v4920 = vpack.c.b16 %v3224, %v3216
        %v4921 = vpack.c.b16 %v3225, %v3217
        %v4922 = vpack.c.b16 %v3226, %v3218
        %v4923 = vpack.c.b16 %v3227, %v3219
        %v4924 = vpack.c.b16 %v3228, %v3220
        %v4925 = vpack.c.b16 %v3237, %v3229
        %v4926 = vpack.c.b16 %v3238, %v3230
        %v4927 = vpack.c.b16 %v3239, %v3231
        %v4928 = vpack.c.b16 %v3240, %v3232
        %v4929 = vpack.c.b16 %v3241, %v3233
        %v4930 = vpack.c.b16 %v3242, %v3234
        %v4931 = vpack.c.b16 %v3243, %v3235
        %v4932 = vpack.c.b16 %v3244, %v3236
        %v4933 = vpack.c.b16 %v3253, %v3245
        %v4934 = vpack.c.b16 %v3254, %v3246
        %v4935 = vpack.c.b16 %v3255, %v3247
        %v4936 = vpack.c.b16 %v3256, %v3248
        %v4937 = vpack.c.b16 %v3257, %v3249
        %v4938 = vpack.c.b16 %v3258, %v3250
        %v4939 = vpack.c.b16 %v3259, %v3251
        %v4940 = vpack.c.b16 %v3260, %v3252
        %v4941 = vpack.c.b16 %v3269, %v3261
        %v4942 = vpack.c.b16 %v3270, %v3262
        %v4943 = vpack.c.b16 %v3271, %v3263
        %v4944 = vpack.c.b16 %v3272, %v3264
        %v4945 = vpack.c.b16 %v3273, %v3265
        %v4946 = vpack.c.b16 %v3274, %v3266
        %v4947 = vpack.c.b16 %v3275, %v3267
        %v4948 = vpack.c.b16 %v3276, %v3268
        %v4949 = vpack.c.b16 %v3285, %v3277
        %v4950 = vpack.c.b16 %v3286, %v3278
        %v4951 = vpack.c.b16 %v3287, %v3279
        %v4952 = vpack.c.b16 %v3288, %v3280
        %v4953 = vpack.c.b16 %v3289, %v3281
        %v4954 = vpack.c.b16 %v3290, %v3282
        %v4955 = vpack.c.b16 %v3291, %v3283
        %v4956 = vpack.c.b16 %v3292, %v3284
        %v4957 = vpack.c.b16 %v3301, %v3293
        %v4958 = vpack.c.b16 %v3302, %v3294
        %v4959 = vpack.c.b16 %v3303, %v3295
        %v4960 = vpack.c.b16 %v3304, %v3296
        %v4961 = vpack.c.b16 %v3305, %v3297
        %v4962 = vpack.c.b16 %v3306, %v3298
        %v4963 = vpack.c.b16 %v3307, %v3299
        %v4964 = vpack.c.b16 %v3308, %v3300
        %v4965 = vpack.c.b16 %v3317, %v3309
        %v4966 = vpack.c.b16 %v3318, %v3310
        %v4967 = vpack.c.b16 %v3319, %v3311
        %v4968 = vpack.c.b16 %v3320, %v3312
        %v4969 = vpack.c.b16 %v3321, %v3313
        %v4970 = vpack.c.b16 %v3322, %v3314
        %v4971 = vpack.c.b16 %v3323, %v3315
        %v4972 = vpack.c.b16 %v3324, %v3316
        %v4973 = vpack.c.b16 %v3333, %v3325
        %v4974 = vpack.c.b16 %v3334, %v3326
        %v4975 = vpack.c.b16 %v3335, %v3327
        %v4976 = vpack.c.b16 %v3336, %v3328
        %v4977 = vpack.c.b16 %v3337, %v3329
        %v4978 = vpack.c.b16 %v3338, %v3330
        %v4979 = vpack.c.b16 %v3339, %v3331
        %v4980 = vpack.c.b16 %v3340, %v3332
        %v4981 = vpack.c.b16 %v3349, %v3341
        %v4982 = vpack.c.b16 %v3350, %v3342
        %v4983 = vpack.c.b16 %v3351, %v3343
        %v4984 = vpack.c.b16 %v3352, %v3344
        %v4985 = vpack.c.b16 %v3353, %v3345
        %v4986 = vpack.c.b16 %v3354, %v3346
        %v4987 = vpack.c.b16 %v3355, %v3347
        %v4988 = vpack.c.b16 %v3356, %v3348
        %v4989 = vpack.c.b16 %v3365, %v3357
        %v4990 = vpack.c.b16 %v3366, %v3358
        %v4991 = vpack.c.b16 %v3367, %v3359
        %v4992 = vpack.c.b16 %v3368, %v3360
        %v4993 = vpack.c.b16 %v3369, %v3361
        %v4994 = vpack.c.b16 %v3370, %v3362
        %v4995 = vpack.c.b16 %v3371, %v3363
        %v4996 = vpack.c.b16 %v3372, %v3364
        %v4997 = vpack.c.b16 %v3381, %v3373
        %v4998 = vpack.c.b16 %v3382, %v3374
        %v4999 = vpack.c.b16 %v3383, %v3375
        %v5000 = vpack.c.b16 %v3384, %v3376
        %v5001 = vpack.c.b16 %v3385, %v3377
        %v5002 = vpack.c.b16 %v3386, %v3378
        %v5003 = vpack.c.b16 %v3387, %v3379
        %v5004 = vpack.c.b16 %v3388, %v3380
        %v5005 = vpack.c.b16 %v3397, %v3389
        %v5006 = vpack.c.b16 %v3398, %v3390
        %v5007 = vpack.c.b16 %v3399, %v3391
        %v5008 = vpack.c.b16 %v3400, %v3392
        %v5009 = vpack.c.b16 %v3401, %v3393
        %v5010 = vpack.c.b16 %v3402, %v3394
        %v5011 = vpack.c.b16 %v3403, %v3395
        %v5012 = vpack.c.b16 %v3404, %v3396
        %v5013 = vpack.c.b16 %v3413, %v3405
        %v5014 = vpack.c.b16 %v3414, %v3406
        %v5015 = vpack.c.b16 %v3415, %v3407
        %v5016 = vpack.c.b16 %v3416, %v3408
        %v5017 = vpack.c.b16 %v3417, %v3409
        %v5018 = vpack.c.b16 %v3418, %v3410
        %v5019 = vpack.c.b16 %v3419, %v3411
        %v5020 = vpack.c.b16 %v3420, %v3412
        %v5021 = vpack.c.b16 %v3429, %v3421
        %v5022 = vpack.c.b16 %v3430, %v3422
        %v5023 = vpack.c.b16 %v3431, %v3423
        %v5024 = vpack.c.b16 %v3432, %v3424
        %v5025 = vpack.c.b16 %v3433, %v3425
        %v5026 = vpack.c.b16 %v3434, %v3426
        %v5027 = vpack.c.b16 %v3435, %v3427
        %v5028 = vpack.c.b16 %v3436, %v3428
        %v5029 = vpack.c.b16 %v3445, %v3437
        %v5030 = vpack.c.b16 %v3446, %v3438
        %v5031 = vpack.c.b16 %v3447, %v3439
        %v5032 = vpack.c.b16 %v3448, %v3440
        %v5033 = vpack.c.b16 %v3449, %v3441
        %v5034 = vpack.c.b16 %v3450, %v3442
        %v5035 = vpack.c.b16 %v3451, %v3443
        %v5036 = vpack.c.b16 %v3452, %v3444
        %v5037 = vpack.c.b16 %v3461, %v3453
        %v5038 = vpack.c.b16 %v3462, %v3454
        %v5039 = vpack.c.b16 %v3463, %v3455
        %v5040 = vpack.c.b16 %v3464, %v3456
        %v5041 = vpack.c.b16 %v3465, %v3457
        %v5042 = vpack.c.b16 %v3466, %v3458
        %v5043 = vpack.c.b16 %v3467, %v3459
        %v5044 = vpack.c.b16 %v3468, %v3460
        %v5045 = vpack.c.b16 %v3477, %v3469
        %v5046 = vpack.c.b16 %v3478, %v3470
        %v5047 = vpack.c.b16 %v3479, %v3471
        %v5048 = vpack.c.b16 %v3480, %v3472
        %v5049 = vpack.c.b16 %v3481, %v3473
        %v5050 = vpack.c.b16 %v3482, %v3474
        %v5051 = vpack.c.b16 %v3483, %v3475
        %v5052 = vpack.c.b16 %v3484, %v3476
        %v5053 = vpack.c.b16 %v3493, %v3485
        %v5054 = vpack.c.b16 %v3494, %v3486
        %v5055 = vpack.c.b16 %v3495, %v3487
        %v5056 = vpack.c.b16 %v3496, %v3488
        %v5057 = vpack.c.b16 %v3497, %v3489
        %v5058 = vpack.c.b16 %v3498, %v3490
        %v5059 = vpack.c.b16 %v3499, %v3491
        %v5060 = vpack.c.b16 %v3500, %v3492
        %v5061 = vpack.c.b16 %v3509, %v3501
        %v5062 = vpack.c.b16 %v3510, %v3502
        %v5063 = vpack.c.b16 %v3511, %v3503
        %v5064 = vpack.c.b16 %v3512, %v3504
        %v5065 = vpack.c.b16 %v3513, %v3505
        %v5066 = vpack.c.b16 %v3514, %v3506
        %v5067 = vpack.c.b16 %v3515, %v3507
        %v5068 = vpack.c.b16 %v3516, %v3508
        %v5069 = vpack.c.b16 %v3525, %v3517
        %v5070 = vpack.c.b16 %v3526, %v3518
        %v5071 = vpack.c.b16 %v3527, %v3519
        %v5072 = vpack.c.b16 %v3528, %v3520
        %v5073 = vpack.c.b16 %v3529, %v3521
        %v5074 = vpack.c.b16 %v3530, %v3522
        %v5075 = vpack.c.b16 %v3531, %v3523
        %v5076 = vpack.c.b16 %v3532, %v3524
        %v5077 = vpack.c.b16 %v3541, %v3533
        %v5078 = vpack.c.b16 %v3542, %v3534
        %v5079 = vpack.c.b16 %v3543, %v3535
        %v5080 = vpack.c.b16 %v3544, %v3536
        %v5081 = vpack.c.b16 %v3545, %v3537
        %v5082 = vpack.c.b16 %v3546, %v3538
        %v5083 = vpack.c.b16 %v3547, %v3539
        %v5084 = vpack.c.b16 %v3548, %v3540
        %v5085 = vpack.c.b16 %v3557, %v3549
        %v5086 = vpack.c.b16 %v3558, %v3550
        %v5087 = vpack.c.b16 %v3559, %v3551
        %v5088 = vpack.c.b16 %v3560, %v3552
        %v5089 = vpack.c.b16 %v3561, %v3553
        %v5090 = vpack.c.b16 %v3562, %v3554
        %v5091 = vpack.c.b16 %v3563, %v3555
        %v5092 = vpack.c.b16 %v3564, %v3556
        %v5093 = vpack.c.b16 %v3573, %v3565
        %v5094 = vpack.c.b16 %v3574, %v3566
        %v5095 = vpack.c.b16 %v3575, %v3567
        %v5096 = vpack.c.b16 %v3576, %v3568
        %v5097 = vpack.c.b16 %v3577, %v3569
        %v5098 = vpack.c.b16 %v3578, %v3570
        %v5099 = vpack.c.b16 %v3579, %v3571
        %v5100 = vpack.c.b16 %v3580, %v3572
        %v5101 = vpack.c.b16 %v3589, %v3581
        %v5102 = vpack.c.b16 %v3590, %v3582
        %v5103 = vpack.c.b16 %v3591, %v3583
        %v5104 = vpack.c.b16 %v3592, %v3584
        %v5105 = vpack.c.b16 %v3593, %v3585
        %v5106 = vpack.c.b16 %v3594, %v3586
        %v5107 = vpack.c.b16 %v3595, %v3587
        %v5108 = vpack.c.b16 %v3596, %v3588
        %v5109 = vpack.c.b16 %v3605, %v3597
        %v5110 = vpack.c.b16 %v3606, %v3598
        %v5111 = vpack.c.b16 %v3607, %v3599
        %v5112 = vpack.c.b16 %v3608, %v3600
        %v5113 = vpack.c.b16 %v3609, %v3601
        %v5114 = vpack.c.b16 %v3610, %v3602
        %v5115 = vpack.c.b16 %v3611, %v3603
        %v5116 = vpack.c.b16 %v3612, %v3604
        %v5117 = vpack.c.b16 %v3621, %v3613
        %v5118 = vpack.c.b16 %v3622, %v3614
        %v5119 = vpack.c.b16 %v3623, %v3615
        %v5120 = vpack.c.b16 %v3624, %v3616
        %v5121 = vpack.c.b16 %v3625, %v3617
        %v5122 = vpack.c.b16 %v3626, %v3618
        %v5123 = vpack.c.b16 %v3627, %v3619
        %v5124 = vpack.c.b16 %v3628, %v3620
        %v5125 = vpack.c.b16 %v3637, %v3629
        %v5126 = vpack.c.b16 %v3638, %v3630
        %v5127 = vpack.c.b16 %v3639, %v3631
        %v5128 = vpack.c.b16 %v3640, %v3632
        %v5129 = vpack.c.b16 %v3641, %v3633
        %v5130 = vpack.c.b16 %v3642, %v3634
        %v5131 = vpack.c.b16 %v3643, %v3635
        %v5132 = vpack.c.b16 %v3644, %v3636
        %v5133 = vpack.c.b16 %v3653, %v3645
        %v5134 = vpack.c.b16 %v3654, %v3646
        %v5135 = vpack.c.b16 %v3655, %v3647
        %v5136 = vpack.c.b16 %v3656, %v3648
        %v5137 = vpack.c.b16 %v3657, %v3649
        %v5138 = vpack.c.b16 %v3658, %v3650
        %v5139 = vpack.c.b16 %v3659, %v3651
        %v5140 = vpack.c.b16 %v3660, %v3652
        %v5141 = vpack.c.b16 %v3669, %v3661
        %v5142 = vpack.c.b16 %v3670, %v3662
        %v5143 = vpack.c.b16 %v3671, %v3663
        %v5144 = vpack.c.b16 %v3672, %v3664
        %v5145 = vpack.c.b16 %v3673, %v3665
        %v5146 = vpack.c.b16 %v3674, %v3666
        %v5147 = vpack.c.b16 %v3675, %v3667
        %v5148 = vpack.c.b16 %v3676, %v3668
        %v5149 = vpack.c.b16 %v3685, %v3677
        %v5150 = vpack.c.b16 %v3686, %v3678
        %v5151 = vpack.c.b16 %v3687, %v3679
        %v5152 = vpack.c.b16 %v3688, %v3680
        %v5153 = vpack.c.b16 %v3689, %v3681
        %v5154 = vpack.c.b16 %v3690, %v3682
        %v5155 = vpack.c.b16 %v3691, %v3683
        %v5156 = vpack.c.b16 %v3692, %v3684
        %v5157 = vpack.c.b16 %v3701, %v3693
        %v5158 = vpack.c.b16 %v3702, %v3694
        %v5159 = vpack.c.b16 %v3703, %v3695
        %v5160 = vpack.c.b16 %v3704, %v3696
        %v5161 = vpack.c.b16 %v3705, %v3697
        %v5162 = vpack.c.b16 %v3706, %v3698
        %v5163 = vpack.c.b16 %v3707, %v3699
        %v5164 = vpack.c.b16 %v3708, %v3700
        %v5165 = vpack.c.b16 %v3717, %v3709
        %v5166 = vpack.c.b16 %v3718, %v3710
        %v5167 = vpack.c.b16 %v3719, %v3711
        %v5168 = vpack.c.b16 %v3720, %v3712
        %v5169 = vpack.c.b16 %v3721, %v3713
        %v5170 = vpack.c.b16 %v3722, %v3714
        %v5171 = vpack.c.b16 %v3723, %v3715
        %v5172 = vpack.c.b16 %v3724, %v3716
        %v5173 = vpack.c.b16 %v3733, %v3725
        %v5174 = vpack.c.b16 %v3734, %v3726
        %v5175 = vpack.c.b16 %v3735, %v3727
        %v5176 = vpack.c.b16 %v3736, %v3728
        %v5177 = vpack.c.b16 %v3737, %v3729
        %v5178 = vpack.c.b16 %v3738, %v3730
        %v5179 = vpack.c.b16 %v3739, %v3731
        %v5180 = vpack.c.b16 %v3740, %v3732
        %v5181 = vpack.c.b16 %v3749, %v3741
        %v5182 = vpack.c.b16 %v3750, %v3742
        %v5183 = vpack.c.b16 %v3751, %v3743
        %v5184 = vpack.c.b16 %v3752, %v3744
        %v5185 = vpack.c.b16 %v3753, %v3745
        %v5186 = vpack.c.b16 %v3754, %v3746
        %v5187 = vpack.c.b16 %v3755, %v3747
        %v5188 = vpack.c.b16 %v3756, %v3748
        %v5189 = vpack.c.b16 %v3765, %v3757
        %v5190 = vpack.c.b16 %v3766, %v3758
        %v5191 = vpack.c.b16 %v3767, %v3759
        %v5192 = vpack.c.b16 %v3768, %v3760
        %v5193 = vpack.c.b16 %v3769, %v3761
        %v5194 = vpack.c.b16 %v3770, %v3762
        %v5195 = vpack.c.b16 %v3771, %v3763
        %v5196 = vpack.c.b16 %v3772, %v3764
        %v5197 = vpack.c.b16 %v3781, %v3773
        %v5198 = vpack.c.b16 %v3782, %v3774
        %v5199 = vpack.c.b16 %v3783, %v3775
        %v5200 = vpack.c.b16 %v3784, %v3776
        %v5201 = vpack.c.b16 %v3785, %v3777
        %v5202 = vpack.c.b16 %v3786, %v3778
        %v5203 = vpack.c.b16 %v3787, %v3779
        %v5204 = vpack.c.b16 %v3788, %v3780
        %v5205 = vpack.c.b16 %v3797, %v3789
        %v5206 = vpack.c.b16 %v3798, %v3790
        %v5207 = vpack.c.b16 %v3799, %v3791
        %v5208 = vpack.c.b16 %v3800, %v3792
        %v5209 = vpack.c.b16 %v3801, %v3793
        %v5210 = vpack.c.b16 %v3802, %v3794
        %v5211 = vpack.c.b16 %v3803, %v3795
        %v5212 = vpack.c.b16 %v3804, %v3796
        %v5213 = vpack.c.b16 %v3813, %v3805
        %v5214 = vpack.c.b16 %v3814, %v3806
        %v5215 = vpack.c.b16 %v3815, %v3807
        %v5216 = vpack.c.b16 %v3816, %v3808
        %v5217 = vpack.c.b16 %v3817, %v3809
        %v5218 = vpack.c.b16 %v3818, %v3810
        %v5219 = vpack.c.b16 %v3819, %v3811
        %v5220 = vpack.c.b16 %v3820, %v3812
        %v5221 = vpack.c.b16 %v3829, %v3821
        %v5222 = vpack.c.b16 %v3830, %v3822
        %v5223 = vpack.c.b16 %v3831, %v3823
        %v5224 = vpack.c.b16 %v3832, %v3824
        %v5225 = vpack.c.b16 %v3833, %v3825
        %v5226 = vpack.c.b16 %v3834, %v3826
        %v5227 = vpack.c.b16 %v3835, %v3827
        %v5228 = vpack.c.b16 %v3836, %v3828
        %v5229 = vpack.c.b16 %v3845, %v3837
        %v5230 = vpack.c.b16 %v3846, %v3838
        %v5231 = vpack.c.b16 %v3847, %v3839
        %v5232 = vpack.c.b16 %v3848, %v3840
        %v5233 = vpack.c.b16 %v3849, %v3841
        %v5234 = vpack.c.b16 %v3850, %v3842
        %v5235 = vpack.c.b16 %v3851, %v3843
        %v5236 = vpack.c.b16 %v3852, %v3844
        %v5237 = vpack.c.b16 %v3861, %v3853
        %v5238 = vpack.c.b16 %v3862, %v3854
        %v5239 = vpack.c.b16 %v3863, %v3855
        %v5240 = vpack.c.b16 %v3864, %v3856
        %v5241 = vpack.c.b16 %v3865, %v3857
        %v5242 = vpack.c.b16 %v3866, %v3858
        %v5243 = vpack.c.b16 %v3867, %v3859
        %v5244 = vpack.c.b16 %v3868, %v3860
        %v5245 = vpack.c.b16 %v3877, %v3869
        %v5246 = vpack.c.b16 %v3878, %v3870
        %v5247 = vpack.c.b16 %v3879, %v3871
        %v5248 = vpack.c.b16 %v3880, %v3872
        %v5249 = vpack.c.b16 %v3881, %v3873
        %v5250 = vpack.c.b16 %v3882, %v3874
        %v5251 = vpack.c.b16 %v3883, %v3875
        %v5252 = vpack.c.b16 %v3884, %v3876
        %v5253 = vpack.c.b16 %v3893, %v3885
        %v5254 = vpack.c.b16 %v3894, %v3886
        %v5255 = vpack.c.b16 %v3895, %v3887
        %v5256 = vpack.c.b16 %v3896, %v3888
        %v5257 = vpack.c.b16 %v3897, %v3889
        %v5258 = vpack.c.b16 %v3898, %v3890
        %v5259 = vpack.c.b16 %v3899, %v3891
        %v5260 = vpack.c.b16 %v3900, %v3892
        %v5261 = vpack.c.b16 %v3909, %v3901
        %v5262 = vpack.c.b16 %v3910, %v3902
        %v5263 = vpack.c.b16 %v3911, %v3903
        %v5264 = vpack.c.b16 %v3912, %v3904
        %v5265 = vpack.c.b16 %v3913, %v3905
        %v5266 = vpack.c.b16 %v3914, %v3906
        %v5267 = vpack.c.b16 %v3915, %v3907
        %v5268 = vpack.c.b16 %v3916, %v3908
        %v5269 = vpack.c.b16 %v3925, %v3917
        %v5270 = vpack.c.b16 %v3926, %v3918
        %v5271 = vpack.c.b16 %v3927, %v3919
        %v5272 = vpack.c.b16 %v3928, %v3920
        %v5273 = vpack.c.b16 %v3929, %v3921
        %v5274 = vpack.c.b16 %v3930, %v3922
        %v5275 = vpack.c.b16 %v3931, %v3923
        %v5276 = vpack.c.b16 %v3932, %v3924
        %v5277 = vpack.c.b16 %v3941, %v3933
        %v5278 = vpack.c.b16 %v3942, %v3934
        %v5279 = vpack.c.b16 %v3943, %v3935
        %v5280 = vpack.c.b16 %v3944, %v3936
        %v5281 = vpack.c.b16 %v3945, %v3937
        %v5282 = vpack.c.b16 %v3946, %v3938
        %v5283 = vpack.c.b16 %v3947, %v3939
        %v5284 = vpack.c.b16 %v3948, %v3940
        %v5285 = vpack.c.b16 %v3957, %v3949
        %v5286 = vpack.c.b16 %v3958, %v3950
        %v5287 = vpack.c.b16 %v3959, %v3951
        %v5288 = vpack.c.b16 %v3960, %v3952
        %v5289 = vpack.c.b16 %v3961, %v3953
        %v5290 = vpack.c.b16 %v3962, %v3954
        %v5291 = vpack.c.b16 %v3963, %v3955
        %v5292 = vpack.c.b16 %v3964, %v3956
        %v5293 = vpack.c.b16 %v3973, %v3965
        %v5294 = vpack.c.b16 %v3974, %v3966
        %v5295 = vpack.c.b16 %v3975, %v3967
        %v5296 = vpack.c.b16 %v3976, %v3968
        %v5297 = vpack.c.b16 %v3977, %v3969
        %v5298 = vpack.c.b16 %v3978, %v3970
        %v5299 = vpack.c.b16 %v3979, %v3971
        %v5300 = vpack.c.b16 %v3980, %v3972
        %v5301 = vpack.c.b16 %v3989, %v3981
        %v5302 = vpack.c.b16 %v3990, %v3982
        %v5303 = vpack.c.b16 %v3991, %v3983
        %v5304 = vpack.c.b16 %v3992, %v3984
        %v5305 = vpack.c.b16 %v3993, %v3985
        %v5306 = vpack.c.b16 %v3994, %v3986
        %v5307 = vpack.c.b16 %v3995, %v3987
        %v5308 = vpack.c.b16 %v3996, %v3988
        %v5309 = vpack.c.b16 %v4005, %v3997
        %v5310 = vpack.c.b16 %v4006, %v3998
        %v5311 = vpack.c.b16 %v4007, %v3999
        %v5312 = vpack.c.b16 %v4008, %v4000
        %v5313 = vpack.c.b16 %v4009, %v4001
        %v5314 = vpack.c.b16 %v4010, %v4002
        %v5315 = vpack.c.b16 %v4011, %v4003
        %v5316 = vpack.c.b16 %v4012, %v4004
        %v5317 = vpack.c.b16 %v4021, %v4013
        %v5318 = vpack.c.b16 %v4022, %v4014
        %v5319 = vpack.c.b16 %v4023, %v4015
        %v5320 = vpack.c.b16 %v4024, %v4016
        %v5321 = vpack.c.b16 %v4025, %v4017
        %v5322 = vpack.c.b16 %v4026, %v4018
        %v5323 = vpack.c.b16 %v4027, %v4019
        %v5324 = vpack.c.b16 %v4028, %v4020
        %v5325 = vpack.c.b16 %v4037, %v4029
        %v5326 = vpack.c.b16 %v4038, %v4030
        %v5327 = vpack.c.b16 %v4039, %v4031
        %v5328 = vpack.c.b16 %v4040, %v4032
        %v5329 = vpack.c.b16 %v4041, %v4033
        %v5330 = vpack.c.b16 %v4042, %v4034
        %v5331 = vpack.c.b16 %v4043, %v4035
        %v5332 = vpack.c.b16 %v4044, %v4036
        %v5333 = vpack.c.b16 %v4053, %v4045
        %v5334 = vpack.c.b16 %v4054, %v4046
        %v5335 = vpack.c.b16 %v4055, %v4047
        %v5336 = vpack.c.b16 %v4056, %v4048
        %v5337 = vpack.c.b16 %v4057, %v4049
        %v5338 = vpack.c.b16 %v4058, %v4050
        %v5339 = vpack.c.b16 %v4059, %v4051
        %v5340 = vpack.c.b16 %v4060, %v4052
        %v5341 = vpack.c.b16 %v4069, %v4061
        %v5342 = vpack.c.b16 %v4070, %v4062
        %v5343 = vpack.c.b16 %v4071, %v4063
        %v5344 = vpack.c.b16 %v4072, %v4064
        %v5345 = vpack.c.b16 %v4073, %v4065
        %v5346 = vpack.c.b16 %v4074, %v4066
        %v5347 = vpack.c.b16 %v4075, %v4067
        %v5348 = vpack.c.b16 %v4076, %v4068
        %v5349 = vpack.c.b16 %v4085, %v4077
        %v5350 = vpack.c.b16 %v4086, %v4078
        %v5351 = vpack.c.b16 %v4087, %v4079
        %v5352 = vpack.c.b16 %v4088, %v4080
        %v5353 = vpack.c.b16 %v4089, %v4081
        %v5354 = vpack.c.b16 %v4090, %v4082
        %v5355 = vpack.c.b16 %v4091, %v4083
        %v5356 = vpack.c.b16 %v4092, %v4084
        %v5357 = vpack.c.b16 %v4101, %v4093
        %v5358 = vpack.c.b16 %v4102, %v4094
        %v5359 = vpack.c.b16 %v4103, %v4095
        %v5360 = vpack.c.b16 %v4104, %v4096
        %v5361 = vpack.c.b16 %v4105, %v4097
        %v5362 = vpack.c.b16 %v4106, %v4098
        %v5363 = vpack.c.b16 %v4107, %v4099
        %v5364 = vpack.c.b16 %v4108, %v4100
        %v5365 = vpack.c.b16 %v4117, %v4109
        %v5366 = vpack.c.b16 %v4118, %v4110
        %v5367 = vpack.c.b16 %v4119, %v4111
        %v5368 = vpack.c.b16 %v4120, %v4112
        %v5369 = vpack.c.b16 %v4121, %v4113
        %v5370 = vpack.c.b16 %v4122, %v4114
        %v5371 = vpack.c.b16 %v4123, %v4115
        %v5372 = vpack.c.b16 %v4124, %v4116
        %v5373 = vpack.c.b16 %v4133, %v4125
        %v5374 = vpack.c.b16 %v4134, %v4126
        %v5375 = vpack.c.b16 %v4135, %v4127
        %v5376 = vpack.c.b16 %v4136, %v4128
        %v5377 = vpack.c.b16 %v4137, %v4129
        %v5378 = vpack.c.b16 %v4138, %v4130
        %v5379 = vpack.c.b16 %v4139, %v4131
        %v5380 = vpack.c.b16 %v4140, %v4132
        %v5381 = vpack.c.b16 %v4149, %v4141
        %v5382 = vpack.c.b16 %v4150, %v4142
        %v5383 = vpack.c.b16 %v4151, %v4143
        %v5384 = vpack.c.b16 %v4152, %v4144
        %v5385 = vpack.c.b16 %v4153, %v4145
        %v5386 = vpack.c.b16 %v4154, %v4146
        %v5387 = vpack.c.b16 %v4155, %v4147
        %v5388 = vpack.c.b16 %v4156, %v4148
        %v5389 = vpack.c.b16 %v4165, %v4157
        %v5390 = vpack.c.b16 %v4166, %v4158
        %v5391 = vpack.c.b16 %v4167, %v4159
        %v5392 = vpack.c.b16 %v4168, %v4160
        %v5393 = vpack.c.b16 %v4169, %v4161
        %v5394 = vpack.c.b16 %v4170, %v4162
        %v5395 = vpack.c.b16 %v4171, %v4163
        %v5396 = vpack.c.b16 %v4172, %v4164
        %v5397 = vpack.c.b16 %v4181, %v4173
        %v5398 = vpack.c.b16 %v4182, %v4174
        %v5399 = vpack.c.b16 %v4183, %v4175
        %v5400 = vpack.c.b16 %v4184, %v4176
        %v5401 = vpack.c.b16 %v4185, %v4177
        %v5402 = vpack.c.b16 %v4186, %v4178
        %v5403 = vpack.c.b16 %v4187, %v4179
        %v5404 = vpack.c.b16 %v4188, %v4180
        %v5405 = vpack.c.b16 %v4197, %v4189
        %v5406 = vpack.c.b16 %v4198, %v4190
        %v5407 = vpack.c.b16 %v4199, %v4191
        %v5408 = vpack.c.b16 %v4200, %v4192
        %v5409 = vpack.c.b16 %v4201, %v4193
        %v5410 = vpack.c.b16 %v4202, %v4194
        %v5411 = vpack.c.b16 %v4203, %v4195
        %v5412 = vpack.c.b16 %v4204, %v4196
        %v5413 = vpack.c.b16 %v4213, %v4205
        %v5414 = vpack.c.b16 %v4214, %v4206
        %v5415 = vpack.c.b16 %v4215, %v4207
        %v5416 = vpack.c.b16 %v4216, %v4208
        %v5417 = vpack.c.b16 %v4217, %v4209
        %v5418 = vpack.c.b16 %v4218, %v4210
        %v5419 = vpack.c.b16 %v4219, %v4211
        %v5420 = vpack.c.b16 %v4220, %v4212
        %v5421 = vpack.c.b16 %v4229, %v4221
        %v5422 = vpack.c.b16 %v4230, %v4222
        %v5423 = vpack.c.b16 %v4231, %v4223
        %v5424 = vpack.c.b16 %v4232, %v4224
        %v5425 = vpack.c.b16 %v4233, %v4225
        %v5426 = vpack.c.b16 %v4234, %v4226
        %v5427 = vpack.c.b16 %v4235, %v4227
        %v5428 = vpack.c.b16 %v4236, %v4228
        %v5429 = vpack.c.b16 %v4245, %v4237
        %v5430 = vpack.c.b16 %v4246, %v4238
        %v5431 = vpack.c.b16 %v4247, %v4239
        %v5432 = vpack.c.b16 %v4248, %v4240
        %v5433 = vpack.c.b16 %v4249, %v4241
        %v5434 = vpack.c.b16 %v4250, %v4242
        %v5435 = vpack.c.b16 %v4251, %v4243
        %v5436 = vpack.c.b16 %v4252, %v4244
        %v5437 = vpack.c.b16 %v4261, %v4253
        %v5438 = vpack.c.b16 %v4262, %v4254
        %v5439 = vpack.c.b16 %v4263, %v4255
        %v5440 = vpack.c.b16 %v4264, %v4256
        %v5441 = vpack.c.b16 %v4265, %v4257
        %v5442 = vpack.c.b16 %v4266, %v4258
        %v5443 = vpack.c.b16 %v4267, %v4259
        %v5444 = vpack.c.b16 %v4268, %v4260
        %v5445 = vpack.c.b16 %v4277, %v4269
        %v5446 = vpack.c.b16 %v4278, %v4270
        %v5447 = vpack.c.b16 %v4279, %v4271
        %v5448 = vpack.c.b16 %v4280, %v4272
        %v5449 = vpack.c.b16 %v4281, %v4273
        %v5450 = vpack.c.b16 %v4282, %v4274
        %v5451 = vpack.c.b16 %v4283, %v4275
        %v5452 = vpack.c.b16 %v4284, %v4276
        %v5453 = vpack.c.b16 %v4293, %v4285
        %v5454 = vpack.c.b16 %v4294, %v4286
        %v5455 = vpack.c.b16 %v4295, %v4287
        %v5456 = vpack.c.b16 %v4296, %v4288
        %v5457 = vpack.c.b16 %v4297, %v4289
        %v5458 = vpack.c.b16 %v4298, %v4290
        %v5459 = vpack.c.b16 %v4299, %v4291
        %v5460 = vpack.c.b16 %v4300, %v4292
        %v5461 = vpack.c.b16 %v4309, %v4301
        %v5462 = vpack.c.b16 %v4310, %v4302
        %v5463 = vpack.c.b16 %v4311, %v4303
        %v5464 = vpack.c.b16 %v4312, %v4304
        %v5465 = vpack.c.b16 %v4313, %v4305
        %v5466 = vpack.c.b16 %v4314, %v4306
        %v5467 = vpack.c.b16 %v4315, %v4307
        %v5468 = vpack.c.b16 %v4316, %v4308
        %v5469 = vpack.c.b16 %v4325, %v4317
        %v5470 = vpack.c.b16 %v4326, %v4318
        %v5471 = vpack.c.b16 %v4327, %v4319
        %v5472 = vpack.c.b16 %v4328, %v4320
        %v5473 = vpack.c.b16 %v4329, %v4321
        %v5474 = vpack.c.b16 %v4330, %v4322
        %v5475 = vpack.c.b16 %v4331, %v4323
        %v5476 = vpack.c.b16 %v4332, %v4324
        %v5477 = vpack.c.b16 %v4341, %v4333
        %v5478 = vpack.c.b16 %v4342, %v4334
        %v5479 = vpack.c.b16 %v4343, %v4335
        %v5480 = vpack.c.b16 %v4344, %v4336
        %v5481 = vpack.c.b16 %v4345, %v4337
        %v5482 = vpack.c.b16 %v4346, %v4338
        %v5483 = vpack.c.b16 %v4347, %v4339
        %v5484 = vpack.c.b16 %v4348, %v4340
        %v5485 = vpack.c.b16 %v4357, %v4349
        %v5486 = vpack.c.b16 %v4358, %v4350
        %v5487 = vpack.c.b16 %v4359, %v4351
        %v5488 = vpack.c.b16 %v4360, %v4352
        %v5489 = vpack.c.b16 %v4361, %v4353
        %v5490 = vpack.c.b16 %v4362, %v4354
        %v5491 = vpack.c.b16 %v4363, %v4355
        %v5492 = vpack.c.b16 %v4364, %v4356
        %v5493 = vpack.c.b16 %v4373, %v4365
        %v5494 = vpack.c.b16 %v4374, %v4366
        %v5495 = vpack.c.b16 %v4375, %v4367
        %v5496 = vpack.c.b16 %v4376, %v4368
        %v5497 = vpack.c.b16 %v4377, %v4369
        %v5498 = vpack.c.b16 %v4378, %v4370
        %v5499 = vpack.c.b16 %v4379, %v4371
        %v5500 = vpack.c.b16 %v4380, %v4372
        %v5501 = vpack.c.b16 %v4389, %v4381
        %v5502 = vpack.c.b16 %v4390, %v4382
        %v5503 = vpack.c.b16 %v4391, %v4383
        %v5504 = vpack.c.b16 %v4392, %v4384
        %v5505 = vpack.c.b16 %v4393, %v4385
        %v5506 = vpack.c.b16 %v4394, %v4386
        %v5507 = vpack.c.b16 %v4395, %v4387
        %v5508 = vpack.c.b16 %v4396, %v4388
        %v5509 = vpack.c.b16 %v4405, %v4397
        %v5510 = vpack.c.b16 %v4406, %v4398
        %v5511 = vpack.c.b16 %v4407, %v4399
        %v5512 = vpack.c.b16 %v4408, %v4400
        %v5513 = vpack.c.b16 %v4409, %v4401
        %v5514 = vpack.c.b16 %v4410, %v4402
        %v5515 = vpack.c.b16 %v4411, %v4403
        %v5516 = vpack.c.b16 %v4412, %v4404
        %v5517 = vpack.c.b16 %v4421, %v4413
        %v5518 = vpack.c.b16 %v4422, %v4414
        %v5519 = vpack.c.b16 %v4423, %v4415
        %v5520 = vpack.c.b16 %v4424, %v4416
        %v5521 = vpack.c.b16 %v4425, %v4417
        %v5522 = vpack.c.b16 %v4426, %v4418
        %v5523 = vpack.c.b16 %v4427, %v4419
        %v5524 = vpack.c.b16 %v4428, %v4420
        %v5525 = vpack.c.b16 %v4437, %v4429
        %v5526 = vpack.c.b16 %v4438, %v4430
        %v5527 = vpack.c.b16 %v4439, %v4431
        %v5528 = vpack.c.b16 %v4440, %v4432
        %v5529 = vpack.c.b16 %v4441, %v4433
        %v5530 = vpack.c.b16 %v4442, %v4434
        %v5531 = vpack.c.b16 %v4443, %v4435
        %v5532 = vpack.c.b16 %v4444, %v4436
        %v5533 = vpack.c.b16 %v4453, %v4445
        %v5534 = vpack.c.b16 %v4454, %v4446
        %v5535 = vpack.c.b16 %v4455, %v4447
        %v5536 = vpack.c.b16 %v4456, %v4448
        %v5537 = vpack.c.b16 %v4457, %v4449
        %v5538 = vpack.c.b16 %v4458, %v4450
        %v5539 = vpack.c.b16 %v4459, %v4451
        %v5540 = vpack.c.b16 %v4460, %v4452
        %v5541 = vpack.c.b16 %v4469, %v4461
        %v5542 = vpack.c.b16 %v4470, %v4462
        %v5543 = vpack.c.b16 %v4471, %v4463
        %v5544 = vpack.c.b16 %v4472, %v4464
        %v5545 = vpack.c.b16 %v4473, %v4465
        %v5546 = vpack.c.b16 %v4474, %v4466
        %v5547 = vpack.c.b16 %v4475, %v4467
        %v5548 = vpack.c.b16 %v4476, %v4468
        %v5549 = vpack.c.b16 %v4485, %v4477
        %v5550 = vpack.c.b16 %v4486, %v4478
        %v5551 = vpack.c.b16 %v4487, %v4479
        %v5552 = vpack.c.b16 %v4488, %v4480
        %v5553 = vpack.c.b16 %v4489, %v4481
        %v5554 = vpack.c.b16 %v4490, %v4482
        %v5555 = vpack.c.b16 %v4491, %v4483
        %v5556 = vpack.c.b16 %v4492, %v4484
        %v5557 = vpack.c.b16 %v4501, %v4493
        %v5558 = vpack.c.b16 %v4502, %v4494
        %v5559 = vpack.c.b16 %v4503, %v4495
        %v5560 = vpack.c.b16 %v4504, %v4496
        %v5561 = vpack.c.b16 %v4505, %v4497
        %v5562 = vpack.c.b16 %v4506, %v4498
        %v5563 = vpack.c.b16 %v4507, %v4499
        %v5564 = vpack.c.b16 %v4508, %v4500
        %v5565 = vpack.c.b16 %v4517, %v4509
        %v5566 = vpack.c.b16 %v4518, %v4510
        %v5567 = vpack.c.b16 %v4519, %v4511
        %v5568 = vpack.c.b16 %v4520, %v4512
        %v5569 = vpack.c.b16 %v4521, %v4513
        %v5570 = vpack.c.b16 %v4522, %v4514
        %v5571 = vpack.c.b16 %v4523, %v4515
        %v5572 = vpack.c.b16 %v4524, %v4516
        %v5573 = vpack.c.b16 %v4533, %v4525
        %v5574 = vpack.c.b16 %v4534, %v4526
        %v5575 = vpack.c.b16 %v4535, %v4527
        %v5576 = vpack.c.b16 %v4536, %v4528
        %v5577 = vpack.c.b16 %v4537, %v4529
        %v5578 = vpack.c.b16 %v4538, %v4530
        %v5579 = vpack.c.b16 %v4539, %v4531
        %v5580 = vpack.c.b16 %v4540, %v4532
        %v5581 = vpack.c.b16 %v4549, %v4541
        %v5582 = vpack.c.b16 %v4550, %v4542
        %v5583 = vpack.c.b16 %v4551, %v4543
        %v5584 = vpack.c.b16 %v4552, %v4544
        %v5585 = vpack.c.b16 %v4553, %v4545
        %v5586 = vpack.c.b16 %v4554, %v4546
        %v5587 = vpack.c.b16 %v4555, %v4547
        %v5588 = vpack.c.b16 %v4556, %v4548
        %v5589 = vpack.c.b16 %v4565, %v4557
        %v5590 = vpack.c.b16 %v4566, %v4558
        %v5591 = vpack.c.b16 %v4567, %v4559
        %v5592 = vpack.c.b16 %v4568, %v4560
        %v5593 = vpack.c.b16 %v4569, %v4561
        %v5594 = vpack.c.b16 %v4570, %v4562
        %v5595 = vpack.c.b16 %v4571, %v4563
        %v5596 = vpack.c.b16 %v4572, %v4564
        %6621 = vmatprep.subr.bf16.mxu0 %v4574
        %6622 = vmatpush1.bf16.msra.mxu0 %v4573
        %6623 = vmatprep.subr.bf16.mxu0 %v4582
        %6624 = vmatpush1.bf16.msra.mxu0 %v4581
        %6625 = vmatprep.subr.bf16.mxu0 %v4590
        %6626 = vmatpush1.bf16.msra.mxu0 %v4589
        %6627 = vmatprep.subr.bf16.mxu0 %v4598
        %6628 = vmatpush1.bf16.msra.mxu0 %v4597
        %6629 = vmatprep.subr.bf16.mxu0 %v4606
        %6630 = vmatpush1.bf16.msra.mxu0 %v4605
        %6631 = vmatprep.subr.bf16.mxu0 %v4614
        %6632 = vmatpush1.bf16.msra.mxu0 %v4613
        %6633 = vmatprep.subr.bf16.mxu0 %v4622
        %6634 = vmatpush1.bf16.msra.mxu0 %v4621
        %6635 = vmatprep.subr.bf16.mxu0 %v4630
        %6636 = vmatpush1.bf16.msra.mxu0 %v4629
        %6637 = vmatprep.subr.bf16.mxu0 %v4638
        %6638 = vmatpush1.bf16.msra.mxu0 %v4637
        %6639 = vmatprep.subr.bf16.mxu0 %v4646
        %6640 = vmatpush1.bf16.msra.mxu0 %v4645
        %6641 = vmatprep.subr.bf16.mxu0 %v4654
        %6642 = vmatpush1.bf16.msra.mxu0 %v4653
        %6643 = vmatprep.subr.bf16.mxu0 %v4662
        %6644 = vmatpush1.bf16.msra.mxu0 %v4661
        %6645 = vmatprep.subr.bf16.mxu0 %v4670
        %6646 = vmatpush1.bf16.msra.mxu0 %v4669
        %6647 = vmatprep.subr.bf16.mxu0 %v4678
        %6648 = vmatpush1.bf16.msra.mxu0 %v4677
        %6649 = vmatprep.subr.bf16.mxu0 %v4686
        %6650 = vmatpush1.bf16.msra.mxu0 %v4685
        %6651 = vmatprep.subr.bf16.mxu0 %v4694
        %6652 = vmatpush1.bf16.msra.mxu0 %v4693
        %6653 = vmatprep.mubr.bf16.mxu0 %v1470
        %6654 = vmatmul.mubr.bf16.gmra.mrb[0].mxu0 %v1469
        %v6655 = vpop.f32.mrb[0].mxu0
        %v6656 = vadd.f32 0.0, %v6655
        %v6657 = vpop.f32.mrb[0].mxu0
        %v6658 = vadd.f32 0.0, %v6657
        %v6659 = vpop.f32.mrb[0].mxu0
        %v6660 = vpop.f32.mrb[0].mxu0
        %6661 = vdwg.mxu0
        %6662 = vmatprep.subr.bf16.mxu0 %v4702
        %6663 = vmatpush1.bf16.msra.mxu0 %v4701
        %6664 = vmatprep.subr.bf16.mxu0 %v4710
        %6665 = vmatpush1.bf16.msra.mxu0 %v4709
        %6666 = vmatprep.subr.bf16.mxu0 %v4718
        %6667 = vmatpush1.bf16.msra.mxu0 %v4717
        %6668 = vmatprep.subr.bf16.mxu0 %v4726
        %6669 = vmatpush1.bf16.msra.mxu0 %v4725
        %6670 = vmatprep.subr.bf16.mxu0 %v4734
        %6671 = vmatpush1.bf16.msra.mxu0 %v4733
        %6672 = vmatprep.subr.bf16.mxu0 %v4742
        %6673 = vmatpush1.bf16.msra.mxu0 %v4741
        %6674 = vmatprep.subr.bf16.mxu0 %v4750
        %6675 = vmatpush1.bf16.msra.mxu0 %v4749
        %6676 = vmatprep.subr.bf16.mxu0 %v4758
        %6677 = vmatpush1.bf16.msra.mxu0 %v4757
        %6678 = vmatprep.subr.bf16.mxu0 %v4766
        %6679 = vmatpush1.bf16.msra.mxu0 %v4765
        %6680 = vmatprep.subr.bf16.mxu0 %v4774
        %6681 = vmatpush1.bf16.msra.mxu0 %v4773
        %6682 = vmatprep.subr.bf16.mxu0 %v4782
        %6683 = vmatpush1.bf16.msra.mxu0 %v4781
        %6684 = vmatprep.subr.bf16.mxu0 %v4790
        %6685 = vmatpush1.bf16.msra.mxu0 %v4789
        %6686 = vmatprep.subr.bf16.mxu0 %v4798
        %6687 = vmatpush1.bf16.msra.mxu0 %v4797
        %6688 = vmatprep.subr.bf16.mxu0 %v4806
        %6689 = vmatpush1.bf16.msra.mxu0 %v4805
        %6690 = vmatprep.subr.bf16.mxu0 %v4814
        %6691 = vmatpush1.bf16.msra.mxu0 %v4813
        %6692 = vmatprep.subr.bf16.mxu0 %v4822
        %6693 = vmatpush1.bf16.msra.mxu0 %v4821
        %6694 = vmatprep.mubr.bf16.mxu0 %v1472
        %6695 = vmatmul.mubr.bf16.gmra.mrb[0].mxu0 %v1471
        %v6696 = vpop.f32.mrb[0].mxu0
        %v6697 = vadd.f32 %v6656, %v6696
        %v6698 = vpop.f32.mrb[0].mxu0
        %v6699 = vadd.f32 %v6658, %v6698
        %v6700 = vpop.f32.mrb[0].mxu0
        %v6701 = vpop.f32.mrb[0].mxu0
        %6702 = vdwg.mxu0
        %6703 = vmatprep.subr.bf16.mxu0 %v4830
        %6704 = vmatpush1.bf16.msra.mxu0 %v4829
        %6705 = vmatprep.subr.bf16.mxu0 %v4838
        %6706 = vmatpush1.bf16.msra.mxu0 %v4837
        %6707 = vmatprep.subr.bf16.mxu0 %v4846
        %6708 = vmatpush1.bf16.msra.mxu0 %v4845
        %6709 = vmatprep.subr.bf16.mxu0 %v4854
        %6710 = vmatpush1.bf16.msra.mxu0 %v4853
        %6711 = vmatprep.subr.bf16.mxu0 %v4862
        %6712 = vmatpush1.bf16.msra.mxu0 %v4861
        %6713 = vmatprep.subr.bf16.mxu0 %v4870
        %6714 = vmatpush1.bf16.msra.mxu0 %v4869
        %6715 = vmatprep.subr.bf16.mxu0 %v4878
        %6716 = vmatpush1.bf16.msra.mxu0 %v4877
        %6717 = vmatprep.subr.bf16.mxu0 %v4886
        %6718 = vmatpush1.bf16.msra.mxu0 %v4885
        %6719 = vmatprep.subr.bf16.mxu0 %v4894
        %6720 = vmatpush1.bf16.msra.mxu0 %v4893
        %6721 = vmatprep.subr.bf16.mxu0 %v4902
        %6722 = vmatpush1.bf16.msra.mxu0 %v4901
        %6723 = vmatprep.subr.bf16.mxu0 %v4910
        %6724 = vmatpush1.bf16.msra.mxu0 %v4909
        %6725 = vmatprep.subr.bf16.mxu0 %v4918
        %6726 = vmatpush1.bf16.msra.mxu0 %v4917
        %6727 = vmatprep.subr.bf16.mxu0 %v4926
        %6728 = vmatpush1.bf16.msra.mxu0 %v4925
        %6729 = vmatprep.subr.bf16.mxu0 %v4934
        %6730 = vmatpush1.bf16.msra.mxu0 %v4933
        %6731 = vmatprep.subr.bf16.mxu0 %v4942
        %6732 = vmatpush1.bf16.msra.mxu0 %v4941
        %6733 = vmatprep.subr.bf16.mxu0 %v4950
        %6734 = vmatpush1.bf16.msra.mxu0 %v4949
        %6735 = vmatprep.mubr.bf16.mxu0 %v1474
        %6736 = vmatmul.mubr.bf16.gmra.mrb[0].mxu0 %v1473
        %v6737 = vpop.f32.mrb[0].mxu0
        %v6738 = vadd.f32 %v6697, %v6737
        %v6739 = vpop.f32.mrb[0].mxu0
        %v6740 = vadd.f32 %v6699, %v6739
        %v6741 = vpop.f32.mrb[0].mxu0
        %v6742 = vpop.f32.mrb[0].mxu0
        %6743 = vdwg.mxu0
        %6744 = vmatprep.subr.bf16.mxu0 %v4958
        %6745 = vmatpush1.bf16.msra.mxu0 %v4957
        %6746 = vmatprep.subr.bf16.mxu0 %v4966
        %6747 = vmatpush1.bf16.msra.mxu0 %v4965
        %6748 = vmatprep.subr.bf16.mxu0 %v4974
        %6749 = vmatpush1.bf16.msra.mxu0 %v4973
        %6750 = vmatprep.subr.bf16.mxu0 %v4982
        %6751 = vmatpush1.bf16.msra.mxu0 %v4981
        %6752 = vmatprep.subr.bf16.mxu0 %v4990
        %6753 = vmatpush1.bf16.msra.mxu0 %v4989
        %6754 = vmatprep.subr.bf16.mxu0 %v4998
        %6755 = vmatpush1.bf16.msra.mxu0 %v4997
        %6756 = vmatprep.subr.bf16.mxu0 %v5006
        %6757 = vmatpush1.bf16.msra.mxu0 %v5005
        %6758 = vmatprep.subr.bf16.mxu0 %v5014
        %6759 = vmatpush1.bf16.msra.mxu0 %v5013
        %6760 = vmatprep.subr.bf16.mxu0 %v5022
        %6761 = vmatpush1.bf16.msra.mxu0 %v5021
        %6762 = vmatprep.subr.bf16.mxu0 %v5030
        %6763 = vmatpush1.bf16.msra.mxu0 %v5029
        %6764 = vmatprep.subr.bf16.mxu0 %v5038
        %6765 = vmatpush1.bf16.msra.mxu0 %v5037
        %6766 = vmatprep.subr.bf16.mxu0 %v5046
        %6767 = vmatpush1.bf16.msra.mxu0 %v5045
        %6768 = vmatprep.subr.bf16.mxu0 %v5054
        %6769 = vmatpush1.bf16.msra.mxu0 %v5053
        %6770 = vmatprep.subr.bf16.mxu0 %v5062
        %6771 = vmatpush1.bf16.msra.mxu0 %v5061
        %6772 = vmatprep.subr.bf16.mxu0 %v5070
        %6773 = vmatpush1.bf16.msra.mxu0 %v5069
        %6774 = vmatprep.subr.bf16.mxu0 %v5078
        %6775 = vmatpush1.bf16.msra.mxu0 %v5077
        %6776 = vmatprep.mubr.bf16.mxu0 %v1476
        %6777 = vmatmul.mubr.bf16.gmra.mrb[0].mxu0 %v1475
        %v6778 = vpop.f32.mrb[0].mxu0
        %v6779 = vadd.f32 %v6738, %v6778
        %v6780 = vpop.f32.mrb[0].mxu0
        %v6781 = vadd.f32 %v6740, %v6780
        %v6782 = vpop.f32.mrb[0].mxu0
        %v6783 = vpop.f32.mrb[0].mxu0
        %6784 = vdwg.mxu0
        %6785 = vmatprep.subr.bf16.mxu0 %v5086
        %6786 = vmatpush1.bf16.msra.mxu0 %v5085
        %6787 = vmatprep.subr.bf16.mxu0 %v5094
        %6788 = vmatpush1.bf16.msra.mxu0 %v5093
        %6789 = vmatprep.subr.bf16.mxu0 %v5102
        %6790 = vmatpush1.bf16.msra.mxu0 %v5101
        %6791 = vmatprep.subr.bf16.mxu0 %v5110
        %6792 = vmatpush1.bf16.msra.mxu0 %v5109
        %6793 = vmatprep.subr.bf16.mxu0 %v5118
        %6794 = vmatpush1.bf16.msra.mxu0 %v5117
        %6795 = vmatprep.subr.bf16.mxu0 %v5126
        %6796 = vmatpush1.bf16.msra.mxu0 %v5125
        %6797 = vmatprep.subr.bf16.mxu0 %v5134
        %6798 = vmatpush1.bf16.msra.mxu0 %v5133
        %6799 = vmatprep.subr.bf16.mxu0 %v5142
        %6800 = vmatpush1.bf16.msra.mxu0 %v5141
        %6801 = vmatprep.subr.bf16.mxu0 %v5150
        %6802 = vmatpush1.bf16.msra.mxu0 %v5149
        %6803 = vmatprep.subr.bf16.mxu0 %v5158
        %6804 = vmatpush1.bf16.msra.mxu0 %v5157
        %6805 = vmatprep.subr.bf16.mxu0 %v5166
        %6806 = vmatpush1.bf16.msra.mxu0 %v5165
        %6807 = vmatprep.subr.bf16.mxu0 %v5174
        %6808 = vmatpush1.bf16.msra.mxu0 %v5173
        %6809 = vmatprep.subr.bf16.mxu0 %v5182
        %6810 = vmatpush1.bf16.msra.mxu0 %v5181
        %6811 = vmatprep.subr.bf16.mxu0 %v5190
        %6812 = vmatpush1.bf16.msra.mxu0 %v5189
        %6813 = vmatprep.subr.bf16.mxu0 %v5198
        %6814 = vmatpush1.bf16.msra.mxu0 %v5197
        %6815 = vmatprep.subr.bf16.mxu0 %v5206
        %6816 = vmatpush1.bf16.msra.mxu0 %v5205
        %6817 = vmatprep.mubr.bf16.mxu0 %v1478
        %6818 = vmatmul.mubr.bf16.gmra.mrb[0].mxu0 %v1477
        %v6819 = vpop.f32.mrb[0].mxu0
        %v6820 = vadd.f32 %v6779, %v6819
        %v6821 = vpop.f32.mrb[0].mxu0
        %v6822 = vadd.f32 %v6781, %v6821
        %v6823 = vpop.f32.mrb[0].mxu0
        %v6824 = vpop.f32.mrb[0].mxu0
        %6825 = vdwg.mxu0
        %6826 = vmatprep.subr.bf16.mxu0 %v5214
        %6827 = vmatpush1.bf16.msra.mxu0 %v5213
        %6828 = vmatprep.subr.bf16.mxu0 %v5222
        %6829 = vmatpush1.bf16.msra.mxu0 %v5221
        %6830 = vmatprep.subr.bf16.mxu0 %v5230
        %6831 = vmatpush1.bf16.msra.mxu0 %v5229
        %6832 = vmatprep.subr.bf16.mxu0 %v5238
        %6833 = vmatpush1.bf16.msra.mxu0 %v5237
        %6834 = vmatprep.subr.bf16.mxu0 %v5246
        %6835 = vmatpush1.bf16.msra.mxu0 %v5245
        %6836 = vmatprep.subr.bf16.mxu0 %v5254
        %6837 = vmatpush1.bf16.msra.mxu0 %v5253
        %6838 = vmatprep.subr.bf16.mxu0 %v5262
        %6839 = vmatpush1.bf16.msra.mxu0 %v5261
        %6840 = vmatprep.subr.bf16.mxu0 %v5270
        %6841 = vmatpush1.bf16.msra.mxu0 %v5269
        %6842 = vmatprep.subr.bf16.mxu0 %v5278
        %6843 = vmatpush1.bf16.msra.mxu0 %v5277
        %6844 = vmatprep.subr.bf16.mxu0 %v5286
        %6845 = vmatpush1.bf16.msra.mxu0 %v5285
        %6846 = vmatprep.subr.bf16.mxu0 %v5294
        %6847 = vmatpush1.bf16.msra.mxu0 %v5293
        %6848 = vmatprep.subr.bf16.mxu0 %v5302
        %6849 = vmatpush1.bf16.msra.mxu0 %v5301
        %6850 = vmatprep.subr.bf16.mxu0 %v5310
        %6851 = vmatpush1.bf16.msra.mxu0 %v5309
        %6852 = vmatprep.subr.bf16.mxu0 %v5318
        %6853 = vmatpush1.bf16.msra.mxu0 %v5317
        %6854 = vmatprep.subr.bf16.mxu0 %v5326
        %6855 = vmatpush1.bf16.msra.mxu0 %v5325
        %6856 = vmatprep.subr.bf16.mxu0 %v5334
        %6857 = vmatpush1.bf16.msra.mxu0 %v5333
        %6858 = vmatprep.mubr.bf16.mxu0 %v1480
        %6859 = vmatmul.mubr.bf16.gmra.mrb[0].mxu0 %v1479
        %v6860 = vpop.f32.mrb[0].mxu0
        %v6861 = vadd.f32 %v6820, %v6860
        %v6862 = vpop.f32.mrb[0].mxu0
        %v6863 = vadd.f32 %v6822, %v6862
        %v6864 = vpop.f32.mrb[0].mxu0
        %v6865 = vpop.f32.mrb[0].mxu0
        %6866 = vdwg.mxu0
        %6867 = vmatprep.subr.bf16.mxu0 %v5342
        %6868 = vmatpush1.bf16.msra.mxu0 %v5341
        %6869 = vmatprep.subr.bf16.mxu0 %v5350
        %6870 = vmatpush1.bf16.msra.mxu0 %v5349
        %6871 = vmatprep.subr.bf16.mxu0 %v5358
        %6872 = vmatpush1.bf16.msra.mxu0 %v5357
        %6873 = vmatprep.subr.bf16.mxu0 %v5366
        %6874 = vmatpush1.bf16.msra.mxu0 %v5365
        %6875 = vmatprep.subr.bf16.mxu0 %v5374
        %6876 = vmatpush1.bf16.msra.mxu0 %v5373
        %6877 = vmatprep.subr.bf16.mxu0 %v5382
        %6878 = vmatpush1.bf16.msra.mxu0 %v5381
        %6879 = vmatprep.subr.bf16.mxu0 %v5390
        %6880 = vmatpush1.bf16.msra.mxu0 %v5389
        %6881 = vmatprep.subr.bf16.mxu0 %v5398
        %6882 = vmatpush1.bf16.msra.mxu0 %v5397
        %6883 = vmatprep.subr.bf16.mxu0 %v5406
        %6884 = vmatpush1.bf16.msra.mxu0 %v5405
        %6885 = vmatprep.subr.bf16.mxu0 %v5414
        %6886 = vmatpush1.bf16.msra.mxu0 %v5413
        %6887 = vmatprep.subr.bf16.mxu0 %v5422
        %6888 = vmatpush1.bf16.msra.mxu0 %v5421
        %6889 = vmatprep.subr.bf16.mxu0 %v5430
        %6890 = vmatpush1.bf16.msra.mxu0 %v5429
        %6891 = vmatprep.subr.bf16.mxu0 %v5438
        %6892 = vmatpush1.bf16.msra.mxu0 %v5437
        %6893 = vmatprep.subr.bf16.mxu0 %v5446
        %6894 = vmatpush1.bf16.msra.mxu0 %v5445
        %6895 = vmatprep.subr.bf16.mxu0 %v5454
        %6896 = vmatpush1.bf16.msra.mxu0 %v5453
        %6897 = vmatprep.subr.bf16.mxu0 %v5462
        %6898 = vmatpush1.bf16.msra.mxu0 %v5461
        %6899 = vmatprep.mubr.bf16.mxu0 %v1482
        %6900 = vmatmul.mubr.bf16.gmra.mrb[0].mxu0 %v1481
        %v6901 = vpop.f32.mrb[0].mxu0
        %v6902 = vadd.f32 %v6861, %v6901
        %v6903 = vpop.f32.mrb[0].mxu0
        %v6904 = vadd.f32 %v6863, %v6903
        %v6905 = vpop.f32.mrb[0].mxu0
        %v6906 = vpop.f32.mrb[0].mxu0
        %6907 = vdwg.mxu0
        %6908 = vmatprep.subr.bf16.mxu0 %v5470
        %6909 = vmatpush1.bf16.msra.mxu0 %v5469
        %6910 = vmatprep.subr.bf16.mxu0 %v5478
        %6911 = vmatpush1.bf16.msra.mxu0 %v5477
        %6912 = vmatprep.subr.bf16.mxu0 %v5486
        %6913 = vmatpush1.bf16.msra.mxu0 %v5485
        %6914 = vmatprep.subr.bf16.mxu0 %v5494
        %6915 = vmatpush1.bf16.msra.mxu0 %v5493
        %6916 = vmatprep.subr.bf16.mxu0 %v5502
        %6917 = vmatpush1.bf16.msra.mxu0 %v5501
        %6918 = vmatprep.subr.bf16.mxu0 %v5510
        %6919 = vmatpush1.bf16.msra.mxu0 %v5509
        %6920 = vmatprep.subr.bf16.mxu0 %v5518
        %6921 = vmatpush1.bf16.msra.mxu0 %v5517
        %6922 = vmatprep.subr.bf16.mxu0 %v5526
        %6923 = vmatpush1.bf16.msra.mxu0 %v5525
        %6924 = vmatprep.subr.bf16.mxu0 %v5534
        %6925 = vmatpush1.bf16.msra.mxu0 %v5533
        %6926 = vmatprep.subr.bf16.mxu0 %v5542
        %6927 = vmatpush1.bf16.msra.mxu0 %v5541
        %6928 = vmatprep.subr.bf16.mxu0 %v5550
        %6929 = vmatpush1.bf16.msra.mxu0 %v5549
        %6930 = vmatprep.subr.bf16.mxu0 %v5558
        %6931 = vmatpush1.bf16.msra.mxu0 %v5557
        %6932 = vmatprep.subr.bf16.mxu0 %v5566
        %6933 = vmatpush1.bf16.msra.mxu0 %v5565
        %6934 = vmatprep.subr.bf16.mxu0 %v5574
        %6935 = vmatpush1.bf16.msra.mxu0 %v5573
        %6936 = vmatprep.subr.bf16.mxu0 %v5582
        %6937 = vmatpush1.bf16.msra.mxu0 %v5581
        %6938 = vmatprep.subr.bf16.mxu0 %v5590
        %6939 = vmatpush1.bf16.msra.mxu0 %v5589
        %6940 = vmatprep.mubr.bf16.mxu0 %v1484
        %6941 = vmatmul.mubr.bf16.gmra.mrb[0].mxu0 %v1483
        %v6942 = vpop.f32.mrb[0].mxu0
        %v6943 = vadd.f32 %v6902, %v6942
        %v6944 = vpop.f32.mrb[0].mxu0
        %v6945 = vadd.f32 %v6904, %v6944
        %v6946 = vpop.f32.mrb[0].mxu0
        %v6947 = vpop.f32.mrb[0].mxu0
        %6948 = vdwg.mxu0
        %6949 = vmatprep.subr.bf16.mxu0 %v4576
        %6950 = vmatpush1.bf16.msra.mxu0 %v4575
        %6951 = vmatprep.subr.bf16.mxu0 %v4584
        %6952 = vmatpush1.bf16.msra.mxu0 %v4583
        %6953 = vmatprep.subr.bf16.mxu0 %v4592
        %6954 = vmatpush1.bf16.msra.mxu0 %v4591
        %6955 = vmatprep.subr.bf16.mxu0 %v4600
        %6956 = vmatpush1.bf16.msra.mxu0 %v4599
        %6957 = vmatprep.subr.bf16.mxu0 %v4608
        %6958 = vmatpush1.bf16.msra.mxu0 %v4607
        %6959 = vmatprep.subr.bf16.mxu0 %v4616
        %6960 = vmatpush1.bf16.msra.mxu0 %v4615
        %6961 = vmatprep.subr.bf16.mxu0 %v4624
        %6962 = vmatpush1.bf16.msra.mxu0 %v4623
        %6963 = vmatprep.subr.bf16.mxu0 %v4632
        %6964 = vmatpush1.bf16.msra.mxu0 %v4631
        %6965 = vmatprep.subr.bf16.mxu0 %v4640
        %6966 = vmatpush1.bf16.msra.mxu0 %v4639
        %6967 = vmatprep.subr.bf16.mxu0 %v4648
        %6968 = vmatpush1.bf16.msra.mxu0 %v4647
        %6969 = vmatprep.subr.bf16.mxu0 %v4656
        %6970 = vmatpush1.bf16.msra.mxu0 %v4655
        %6971 = vmatprep.subr.bf16.mxu0 %v4664
        %6972 = vmatpush1.bf16.msra.mxu0 %v4663
        %6973 = vmatprep.subr.bf16.mxu0 %v4672
        %6974 = vmatpush1.bf16.msra.mxu0 %v4671
        %6975 = vmatprep.subr.bf16.mxu0 %v4680
        %6976 = vmatpush1.bf16.msra.mxu0 %v4679
        %6977 = vmatprep.subr.bf16.mxu0 %v4688
        %6978 = vmatpush1.bf16.msra.mxu0 %v4687
        %6979 = vmatprep.subr.bf16.mxu0 %v4696
        %6980 = vmatpush1.bf16.msra.mxu0 %v4695
        %6981 = vmatprep.mubr.bf16.mxu0 %v1470
        %6982 = vmatmul.mubr.bf16.gmra.mrb[0].mxu0 %v1469
        %v6983 = vpop.f32.mrb[0].mxu0
        %v6984 = vadd.f32 0.0, %v6983
        %v6985 = vpop.f32.mrb[0].mxu0
        %v6986 = vadd.f32 0.0, %v6985
        %v6987 = vpop.f32.mrb[0].mxu0
        %v6988 = vpop.f32.mrb[0].mxu0
        %6989 = vdwg.mxu0
        %6990 = vmatprep.subr.bf16.mxu0 %v4704
        %6991 = vmatpush1.bf16.msra.mxu0 %v4703
        %6992 = vmatprep.subr.bf16.mxu0 %v4712
        %6993 = vmatpush1.bf16.msra.mxu0 %v4711
        %6994 = vmatprep.subr.bf16.mxu0 %v4720
        %6995 = vmatpush1.bf16.msra.mxu0 %v4719
        %6996 = vmatprep.subr.bf16.mxu0 %v4728
        %6997 = vmatpush1.bf16.msra.mxu0 %v4727
        %6998 = vmatprep.subr.bf16.mxu0 %v4736
        %6999 = vmatpush1.bf16.msra.mxu0 %v4735
        %7000 = vmatprep.subr.bf16.mxu0 %v4744
        %7001 = vmatpush1.bf16.msra.mxu0 %v4743
        %7002 = vmatprep.subr.bf16.mxu0 %v4752
        %7003 = vmatpush1.bf16.msra.mxu0 %v4751
        %7004 = vmatprep.subr.bf16.mxu0 %v4760
        %7005 = vmatpush1.bf16.msra.mxu0 %v4759
        %7006 = vmatprep.subr.bf16.mxu0 %v4768
        %7007 = vmatpush1.bf16.msra.mxu0 %v4767
        %7008 = vmatprep.subr.bf16.mxu0 %v4776
        %7009 = vmatpush1.bf16.msra.mxu0 %v4775
        %7010 = vmatprep.subr.bf16.mxu0 %v4784
        %7011 = vmatpush1.bf16.msra.mxu0 %v4783
        %7012 = vmatprep.subr.bf16.mxu0 %v4792
        %7013 = vmatpush1.bf16.msra.mxu0 %v4791
        %7014 = vmatprep.subr.bf16.mxu0 %v4800
        %7015 = vmatpush1.bf16.msra.mxu0 %v4799
        %7016 = vmatprep.subr.bf16.mxu0 %v4808
        %7017 = vmatpush1.bf16.msra.mxu0 %v4807
        %7018 = vmatprep.subr.bf16.mxu0 %v4816
        %7019 = vmatpush1.bf16.msra.mxu0 %v4815
        %7020 = vmatprep.subr.bf16.mxu0 %v4824
        %7021 = vmatpush1.bf16.msra.mxu0 %v4823
        %7022 = vmatprep.mubr.bf16.mxu0 %v1472
        %7023 = vmatmul.mubr.bf16.gmra.mrb[0].mxu0 %v1471
        %v7024 = vpop.f32.mrb[0].mxu0
        %v7025 = vadd.f32 %v6984, %v7024
        %v7026 = vpop.f32.mrb[0].mxu0
        %v7027 = vadd.f32 %v6986, %v7026
        %v7028 = vpop.f32.mrb[0].mxu0
        %v7029 = vpop.f32.mrb[0].mxu0
        %7030 = vdwg.mxu0
        %7031 = vmatprep.subr.bf16.mxu0 %v4832
        %7032 = vmatpush1.bf16.msra.mxu0 %v4831
        %7033 = vmatprep.subr.bf16.mxu0 %v4840
        %7034 = vmatpush1.bf16.msra.mxu0 %v4839
        %7035 = vmatprep.subr.bf16.mxu0 %v4848
        %7036 = vmatpush1.bf16.msra.mxu0 %v4847
        %7037 = vmatprep.subr.bf16.mxu0 %v4856
        %7038 = vmatpush1.bf16.msra.mxu0 %v4855
        %7039 = vmatprep.subr.bf16.mxu0 %v4864
        %7040 = vmatpush1.bf16.msra.mxu0 %v4863
        %7041 = vmatprep.subr.bf16.mxu0 %v4872
        %7042 = vmatpush1.bf16.msra.mxu0 %v4871
        %7043 = vmatprep.subr.bf16.mxu0 %v4880
        %7044 = vmatpush1.bf16.msra.mxu0 %v4879
        %7045 = vmatprep.subr.bf16.mxu0 %v4888
        %7046 = vmatpush1.bf16.msra.mxu0 %v4887
        %7047 = vmatprep.subr.bf16.mxu0 %v4896
        %7048 = vmatpush1.bf16.msra.mxu0 %v4895
        %7049 = vmatprep.subr.bf16.mxu0 %v4904
        %7050 = vmatpush1.bf16.msra.mxu0 %v4903
        %7051 = vmatprep.subr.bf16.mxu0 %v4912
        %7052 = vmatpush1.bf16.msra.mxu0 %v4911
        %7053 = vmatprep.subr.bf16.mxu0 %v4920
        %7054 = vmatpush1.bf16.msra.mxu0 %v4919
        %7055 = vmatprep.subr.bf16.mxu0 %v4928
        %7056 = vmatpush1.bf16.msra.mxu0 %v4927
        %7057 = vmatprep.subr.bf16.mxu0 %v4936
        %7058 = vmatpush1.bf16.msra.mxu0 %v4935
        %7059 = vmatprep.subr.bf16.mxu0 %v4944
        %7060 = vmatpush1.bf16.msra.mxu0 %v4943
        %7061 = vmatprep.subr.bf16.mxu0 %v4952
        %7062 = vmatpush1.bf16.msra.mxu0 %v4951
        %7063 = vmatprep.mubr.bf16.mxu0 %v1474
        %7064 = vmatmul.mubr.bf16.gmra.mrb[0].mxu0 %v1473
        %v7065 = vpop.f32.mrb[0].mxu0
        %v7066 = vadd.f32 %v7025, %v7065
        %v7067 = vpop.f32.mrb[0].mxu0
        %v7068 = vadd.f32 %v7027, %v7067
        %v7069 = vpop.f32.mrb[0].mxu0
        %v7070 = vpop.f32.mrb[0].mxu0
        %7071 = vdwg.mxu0
        %7072 = vmatprep.subr.bf16.mxu0 %v4960
        %7073 = vmatpush1.bf16.msra.mxu0 %v4959
        %7074 = vmatprep.subr.bf16.mxu0 %v4968
        %7075 = vmatpush1.bf16.msra.mxu0 %v4967
        %7076 = vmatprep.subr.bf16.mxu0 %v4976
        %7077 = vmatpush1.bf16.msra.mxu0 %v4975
        %7078 = vmatprep.subr.bf16.mxu0 %v4984
        %7079 = vmatpush1.bf16.msra.mxu0 %v4983
        %7080 = vmatprep.subr.bf16.mxu0 %v4992
        %7081 = vmatpush1.bf16.msra.mxu0 %v4991
        %7082 = vmatprep.subr.bf16.mxu0 %v5000
        %7083 = vmatpush1.bf16.msra.mxu0 %v4999
        %7084 = vmatprep.subr.bf16.mxu0 %v5008
        %7085 = vmatpush1.bf16.msra.mxu0 %v5007
        %7086 = vmatprep.subr.bf16.mxu0 %v5016
        %7087 = vmatpush1.bf16.msra.mxu0 %v5015
        %7088 = vmatprep.subr.bf16.mxu0 %v5024
        %7089 = vmatpush1.bf16.msra.mxu0 %v5023
        %7090 = vmatprep.subr.bf16.mxu0 %v5032
        %7091 = vmatpush1.bf16.msra.mxu0 %v5031
        %7092 = vmatprep.subr.bf16.mxu0 %v5040
        %7093 = vmatpush1.bf16.msra.mxu0 %v5039
        %7094 = vmatprep.subr.bf16.mxu0 %v5048
        %7095 = vmatpush1.bf16.msra.mxu0 %v5047
        %7096 = vmatprep.subr.bf16.mxu0 %v5056
        %7097 = vmatpush1.bf16.msra.mxu0 %v5055
        %7098 = vmatprep.subr.bf16.mxu0 %v5064
        %7099 = vmatpush1.bf16.msra.mxu0 %v5063
        %7100 = vmatprep.subr.bf16.mxu0 %v5072
        %7101 = vmatpush1.bf16.msra.mxu0 %v5071
        %7102 = vmatprep.subr.bf16.mxu0 %v5080
        %7103 = vmatpush1.bf16.msra.mxu0 %v5079
        %7104 = vmatprep.mubr.bf16.mxu0 %v1476
        %7105 = vmatmul.mubr.bf16.gmra.mrb[0].mxu0 %v1475
        %v7106 = vpop.f32.mrb[0].mxu0
        %v7107 = vadd.f32 %v7066, %v7106
        %v7108 = vpop.f32.mrb[0].mxu0
        %v7109 = vadd.f32 %v7068, %v7108
        %v7110 = vpop.f32.mrb[0].mxu0
        %v7111 = vpop.f32.mrb[0].mxu0
        %7112 = vdwg.mxu0
        %7113 = vmatprep.subr.bf16.mxu0 %v5088
        %7114 = vmatpush1.bf16.msra.mxu0 %v5087
        %7115 = vmatprep.subr.bf16.mxu0 %v5096
        %7116 = vmatpush1.bf16.msra.mxu0 %v5095
        %7117 = vmatprep.subr.bf16.mxu0 %v5104
        %7118 = vmatpush1.bf16.msra.mxu0 %v5103
        %7119 = vmatprep.subr.bf16.mxu0 %v5112
        %7120 = vmatpush1.bf16.msra.mxu0 %v5111
        %7121 = vmatprep.subr.bf16.mxu0 %v5120
        %7122 = vmatpush1.bf16.msra.mxu0 %v5119
        %7123 = vmatprep.subr.bf16.mxu0 %v5128
        %7124 = vmatpush1.bf16.msra.mxu0 %v5127
        %7125 = vmatprep.subr.bf16.mxu0 %v5136
        %7126 = vmatpush1.bf16.msra.mxu0 %v5135
        %7127 = vmatprep.subr.bf16.mxu0 %v5144
        %7128 = vmatpush1.bf16.msra.mxu0 %v5143
        %7129 = vmatprep.subr.bf16.mxu0 %v5152
        %7130 = vmatpush1.bf16.msra.mxu0 %v5151
        %7131 = vmatprep.subr.bf16.mxu0 %v5160
        %7132 = vmatpush1.bf16.msra.mxu0 %v5159
        %7133 = vmatprep.subr.bf16.mxu0 %v5168
        %7134 = vmatpush1.bf16.msra.mxu0 %v5167
        %7135 = vmatprep.subr.bf16.mxu0 %v5176
        %7136 = vmatpush1.bf16.msra.mxu0 %v5175
        %7137 = vmatprep.subr.bf16.mxu0 %v5184
        %7138 = vmatpush1.bf16.msra.mxu0 %v5183
        %7139 = vmatprep.subr.bf16.mxu0 %v5192
        %7140 = vmatpush1.bf16.msra.mxu0 %v5191
        %7141 = vmatprep.subr.bf16.mxu0 %v5200
        %7142 = vmatpush1.bf16.msra.mxu0 %v5199
        %7143 = vmatprep.subr.bf16.mxu0 %v5208
        %7144 = vmatpush1.bf16.msra.mxu0 %v5207
        %7145 = vmatprep.mubr.bf16.mxu0 %v1478
        %7146 = vmatmul.mubr.bf16.gmra.mrb[0].mxu0 %v1477
        %v7147 = vpop.f32.mrb[0].mxu0
        %v7148 = vadd.f32 %v7107, %v7147
        %v7149 = vpop.f32.mrb[0].mxu0
        %v7150 = vadd.f32 %v7109, %v7149
        %v7151 = vpop.f32.mrb[0].mxu0
        %v7152 = vpop.f32.mrb[0].mxu0
        %7153 = vdwg.mxu0
        %7154 = vmatprep.subr.bf16.mxu0 %v5216
        %7155 = vmatpush1.bf16.msra.mxu0 %v5215
        %7156 = vmatprep.subr.bf16.mxu0 %v5224
        %7157 = vmatpush1.bf16.msra.mxu0 %v5223
        %7158 = vmatprep.subr.bf16.mxu0 %v5232
        %7159 = vmatpush1.bf16.msra.mxu0 %v5231
        %7160 = vmatprep.subr.bf16.mxu0 %v5240
        %7161 = vmatpush1.bf16.msra.mxu0 %v5239
        %7162 = vmatprep.subr.bf16.mxu0 %v5248
        %7163 = vmatpush1.bf16.msra.mxu0 %v5247
        %7164 = vmatprep.subr.bf16.mxu0 %v5256
        %7165 = vmatpush1.bf16.msra.mxu0 %v5255
        %7166 = vmatprep.subr.bf16.mxu0 %v5264
        %7167 = vmatpush1.bf16.msra.mxu0 %v5263
        %7168 = vmatprep.subr.bf16.mxu0 %v5272
        %7169 = vmatpush1.bf16.msra.mxu0 %v5271
        %7170 = vmatprep.subr.bf16.mxu0 %v5280
        %7171 = vmatpush1.bf16.msra.mxu0 %v5279
        %7172 = vmatprep.subr.bf16.mxu0 %v5288
        %7173 = vmatpush1.bf16.msra.mxu0 %v5287
        %7174 = vmatprep.subr.bf16.mxu0 %v5296
        %7175 = vmatpush1.bf16.msra.mxu0 %v5295
        %7176 = vmatprep.subr.bf16.mxu0 %v5304
        %7177 = vmatpush1.bf16.msra.mxu0 %v5303
        %7178 = vmatprep.subr.bf16.mxu0 %v5312
        %7179 = vmatpush1.bf16.msra.mxu0 %v5311
        %7180 = vmatprep.subr.bf16.mxu0 %v5320
        %7181 = vmatpush1.bf16.msra.mxu0 %v5319
        %7182 = vmatprep.subr.bf16.mxu0 %v5328
        %7183 = vmatpush1.bf16.msra.mxu0 %v5327
        %7184 = vmatprep.subr.bf16.mxu0 %v5336
        %7185 = vmatpush1.bf16.msra.mxu0 %v5335
        %7186 = vmatprep.mubr.bf16.mxu0 %v1480
        %7187 = vmatmul.mubr.bf16.gmra.mrb[0].mxu0 %v1479
        %v7188 = vpop.f32.mrb[0].mxu0
        %v7189 = vadd.f32 %v7148, %v7188
        %v7190 = vpop.f32.mrb[0].mxu0
        %v7191 = vadd.f32 %v7150, %v7190
        %v7192 = vpop.f32.mrb[0].mxu0
        %v7193 = vpop.f32.mrb[0].mxu0
        %7194 = vdwg.mxu0
        %7195 = vmatprep.subr.bf16.mxu0 %v5344
        %7196 = vmatpush1.bf16.msra.mxu0 %v5343
        %7197 = vmatprep.subr.bf16.mxu0 %v5352
        %7198 = vmatpush1.bf16.msra.mxu0 %v5351
        %7199 = vmatprep.subr.bf16.mxu0 %v5360
        %7200 = vmatpush1.bf16.msra.mxu0 %v5359
        %7201 = vmatprep.subr.bf16.mxu0 %v5368
        %7202 = vmatpush1.bf16.msra.mxu0 %v5367
        %7203 = vmatprep.subr.bf16.mxu0 %v5376
        %7204 = vmatpush1.bf16.msra.mxu0 %v5375
        %7205 = vmatprep.subr.bf16.mxu0 %v5384
        %7206 = vmatpush1.bf16.msra.mxu0 %v5383
        %7207 = vmatprep.subr.bf16.mxu0 %v5392
        %7208 = vmatpush1.bf16.msra.mxu0 %v5391
        %7209 = vmatprep.subr.bf16.mxu0 %v5400
        %7210 = vmatpush1.bf16.msra.mxu0 %v5399
        %7211 = vmatprep.subr.bf16.mxu0 %v5408
        %7212 = vmatpush1.bf16.msra.mxu0 %v5407
        %7213 = vmatprep.subr.bf16.mxu0 %v5416
        %7214 = vmatpush1.bf16.msra.mxu0 %v5415
        %7215 = vmatprep.subr.bf16.mxu0 %v5424
        %7216 = vmatpush1.bf16.msra.mxu0 %v5423
        %7217 = vmatprep.subr.bf16.mxu0 %v5432
        %7218 = vmatpush1.bf16.msra.mxu0 %v5431
        %7219 = vmatprep.subr.bf16.mxu0 %v5440
        %7220 = vmatpush1.bf16.msra.mxu0 %v5439
        %7221 = vmatprep.subr.bf16.mxu0 %v5448
        %7222 = vmatpush1.bf16.msra.mxu0 %v5447
        %7223 = vmatprep.subr.bf16.mxu0 %v5456
        %7224 = vmatpush1.bf16.msra.mxu0 %v5455
        %7225 = vmatprep.subr.bf16.mxu0 %v5464
        %7226 = vmatpush1.bf16.msra.mxu0 %v5463
        %7227 = vmatprep.mubr.bf16.mxu0 %v1482
        %7228 = vmatmul.mubr.bf16.gmra.mrb[0].mxu0 %v1481
        %v7229 = vpop.f32.mrb[0].mxu0
        %v7230 = vadd.f32 %v7189, %v7229
        %v7231 = vpop.f32.mrb[0].mxu0
        %v7232 = vadd.f32 %v7191, %v7231
        %v7233 = vpop.f32.mrb[0].mxu0
        %v7234 = vpop.f32.mrb[0].mxu0
        %7235 = vdwg.mxu0
        %7236 = vmatprep.subr.bf16.mxu0 %v5472
        %7237 = vmatpush1.bf16.msra.mxu0 %v5471
        %7238 = vmatprep.subr.bf16.mxu0 %v5480
        %7239 = vmatpush1.bf16.msra.mxu0 %v5479
        %7240 = vmatprep.subr.bf16.mxu0 %v5488
        %7241 = vmatpush1.bf16.msra.mxu0 %v5487
        %7242 = vmatprep.subr.bf16.mxu0 %v5496
        %7243 = vmatpush1.bf16.msra.mxu0 %v5495
        %7244 = vmatprep.subr.bf16.mxu0 %v5504
        %7245 = vmatpush1.bf16.msra.mxu0 %v5503
        %7246 = vmatprep.subr.bf16.mxu0 %v5512
        %7247 = vmatpush1.bf16.msra.mxu0 %v5511
        %7248 = vmatprep.subr.bf16.mxu0 %v5520
        %7249 = vmatpush1.bf16.msra.mxu0 %v5519
        %7250 = vmatprep.subr.bf16.mxu0 %v5528
        %7251 = vmatpush1.bf16.msra.mxu0 %v5527
        %7252 = vmatprep.subr.bf16.mxu0 %v5536
        %7253 = vmatpush1.bf16.msra.mxu0 %v5535
        %7254 = vmatprep.subr.bf16.mxu0 %v5544
        %7255 = vmatpush1.bf16.msra.mxu0 %v5543
        %7256 = vmatprep.subr.bf16.mxu0 %v5552
        %7257 = vmatpush1.bf16.msra.mxu0 %v5551
        %7258 = vmatprep.subr.bf16.mxu0 %v5560
        %7259 = vmatpush1.bf16.msra.mxu0 %v5559
        %7260 = vmatprep.subr.bf16.mxu0 %v5568
        %7261 = vmatpush1.bf16.msra.mxu0 %v5567
        %7262 = vmatprep.subr.bf16.mxu0 %v5576
        %7263 = vmatpush1.bf16.msra.mxu0 %v5575
        %7264 = vmatprep.subr.bf16.mxu0 %v5584
        %7265 = vmatpush1.bf16.msra.mxu0 %v5583
        %7266 = vmatprep.subr.bf16.mxu0 %v5592
        %7267 = vmatpush1.bf16.msra.mxu0 %v5591
        %7268 = vmatprep.mubr.bf16.mxu0 %v1484
        %7269 = vmatmul.mubr.bf16.gmra.mrb[0].mxu0 %v1483
        %v7270 = vpop.f32.mrb[0].mxu0
        %v7271 = vadd.f32 %v7230, %v7270
        %v7272 = vpop.f32.mrb[0].mxu0
        %v7273 = vadd.f32 %v7232, %v7272
        %v7274 = vpop.f32.mrb[0].mxu0
        %v7275 = vpop.f32.mrb[0].mxu0
        %7276 = vdwg.mxu0
        %7277 = vmatprep.subr.bf16.mxu0 %v4578
        %7278 = vmatpush1.bf16.msra.mxu0 %v4577
        %7279 = vmatprep.subr.bf16.mxu0 %v4586
        %7280 = vmatpush1.bf16.msra.mxu0 %v4585
        %7281 = vmatprep.subr.bf16.mxu0 %v4594
        %7282 = vmatpush1.bf16.msra.mxu0 %v4593
        %7283 = vmatprep.subr.bf16.mxu0 %v4602
        %7284 = vmatpush1.bf16.msra.mxu0 %v4601
        %7285 = vmatprep.subr.bf16.mxu0 %v4610
        %7286 = vmatpush1.bf16.msra.mxu0 %v4609
        %7287 = vmatprep.subr.bf16.mxu0 %v4618
        %7288 = vmatpush1.bf16.msra.mxu0 %v4617
        %7289 = vmatprep.subr.bf16.mxu0 %v4626
        %7290 = vmatpush1.bf16.msra.mxu0 %v4625
        %7291 = vmatprep.subr.bf16.mxu0 %v4634
        %7292 = vmatpush1.bf16.msra.mxu0 %v4633
        %7293 = vmatprep.subr.bf16.mxu0 %v4642
        %7294 = vmatpush1.bf16.msra.mxu0 %v4641
        %7295 = vmatprep.subr.bf16.mxu0 %v4650
        %7296 = vmatpush1.bf16.msra.mxu0 %v4649
        %7297 = vmatprep.subr.bf16.mxu0 %v4658
        %7298 = vmatpush1.bf16.msra.mxu0 %v4657
        %7299 = vmatprep.subr.bf16.mxu0 %v4666
        %7300 = vmatpush1.bf16.msra.mxu0 %v4665
        %7301 = vmatprep.subr.bf16.mxu0 %v4674
        %7302 = vmatpush1.bf16.msra.mxu0 %v4673
        %7303 = vmatprep.subr.bf16.mxu0 %v4682
        %7304 = vmatpush1.bf16.msra.mxu0 %v4681
        %7305 = vmatprep.subr.bf16.mxu0 %v4690
        %7306 = vmatpush1.bf16.msra.mxu0 %v4689
        %7307 = vmatprep.subr.bf16.mxu0 %v4698
        %7308 = vmatpush1.bf16.msra.mxu0 %v4697
        %7309 = vmatprep.mubr.bf16.mxu0 %v1470
        %7310 = vmatmul.mubr.bf16.gmra.mrb[0].mxu0 %v1469
        %v7311 = vpop.f32.mrb[0].mxu0
        %v7312 = vadd.f32 0.0, %v7311
        %v7313 = vpop.f32.mrb[0].mxu0
        %v7314 = vadd.f32 0.0, %v7313
        %v7315 = vpop.f32.mrb[0].mxu0
        %v7316 = vpop.f32.mrb[0].mxu0
        %7317 = vdwg.mxu0
        %7318 = vmatprep.subr.bf16.mxu0 %v4706
        %7319 = vmatpush1.bf16.msra.mxu0 %v4705
        %7320 = vmatprep.subr.bf16.mxu0 %v4714
        %7321 = vmatpush1.bf16.msra.mxu0 %v4713
        %7322 = vmatprep.subr.bf16.mxu0 %v4722
        %7323 = vmatpush1.bf16.msra.mxu0 %v4721
        %7324 = vmatprep.subr.bf16.mxu0 %v4730
        %7325 = vmatpush1.bf16.msra.mxu0 %v4729
        %7326 = vmatprep.subr.bf16.mxu0 %v4738
        %7327 = vmatpush1.bf16.msra.mxu0 %v4737
        %7328 = vmatprep.subr.bf16.mxu0 %v4746
        %7329 = vmatpush1.bf16.msra.mxu0 %v4745
        %7330 = vmatprep.subr.bf16.mxu0 %v4754
        %7331 = vmatpush1.bf16.msra.mxu0 %v4753
        %7332 = vmatprep.subr.bf16.mxu0 %v4762
        %7333 = vmatpush1.bf16.msra.mxu0 %v4761
        %7334 = vmatprep.subr.bf16.mxu0 %v4770
        %7335 = vmatpush1.bf16.msra.mxu0 %v4769
        %7336 = vmatprep.subr.bf16.mxu0 %v4778
        %7337 = vmatpush1.bf16.msra.mxu0 %v4777
        %7338 = vmatprep.subr.bf16.mxu0 %v4786
        %7339 = vmatpush1.bf16.msra.mxu0 %v4785
        %7340 = vmatprep.subr.bf16.mxu0 %v4794
        %7341 = vmatpush1.bf16.msra.mxu0 %v4793
        %7342 = vmatprep.subr.bf16.mxu0 %v4802
        %7343 = vmatpush1.bf16.msra.mxu0 %v4801
        %7344 = vmatprep.subr.bf16.mxu0 %v4810
        %7345 = vmatpush1.bf16.msra.mxu0 %v4809
        %7346 = vmatprep.subr.bf16.mxu0 %v4818
        %7347 = vmatpush1.bf16.msra.mxu0 %v4817
        %7348 = vmatprep.subr.bf16.mxu0 %v4826
        %7349 = vmatpush1.bf16.msra.mxu0 %v4825
        %7350 = vmatprep.mubr.bf16.mxu0 %v1472
        %7351 = vmatmul.mubr.bf16.gmra.mrb[0].mxu0 %v1471
        %v7352 = vpop.f32.mrb[0].mxu0
        %v7353 = vadd.f32 %v7312, %v7352
        %v7354 = vpop.f32.mrb[0].mxu0
        %v7355 = vadd.f32 %v7314, %v7354
        %v7356 = vpop.f32.mrb[0].mxu0
        %v7357 = vpop.f32.mrb[0].mxu0
        %7358 = vdwg.mxu0
        %7359 = vmatprep.subr.bf16.mxu0 %v4834
        %7360 = vmatpush1.bf16.msra.mxu0 %v4833
        %7361 = vmatprep.subr.bf16.mxu0 %v4842
        %7362 = vmatpush1.bf16.msra.mxu0 %v4841
        %7363 = vmatprep.subr.bf16.mxu0 %v4850
        %7364 = vmatpush1.bf16.msra.mxu0 %v4849
        %7365 = vmatprep.subr.bf16.mxu0 %v4858
        %7366 = vmatpush1.bf16.msra.mxu0 %v4857
        %7367 = vmatprep.subr.bf16.mxu0 %v4866
        %7368 = vmatpush1.bf16.msra.mxu0 %v4865
        %7369 = vmatprep.subr.bf16.mxu0 %v4874
        %7370 = vmatpush1.bf16.msra.mxu0 %v4873
        %7371 = vmatprep.subr.bf16.mxu0 %v4882
        %7372 = vmatpush1.bf16.msra.mxu0 %v4881
        %7373 = vmatprep.subr.bf16.mxu0 %v4890
        %7374 = vmatpush1.bf16.msra.mxu0 %v4889
        %7375 = vmatprep.subr.bf16.mxu0 %v4898
        %7376 = vmatpush1.bf16.msra.mxu0 %v4897
        %7377 = vmatprep.subr.bf16.mxu0 %v4906
        %7378 = vmatpush1.bf16.msra.mxu0 %v4905
        %7379 = vmatprep.subr.bf16.mxu0 %v4914
        %7380 = vmatpush1.bf16.msra.mxu0 %v4913
        %7381 = vmatprep.subr.bf16.mxu0 %v4922
        %7382 = vmatpush1.bf16.msra.mxu0 %v4921
        %7383 = vmatprep.subr.bf16.mxu0 %v4930
        %7384 = vmatpush1.bf16.msra.mxu0 %v4929
        %7385 = vmatprep.subr.bf16.mxu0 %v4938
        %7386 = vmatpush1.bf16.msra.mxu0 %v4937
        %7387 = vmatprep.subr.bf16.mxu0 %v4946
        %7388 = vmatpush1.bf16.msra.mxu0 %v4945
        %7389 = vmatprep.subr.bf16.mxu0 %v4954
        %7390 = vmatpush1.bf16.msra.mxu0 %v4953
        %7391 = vmatprep.mubr.bf16.mxu0 %v1474
        %7392 = vmatmul.mubr.bf16.gmra.mrb[0].mxu0 %v1473
        %v7393 = vpop.f32.mrb[0].mxu0
        %v7394 = vadd.f32 %v7353, %v7393
        %v7395 = vpop.f32.mrb[0].mxu0
        %v7396 = vadd.f32 %v7355, %v7395
        %v7397 = vpop.f32.mrb[0].mxu0
        %v7398 = vpop.f32.mrb[0].mxu0
        %7399 = vdwg.mxu0
        %7400 = vmatprep.subr.bf16.mxu0 %v4962
        %7401 = vmatpush1.bf16.msra.mxu0 %v4961
        %7402 = vmatprep.subr.bf16.mxu0 %v4970
        %7403 = vmatpush1.bf16.msra.mxu0 %v4969
        %7404 = vmatprep.subr.bf16.mxu0 %v4978
        %7405 = vmatpush1.bf16.msra.mxu0 %v4977
        %7406 = vmatprep.subr.bf16.mxu0 %v4986
        %7407 = vmatpush1.bf16.msra.mxu0 %v4985
        %7408 = vmatprep.subr.bf16.mxu0 %v4994
        %7409 = vmatpush1.bf16.msra.mxu0 %v4993
        %7410 = vmatprep.subr.bf16.mxu0 %v5002
        %7411 = vmatpush1.bf16.msra.mxu0 %v5001
        %7412 = vmatprep.subr.bf16.mxu0 %v5010
        %7413 = vmatpush1.bf16.msra.mxu0 %v5009
        %7414 = vmatprep.subr.bf16.mxu0 %v5018
        %7415 = vmatpush1.bf16.msra.mxu0 %v5017
        %7416 = vmatprep.subr.bf16.mxu0 %v5026
        %7417 = vmatpush1.bf16.msra.mxu0 %v5025
        %7418 = vmatprep.subr.bf16.mxu0 %v5034
        %7419 = vmatpush1.bf16.msra.mxu0 %v5033
        %7420 = vmatprep.subr.bf16.mxu0 %v5042
        %7421 = vmatpush1.bf16.msra.mxu0 %v5041
        %7422 = vmatprep.subr.bf16.mxu0 %v5050
        %7423 = vmatpush1.bf16.msra.mxu0 %v5049
        %7424 = vmatprep.subr.bf16.mxu0 %v5058
        %7425 = vmatpush1.bf16.msra.mxu0 %v5057
        %7426 = vmatprep.subr.bf16.mxu0 %v5066
        %7427 = vmatpush1.bf16.msra.mxu0 %v5065
        %7428 = vmatprep.subr.bf16.mxu0 %v5074
        %7429 = vmatpush1.bf16.msra.mxu0 %v5073
        %7430 = vmatprep.subr.bf16.mxu0 %v5082
        %7431 = vmatpush1.bf16.msra.mxu0 %v5081
        %7432 = vmatprep.mubr.bf16.mxu0 %v1476
        %7433 = vmatmul.mubr.bf16.gmra.mrb[0].mxu0 %v1475
        %v7434 = vpop.f32.mrb[0].mxu0
        %v7435 = vadd.f32 %v7394, %v7434
        %v7436 = vpop.f32.mrb[0].mxu0
        %v7437 = vadd.f32 %v7396, %v7436
        %v7438 = vpop.f32.mrb[0].mxu0
        %v7439 = vpop.f32.mrb[0].mxu0
        %7440 = vdwg.mxu0
        %7441 = vmatprep.subr.bf16.mxu0 %v5090
        %7442 = vmatpush1.bf16.msra.mxu0 %v5089
        %7443 = vmatprep.subr.bf16.mxu0 %v5098
        %7444 = vmatpush1.bf16.msra.mxu0 %v5097
        %7445 = vmatprep.subr.bf16.mxu0 %v5106
        %7446 = vmatpush1.bf16.msra.mxu0 %v5105
        %7447 = vmatprep.subr.bf16.mxu0 %v5114
        %7448 = vmatpush1.bf16.msra.mxu0 %v5113
        %7449 = vmatprep.subr.bf16.mxu0 %v5122
        %7450 = vmatpush1.bf16.msra.mxu0 %v5121
        %7451 = vmatprep.subr.bf16.mxu0 %v5130
        %7452 = vmatpush1.bf16.msra.mxu0 %v5129
        %7453 = vmatprep.subr.bf16.mxu0 %v5138
        %7454 = vmatpush1.bf16.msra.mxu0 %v5137
        %7455 = vmatprep.subr.bf16.mxu0 %v5146
        %7456 = vmatpush1.bf16.msra.mxu0 %v5145
        %7457 = vmatprep.subr.bf16.mxu0 %v5154
        %7458 = vmatpush1.bf16.msra.mxu0 %v5153
        %7459 = vmatprep.subr.bf16.mxu0 %v5162
        %7460 = vmatpush1.bf16.msra.mxu0 %v5161
        %7461 = vmatprep.subr.bf16.mxu0 %v5170
        %7462 = vmatpush1.bf16.msra.mxu0 %v5169
        %7463 = vmatprep.subr.bf16.mxu0 %v5178
        %7464 = vmatpush1.bf16.msra.mxu0 %v5177
        %7465 = vmatprep.subr.bf16.mxu0 %v5186
        %7466 = vmatpush1.bf16.msra.mxu0 %v5185
        %7467 = vmatprep.subr.bf16.mxu0 %v5194
        %7468 = vmatpush1.bf16.msra.mxu0 %v5193
        %7469 = vmatprep.subr.bf16.mxu0 %v5202
        %7470 = vmatpush1.bf16.msra.mxu0 %v5201
        %7471 = vmatprep.subr.bf16.mxu0 %v5210
        %7472 = vmatpush1.bf16.msra.mxu0 %v5209
        %7473 = vmatprep.mubr.bf16.mxu0 %v1478
        %7474 = vmatmul.mubr.bf16.gmra.mrb[0].mxu0 %v1477
        %v7475 = vpop.f32.mrb[0].mxu0
        %v7476 = vadd.f32 %v7435, %v7475
        %v7477 = vpop.f32.mrb[0].mxu0
        %v7478 = vadd.f32 %v7437, %v7477
        %v7479 = vpop.f32.mrb[0].mxu0
        %v7480 = vpop.f32.mrb[0].mxu0
        %7481 = vdwg.mxu0
        %7482 = vmatprep.subr.bf16.mxu0 %v5218
        %7483 = vmatpush1.bf16.msra.mxu0 %v5217
        %7484 = vmatprep.subr.bf16.mxu0 %v5226
        %7485 = vmatpush1.bf16.msra.mxu0 %v5225
        %7486 = vmatprep.subr.bf16.mxu0 %v5234
        %7487 = vmatpush1.bf16.msra.mxu0 %v5233
        %7488 = vmatprep.subr.bf16.mxu0 %v5242
        %7489 = vmatpush1.bf16.msra.mxu0 %v5241
        %7490 = vmatprep.subr.bf16.mxu0 %v5250
        %7491 = vmatpush1.bf16.msra.mxu0 %v5249
        %7492 = vmatprep.subr.bf16.mxu0 %v5258
        %7493 = vmatpush1.bf16.msra.mxu0 %v5257
        %7494 = vmatprep.subr.bf16.mxu0 %v5266
        %7495 = vmatpush1.bf16.msra.mxu0 %v5265
        %7496 = vmatprep.subr.bf16.mxu0 %v5274
        %7497 = vmatpush1.bf16.msra.mxu0 %v5273
        %7498 = vmatprep.subr.bf16.mxu0 %v5282
        %7499 = vmatpush1.bf16.msra.mxu0 %v5281
        %7500 = vmatprep.subr.bf16.mxu0 %v5290
        %7501 = vmatpush1.bf16.msra.mxu0 %v5289
        %7502 = vmatprep.subr.bf16.mxu0 %v5298
        %7503 = vmatpush1.bf16.msra.mxu0 %v5297
        %7504 = vmatprep.subr.bf16.mxu0 %v5306
        %7505 = vmatpush1.bf16.msra.mxu0 %v5305
        %7506 = vmatprep.subr.bf16.mxu0 %v5314
        %7507 = vmatpush1.bf16.msra.mxu0 %v5313
        %7508 = vmatprep.subr.bf16.mxu0 %v5322
        %7509 = vmatpush1.bf16.msra.mxu0 %v5321
        %7510 = vmatprep.subr.bf16.mxu0 %v5330
        %7511 = vmatpush1.bf16.msra.mxu0 %v5329
        %7512 = vmatprep.subr.bf16.mxu0 %v5338
        %7513 = vmatpush1.bf16.msra.mxu0 %v5337
        %7514 = vmatprep.mubr.bf16.mxu0 %v1480
        %7515 = vmatmul.mubr.bf16.gmra.mrb[0].mxu0 %v1479
        %v7516 = vpop.f32.mrb[0].mxu0
        %v7517 = vadd.f32 %v7476, %v7516
        %v7518 = vpop.f32.mrb[0].mxu0
        %v7519 = vadd.f32 %v7478, %v7518
        %v7520 = vpop.f32.mrb[0].mxu0
        %v7521 = vpop.f32.mrb[0].mxu0
        %7522 = vdwg.mxu0
        %7523 = vmatprep.subr.bf16.mxu0 %v5346
        %7524 = vmatpush1.bf16.msra.mxu0 %v5345
        %7525 = vmatprep.subr.bf16.mxu0 %v5354
        %7526 = vmatpush1.bf16.msra.mxu0 %v5353
        %7527 = vmatprep.subr.bf16.mxu0 %v5362
        %7528 = vmatpush1.bf16.msra.mxu0 %v5361
        %7529 = vmatprep.subr.bf16.mxu0 %v5370
        %7530 = vmatpush1.bf16.msra.mxu0 %v5369
        %7531 = vmatprep.subr.bf16.mxu0 %v5378
        %7532 = vmatpush1.bf16.msra.mxu0 %v5377
        %7533 = vmatprep.subr.bf16.mxu0 %v5386
        %7534 = vmatpush1.bf16.msra.mxu0 %v5385
        %7535 = vmatprep.subr.bf16.mxu0 %v5394
        %7536 = vmatpush1.bf16.msra.mxu0 %v5393
        %7537 = vmatprep.subr.bf16.mxu0 %v5402
        %7538 = vmatpush1.bf16.msra.mxu0 %v5401
        %7539 = vmatprep.subr.bf16.mxu0 %v5410
        %7540 = vmatpush1.bf16.msra.mxu0 %v5409
        %7541 = vmatprep.subr.bf16.mxu0 %v5418
        %7542 = vmatpush1.bf16.msra.mxu0 %v5417
        %7543 = vmatprep.subr.bf16.mxu0 %v5426
        %7544 = vmatpush1.bf16.msra.mxu0 %v5425
        %7545 = vmatprep.subr.bf16.mxu0 %v5434
        %7546 = vmatpush1.bf16.msra.mxu0 %v5433
        %7547 = vmatprep.subr.bf16.mxu0 %v5442
        %7548 = vmatpush1.bf16.msra.mxu0 %v5441
        %7549 = vmatprep.subr.bf16.mxu0 %v5450
        %7550 = vmatpush1.bf16.msra.mxu0 %v5449
        %7551 = vmatprep.subr.bf16.mxu0 %v5458
        %7552 = vmatpush1.bf16.msra.mxu0 %v5457
        %7553 = vmatprep.subr.bf16.mxu0 %v5466
        %7554 = vmatpush1.bf16.msra.mxu0 %v5465
        %7555 = vmatprep.mubr.bf16.mxu0 %v1482
        %7556 = vmatmul.mubr.bf16.gmra.mrb[0].mxu0 %v1481
        %v7557 = vpop.f32.mrb[0].mxu0
        %v7558 = vadd.f32 %v7517, %v7557
        %v7559 = vpop.f32.mrb[0].mxu0
        %v7560 = vadd.f32 %v7519, %v7559
        %v7561 = vpop.f32.mrb[0].mxu0
        %v7562 = vpop.f32.mrb[0].mxu0
        %7563 = vdwg.mxu0
        %7564 = vmatprep.subr.bf16.mxu0 %v5474
        %7565 = vmatpush1.bf16.msra.mxu0 %v5473
        %7566 = vmatprep.subr.bf16.mxu0 %v5482
        %7567 = vmatpush1.bf16.msra.mxu0 %v5481
        %7568 = vmatprep.subr.bf16.mxu0 %v5490
        %7569 = vmatpush1.bf16.msra.mxu0 %v5489
        %7570 = vmatprep.subr.bf16.mxu0 %v5498
        %7571 = vmatpush1.bf16.msra.mxu0 %v5497
        %7572 = vmatprep.subr.bf16.mxu0 %v5506
        %7573 = vmatpush1.bf16.msra.mxu0 %v5505
        %7574 = vmatprep.subr.bf16.mxu0 %v5514
        %7575 = vmatpush1.bf16.msra.mxu0 %v5513
        %7576 = vmatprep.subr.bf16.mxu0 %v5522
        %7577 = vmatpush1.bf16.msra.mxu0 %v5521
        %7578 = vmatprep.subr.bf16.mxu0 %v5530
        %7579 = vmatpush1.bf16.msra.mxu0 %v5529
        %7580 = vmatprep.subr.bf16.mxu0 %v5538
        %7581 = vmatpush1.bf16.msra.mxu0 %v5537
        %7582 = vmatprep.subr.bf16.mxu0 %v5546
        %7583 = vmatpush1.bf16.msra.mxu0 %v5545
        %7584 = vmatprep.subr.bf16.mxu0 %v5554
        %7585 = vmatpush1.bf16.msra.mxu0 %v5553
        %7586 = vmatprep.subr.bf16.mxu0 %v5562
        %7587 = vmatpush1.bf16.msra.mxu0 %v5561
        %7588 = vmatprep.subr.bf16.mxu0 %v5570
        %7589 = vmatpush1.bf16.msra.mxu0 %v5569
        %7590 = vmatprep.subr.bf16.mxu0 %v5578
        %7591 = vmatpush1.bf16.msra.mxu0 %v5577
        %7592 = vmatprep.subr.bf16.mxu0 %v5586
        %7593 = vmatpush1.bf16.msra.mxu0 %v5585
        %7594 = vmatprep.subr.bf16.mxu0 %v5594
        %7595 = vmatpush1.bf16.msra.mxu0 %v5593
        %7596 = vmatprep.mubr.bf16.mxu0 %v1484
        %7597 = vmatmul.mubr.bf16.gmra.mrb[0].mxu0 %v1483
        %v7598 = vpop.f32.mrb[0].mxu0
        %v7599 = vadd.f32 %v7558, %v7598
        %v7600 = vpop.f32.mrb[0].mxu0
        %v7601 = vadd.f32 %v7560, %v7600
        %v7602 = vpop.f32.mrb[0].mxu0
        %v7603 = vpop.f32.mrb[0].mxu0
        %7604 = vdwg.mxu0
        %7605 = vmatprep.subr.bf16.mxu0 %v4580
        %7606 = vmatpush1.bf16.msra.mxu0 %v4579
        %7607 = vmatprep.subr.bf16.mxu0 %v4588
        %7608 = vmatpush1.bf16.msra.mxu0 %v4587
        %7609 = vmatprep.subr.bf16.mxu0 %v4596
        %7610 = vmatpush1.bf16.msra.mxu0 %v4595
        %7611 = vmatprep.subr.bf16.mxu0 %v4604
        %7612 = vmatpush1.bf16.msra.mxu0 %v4603
        %7613 = vmatprep.subr.bf16.mxu0 %v4612
        %7614 = vmatpush1.bf16.msra.mxu0 %v4611
        %7615 = vmatprep.subr.bf16.mxu0 %v4620
        %7616 = vmatpush1.bf16.msra.mxu0 %v4619
        %7617 = vmatprep.subr.bf16.mxu0 %v4628
        %7618 = vmatpush1.bf16.msra.mxu0 %v4627
        %7619 = vmatprep.subr.bf16.mxu0 %v4636
        %7620 = vmatpush1.bf16.msra.mxu0 %v4635
        %7621 = vmatprep.subr.bf16.mxu0 %v4644
        %7622 = vmatpush1.bf16.msra.mxu0 %v4643
        %7623 = vmatprep.subr.bf16.mxu0 %v4652
        %7624 = vmatpush1.bf16.msra.mxu0 %v4651
        %7625 = vmatprep.subr.bf16.mxu0 %v4660
        %7626 = vmatpush1.bf16.msra.mxu0 %v4659
        %7627 = vmatprep.subr.bf16.mxu0 %v4668
        %7628 = vmatpush1.bf16.msra.mxu0 %v4667
        %7629 = vmatprep.subr.bf16.mxu0 %v4676
        %7630 = vmatpush1.bf16.msra.mxu0 %v4675
        %7631 = vmatprep.subr.bf16.mxu0 %v4684
        %7632 = vmatpush1.bf16.msra.mxu0 %v4683
        %7633 = vmatprep.subr.bf16.mxu0 %v4692
        %7634 = vmatpush1.bf16.msra.mxu0 %v4691
        %7635 = vmatprep.subr.bf16.mxu0 %v4700
        %7636 = vmatpush1.bf16.msra.mxu0 %v4699
        %7637 = vmatprep.mubr.bf16.mxu0 %v1470
        %7638 = vmatmul.mubr.bf16.gmra.mrb[0].mxu0 %v1469
        %v7639 = vpop.f32.mrb[0].mxu0
        %v7640 = vadd.f32 0.0, %v7639
        %v7641 = vpop.f32.mrb[0].mxu0
        %v7642 = vadd.f32 0.0, %v7641
        %v7643 = vpop.f32.mrb[0].mxu0
        %v7644 = vpop.f32.mrb[0].mxu0
        %7645 = vdwg.mxu0
        %7646 = vmatprep.subr.bf16.mxu0 %v4708
        %7647 = vmatpush1.bf16.msra.mxu0 %v4707
        %7648 = vmatprep.subr.bf16.mxu0 %v4716
        %7649 = vmatpush1.bf16.msra.mxu0 %v4715
        %7650 = vmatprep.subr.bf16.mxu0 %v4724
        %7651 = vmatpush1.bf16.msra.mxu0 %v4723
        %7652 = vmatprep.subr.bf16.mxu0 %v4732
        %7653 = vmatpush1.bf16.msra.mxu0 %v4731
        %7654 = vmatprep.subr.bf16.mxu0 %v4740
        %7655 = vmatpush1.bf16.msra.mxu0 %v4739
        %7656 = vmatprep.subr.bf16.mxu0 %v4748
        %7657 = vmatpush1.bf16.msra.mxu0 %v4747
        %7658 = vmatprep.subr.bf16.mxu0 %v4756
        %7659 = vmatpush1.bf16.msra.mxu0 %v4755
        %7660 = vmatprep.subr.bf16.mxu0 %v4764
        %7661 = vmatpush1.bf16.msra.mxu0 %v4763
        %7662 = vmatprep.subr.bf16.mxu0 %v4772
        %7663 = vmatpush1.bf16.msra.mxu0 %v4771
        %7664 = vmatprep.subr.bf16.mxu0 %v4780
        %7665 = vmatpush1.bf16.msra.mxu0 %v4779
        %7666 = vmatprep.subr.bf16.mxu0 %v4788
        %7667 = vmatpush1.bf16.msra.mxu0 %v4787
        %7668 = vmatprep.subr.bf16.mxu0 %v4796
        %7669 = vmatpush1.bf16.msra.mxu0 %v4795
        %7670 = vmatprep.subr.bf16.mxu0 %v4804
        %7671 = vmatpush1.bf16.msra.mxu0 %v4803
        %7672 = vmatprep.subr.bf16.mxu0 %v4812
        %7673 = vmatpush1.bf16.msra.mxu0 %v4811
        %7674 = vmatprep.subr.bf16.mxu0 %v4820
        %7675 = vmatpush1.bf16.msra.mxu0 %v4819
        %7676 = vmatprep.subr.bf16.mxu0 %v4828
        %7677 = vmatpush1.bf16.msra.mxu0 %v4827
        %7678 = vmatprep.mubr.bf16.mxu0 %v1472
        %7679 = vmatmul.mubr.bf16.gmra.mrb[0].mxu0 %v1471
        %v7680 = vpop.f32.mrb[0].mxu0
        %v7681 = vadd.f32 %v7640, %v7680
        %v7682 = vpop.f32.mrb[0].mxu0
        %v7683 = vadd.f32 %v7642, %v7682
        %v7684 = vpop.f32.mrb[0].mxu0
        %v7685 = vpop.f32.mrb[0].mxu0
        %7686 = vdwg.mxu0
        %7687 = vmatprep.subr.bf16.mxu0 %v4836
        %7688 = vmatpush1.bf16.msra.mxu0 %v4835
        %7689 = vmatprep.subr.bf16.mxu0 %v4844
        %7690 = vmatpush1.bf16.msra.mxu0 %v4843
        %7691 = vmatprep.subr.bf16.mxu0 %v4852
        %7692 = vmatpush1.bf16.msra.mxu0 %v4851
        %7693 = vmatprep.subr.bf16.mxu0 %v4860
        %7694 = vmatpush1.bf16.msra.mxu0 %v4859
        %7695 = vmatprep.subr.bf16.mxu0 %v4868
        %7696 = vmatpush1.bf16.msra.mxu0 %v4867
        %7697 = vmatprep.subr.bf16.mxu0 %v4876
        %7698 = vmatpush1.bf16.msra.mxu0 %v4875
        %7699 = vmatprep.subr.bf16.mxu0 %v4884
        %7700 = vmatpush1.bf16.msra.mxu0 %v4883
        %7701 = vmatprep.subr.bf16.mxu0 %v4892
        %7702 = vmatpush1.bf16.msra.mxu0 %v4891
        %7703 = vmatprep.subr.bf16.mxu0 %v4900
        %7704 = vmatpush1.bf16.msra.mxu0 %v4899
        %7705 = vmatprep.subr.bf16.mxu0 %v4908
        %7706 = vmatpush1.bf16.msra.mxu0 %v4907
        %7707 = vmatprep.subr.bf16.mxu0 %v4916
        %7708 = vmatpush1.bf16.msra.mxu0 %v4915
        %7709 = vmatprep.subr.bf16.mxu0 %v4924
        %7710 = vmatpush1.bf16.msra.mxu0 %v4923
        %7711 = vmatprep.subr.bf16.mxu0 %v4932
        %7712 = vmatpush1.bf16.msra.mxu0 %v4931
        %7713 = vmatprep.subr.bf16.mxu0 %v4940
        %7714 = vmatpush1.bf16.msra.mxu0 %v4939
        %7715 = vmatprep.subr.bf16.mxu0 %v4948
        %7716 = vmatpush1.bf16.msra.mxu0 %v4947
        %7717 = vmatprep.subr.bf16.mxu0 %v4956
        %7718 = vmatpush1.bf16.msra.mxu0 %v4955
        %7719 = vmatprep.mubr.bf16.mxu0 %v1474
        %7720 = vmatmul.mubr.bf16.gmra.mrb[0].mxu0 %v1473
        %v7721 = vpop.f32.mrb[0].mxu0
        %v7722 = vadd.f32 %v7681, %v7721
        %v7723 = vpop.f32.mrb[0].mxu0
        %v7724 = vadd.f32 %v7683, %v7723
        %v7725 = vpop.f32.mrb[0].mxu0
        %v7726 = vpop.f32.mrb[0].mxu0
        %7727 = vdwg.mxu0
        %7728 = vmatprep.subr.bf16.mxu0 %v4964
        %7729 = vmatpush1.bf16.msra.mxu0 %v4963
        %7730 = vmatprep.subr.bf16.mxu0 %v4972
        %7731 = vmatpush1.bf16.msra.mxu0 %v4971
        %7732 = vmatprep.subr.bf16.mxu0 %v4980
        %7733 = vmatpush1.bf16.msra.mxu0 %v4979
        %7734 = vmatprep.subr.bf16.mxu0 %v4988
        %7735 = vmatpush1.bf16.msra.mxu0 %v4987
        %7736 = vmatprep.subr.bf16.mxu0 %v4996
        %7737 = vmatpush1.bf16.msra.mxu0 %v4995
        %7738 = vmatprep.subr.bf16.mxu0 %v5004
        %7739 = vmatpush1.bf16.msra.mxu0 %v5003
        %7740 = vmatprep.subr.bf16.mxu0 %v5012
        %7741 = vmatpush1.bf16.msra.mxu0 %v5011
        %7742 = vmatprep.subr.bf16.mxu0 %v5020
        %7743 = vmatpush1.bf16.msra.mxu0 %v5019
        %7744 = vmatprep.subr.bf16.mxu0 %v5028
        %7745 = vmatpush1.bf16.msra.mxu0 %v5027
        %7746 = vmatprep.subr.bf16.mxu0 %v5036
        %7747 = vmatpush1.bf16.msra.mxu0 %v5035
        %7748 = vmatprep.subr.bf16.mxu0 %v5044
        %7749 = vmatpush1.bf16.msra.mxu0 %v5043
        %7750 = vmatprep.subr.bf16.mxu0 %v5052
        %7751 = vmatpush1.bf16.msra.mxu0 %v5051
        %7752 = vmatprep.subr.bf16.mxu0 %v5060
        %7753 = vmatpush1.bf16.msra.mxu0 %v5059
        %7754 = vmatprep.subr.bf16.mxu0 %v5068
        %7755 = vmatpush1.bf16.msra.mxu0 %v5067
        %7756 = vmatprep.subr.bf16.mxu0 %v5076
        %7757 = vmatpush1.bf16.msra.mxu0 %v5075
        %7758 = vmatprep.subr.bf16.mxu0 %v5084
        %7759 = vmatpush1.bf16.msra.mxu0 %v5083
        %7760 = vmatprep.mubr.bf16.mxu0 %v1476
        %7761 = vmatmul.mubr.bf16.gmra.mrb[0].mxu0 %v1475
        %v7762 = vpop.f32.mrb[0].mxu0
        %v7763 = vadd.f32 %v7722, %v7762
        %v7764 = vpop.f32.mrb[0].mxu0
        %v7765 = vadd.f32 %v7724, %v7764
        %v7766 = vpop.f32.mrb[0].mxu0
        %v7767 = vpop.f32.mrb[0].mxu0
        %7768 = vdwg.mxu0
        %7769 = vmatprep.subr.bf16.mxu0 %v5092
        %7770 = vmatpush1.bf16.msra.mxu0 %v5091
        %7771 = vmatprep.subr.bf16.mxu0 %v5100
        %7772 = vmatpush1.bf16.msra.mxu0 %v5099
        %7773 = vmatprep.subr.bf16.mxu0 %v5108
        %7774 = vmatpush1.bf16.msra.mxu0 %v5107
        %7775 = vmatprep.subr.bf16.mxu0 %v5116
        %7776 = vmatpush1.bf16.msra.mxu0 %v5115
        %7777 = vmatprep.subr.bf16.mxu0 %v5124
        %7778 = vmatpush1.bf16.msra.mxu0 %v5123
        %7779 = vmatprep.subr.bf16.mxu0 %v5132
        %7780 = vmatpush1.bf16.msra.mxu0 %v5131
        %7781 = vmatprep.subr.bf16.mxu0 %v5140
        %7782 = vmatpush1.bf16.msra.mxu0 %v5139
        %7783 = vmatprep.subr.bf16.mxu0 %v5148
        %7784 = vmatpush1.bf16.msra.mxu0 %v5147
        %7785 = vmatprep.subr.bf16.mxu0 %v5156
        %7786 = vmatpush1.bf16.msra.mxu0 %v5155
        %7787 = vmatprep.subr.bf16.mxu0 %v5164
        %7788 = vmatpush1.bf16.msra.mxu0 %v5163
        %7789 = vmatprep.subr.bf16.mxu0 %v5172
        %7790 = vmatpush1.bf16.msra.mxu0 %v5171
        %7791 = vmatprep.subr.bf16.mxu0 %v5180
        %7792 = vmatpush1.bf16.msra.mxu0 %v5179
        %7793 = vmatprep.subr.bf16.mxu0 %v5188
        %7794 = vmatpush1.bf16.msra.mxu0 %v5187
        %7795 = vmatprep.subr.bf16.mxu0 %v5196
        %7796 = vmatpush1.bf16.msra.mxu0 %v5195
        %7797 = vmatprep.subr.bf16.mxu0 %v5204
        %7798 = vmatpush1.bf16.msra.mxu0 %v5203
        %7799 = vmatprep.subr.bf16.mxu0 %v5212
        %7800 = vmatpush1.bf16.msra.mxu0 %v5211
        %7801 = vmatprep.mubr.bf16.mxu0 %v1478
        %7802 = vmatmul.mubr.bf16.gmra.mrb[0].mxu0 %v1477
        %v7803 = vpop.f32.mrb[0].mxu0
        %v7804 = vadd.f32 %v7763, %v7803
        %v7805 = vpop.f32.mrb[0].mxu0
        %v7806 = vadd.f32 %v7765, %v7805
        %v7807 = vpop.f32.mrb[0].mxu0
        %v7808 = vpop.f32.mrb[0].mxu0
        %7809 = vdwg.mxu0
        %7810 = vmatprep.subr.bf16.mxu0 %v5220
        %7811 = vmatpush1.bf16.msra.mxu0 %v5219
        %7812 = vmatprep.subr.bf16.mxu0 %v5228
        %7813 = vmatpush1.bf16.msra.mxu0 %v5227
        %7814 = vmatprep.subr.bf16.mxu0 %v5236
        %7815 = vmatpush1.bf16.msra.mxu0 %v5235
        %7816 = vmatprep.subr.bf16.mxu0 %v5244
        %7817 = vmatpush1.bf16.msra.mxu0 %v5243
        %7818 = vmatprep.subr.bf16.mxu0 %v5252
        %7819 = vmatpush1.bf16.msra.mxu0 %v5251
        %7820 = vmatprep.subr.bf16.mxu0 %v5260
        %7821 = vmatpush1.bf16.msra.mxu0 %v5259
        %7822 = vmatprep.subr.bf16.mxu0 %v5268
        %7823 = vmatpush1.bf16.msra.mxu0 %v5267
        %7824 = vmatprep.subr.bf16.mxu0 %v5276
        %7825 = vmatpush1.bf16.msra.mxu0 %v5275
        %7826 = vmatprep.subr.bf16.mxu0 %v5284
        %7827 = vmatpush1.bf16.msra.mxu0 %v5283
        %7828 = vmatprep.subr.bf16.mxu0 %v5292
        %7829 = vmatpush1.bf16.msra.mxu0 %v5291
        %7830 = vmatprep.subr.bf16.mxu0 %v5300
        %7831 = vmatpush1.bf16.msra.mxu0 %v5299
        %7832 = vmatprep.subr.bf16.mxu0 %v5308
        %7833 = vmatpush1.bf16.msra.mxu0 %v5307
        %7834 = vmatprep.subr.bf16.mxu0 %v5316
        %7835 = vmatpush1.bf16.msra.mxu0 %v5315
        %7836 = vmatprep.subr.bf16.mxu0 %v5324
        %7837 = vmatpush1.bf16.msra.mxu0 %v5323
        %7838 = vmatprep.subr.bf16.mxu0 %v5332
        %7839 = vmatpush1.bf16.msra.mxu0 %v5331
        %7840 = vmatprep.subr.bf16.mxu0 %v5340
        %7841 = vmatpush1.bf16.msra.mxu0 %v5339
        %7842 = vmatprep.mubr.bf16.mxu0 %v1480
        %7843 = vmatmul.mubr.bf16.gmra.mrb[0].mxu0 %v1479
        %v7844 = vpop.f32.mrb[0].mxu0
        %v7845 = vadd.f32 %v7804, %v7844
        %v7846 = vpop.f32.mrb[0].mxu0
        %v7847 = vadd.f32 %v7806, %v7846
        %v7848 = vpop.f32.mrb[0].mxu0
        %v7849 = vpop.f32.mrb[0].mxu0
        %7850 = vdwg.mxu0
        %7851 = vmatprep.subr.bf16.mxu0 %v5348
        %7852 = vmatpush1.bf16.msra.mxu0 %v5347
        %7853 = vmatprep.subr.bf16.mxu0 %v5356
        %7854 = vmatpush1.bf16.msra.mxu0 %v5355
        %7855 = vmatprep.subr.bf16.mxu0 %v5364
        %7856 = vmatpush1.bf16.msra.mxu0 %v5363
        %7857 = vmatprep.subr.bf16.mxu0 %v5372
        %7858 = vmatpush1.bf16.msra.mxu0 %v5371
        %7859 = vmatprep.subr.bf16.mxu0 %v5380
        %7860 = vmatpush1.bf16.msra.mxu0 %v5379
        %7861 = vmatprep.subr.bf16.mxu0 %v5388
        %7862 = vmatpush1.bf16.msra.mxu0 %v5387
        %7863 = vmatprep.subr.bf16.mxu0 %v5396
        %7864 = vmatpush1.bf16.msra.mxu0 %v5395
        %7865 = vmatprep.subr.bf16.mxu0 %v5404
        %7866 = vmatpush1.bf16.msra.mxu0 %v5403
        %7867 = vmatprep.subr.bf16.mxu0 %v5412
        %7868 = vmatpush1.bf16.msra.mxu0 %v5411
        %7869 = vmatprep.subr.bf16.mxu0 %v5420
        %7870 = vmatpush1.bf16.msra.mxu0 %v5419
        %7871 = vmatprep.subr.bf16.mxu0 %v5428
        %7872 = vmatpush1.bf16.msra.mxu0 %v5427
        %7873 = vmatprep.subr.bf16.mxu0 %v5436
        %7874 = vmatpush1.bf16.msra.mxu0 %v5435
        %7875 = vmatprep.subr.bf16.mxu0 %v5444
        %7876 = vmatpush1.bf16.msra.mxu0 %v5443
        %7877 = vmatprep.subr.bf16.mxu0 %v5452
        %7878 = vmatpush1.bf16.msra.mxu0 %v5451
        %7879 = vmatprep.subr.bf16.mxu0 %v5460
        %7880 = vmatpush1.bf16.msra.mxu0 %v5459
        %7881 = vmatprep.subr.bf16.mxu0 %v5468
        %7882 = vmatpush1.bf16.msra.mxu0 %v5467
        %7883 = vmatprep.mubr.bf16.mxu0 %v1482
        %7884 = vmatmul.mubr.bf16.gmra.mrb[0].mxu0 %v1481
        %v7885 = vpop.f32.mrb[0].mxu0
        %v7886 = vadd.f32 %v7845, %v7885
        %v7887 = vpop.f32.mrb[0].mxu0
        %v7888 = vadd.f32 %v7847, %v7887
        %v7889 = vpop.f32.mrb[0].mxu0
        %v7890 = vpop.f32.mrb[0].mxu0
        %7891 = vdwg.mxu0
        %7892 = vmatprep.subr.bf16.mxu0 %v5476
        %7893 = vmatpush1.bf16.msra.mxu0 %v5475
        %7894 = vmatprep.subr.bf16.mxu0 %v5484
        %7895 = vmatpush1.bf16.msra.mxu0 %v5483
        %7896 = vmatprep.subr.bf16.mxu0 %v5492
        %7897 = vmatpush1.bf16.msra.mxu0 %v5491
        %7898 = vmatprep.subr.bf16.mxu0 %v5500
        %7899 = vmatpush1.bf16.msra.mxu0 %v5499
        %7900 = vmatprep.subr.bf16.mxu0 %v5508
        %7901 = vmatpush1.bf16.msra.mxu0 %v5507
        %7902 = vmatprep.subr.bf16.mxu0 %v5516
        %7903 = vmatpush1.bf16.msra.mxu0 %v5515
        %7904 = vmatprep.subr.bf16.mxu0 %v5524
        %7905 = vmatpush1.bf16.msra.mxu0 %v5523
        %7906 = vmatprep.subr.bf16.mxu0 %v5532
        %7907 = vmatpush1.bf16.msra.mxu0 %v5531
        %7908 = vmatprep.subr.bf16.mxu0 %v5540
        %7909 = vmatpush1.bf16.msra.mxu0 %v5539
        %7910 = vmatprep.subr.bf16.mxu0 %v5548
        %7911 = vmatpush1.bf16.msra.mxu0 %v5547
        %7912 = vmatprep.subr.bf16.mxu0 %v5556
        %7913 = vmatpush1.bf16.msra.mxu0 %v5555
        %7914 = vmatprep.subr.bf16.mxu0 %v5564
        %7915 = vmatpush1.bf16.msra.mxu0 %v5563
        %7916 = vmatprep.subr.bf16.mxu0 %v5572
        %7917 = vmatpush1.bf16.msra.mxu0 %v5571
        %7918 = vmatprep.subr.bf16.mxu0 %v5580
        %7919 = vmatpush1.bf16.msra.mxu0 %v5579
        %7920 = vmatprep.subr.bf16.mxu0 %v5588
        %7921 = vmatpush1.bf16.msra.mxu0 %v5587
        %7922 = vmatprep.subr.bf16.mxu0 %v5596
        %7923 = vmatpush1.bf16.msra.mxu0 %v5595
        %7924 = vmatprep.mubr.bf16.mxu0 %v1484
        %7925 = vmatmul.mubr.bf16.gmra.mrb[0].mxu0 %v1483
        %v7926 = vpop.f32.mrb[0].mxu0
        %v7927 = vadd.f32 %v7886, %v7926
        %v7928 = vpop.f32.mrb[0].mxu0
        %v7929 = vadd.f32 %v7888, %v7928
        %v7930 = vpop.f32.mrb[0].mxu0
        %v7931 = vpop.f32.mrb[0].mxu0
        %7932 = vdwg.mxu0
        %v7933 = vadd.f32 %v405, %v6943
        %v7934 = vadd.f32 %v406, %v6945
        %v7935 = vadd.f32 %v407, %v7271
        %v7936 = vadd.f32 %v408, %v7273
        %v7937 = vadd.f32 %v409, %v7599
        %v7938 = vadd.f32 %v410, %v7601
        %v7939 = vadd.f32 %v411, %v7927
        %v7940 = vadd.f32 %v412, %v7929
        %7941 = vst [vmem:[#allocation2] sm:$0xff] %v7933
        %7942 = vst [vmem:[#allocation2 + $0x8] sm:$0xff] %v7934
        %7943 = vst [vmem:[#allocation2 + $0x10] sm:$0xff] %v7935
        %7944 = vst [vmem:[#allocation2 + $0x18] sm:$0xff] %v7936
        %7945 = vst [vmem:[#allocation2 + $0x20] sm:$0xff] %v7937
        %7946 = vst [vmem:[#allocation2 + $0x28] sm:$0xff] %v7938
        %7947 = vst [vmem:[#allocation2 + $0x30] sm:$0xff] %v7939
        %7948 = vst [vmem:[#allocation2 + $0x38] sm:$0xff] %v7940
        %p7949 = scmp.eq.s32.totalorder %s27, 1
        // Predicated region
        $region81: #{tpu_custom_call.1} parent=47 // pred_check
          %p7950 = pneg %p7949
        $region82: #{tpu_custom_call.1} parent=47 // pred_check_branch
          %7952 = sbr.rel (%p7950) target = $region84
        $region83: #{tpu_custom_call.1} parent=47 // pred_region
          %v7953 = vld [vmem:[#allocation2] sm:$0xff]
          %v7954 = vld [vmem:[#allocation2 + $0x8] sm:$0xff]
          %v7955 = vld [vmem:[#allocation2 + $0x10] sm:$0xff]
          %v7956 = vld [vmem:[#allocation2 + $0x18] sm:$0xff]
          %v7957 = vld [vmem:[#allocation2 + $0x20] sm:$0xff]
          %v7958 = vld [vmem:[#allocation2 + $0x28] sm:$0xff]
          %v7959 = vld [vmem:[#allocation2 + $0x30] sm:$0xff]
          %v7960 = vld [vmem:[#allocation2 + $0x38] sm:$0xff]
          %v7961 = vld [vmem:[#allocation8] sm:$0xff]
          %v7963 = vlaneseq
          %v7964 = vshrl.u32 %v7963, 7
          %v7965 = vsub.s32 0, %v7964
          %v7966 = vrot.slane %v7961, %v7965
          %v7967 = vlaneseq
          %v7968 = vshrl.u32 %v7967, 7
          %v7969 = vsub.s32 1, %v7968
          %v7970 = vrot.slane %v7961, %v7969
          %v7971 = vlaneseq
          %v7972 = vshrl.u32 %v7971, 7
          %v7973 = vsub.s32 2, %v7972
          %v7974 = vrot.slane %v7961, %v7973
          %v7975 = vlaneseq
          %v7976 = vshrl.u32 %v7975, 7
          %v7977 = vsub.s32 3, %v7976
          %v7978 = vrot.slane %v7961, %v7977
          %v7979 = vlaneseq
          %v7980 = vshrl.u32 %v7979, 7
          %v7981 = vsub.s32 4, %v7980
          %v7982 = vrot.slane %v7961, %v7981
          %v7983 = vlaneseq
          %v7984 = vshrl.u32 %v7983, 7
          %v7985 = vsub.s32 5, %v7984
          %v7986 = vrot.slane %v7961, %v7985
          %v7987 = vlaneseq
          %v7988 = vshrl.u32 %v7987, 7
          %v7989 = vsub.s32 6, %v7988
          %v7990 = vrot.slane %v7961, %v7989
          %v7991 = vlaneseq
          %v7992 = vshrl.u32 %v7991, 7
          %v7993 = vsub.s32 7, %v7992
          %v7994 = vrot.slane %v7961, %v7993
          %v8003 = vadd.f32 %v7953, %v7966
          %v8004 = vadd.f32 %v7954, %v7970
          %v8005 = vadd.f32 %v7955, %v7974
          %v8006 = vadd.f32 %v7956, %v7978
          %v8007 = vadd.f32 %v7957, %v7982
          %v8008 = vadd.f32 %v7958, %v7986
          %v8009 = vadd.f32 %v7959, %v7990
          %v8010 = vadd.f32 %v7960, %v7994
          %v8011 = vmax.f32 %v8003, 0.0
          %v8012 = vmax.f32 %v8004, 0.0
          %v8013 = vmax.f32 %v8005, 0.0
          %v8014 = vmax.f32 %v8006, 0.0
          %v8015 = vmax.f32 %v8007, 0.0
          %v8016 = vmax.f32 %v8008, 0.0
          %v8017 = vmax.f32 %v8009, 0.0
          %v8018 = vmax.f32 %v8010, 0.0
          %v8019 = vpack.c.bf16 %v8011, %v8011
          %v8020 = vpack.c.bf16 %v8012, %v8012
          %v8021 = vpack.c.bf16 %v8013, %v8013
          %v8022 = vpack.c.bf16 %v8014, %v8014
          %v8023 = vpack.c.bf16 %v8015, %v8015
          %v8024 = vpack.c.bf16 %v8016, %v8016
          %v8025 = vpack.c.bf16 %v8017, %v8017
          %v8026 = vpack.c.bf16 %v8018, %v8018
          %v8027 = vld [vmem:[#allocation9] sm:$0xff]
          %v8028 = vld [vmem:[#allocation9 + $0x8] sm:$0xff]
          %v8029 = vld [vmem:[#allocation9 + $0x10] sm:$0xff]
          %v8030 = vld [vmem:[#allocation9 + $0x18] sm:$0xff]
          %v8031 = vld [vmem:[#allocation9 + $0x20] sm:$0xff]
          %v8032 = vld [vmem:[#allocation9 + $0x28] sm:$0xff]
          %v8033 = vld [vmem:[#allocation9 + $0x30] sm:$0xff]
          %v8034 = vld [vmem:[#allocation9 + $0x38] sm:$0xff]
          %v8035 = vld [vmem:[#allocation9 + $0x40] sm:$0xff]
          %v8036 = vld [vmem:[#allocation9 + $0x48] sm:$0xff]
          %v8037 = vld [vmem:[#allocation9 + $0x50] sm:$0xff]
          %v8038 = vld [vmem:[#allocation9 + $0x58] sm:$0xff]
          %v8039 = vld [vmem:[#allocation9 + $0x60] sm:$0xff]
          %v8040 = vld [vmem:[#allocation9 + $0x68] sm:$0xff]
          %v8041 = vld [vmem:[#allocation9 + $0x70] sm:$0xff]
          %v8042 = vld [vmem:[#allocation9 + $0x78] sm:$0xff]
          %v8043 = vld [vmem:[#allocation9 + $0x80] sm:$0xff]
          %v8044 = vld [vmem:[#allocation9 + $0x88] sm:$0xff]
          %v8045 = vld [vmem:[#allocation9 + $0x90] sm:$0xff]
          %v8046 = vld [vmem:[#allocation9 + $0x98] sm:$0xff]
          %v8047 = vld [vmem:[#allocation9 + $0xa0] sm:$0xff]
          %v8048 = vld [vmem:[#allocation9 + $0xa8] sm:$0xff]
          %v8049 = vld [vmem:[#allocation9 + $0xb0] sm:$0xff]
          %v8050 = vld [vmem:[#allocation9 + $0xb8] sm:$0xff]
          %v8051 = vld [vmem:[#allocation9 + $0xc0] sm:$0xff]
          %v8052 = vld [vmem:[#allocation9 + $0xc8] sm:$0xff]
          %v8053 = vld [vmem:[#allocation9 + $0xd0] sm:$0xff]
          %v8054 = vld [vmem:[#allocation9 + $0xd8] sm:$0xff]
          %v8055 = vld [vmem:[#allocation9 + $0xe0] sm:$0xff]
          %v8056 = vld [vmem:[#allocation9 + $0xe8] sm:$0xff]
          %v8057 = vld [vmem:[#allocation9 + $0xf0] sm:$0xff]
          %v8058 = vld [vmem:[#allocation9 + $0xf8] sm:$0xff]
          %v8059 = vld [vmem:[#allocation9 + $0x100] sm:$0xff]
          %v8060 = vld [vmem:[#allocation9 + $0x108] sm:$0xff]
          %v8061 = vld [vmem:[#allocation9 + $0x110] sm:$0xff]
          %v8062 = vld [vmem:[#allocation9 + $0x118] sm:$0xff]
          %v8063 = vld [vmem:[#allocation9 + $0x120] sm:$0xff]
          %v8064 = vld [vmem:[#allocation9 + $0x128] sm:$0xff]
          %v8065 = vld [vmem:[#allocation9 + $0x130] sm:$0xff]
          %v8066 = vld [vmem:[#allocation9 + $0x138] sm:$0xff]
          %v8067 = vld [vmem:[#allocation9 + $0x140] sm:$0xff]
          %v8068 = vld [vmem:[#allocation9 + $0x148] sm:$0xff]
          %v8069 = vld [vmem:[#allocation9 + $0x150] sm:$0xff]
          %v8070 = vld [vmem:[#allocation9 + $0x158] sm:$0xff]
          %v8071 = vld [vmem:[#allocation9 + $0x160] sm:$0xff]
          %v8072 = vld [vmem:[#allocation9 + $0x168] sm:$0xff]
          %v8073 = vld [vmem:[#allocation9 + $0x170] sm:$0xff]
          %v8074 = vld [vmem:[#allocation9 + $0x178] sm:$0xff]
          %v8075 = vld [vmem:[#allocation9 + $0x180] sm:$0xff]
          %v8076 = vld [vmem:[#allocation9 + $0x188] sm:$0xff]
          %v8077 = vld [vmem:[#allocation9 + $0x190] sm:$0xff]
          %v8078 = vld [vmem:[#allocation9 + $0x198] sm:$0xff]
          %v8079 = vld [vmem:[#allocation9 + $0x1a0] sm:$0xff]
          %v8080 = vld [vmem:[#allocation9 + $0x1a8] sm:$0xff]
          %v8081 = vld [vmem:[#allocation9 + $0x1b0] sm:$0xff]
          %v8082 = vld [vmem:[#allocation9 + $0x1b8] sm:$0xff]
          %v8083 = vld [vmem:[#allocation9 + $0x1c0] sm:$0xff]
          %v8084 = vld [vmem:[#allocation9 + $0x1c8] sm:$0xff]
          %v8085 = vld [vmem:[#allocation9 + $0x1d0] sm:$0xff]
          %v8086 = vld [vmem:[#allocation9 + $0x1d8] sm:$0xff]
          %v8087 = vld [vmem:[#allocation9 + $0x1e0] sm:$0xff]
          %v8088 = vld [vmem:[#allocation9 + $0x1e8] sm:$0xff]
          %v8089 = vld [vmem:[#allocation9 + $0x1f0] sm:$0xff]
          %v8090 = vld [vmem:[#allocation9 + $0x1f8] sm:$0xff]
          %v8091 = vld [vmem:[#allocation9 + $0x200] sm:$0xff]
          %v8092 = vld [vmem:[#allocation9 + $0x208] sm:$0xff]
          %v8093 = vld [vmem:[#allocation9 + $0x210] sm:$0xff]
          %v8094 = vld [vmem:[#allocation9 + $0x218] sm:$0xff]
          %v8095 = vld [vmem:[#allocation9 + $0x220] sm:$0xff]
          %v8096 = vld [vmem:[#allocation9 + $0x228] sm:$0xff]
          %v8097 = vld [vmem:[#allocation9 + $0x230] sm:$0xff]
          %v8098 = vld [vmem:[#allocation9 + $0x238] sm:$0xff]
          %v8099 = vld [vmem:[#allocation9 + $0x240] sm:$0xff]
          %v8100 = vld [vmem:[#allocation9 + $0x248] sm:$0xff]
          %v8101 = vld [vmem:[#allocation9 + $0x250] sm:$0xff]
          %v8102 = vld [vmem:[#allocation9 + $0x258] sm:$0xff]
          %v8103 = vld [vmem:[#allocation9 + $0x260] sm:$0xff]
          %v8104 = vld [vmem:[#allocation9 + $0x268] sm:$0xff]
          %v8105 = vld [vmem:[#allocation9 + $0x270] sm:$0xff]
          %v8106 = vld [vmem:[#allocation9 + $0x278] sm:$0xff]
          %v8107 = vld [vmem:[#allocation9 + $0x280] sm:$0xff]
          %v8108 = vld [vmem:[#allocation9 + $0x288] sm:$0xff]
          %v8109 = vld [vmem:[#allocation9 + $0x290] sm:$0xff]
          %v8110 = vld [vmem:[#allocation9 + $0x298] sm:$0xff]
          %v8111 = vld [vmem:[#allocation9 + $0x2a0] sm:$0xff]
          %v8112 = vld [vmem:[#allocation9 + $0x2a8] sm:$0xff]
          %v8113 = vld [vmem:[#allocation9 + $0x2b0] sm:$0xff]
          %v8114 = vld [vmem:[#allocation9 + $0x2b8] sm:$0xff]
          %v8115 = vld [vmem:[#allocation9 + $0x2c0] sm:$0xff]
          %v8116 = vld [vmem:[#allocation9 + $0x2c8] sm:$0xff]
          %v8117 = vld [vmem:[#allocation9 + $0x2d0] sm:$0xff]
          %v8118 = vld [vmem:[#allocation9 + $0x2d8] sm:$0xff]
          %v8119 = vld [vmem:[#allocation9 + $0x2e0] sm:$0xff]
          %v8120 = vld [vmem:[#allocation9 + $0x2e8] sm:$0xff]
          %v8121 = vld [vmem:[#allocation9 + $0x2f0] sm:$0xff]
          %v8122 = vld [vmem:[#allocation9 + $0x2f8] sm:$0xff]
          %v8123 = vld [vmem:[#allocation9 + $0x300] sm:$0xff]
          %v8124 = vld [vmem:[#allocation9 + $0x308] sm:$0xff]
          %v8125 = vld [vmem:[#allocation9 + $0x310] sm:$0xff]
          %v8126 = vld [vmem:[#allocation9 + $0x318] sm:$0xff]
          %v8127 = vld [vmem:[#allocation9 + $0x320] sm:$0xff]
          %v8128 = vld [vmem:[#allocation9 + $0x328] sm:$0xff]
          %v8129 = vld [vmem:[#allocation9 + $0x330] sm:$0xff]
          %v8130 = vld [vmem:[#allocation9 + $0x338] sm:$0xff]
          %v8131 = vld [vmem:[#allocation9 + $0x340] sm:$0xff]
          %v8132 = vld [vmem:[#allocation9 + $0x348] sm:$0xff]
          %v8133 = vld [vmem:[#allocation9 + $0x350] sm:$0xff]
          %v8134 = vld [vmem:[#allocation9 + $0x358] sm:$0xff]
          %v8135 = vld [vmem:[#allocation9 + $0x360] sm:$0xff]
          %v8136 = vld [vmem:[#allocation9 + $0x368] sm:$0xff]
          %v8137 = vld [vmem:[#allocation9 + $0x370] sm:$0xff]
          %v8138 = vld [vmem:[#allocation9 + $0x378] sm:$0xff]
          %v8139 = vld [vmem:[#allocation9 + $0x380] sm:$0xff]
          %v8140 = vld [vmem:[#allocation9 + $0x388] sm:$0xff]
          %v8141 = vld [vmem:[#allocation9 + $0x390] sm:$0xff]
          %v8142 = vld [vmem:[#allocation9 + $0x398] sm:$0xff]
          %v8143 = vld [vmem:[#allocation9 + $0x3a0] sm:$0xff]
          %v8144 = vld [vmem:[#allocation9 + $0x3a8] sm:$0xff]
          %v8145 = vld [vmem:[#allocation9 + $0x3b0] sm:$0xff]
          %v8146 = vld [vmem:[#allocation9 + $0x3b8] sm:$0xff]
          %v8147 = vld [vmem:[#allocation9 + $0x3c0] sm:$0xff]
          %v8148 = vld [vmem:[#allocation9 + $0x3c8] sm:$0xff]
          %v8149 = vld [vmem:[#allocation9 + $0x3d0] sm:$0xff]
          %v8150 = vld [vmem:[#allocation9 + $0x3d8] sm:$0xff]
          %v8151 = vld [vmem:[#allocation9 + $0x3e0] sm:$0xff]
          %v8152 = vld [vmem:[#allocation9 + $0x3e8] sm:$0xff]
          %v8153 = vld [vmem:[#allocation9 + $0x3f0] sm:$0xff]
          %v8154 = vld [vmem:[#allocation9 + $0x3f8] sm:$0xff]
          %v8155 = vld [vmem:[#allocation9 + $0x400] sm:$0xff]
          %v8156 = vld [vmem:[#allocation9 + $0x408] sm:$0xff]
          %v8157 = vld [vmem:[#allocation9 + $0x410] sm:$0xff]
          %v8158 = vld [vmem:[#allocation9 + $0x418] sm:$0xff]
          %v8159 = vld [vmem:[#allocation9 + $0x420] sm:$0xff]
          %v8160 = vld [vmem:[#allocation9 + $0x428] sm:$0xff]
          %v8161 = vld [vmem:[#allocation9 + $0x430] sm:$0xff]
          %v8162 = vld [vmem:[#allocation9 + $0x438] sm:$0xff]
          %v8163 = vld [vmem:[#allocation9 + $0x440] sm:$0xff]
          %v8164 = vld [vmem:[#allocation9 + $0x448] sm:$0xff]
          %v8165 = vld [vmem:[#allocation9 + $0x450] sm:$0xff]
          %v8166 = vld [vmem:[#allocation9 + $0x458] sm:$0xff]
          %v8167 = vld [vmem:[#allocation9 + $0x460] sm:$0xff]
          %v8168 = vld [vmem:[#allocation9 + $0x468] sm:$0xff]
          %v8169 = vld [vmem:[#allocation9 + $0x470] sm:$0xff]
          %v8170 = vld [vmem:[#allocation9 + $0x478] sm:$0xff]
          %v8171 = vld [vmem:[#allocation9 + $0x480] sm:$0xff]
          %v8172 = vld [vmem:[#allocation9 + $0x488] sm:$0xff]
          %v8173 = vld [vmem:[#allocation9 + $0x490] sm:$0xff]
          %v8174 = vld [vmem:[#allocation9 + $0x498] sm:$0xff]
          %v8175 = vld [vmem:[#allocation9 + $0x4a0] sm:$0xff]
          %v8176 = vld [vmem:[#allocation9 + $0x4a8] sm:$0xff]
          %v8177 = vld [vmem:[#allocation9 + $0x4b0] sm:$0xff]
          %v8178 = vld [vmem:[#allocation9 + $0x4b8] sm:$0xff]
          %v8179 = vld [vmem:[#allocation9 + $0x4c0] sm:$0xff]
          %v8180 = vld [vmem:[#allocation9 + $0x4c8] sm:$0xff]
          %v8181 = vld [vmem:[#allocation9 + $0x4d0] sm:$0xff]
          %v8182 = vld [vmem:[#allocation9 + $0x4d8] sm:$0xff]
          %v8183 = vld [vmem:[#allocation9 + $0x4e0] sm:$0xff]
          %v8184 = vld [vmem:[#allocation9 + $0x4e8] sm:$0xff]
          %v8185 = vld [vmem:[#allocation9 + $0x4f0] sm:$0xff]
          %v8186 = vld [vmem:[#allocation9 + $0x4f8] sm:$0xff]
          %v8187 = vld [vmem:[#allocation9 + $0x500] sm:$0xff]
          %v8188 = vld [vmem:[#allocation9 + $0x508] sm:$0xff]
          %v8189 = vld [vmem:[#allocation9 + $0x510] sm:$0xff]
          %v8190 = vld [vmem:[#allocation9 + $0x518] sm:$0xff]
          %v8191 = vld [vmem:[#allocation9 + $0x520] sm:$0xff]
          %v8192 = vld [vmem:[#allocation9 + $0x528] sm:$0xff]
          %v8193 = vld [vmem:[#allocation9 + $0x530] sm:$0xff]
          %v8194 = vld [vmem:[#allocation9 + $0x538] sm:$0xff]
          %v8195 = vld [vmem:[#allocation9 + $0x540] sm:$0xff]
          %v8196 = vld [vmem:[#allocation9 + $0x548] sm:$0xff]
          %v8197 = vld [vmem:[#allocation9 + $0x550] sm:$0xff]
          %v8198 = vld [vmem:[#allocation9 + $0x558] sm:$0xff]
          %v8199 = vld [vmem:[#allocation9 + $0x560] sm:$0xff]
          %v8200 = vld [vmem:[#allocation9 + $0x568] sm:$0xff]
          %v8201 = vld [vmem:[#allocation9 + $0x570] sm:$0xff]
          %v8202 = vld [vmem:[#allocation9 + $0x578] sm:$0xff]
          %v8203 = vld [vmem:[#allocation9 + $0x580] sm:$0xff]
          %v8204 = vld [vmem:[#allocation9 + $0x588] sm:$0xff]
          %v8205 = vld [vmem:[#allocation9 + $0x590] sm:$0xff]
          %v8206 = vld [vmem:[#allocation9 + $0x598] sm:$0xff]
          %v8207 = vld [vmem:[#allocation9 + $0x5a0] sm:$0xff]
          %v8208 = vld [vmem:[#allocation9 + $0x5a8] sm:$0xff]
          %v8209 = vld [vmem:[#allocation9 + $0x5b0] sm:$0xff]
          %v8210 = vld [vmem:[#allocation9 + $0x5b8] sm:$0xff]
          %v8211 = vld [vmem:[#allocation9 + $0x5c0] sm:$0xff]
          %v8212 = vld [vmem:[#allocation9 + $0x5c8] sm:$0xff]
          %v8213 = vld [vmem:[#allocation9 + $0x5d0] sm:$0xff]
          %v8214 = vld [vmem:[#allocation9 + $0x5d8] sm:$0xff]
          %v8215 = vld [vmem:[#allocation9 + $0x5e0] sm:$0xff]
          %v8216 = vld [vmem:[#allocation9 + $0x5e8] sm:$0xff]
          %v8217 = vld [vmem:[#allocation9 + $0x5f0] sm:$0xff]
          %v8218 = vld [vmem:[#allocation9 + $0x5f8] sm:$0xff]
          %v8219 = vld [vmem:[#allocation9 + $0x600] sm:$0xff]
          %v8220 = vld [vmem:[#allocation9 + $0x608] sm:$0xff]
          %v8221 = vld [vmem:[#allocation9 + $0x610] sm:$0xff]
          %v8222 = vld [vmem:[#allocation9 + $0x618] sm:$0xff]
          %v8223 = vld [vmem:[#allocation9 + $0x620] sm:$0xff]
          %v8224 = vld [vmem:[#allocation9 + $0x628] sm:$0xff]
          %v8225 = vld [vmem:[#allocation9 + $0x630] sm:$0xff]
          %v8226 = vld [vmem:[#allocation9 + $0x638] sm:$0xff]
          %v8227 = vld [vmem:[#allocation9 + $0x640] sm:$0xff]
          %v8228 = vld [vmem:[#allocation9 + $0x648] sm:$0xff]
          %v8229 = vld [vmem:[#allocation9 + $0x650] sm:$0xff]
          %v8230 = vld [vmem:[#allocation9 + $0x658] sm:$0xff]
          %v8231 = vld [vmem:[#allocation9 + $0x660] sm:$0xff]
          %v8232 = vld [vmem:[#allocation9 + $0x668] sm:$0xff]
          %v8233 = vld [vmem:[#allocation9 + $0x670] sm:$0xff]
          %v8234 = vld [vmem:[#allocation9 + $0x678] sm:$0xff]
          %v8235 = vld [vmem:[#allocation9 + $0x680] sm:$0xff]
          %v8236 = vld [vmem:[#allocation9 + $0x688] sm:$0xff]
          %v8237 = vld [vmem:[#allocation9 + $0x690] sm:$0xff]
          %v8238 = vld [vmem:[#allocation9 + $0x698] sm:$0xff]
          %v8239 = vld [vmem:[#allocation9 + $0x6a0] sm:$0xff]
          %v8240 = vld [vmem:[#allocation9 + $0x6a8] sm:$0xff]
          %v8241 = vld [vmem:[#allocation9 + $0x6b0] sm:$0xff]
          %v8242 = vld [vmem:[#allocation9 + $0x6b8] sm:$0xff]
          %v8243 = vld [vmem:[#allocation9 + $0x6c0] sm:$0xff]
          %v8244 = vld [vmem:[#allocation9 + $0x6c8] sm:$0xff]
          %v8245 = vld [vmem:[#allocation9 + $0x6d0] sm:$0xff]
          %v8246 = vld [vmem:[#allocation9 + $0x6d8] sm:$0xff]
          %v8247 = vld [vmem:[#allocation9 + $0x6e0] sm:$0xff]
          %v8248 = vld [vmem:[#allocation9 + $0x6e8] sm:$0xff]
          %v8249 = vld [vmem:[#allocation9 + $0x6f0] sm:$0xff]
          %v8250 = vld [vmem:[#allocation9 + $0x6f8] sm:$0xff]
          %v8251 = vld [vmem:[#allocation9 + $0x700] sm:$0xff]
          %v8252 = vld [vmem:[#allocation9 + $0x708] sm:$0xff]
          %v8253 = vld [vmem:[#allocation9 + $0x710] sm:$0xff]
          %v8254 = vld [vmem:[#allocation9 + $0x718] sm:$0xff]
          %v8255 = vld [vmem:[#allocation9 + $0x720] sm:$0xff]
          %v8256 = vld [vmem:[#allocation9 + $0x728] sm:$0xff]
          %v8257 = vld [vmem:[#allocation9 + $0x730] sm:$0xff]
          %v8258 = vld [vmem:[#allocation9 + $0x738] sm:$0xff]
          %v8259 = vld [vmem:[#allocation9 + $0x740] sm:$0xff]
          %v8260 = vld [vmem:[#allocation9 + $0x748] sm:$0xff]
          %v8261 = vld [vmem:[#allocation9 + $0x750] sm:$0xff]
          %v8262 = vld [vmem:[#allocation9 + $0x758] sm:$0xff]
          %v8263 = vld [vmem:[#allocation9 + $0x760] sm:$0xff]
          %v8264 = vld [vmem:[#allocation9 + $0x768] sm:$0xff]
          %v8265 = vld [vmem:[#allocation9 + $0x770] sm:$0xff]
          %v8266 = vld [vmem:[#allocation9 + $0x778] sm:$0xff]
          %v8267 = vld [vmem:[#allocation9 + $0x780] sm:$0xff]
          %v8268 = vld [vmem:[#allocation9 + $0x788] sm:$0xff]
          %v8269 = vld [vmem:[#allocation9 + $0x790] sm:$0xff]
          %v8270 = vld [vmem:[#allocation9 + $0x798] sm:$0xff]
          %v8271 = vld [vmem:[#allocation9 + $0x7a0] sm:$0xff]
          %v8272 = vld [vmem:[#allocation9 + $0x7a8] sm:$0xff]
          %v8273 = vld [vmem:[#allocation9 + $0x7b0] sm:$0xff]
          %v8274 = vld [vmem:[#allocation9 + $0x7b8] sm:$0xff]
          %v8275 = vld [vmem:[#allocation9 + $0x7c0] sm:$0xff]
          %v8276 = vld [vmem:[#allocation9 + $0x7c8] sm:$0xff]
          %v8277 = vld [vmem:[#allocation9 + $0x7d0] sm:$0xff]
          %v8278 = vld [vmem:[#allocation9 + $0x7d8] sm:$0xff]
          %v8279 = vld [vmem:[#allocation9 + $0x7e0] sm:$0xff]
          %v8280 = vld [vmem:[#allocation9 + $0x7e8] sm:$0xff]
          %v8281 = vld [vmem:[#allocation9 + $0x7f0] sm:$0xff]
          %v8282 = vld [vmem:[#allocation9 + $0x7f8] sm:$0xff]
          %v8283 = vld [vmem:[#allocation11] sm:$0xf]
          %v8285 = vlaneseq
          %v8286 = vshrl.u32 %v8285, 7
          %v8287 = vsub.s32 0, %v8286
          %v8288 = vrot.slane %v8283, %v8287
          %v8289 = vlaneseq
          %v8290 = vshrl.u32 %v8289, 7
          %v8291 = vsub.s32 1, %v8290
          %v8292 = vrot.slane %v8283, %v8291
          %v8293 = vlaneseq
          %v8294 = vshrl.u32 %v8293, 7
          %v8295 = vsub.s32 2, %v8294
          %v8296 = vrot.slane %v8283, %v8295
          %v8297 = vlaneseq
          %v8298 = vshrl.u32 %v8297, 7
          %v8299 = vsub.s32 3, %v8298
          %v8300 = vrot.slane %v8283, %v8299
          %v8561 = vunpack.c.l.b16 %v8027
          %v8562 = vunpack.c.h.b16 %v8027
          %v8563 = vunpack.c.l.b16 %v8028
          %v8564 = vunpack.c.h.b16 %v8028
          %v8565 = vunpack.c.l.b16 %v8029
          %v8566 = vunpack.c.h.b16 %v8029
          %v8567 = vunpack.c.l.b16 %v8030
          %v8568 = vunpack.c.h.b16 %v8030
          %v8569 = vunpack.c.l.b16 %v8031
          %v8570 = vunpack.c.h.b16 %v8031
          %v8571 = vunpack.c.l.b16 %v8032
          %v8572 = vunpack.c.h.b16 %v8032
          %v8573 = vunpack.c.l.b16 %v8033
          %v8574 = vunpack.c.h.b16 %v8033
          %v8575 = vunpack.c.l.b16 %v8034
          %v8576 = vunpack.c.h.b16 %v8034
          %v8577 = vunpack.c.l.b16 %v8035
          %v8578 = vunpack.c.h.b16 %v8035
          %v8579 = vunpack.c.l.b16 %v8036
          %v8580 = vunpack.c.h.b16 %v8036
          %v8581 = vunpack.c.l.b16 %v8037
          %v8582 = vunpack.c.h.b16 %v8037
          %v8583 = vunpack.c.l.b16 %v8038
          %v8584 = vunpack.c.h.b16 %v8038
          %v8585 = vunpack.c.l.b16 %v8039
          %v8586 = vunpack.c.h.b16 %v8039
          %v8587 = vunpack.c.l.b16 %v8040
          %v8588 = vunpack.c.h.b16 %v8040
          %v8589 = vunpack.c.l.b16 %v8041
          %v8590 = vunpack.c.h.b16 %v8041
          %v8591 = vunpack.c.l.b16 %v8042
          %v8592 = vunpack.c.h.b16 %v8042
          %v8593 = vunpack.c.l.b16 %v8043
          %v8594 = vunpack.c.h.b16 %v8043
          %v8595 = vunpack.c.l.b16 %v8044
          %v8596 = vunpack.c.h.b16 %v8044
          %v8597 = vunpack.c.l.b16 %v8045
          %v8598 = vunpack.c.h.b16 %v8045
          %v8599 = vunpack.c.l.b16 %v8046
          %v8600 = vunpack.c.h.b16 %v8046
          %v8601 = vunpack.c.l.b16 %v8047
          %v8602 = vunpack.c.h.b16 %v8047
          %v8603 = vunpack.c.l.b16 %v8048
          %v8604 = vunpack.c.h.b16 %v8048
          %v8605 = vunpack.c.l.b16 %v8049
          %v8606 = vunpack.c.h.b16 %v8049
          %v8607 = vunpack.c.l.b16 %v8050
          %v8608 = vunpack.c.h.b16 %v8050
          %v8609 = vunpack.c.l.b16 %v8051
          %v8610 = vunpack.c.h.b16 %v8051
          %v8611 = vunpack.c.l.b16 %v8052
          %v8612 = vunpack.c.h.b16 %v8052
          %v8613 = vunpack.c.l.b16 %v8053
          %v8614 = vunpack.c.h.b16 %v8053
          %v8615 = vunpack.c.l.b16 %v8054
          %v8616 = vunpack.c.h.b16 %v8054
          %v8617 = vunpack.c.l.b16 %v8055
          %v8618 = vunpack.c.h.b16 %v8055
          %v8619 = vunpack.c.l.b16 %v8056
          %v8620 = vunpack.c.h.b16 %v8056
          %v8621 = vunpack.c.l.b16 %v8057
          %v8622 = vunpack.c.h.b16 %v8057
          %v8623 = vunpack.c.l.b16 %v8058
          %v8624 = vunpack.c.h.b16 %v8058
          %v8625 = vunpack.c.l.b16 %v8059
          %v8626 = vunpack.c.h.b16 %v8059
          %v8627 = vunpack.c.l.b16 %v8060
          %v8628 = vunpack.c.h.b16 %v8060
          %v8629 = vunpack.c.l.b16 %v8061
          %v8630 = vunpack.c.h.b16 %v8061
          %v8631 = vunpack.c.l.b16 %v8062
          %v8632 = vunpack.c.h.b16 %v8062
          %v8633 = vunpack.c.l.b16 %v8063
          %v8634 = vunpack.c.h.b16 %v8063
          %v8635 = vunpack.c.l.b16 %v8064
          %v8636 = vunpack.c.h.b16 %v8064
          %v8637 = vunpack.c.l.b16 %v8065
          %v8638 = vunpack.c.h.b16 %v8065
          %v8639 = vunpack.c.l.b16 %v8066
          %v8640 = vunpack.c.h.b16 %v8066
          %v8641 = vunpack.c.l.b16 %v8067
          %v8642 = vunpack.c.h.b16 %v8067
          %v8643 = vunpack.c.l.b16 %v8068
          %v8644 = vunpack.c.h.b16 %v8068
          %v8645 = vunpack.c.l.b16 %v8069
          %v8646 = vunpack.c.h.b16 %v8069
          %v8647 = vunpack.c.l.b16 %v8070
          %v8648 = vunpack.c.h.b16 %v8070
          %v8649 = vunpack.c.l.b16 %v8071
          %v8650 = vunpack.c.h.b16 %v8071
          %v8651 = vunpack.c.l.b16 %v8072
          %v8652 = vunpack.c.h.b16 %v8072
          %v8653 = vunpack.c.l.b16 %v8073
          %v8654 = vunpack.c.h.b16 %v8073
          %v8655 = vunpack.c.l.b16 %v8074
          %v8656 = vunpack.c.h.b16 %v8074
          %v8657 = vunpack.c.l.b16 %v8075
          %v8658 = vunpack.c.h.b16 %v8075
          %v8659 = vunpack.c.l.b16 %v8076
          %v8660 = vunpack.c.h.b16 %v8076
          %v8661 = vunpack.c.l.b16 %v8077
          %v8662 = vunpack.c.h.b16 %v8077
          %v8663 = vunpack.c.l.b16 %v8078
          %v8664 = vunpack.c.h.b16 %v8078
          %v8665 = vunpack.c.l.b16 %v8079
          %v8666 = vunpack.c.h.b16 %v8079
          %v8667 = vunpack.c.l.b16 %v8080
          %v8668 = vunpack.c.h.b16 %v8080
          %v8669 = vunpack.c.l.b16 %v8081
          %v8670 = vunpack.c.h.b16 %v8081
          %v8671 = vunpack.c.l.b16 %v8082
          %v8672 = vunpack.c.h.b16 %v8082
          %v8673 = vunpack.c.l.b16 %v8083
          %v8674 = vunpack.c.h.b16 %v8083
          %v8675 = vunpack.c.l.b16 %v8084
          %v8676 = vunpack.c.h.b16 %v8084
          %v8677 = vunpack.c.l.b16 %v8085
          %v8678 = vunpack.c.h.b16 %v8085
          %v8679 = vunpack.c.l.b16 %v8086
          %v8680 = vunpack.c.h.b16 %v8086
          %v8681 = vunpack.c.l.b16 %v8087
          %v8682 = vunpack.c.h.b16 %v8087
          %v8683 = vunpack.c.l.b16 %v8088
          %v8684 = vunpack.c.h.b16 %v8088
          %v8685 = vunpack.c.l.b16 %v8089
          %v8686 = vunpack.c.h.b16 %v8089
          %v8687 = vunpack.c.l.b16 %v8090
          %v8688 = vunpack.c.h.b16 %v8090
          %v8689 = vunpack.c.l.b16 %v8091
          %v8690 = vunpack.c.h.b16 %v8091
          %v8691 = vunpack.c.l.b16 %v8092
          %v8692 = vunpack.c.h.b16 %v8092
          %v8693 = vunpack.c.l.b16 %v8093
          %v8694 = vunpack.c.h.b16 %v8093
          %v8695 = vunpack.c.l.b16 %v8094
          %v8696 = vunpack.c.h.b16 %v8094
          %v8697 = vunpack.c.l.b16 %v8095
          %v8698 = vunpack.c.h.b16 %v8095
          %v8699 = vunpack.c.l.b16 %v8096
          %v8700 = vunpack.c.h.b16 %v8096
          %v8701 = vunpack.c.l.b16 %v8097
          %v8702 = vunpack.c.h.b16 %v8097
          %v8703 = vunpack.c.l.b16 %v8098
          %v8704 = vunpack.c.h.b16 %v8098
          %v8705 = vunpack.c.l.b16 %v8099
          %v8706 = vunpack.c.h.b16 %v8099
          %v8707 = vunpack.c.l.b16 %v8100
          %v8708 = vunpack.c.h.b16 %v8100
          %v8709 = vunpack.c.l.b16 %v8101
          %v8710 = vunpack.c.h.b16 %v8101
          %v8711 = vunpack.c.l.b16 %v8102
          %v8712 = vunpack.c.h.b16 %v8102
          %v8713 = vunpack.c.l.b16 %v8103
          %v8714 = vunpack.c.h.b16 %v8103
          %v8715 = vunpack.c.l.b16 %v8104
          %v8716 = vunpack.c.h.b16 %v8104
          %v8717 = vunpack.c.l.b16 %v8105
          %v8718 = vunpack.c.h.b16 %v8105
          %v8719 = vunpack.c.l.b16 %v8106
          %v8720 = vunpack.c.h.b16 %v8106
          %v8721 = vunpack.c.l.b16 %v8107
          %v8722 = vunpack.c.h.b16 %v8107
          %v8723 = vunpack.c.l.b16 %v8108
          %v8724 = vunpack.c.h.b16 %v8108
          %v8725 = vunpack.c.l.b16 %v8109
          %v8726 = vunpack.c.h.b16 %v8109
          %v8727 = vunpack.c.l.b16 %v8110
          %v8728 = vunpack.c.h.b16 %v8110
          %v8729 = vunpack.c.l.b16 %v8111
          %v8730 = vunpack.c.h.b16 %v8111
          %v8731 = vunpack.c.l.b16 %v8112
          %v8732 = vunpack.c.h.b16 %v8112
          %v8733 = vunpack.c.l.b16 %v8113
          %v8734 = vunpack.c.h.b16 %v8113
          %v8735 = vunpack.c.l.b16 %v8114
          %v8736 = vunpack.c.h.b16 %v8114
          %v8737 = vunpack.c.l.b16 %v8115
          %v8738 = vunpack.c.h.b16 %v8115
          %v8739 = vunpack.c.l.b16 %v8116
          %v8740 = vunpack.c.h.b16 %v8116
          %v8741 = vunpack.c.l.b16 %v8117
          %v8742 = vunpack.c.h.b16 %v8117
          %v8743 = vunpack.c.l.b16 %v8118
          %v8744 = vunpack.c.h.b16 %v8118
          %v8745 = vunpack.c.l.b16 %v8119
          %v8746 = vunpack.c.h.b16 %v8119
          %v8747 = vunpack.c.l.b16 %v8120
          %v8748 = vunpack.c.h.b16 %v8120
          %v8749 = vunpack.c.l.b16 %v8121
          %v8750 = vunpack.c.h.b16 %v8121
          %v8751 = vunpack.c.l.b16 %v8122
          %v8752 = vunpack.c.h.b16 %v8122
          %v8753 = vunpack.c.l.b16 %v8123
          %v8754 = vunpack.c.h.b16 %v8123
          %v8755 = vunpack.c.l.b16 %v8124
          %v8756 = vunpack.c.h.b16 %v8124
          %v8757 = vunpack.c.l.b16 %v8125
          %v8758 = vunpack.c.h.b16 %v8125
          %v8759 = vunpack.c.l.b16 %v8126
          %v8760 = vunpack.c.h.b16 %v8126
          %v8761 = vunpack.c.l.b16 %v8127
          %v8762 = vunpack.c.h.b16 %v8127
          %v8763 = vunpack.c.l.b16 %v8128
          %v8764 = vunpack.c.h.b16 %v8128
          %v8765 = vunpack.c.l.b16 %v8129
          %v8766 = vunpack.c.h.b16 %v8129
          %v8767 = vunpack.c.l.b16 %v8130
          %v8768 = vunpack.c.h.b16 %v8130
          %v8769 = vunpack.c.l.b16 %v8131
          %v8770 = vunpack.c.h.b16 %v8131
          %v8771 = vunpack.c.l.b16 %v8132
          %v8772 = vunpack.c.h.b16 %v8132
          %v8773 = vunpack.c.l.b16 %v8133
          %v8774 = vunpack.c.h.b16 %v8133
          %v8775 = vunpack.c.l.b16 %v8134
          %v8776 = vunpack.c.h.b16 %v8134
          %v8777 = vunpack.c.l.b16 %v8135
          %v8778 = vunpack.c.h.b16 %v8135
          %v8779 = vunpack.c.l.b16 %v8136
          %v8780 = vunpack.c.h.b16 %v8136
          %v8781 = vunpack.c.l.b16 %v8137
          %v8782 = vunpack.c.h.b16 %v8137
          %v8783 = vunpack.c.l.b16 %v8138
          %v8784 = vunpack.c.h.b16 %v8138
          %v8785 = vunpack.c.l.b16 %v8139
          %v8786 = vunpack.c.h.b16 %v8139
          %v8787 = vunpack.c.l.b16 %v8140
          %v8788 = vunpack.c.h.b16 %v8140
          %v8789 = vunpack.c.l.b16 %v8141
          %v8790 = vunpack.c.h.b16 %v8141
          %v8791 = vunpack.c.l.b16 %v8142
          %v8792 = vunpack.c.h.b16 %v8142
          %v8793 = vunpack.c.l.b16 %v8143
          %v8794 = vunpack.c.h.b16 %v8143
          %v8795 = vunpack.c.l.b16 %v8144
          %v8796 = vunpack.c.h.b16 %v8144
          %v8797 = vunpack.c.l.b16 %v8145
          %v8798 = vunpack.c.h.b16 %v8145
          %v8799 = vunpack.c.l.b16 %v8146
          %v8800 = vunpack.c.h.b16 %v8146
          %v8801 = vunpack.c.l.b16 %v8147
          %v8802 = vunpack.c.h.b16 %v8147
          %v8803 = vunpack.c.l.b16 %v8148
          %v8804 = vunpack.c.h.b16 %v8148
          %v8805 = vunpack.c.l.b16 %v8149
          %v8806 = vunpack.c.h.b16 %v8149
          %v8807 = vunpack.c.l.b16 %v8150
          %v8808 = vunpack.c.h.b16 %v8150
          %v8809 = vunpack.c.l.b16 %v8151
          %v8810 = vunpack.c.h.b16 %v8151
          %v8811 = vunpack.c.l.b16 %v8152
          %v8812 = vunpack.c.h.b16 %v8152
          %v8813 = vunpack.c.l.b16 %v8153
          %v8814 = vunpack.c.h.b16 %v8153
          %v8815 = vunpack.c.l.b16 %v8154
          %v8816 = vunpack.c.h.b16 %v8154
          %v8817 = vunpack.c.l.b16 %v8155
          %v8818 = vunpack.c.h.b16 %v8155
          %v8819 = vunpack.c.l.b16 %v8156
          %v8820 = vunpack.c.h.b16 %v8156
          %v8821 = vunpack.c.l.b16 %v8157
          %v8822 = vunpack.c.h.b16 %v8157
          %v8823 = vunpack.c.l.b16 %v8158
          %v8824 = vunpack.c.h.b16 %v8158
          %v8825 = vunpack.c.l.b16 %v8159
          %v8826 = vunpack.c.h.b16 %v8159
          %v8827 = vunpack.c.l.b16 %v8160
          %v8828 = vunpack.c.h.b16 %v8160
          %v8829 = vunpack.c.l.b16 %v8161
          %v8830 = vunpack.c.h.b16 %v8161
          %v8831 = vunpack.c.l.b16 %v8162
          %v8832 = vunpack.c.h.b16 %v8162
          %v8833 = vunpack.c.l.b16 %v8163
          %v8834 = vunpack.c.h.b16 %v8163
          %v8835 = vunpack.c.l.b16 %v8164
          %v8836 = vunpack.c.h.b16 %v8164
          %v8837 = vunpack.c.l.b16 %v8165
          %v8838 = vunpack.c.h.b16 %v8165
          %v8839 = vunpack.c.l.b16 %v8166
          %v8840 = vunpack.c.h.b16 %v8166
          %v8841 = vunpack.c.l.b16 %v8167
          %v8842 = vunpack.c.h.b16 %v8167
          %v8843 = vunpack.c.l.b16 %v8168
          %v8844 = vunpack.c.h.b16 %v8168
          %v8845 = vunpack.c.l.b16 %v8169
          %v8846 = vunpack.c.h.b16 %v8169
          %v8847 = vunpack.c.l.b16 %v8170
          %v8848 = vunpack.c.h.b16 %v8170
          %v8849 = vunpack.c.l.b16 %v8171
          %v8850 = vunpack.c.h.b16 %v8171
          %v8851 = vunpack.c.l.b16 %v8172
          %v8852 = vunpack.c.h.b16 %v8172
          %v8853 = vunpack.c.l.b16 %v8173
          %v8854 = vunpack.c.h.b16 %v8173
          %v8855 = vunpack.c.l.b16 %v8174
          %v8856 = vunpack.c.h.b16 %v8174
          %v8857 = vunpack.c.l.b16 %v8175
          %v8858 = vunpack.c.h.b16 %v8175
          %v8859 = vunpack.c.l.b16 %v8176
          %v8860 = vunpack.c.h.b16 %v8176
          %v8861 = vunpack.c.l.b16 %v8177
          %v8862 = vunpack.c.h.b16 %v8177
          %v8863 = vunpack.c.l.b16 %v8178
          %v8864 = vunpack.c.h.b16 %v8178
          %v8865 = vunpack.c.l.b16 %v8179
          %v8866 = vunpack.c.h.b16 %v8179
          %v8867 = vunpack.c.l.b16 %v8180
          %v8868 = vunpack.c.h.b16 %v8180
          %v8869 = vunpack.c.l.b16 %v8181
          %v8870 = vunpack.c.h.b16 %v8181
          %v8871 = vunpack.c.l.b16 %v8182
          %v8872 = vunpack.c.h.b16 %v8182
          %v8873 = vunpack.c.l.b16 %v8183
          %v8874 = vunpack.c.h.b16 %v8183
          %v8875 = vunpack.c.l.b16 %v8184
          %v8876 = vunpack.c.h.b16 %v8184
          %v8877 = vunpack.c.l.b16 %v8185
          %v8878 = vunpack.c.h.b16 %v8185
          %v8879 = vunpack.c.l.b16 %v8186
          %v8880 = vunpack.c.h.b16 %v8186
          %v8881 = vunpack.c.l.b16 %v8187
          %v8882 = vunpack.c.h.b16 %v8187
          %v8883 = vunpack.c.l.b16 %v8188
          %v8884 = vunpack.c.h.b16 %v8188
          %v8885 = vunpack.c.l.b16 %v8189
          %v8886 = vunpack.c.h.b16 %v8189
          %v8887 = vunpack.c.l.b16 %v8190
          %v8888 = vunpack.c.h.b16 %v8190
          %v8889 = vunpack.c.l.b16 %v8191
          %v8890 = vunpack.c.h.b16 %v8191
          %v8891 = vunpack.c.l.b16 %v8192
          %v8892 = vunpack.c.h.b16 %v8192
          %v8893 = vunpack.c.l.b16 %v8193
          %v8894 = vunpack.c.h.b16 %v8193
          %v8895 = vunpack.c.l.b16 %v8194
          %v8896 = vunpack.c.h.b16 %v8194
          %v8897 = vunpack.c.l.b16 %v8195
          %v8898 = vunpack.c.h.b16 %v8195
          %v8899 = vunpack.c.l.b16 %v8196
          %v8900 = vunpack.c.h.b16 %v8196
          %v8901 = vunpack.c.l.b16 %v8197
          %v8902 = vunpack.c.h.b16 %v8197
          %v8903 = vunpack.c.l.b16 %v8198
          %v8904 = vunpack.c.h.b16 %v8198
          %v8905 = vunpack.c.l.b16 %v8199
          %v8906 = vunpack.c.h.b16 %v8199
          %v8907 = vunpack.c.l.b16 %v8200
          %v8908 = vunpack.c.h.b16 %v8200
          %v8909 = vunpack.c.l.b16 %v8201
          %v8910 = vunpack.c.h.b16 %v8201
          %v8911 = vunpack.c.l.b16 %v8202
          %v8912 = vunpack.c.h.b16 %v8202
          %v8913 = vunpack.c.l.b16 %v8203
          %v8914 = vunpack.c.h.b16 %v8203
          %v8915 = vunpack.c.l.b16 %v8204
          %v8916 = vunpack.c.h.b16 %v8204
          %v8917 = vunpack.c.l.b16 %v8205
          %v8918 = vunpack.c.h.b16 %v8205
          %v8919 = vunpack.c.l.b16 %v8206
          %v8920 = vunpack.c.h.b16 %v8206
          %v8921 = vunpack.c.l.b16 %v8207
          %v8922 = vunpack.c.h.b16 %v8207
          %v8923 = vunpack.c.l.b16 %v8208
          %v8924 = vunpack.c.h.b16 %v8208
          %v8925 = vunpack.c.l.b16 %v8209
          %v8926 = vunpack.c.h.b16 %v8209
          %v8927 = vunpack.c.l.b16 %v8210
          %v8928 = vunpack.c.h.b16 %v8210
          %v8929 = vunpack.c.l.b16 %v8211
          %v8930 = vunpack.c.h.b16 %v8211
          %v8931 = vunpack.c.l.b16 %v8212
          %v8932 = vunpack.c.h.b16 %v8212
          %v8933 = vunpack.c.l.b16 %v8213
          %v8934 = vunpack.c.h.b16 %v8213
          %v8935 = vunpack.c.l.b16 %v8214
          %v8936 = vunpack.c.h.b16 %v8214
          %v8937 = vunpack.c.l.b16 %v8215
          %v8938 = vunpack.c.h.b16 %v8215
          %v8939 = vunpack.c.l.b16 %v8216
          %v8940 = vunpack.c.h.b16 %v8216
          %v8941 = vunpack.c.l.b16 %v8217
          %v8942 = vunpack.c.h.b16 %v8217
          %v8943 = vunpack.c.l.b16 %v8218
          %v8944 = vunpack.c.h.b16 %v8218
          %v8945 = vunpack.c.l.b16 %v8219
          %v8946 = vunpack.c.h.b16 %v8219
          %v8947 = vunpack.c.l.b16 %v8220
          %v8948 = vunpack.c.h.b16 %v8220
          %v8949 = vunpack.c.l.b16 %v8221
          %v8950 = vunpack.c.h.b16 %v8221
          %v8951 = vunpack.c.l.b16 %v8222
          %v8952 = vunpack.c.h.b16 %v8222
          %v8953 = vunpack.c.l.b16 %v8223
          %v8954 = vunpack.c.h.b16 %v8223
          %v8955 = vunpack.c.l.b16 %v8224
          %v8956 = vunpack.c.h.b16 %v8224
          %v8957 = vunpack.c.l.b16 %v8225
          %v8958 = vunpack.c.h.b16 %v8225
          %v8959 = vunpack.c.l.b16 %v8226
          %v8960 = vunpack.c.h.b16 %v8226
          %v8961 = vunpack.c.l.b16 %v8227
          %v8962 = vunpack.c.h.b16 %v8227
          %v8963 = vunpack.c.l.b16 %v8228
          %v8964 = vunpack.c.h.b16 %v8228
          %v8965 = vunpack.c.l.b16 %v8229
          %v8966 = vunpack.c.h.b16 %v8229
          %v8967 = vunpack.c.l.b16 %v8230
          %v8968 = vunpack.c.h.b16 %v8230
          %v8969 = vunpack.c.l.b16 %v8231
          %v8970 = vunpack.c.h.b16 %v8231
          %v8971 = vunpack.c.l.b16 %v8232
          %v8972 = vunpack.c.h.b16 %v8232
          %v8973 = vunpack.c.l.b16 %v8233
          %v8974 = vunpack.c.h.b16 %v8233
          %v8975 = vunpack.c.l.b16 %v8234
          %v8976 = vunpack.c.h.b16 %v8234
          %v8977 = vunpack.c.l.b16 %v8235
          %v8978 = vunpack.c.h.b16 %v8235
          %v8979 = vunpack.c.l.b16 %v8236
          %v8980 = vunpack.c.h.b16 %v8236
          %v8981 = vunpack.c.l.b16 %v8237
          %v8982 = vunpack.c.h.b16 %v8237
          %v8983 = vunpack.c.l.b16 %v8238
          %v8984 = vunpack.c.h.b16 %v8238
          %v8985 = vunpack.c.l.b16 %v8239
          %v8986 = vunpack.c.h.b16 %v8239
          %v8987 = vunpack.c.l.b16 %v8240
          %v8988 = vunpack.c.h.b16 %v8240
          %v8989 = vunpack.c.l.b16 %v8241
          %v8990 = vunpack.c.h.b16 %v8241
          %v8991 = vunpack.c.l.b16 %v8242
          %v8992 = vunpack.c.h.b16 %v8242
          %v8993 = vunpack.c.l.b16 %v8243
          %v8994 = vunpack.c.h.b16 %v8243
          %v8995 = vunpack.c.l.b16 %v8244
          %v8996 = vunpack.c.h.b16 %v8244
          %v8997 = vunpack.c.l.b16 %v8245
          %v8998 = vunpack.c.h.b16 %v8245
          %v8999 = vunpack.c.l.b16 %v8246
          %v9000 = vunpack.c.h.b16 %v8246
          %v9001 = vunpack.c.l.b16 %v8247
          %v9002 = vunpack.c.h.b16 %v8247
          %v9003 = vunpack.c.l.b16 %v8248
          %v9004 = vunpack.c.h.b16 %v8248
          %v9005 = vunpack.c.l.b16 %v8249
          %v9006 = vunpack.c.h.b16 %v8249
          %v9007 = vunpack.c.l.b16 %v8250
          %v9008 = vunpack.c.h.b16 %v8250
          %v9009 = vunpack.c.l.b16 %v8251
          %v9010 = vunpack.c.h.b16 %v8251
          %v9011 = vunpack.c.l.b16 %v8252
          %v9012 = vunpack.c.h.b16 %v8252
          %v9013 = vunpack.c.l.b16 %v8253
          %v9014 = vunpack.c.h.b16 %v8253
          %v9015 = vunpack.c.l.b16 %v8254
          %v9016 = vunpack.c.h.b16 %v8254
          %v9017 = vunpack.c.l.b16 %v8255
          %v9018 = vunpack.c.h.b16 %v8255
          %v9019 = vunpack.c.l.b16 %v8256
          %v9020 = vunpack.c.h.b16 %v8256
          %v9021 = vunpack.c.l.b16 %v8257
          %v9022 = vunpack.c.h.b16 %v8257
          %v9023 = vunpack.c.l.b16 %v8258
          %v9024 = vunpack.c.h.b16 %v8258
          %v9025 = vunpack.c.l.b16 %v8259
          %v9026 = vunpack.c.h.b16 %v8259
          %v9027 = vunpack.c.l.b16 %v8260
          %v9028 = vunpack.c.h.b16 %v8260
          %v9029 = vunpack.c.l.b16 %v8261
          %v9030 = vunpack.c.h.b16 %v8261
          %v9031 = vunpack.c.l.b16 %v8262
          %v9032 = vunpack.c.h.b16 %v8262
          %v9033 = vunpack.c.l.b16 %v8263
          %v9034 = vunpack.c.h.b16 %v8263
          %v9035 = vunpack.c.l.b16 %v8264
          %v9036 = vunpack.c.h.b16 %v8264
          %v9037 = vunpack.c.l.b16 %v8265
          %v9038 = vunpack.c.h.b16 %v8265
          %v9039 = vunpack.c.l.b16 %v8266
          %v9040 = vunpack.c.h.b16 %v8266
          %v9041 = vunpack.c.l.b16 %v8267
          %v9042 = vunpack.c.h.b16 %v8267
          %v9043 = vunpack.c.l.b16 %v8268
          %v9044 = vunpack.c.h.b16 %v8268
          %v9045 = vunpack.c.l.b16 %v8269
          %v9046 = vunpack.c.h.b16 %v8269
          %v9047 = vunpack.c.l.b16 %v8270
          %v9048 = vunpack.c.h.b16 %v8270
          %v9049 = vunpack.c.l.b16 %v8271
          %v9050 = vunpack.c.h.b16 %v8271
          %v9051 = vunpack.c.l.b16 %v8272
          %v9052 = vunpack.c.h.b16 %v8272
          %v9053 = vunpack.c.l.b16 %v8273
          %v9054 = vunpack.c.h.b16 %v8273
          %v9055 = vunpack.c.l.b16 %v8274
          %v9056 = vunpack.c.h.b16 %v8274
          %v9057 = vunpack.c.l.b16 %v8275
          %v9058 = vunpack.c.h.b16 %v8275
          %v9059 = vunpack.c.l.b16 %v8276
          %v9060 = vunpack.c.h.b16 %v8276
          %v9061 = vunpack.c.l.b16 %v8277
          %v9062 = vunpack.c.h.b16 %v8277
          %v9063 = vunpack.c.l.b16 %v8278
          %v9064 = vunpack.c.h.b16 %v8278
          %v9065 = vunpack.c.l.b16 %v8279
          %v9066 = vunpack.c.h.b16 %v8279
          %v9067 = vunpack.c.l.b16 %v8280
          %v9068 = vunpack.c.h.b16 %v8280
          %v9069 = vunpack.c.l.b16 %v8281
          %v9070 = vunpack.c.h.b16 %v8281
          %v9071 = vunpack.c.l.b16 %v8282
          %v9072 = vunpack.c.h.b16 %v8282
          %v9073 = vpack.c.b16 %v8565, %v8561
          %v9074 = vpack.c.b16 %v8566, %v8562
          %v9075 = vpack.c.b16 %v8567, %v8563
          %v9076 = vpack.c.b16 %v8568, %v8564
          %v9077 = vpack.c.b16 %v8573, %v8569
          %v9078 = vpack.c.b16 %v8574, %v8570
          %v9079 = vpack.c.b16 %v8575, %v8571
          %v9080 = vpack.c.b16 %v8576, %v8572
          %v9081 = vpack.c.b16 %v8581, %v8577
          %v9082 = vpack.c.b16 %v8582, %v8578
          %v9083 = vpack.c.b16 %v8583, %v8579
          %v9084 = vpack.c.b16 %v8584, %v8580
          %v9085 = vpack.c.b16 %v8589, %v8585
          %v9086 = vpack.c.b16 %v8590, %v8586
          %v9087 = vpack.c.b16 %v8591, %v8587
          %v9088 = vpack.c.b16 %v8592, %v8588
          %v9089 = vpack.c.b16 %v8597, %v8593
          %v9090 = vpack.c.b16 %v8598, %v8594
          %v9091 = vpack.c.b16 %v8599, %v8595
          %v9092 = vpack.c.b16 %v8600, %v8596
          %v9093 = vpack.c.b16 %v8605, %v8601
          %v9094 = vpack.c.b16 %v8606, %v8602
          %v9095 = vpack.c.b16 %v8607, %v8603
          %v9096 = vpack.c.b16 %v8608, %v8604
          %v9097 = vpack.c.b16 %v8613, %v8609
          %v9098 = vpack.c.b16 %v8614, %v8610
          %v9099 = vpack.c.b16 %v8615, %v8611
          %v9100 = vpack.c.b16 %v8616, %v8612
          %v9101 = vpack.c.b16 %v8621, %v8617
          %v9102 = vpack.c.b16 %v8622, %v8618
          %v9103 = vpack.c.b16 %v8623, %v8619
          %v9104 = vpack.c.b16 %v8624, %v8620
          %v9105 = vpack.c.b16 %v8629, %v8625
          %v9106 = vpack.c.b16 %v8630, %v8626
          %v9107 = vpack.c.b16 %v8631, %v8627
          %v9108 = vpack.c.b16 %v8632, %v8628
          %v9109 = vpack.c.b16 %v8637, %v8633
          %v9110 = vpack.c.b16 %v8638, %v8634
          %v9111 = vpack.c.b16 %v8639, %v8635
          %v9112 = vpack.c.b16 %v8640, %v8636
          %v9113 = vpack.c.b16 %v8645, %v8641
          %v9114 = vpack.c.b16 %v8646, %v8642
          %v9115 = vpack.c.b16 %v8647, %v8643
          %v9116 = vpack.c.b16 %v8648, %v8644
          %v9117 = vpack.c.b16 %v8653, %v8649
          %v9118 = vpack.c.b16 %v8654, %v8650
          %v9119 = vpack.c.b16 %v8655, %v8651
          %v9120 = vpack.c.b16 %v8656, %v8652
          %v9121 = vpack.c.b16 %v8661, %v8657
          %v9122 = vpack.c.b16 %v8662, %v8658
          %v9123 = vpack.c.b16 %v8663, %v8659
          %v9124 = vpack.c.b16 %v8664, %v8660
          %v9125 = vpack.c.b16 %v8669, %v8665
          %v9126 = vpack.c.b16 %v8670, %v8666
          %v9127 = vpack.c.b16 %v8671, %v8667
          %v9128 = vpack.c.b16 %v8672, %v8668
          %v9129 = vpack.c.b16 %v8677, %v8673
          %v9130 = vpack.c.b16 %v8678, %v8674
          %v9131 = vpack.c.b16 %v8679, %v8675
          %v9132 = vpack.c.b16 %v8680, %v8676
          %v9133 = vpack.c.b16 %v8685, %v8681
          %v9134 = vpack.c.b16 %v8686, %v8682
          %v9135 = vpack.c.b16 %v8687, %v8683
          %v9136 = vpack.c.b16 %v8688, %v8684
          %v9137 = vpack.c.b16 %v8693, %v8689
          %v9138 = vpack.c.b16 %v8694, %v8690
          %v9139 = vpack.c.b16 %v8695, %v8691
          %v9140 = vpack.c.b16 %v8696, %v8692
          %v9141 = vpack.c.b16 %v8701, %v8697
          %v9142 = vpack.c.b16 %v8702, %v8698
          %v9143 = vpack.c.b16 %v8703, %v8699
          %v9144 = vpack.c.b16 %v8704, %v8700
          %v9145 = vpack.c.b16 %v8709, %v8705
          %v9146 = vpack.c.b16 %v8710, %v8706
          %v9147 = vpack.c.b16 %v8711, %v8707
          %v9148 = vpack.c.b16 %v8712, %v8708
          %v9149 = vpack.c.b16 %v8717, %v8713
          %v9150 = vpack.c.b16 %v8718, %v8714
          %v9151 = vpack.c.b16 %v8719, %v8715
          %v9152 = vpack.c.b16 %v8720, %v8716
          %v9153 = vpack.c.b16 %v8725, %v8721
          %v9154 = vpack.c.b16 %v8726, %v8722
          %v9155 = vpack.c.b16 %v8727, %v8723
          %v9156 = vpack.c.b16 %v8728, %v8724
          %v9157 = vpack.c.b16 %v8733, %v8729
          %v9158 = vpack.c.b16 %v8734, %v8730
          %v9159 = vpack.c.b16 %v8735, %v8731
          %v9160 = vpack.c.b16 %v8736, %v8732
          %v9161 = vpack.c.b16 %v8741, %v8737
          %v9162 = vpack.c.b16 %v8742, %v8738
          %v9163 = vpack.c.b16 %v8743, %v8739
          %v9164 = vpack.c.b16 %v8744, %v8740
          %v9165 = vpack.c.b16 %v8749, %v8745
          %v9166 = vpack.c.b16 %v8750, %v8746
          %v9167 = vpack.c.b16 %v8751, %v8747
          %v9168 = vpack.c.b16 %v8752, %v8748
          %v9169 = vpack.c.b16 %v8757, %v8753
          %v9170 = vpack.c.b16 %v8758, %v8754
          %v9171 = vpack.c.b16 %v8759, %v8755
          %v9172 = vpack.c.b16 %v8760, %v8756
          %v9173 = vpack.c.b16 %v8765, %v8761
          %v9174 = vpack.c.b16 %v8766, %v8762
          %v9175 = vpack.c.b16 %v8767, %v8763
          %v9176 = vpack.c.b16 %v8768, %v8764
          %v9177 = vpack.c.b16 %v8773, %v8769
          %v9178 = vpack.c.b16 %v8774, %v8770
          %v9179 = vpack.c.b16 %v8775, %v8771
          %v9180 = vpack.c.b16 %v8776, %v8772
          %v9181 = vpack.c.b16 %v8781, %v8777
          %v9182 = vpack.c.b16 %v8782, %v8778
          %v9183 = vpack.c.b16 %v8783, %v8779
          %v9184 = vpack.c.b16 %v8784, %v8780
          %v9185 = vpack.c.b16 %v8789, %v8785
          %v9186 = vpack.c.b16 %v8790, %v8786
          %v9187 = vpack.c.b16 %v8791, %v8787
          %v9188 = vpack.c.b16 %v8792, %v8788
          %v9189 = vpack.c.b16 %v8797, %v8793
          %v9190 = vpack.c.b16 %v8798, %v8794
          %v9191 = vpack.c.b16 %v8799, %v8795
          %v9192 = vpack.c.b16 %v8800, %v8796
          %v9193 = vpack.c.b16 %v8805, %v8801
          %v9194 = vpack.c.b16 %v8806, %v8802
          %v9195 = vpack.c.b16 %v8807, %v8803
          %v9196 = vpack.c.b16 %v8808, %v8804
          %v9197 = vpack.c.b16 %v8813, %v8809
          %v9198 = vpack.c.b16 %v8814, %v8810
          %v9199 = vpack.c.b16 %v8815, %v8811
          %v9200 = vpack.c.b16 %v8816, %v8812
          %v9201 = vpack.c.b16 %v8821, %v8817
          %v9202 = vpack.c.b16 %v8822, %v8818
          %v9203 = vpack.c.b16 %v8823, %v8819
          %v9204 = vpack.c.b16 %v8824, %v8820
          %v9205 = vpack.c.b16 %v8829, %v8825
          %v9206 = vpack.c.b16 %v8830, %v8826
          %v9207 = vpack.c.b16 %v8831, %v8827
          %v9208 = vpack.c.b16 %v8832, %v8828
          %v9209 = vpack.c.b16 %v8837, %v8833
          %v9210 = vpack.c.b16 %v8838, %v8834
          %v9211 = vpack.c.b16 %v8839, %v8835
          %v9212 = vpack.c.b16 %v8840, %v8836
          %v9213 = vpack.c.b16 %v8845, %v8841
          %v9214 = vpack.c.b16 %v8846, %v8842
          %v9215 = vpack.c.b16 %v8847, %v8843
          %v9216 = vpack.c.b16 %v8848, %v8844
          %v9217 = vpack.c.b16 %v8853, %v8849
          %v9218 = vpack.c.b16 %v8854, %v8850
          %v9219 = vpack.c.b16 %v8855, %v8851
          %v9220 = vpack.c.b16 %v8856, %v8852
          %v9221 = vpack.c.b16 %v8861, %v8857
          %v9222 = vpack.c.b16 %v8862, %v8858
          %v9223 = vpack.c.b16 %v8863, %v8859
          %v9224 = vpack.c.b16 %v8864, %v8860
          %v9225 = vpack.c.b16 %v8869, %v8865
          %v9226 = vpack.c.b16 %v8870, %v8866
          %v9227 = vpack.c.b16 %v8871, %v8867
          %v9228 = vpack.c.b16 %v8872, %v8868
          %v9229 = vpack.c.b16 %v8877, %v8873
          %v9230 = vpack.c.b16 %v8878, %v8874
          %v9231 = vpack.c.b16 %v8879, %v8875
          %v9232 = vpack.c.b16 %v8880, %v8876
          %v9233 = vpack.c.b16 %v8885, %v8881
          %v9234 = vpack.c.b16 %v8886, %v8882
          %v9235 = vpack.c.b16 %v8887, %v8883
          %v9236 = vpack.c.b16 %v8888, %v8884
          %v9237 = vpack.c.b16 %v8893, %v8889
          %v9238 = vpack.c.b16 %v8894, %v8890
          %v9239 = vpack.c.b16 %v8895, %v8891
          %v9240 = vpack.c.b16 %v8896, %v8892
          %v9241 = vpack.c.b16 %v8901, %v8897
          %v9242 = vpack.c.b16 %v8902, %v8898
          %v9243 = vpack.c.b16 %v8903, %v8899
          %v9244 = vpack.c.b16 %v8904, %v8900
          %v9245 = vpack.c.b16 %v8909, %v8905
          %v9246 = vpack.c.b16 %v8910, %v8906
          %v9247 = vpack.c.b16 %v8911, %v8907
          %v9248 = vpack.c.b16 %v8912, %v8908
          %v9249 = vpack.c.b16 %v8917, %v8913
          %v9250 = vpack.c.b16 %v8918, %v8914
          %v9251 = vpack.c.b16 %v8919, %v8915
          %v9252 = vpack.c.b16 %v8920, %v8916
          %v9253 = vpack.c.b16 %v8925, %v8921
          %v9254 = vpack.c.b16 %v8926, %v8922
          %v9255 = vpack.c.b16 %v8927, %v8923
          %v9256 = vpack.c.b16 %v8928, %v8924
          %v9257 = vpack.c.b16 %v8933, %v8929
          %v9258 = vpack.c.b16 %v8934, %v8930
          %v9259 = vpack.c.b16 %v8935, %v8931
          %v9260 = vpack.c.b16 %v8936, %v8932
          %v9261 = vpack.c.b16 %v8941, %v8937
          %v9262 = vpack.c.b16 %v8942, %v8938
          %v9263 = vpack.c.b16 %v8943, %v8939
          %v9264 = vpack.c.b16 %v8944, %v8940
          %v9265 = vpack.c.b16 %v8949, %v8945
          %v9266 = vpack.c.b16 %v8950, %v8946
          %v9267 = vpack.c.b16 %v8951, %v8947
          %v9268 = vpack.c.b16 %v8952, %v8948
          %v9269 = vpack.c.b16 %v8957, %v8953
          %v9270 = vpack.c.b16 %v8958, %v8954
          %v9271 = vpack.c.b16 %v8959, %v8955
          %v9272 = vpack.c.b16 %v8960, %v8956
          %v9273 = vpack.c.b16 %v8965, %v8961
          %v9274 = vpack.c.b16 %v8966, %v8962
          %v9275 = vpack.c.b16 %v8967, %v8963
          %v9276 = vpack.c.b16 %v8968, %v8964
          %v9277 = vpack.c.b16 %v8973, %v8969
          %v9278 = vpack.c.b16 %v8974, %v8970
          %v9279 = vpack.c.b16 %v8975, %v8971
          %v9280 = vpack.c.b16 %v8976, %v8972
          %v9281 = vpack.c.b16 %v8981, %v8977
          %v9282 = vpack.c.b16 %v8982, %v8978
          %v9283 = vpack.c.b16 %v8983, %v8979
          %v9284 = vpack.c.b16 %v8984, %v8980
          %v9285 = vpack.c.b16 %v8989, %v8985
          %v9286 = vpack.c.b16 %v8990, %v8986
          %v9287 = vpack.c.b16 %v8991, %v8987
          %v9288 = vpack.c.b16 %v8992, %v8988
          %v9289 = vpack.c.b16 %v8997, %v8993
          %v9290 = vpack.c.b16 %v8998, %v8994
          %v9291 = vpack.c.b16 %v8999, %v8995
          %v9292 = vpack.c.b16 %v9000, %v8996
          %v9293 = vpack.c.b16 %v9005, %v9001
          %v9294 = vpack.c.b16 %v9006, %v9002
          %v9295 = vpack.c.b16 %v9007, %v9003
          %v9296 = vpack.c.b16 %v9008, %v9004
          %v9297 = vpack.c.b16 %v9013, %v9009
          %v9298 = vpack.c.b16 %v9014, %v9010
          %v9299 = vpack.c.b16 %v9015, %v9011
          %v9300 = vpack.c.b16 %v9016, %v9012
          %v9301 = vpack.c.b16 %v9021, %v9017
          %v9302 = vpack.c.b16 %v9022, %v9018
          %v9303 = vpack.c.b16 %v9023, %v9019
          %v9304 = vpack.c.b16 %v9024, %v9020
          %v9305 = vpack.c.b16 %v9029, %v9025
          %v9306 = vpack.c.b16 %v9030, %v9026
          %v9307 = vpack.c.b16 %v9031, %v9027
          %v9308 = vpack.c.b16 %v9032, %v9028
          %v9309 = vpack.c.b16 %v9037, %v9033
          %v9310 = vpack.c.b16 %v9038, %v9034
          %v9311 = vpack.c.b16 %v9039, %v9035
          %v9312 = vpack.c.b16 %v9040, %v9036
          %v9313 = vpack.c.b16 %v9045, %v9041
          %v9314 = vpack.c.b16 %v9046, %v9042
          %v9315 = vpack.c.b16 %v9047, %v9043
          %v9316 = vpack.c.b16 %v9048, %v9044
          %v9317 = vpack.c.b16 %v9053, %v9049
          %v9318 = vpack.c.b16 %v9054, %v9050
          %v9319 = vpack.c.b16 %v9055, %v9051
          %v9320 = vpack.c.b16 %v9056, %v9052
          %v9321 = vpack.c.b16 %v9061, %v9057
          %v9322 = vpack.c.b16 %v9062, %v9058
          %v9323 = vpack.c.b16 %v9063, %v9059
          %v9324 = vpack.c.b16 %v9064, %v9060
          %v9325 = vpack.c.b16 %v9069, %v9065
          %v9326 = vpack.c.b16 %v9070, %v9066
          %v9327 = vpack.c.b16 %v9071, %v9067
          %v9328 = vpack.c.b16 %v9072, %v9068
          %9585 = vmatprep.subr.bf16.mxu0 %v9074
          %9586 = vmatpush1.bf16.msra.mxu0 %v9073
          %9587 = vmatprep.subr.bf16.mxu0 %v9078
          %9588 = vmatpush1.bf16.msra.mxu0 %v9077
          %9589 = vmatprep.subr.bf16.mxu0 %v9082
          %9590 = vmatpush1.bf16.msra.mxu0 %v9081
          %9591 = vmatprep.subr.bf16.mxu0 %v9086
          %9592 = vmatpush1.bf16.msra.mxu0 %v9085
          %9593 = vmatprep.subr.bf16.mxu0 %v9090
          %9594 = vmatpush1.bf16.msra.mxu0 %v9089
          %9595 = vmatprep.subr.bf16.mxu0 %v9094
          %9596 = vmatpush1.bf16.msra.mxu0 %v9093
          %9597 = vmatprep.subr.bf16.mxu0 %v9098
          %9598 = vmatpush1.bf16.msra.mxu0 %v9097
          %9599 = vmatprep.subr.bf16.mxu0 %v9102
          %9600 = vmatpush1.bf16.msra.mxu0 %v9101
          %9601 = vmatprep.subr.bf16.mxu0 %v9106
          %9602 = vmatpush1.bf16.msra.mxu0 %v9105
          %9603 = vmatprep.subr.bf16.mxu0 %v9110
          %9604 = vmatpush1.bf16.msra.mxu0 %v9109
          %9605 = vmatprep.subr.bf16.mxu0 %v9114
          %9606 = vmatpush1.bf16.msra.mxu0 %v9113
          %9607 = vmatprep.subr.bf16.mxu0 %v9118
          %9608 = vmatpush1.bf16.msra.mxu0 %v9117
          %9609 = vmatprep.subr.bf16.mxu0 %v9122
          %9610 = vmatpush1.bf16.msra.mxu0 %v9121
          %9611 = vmatprep.subr.bf16.mxu0 %v9126
          %9612 = vmatpush1.bf16.msra.mxu0 %v9125
          %9613 = vmatprep.subr.bf16.mxu0 %v9130
          %9614 = vmatpush1.bf16.msra.mxu0 %v9129
          %9615 = vmatprep.subr.bf16.mxu0 %v9134
          %9616 = vmatpush1.bf16.msra.mxu0 %v9133
          %9617 = vmatprep.mubr.bf16.mxu0 %v8020
          %9618 = vmatmul.mubr.bf16.gmra.mrb[0].mxu0 %v8019
          %v9619 = vpop.f32.mrb[0].mxu0
          %v9620 = vadd.f32 %v8288, %v9619
          %v9621 = vpop.f32.mrb[0].mxu0
          %v9622 = vadd.f32 %v8292, %v9621
          %v9623 = vpop.f32.mrb[0].mxu0
          %v9624 = vpop.f32.mrb[0].mxu0
          %9625 = vdwg.mxu0
          %9626 = vmatprep.subr.bf16.mxu0 %v9138
          %9627 = vmatpush1.bf16.msra.mxu0 %v9137
          %9628 = vmatprep.subr.bf16.mxu0 %v9142
          %9629 = vmatpush1.bf16.msra.mxu0 %v9141
          %9630 = vmatprep.subr.bf16.mxu0 %v9146
          %9631 = vmatpush1.bf16.msra.mxu0 %v9145
          %9632 = vmatprep.subr.bf16.mxu0 %v9150
          %9633 = vmatpush1.bf16.msra.mxu0 %v9149
          %9634 = vmatprep.subr.bf16.mxu0 %v9154
          %9635 = vmatpush1.bf16.msra.mxu0 %v9153
          %9636 = vmatprep.subr.bf16.mxu0 %v9158
          %9637 = vmatpush1.bf16.msra.mxu0 %v9157
          %9638 = vmatprep.subr.bf16.mxu0 %v9162
          %9639 = vmatpush1.bf16.msra.mxu0 %v9161
          %9640 = vmatprep.subr.bf16.mxu0 %v9166
          %9641 = vmatpush1.bf16.msra.mxu0 %v9165
          %9642 = vmatprep.subr.bf16.mxu0 %v9170
          %9643 = vmatpush1.bf16.msra.mxu0 %v9169
          %9644 = vmatprep.subr.bf16.mxu0 %v9174
          %9645 = vmatpush1.bf16.msra.mxu0 %v9173
          %9646 = vmatprep.subr.bf16.mxu0 %v9178
          %9647 = vmatpush1.bf16.msra.mxu0 %v9177
          %9648 = vmatprep.subr.bf16.mxu0 %v9182
          %9649 = vmatpush1.bf16.msra.mxu0 %v9181
          %9650 = vmatprep.subr.bf16.mxu0 %v9186
          %9651 = vmatpush1.bf16.msra.mxu0 %v9185
          %9652 = vmatprep.subr.bf16.mxu0 %v9190
          %9653 = vmatpush1.bf16.msra.mxu0 %v9189
          %9654 = vmatprep.subr.bf16.mxu0 %v9194
          %9655 = vmatpush1.bf16.msra.mxu0 %v9193
          %9656 = vmatprep.subr.bf16.mxu0 %v9198
          %9657 = vmatpush1.bf16.msra.mxu0 %v9197
          %9658 = vmatprep.mubr.bf16.mxu0 %v8022
          %9659 = vmatmul.mubr.bf16.gmra.mrb[0].mxu0 %v8021
          %v9660 = vpop.f32.mrb[0].mxu0
          %v9661 = vadd.f32 %v9620, %v9660
          %v9662 = vpop.f32.mrb[0].mxu0
          %v9663 = vadd.f32 %v9622, %v9662
          %v9664 = vpop.f32.mrb[0].mxu0
          %v9665 = vpop.f32.mrb[0].mxu0
          %9666 = vdwg.mxu0
          %9667 = vmatprep.subr.bf16.mxu0 %v9202
          %9668 = vmatpush1.bf16.msra.mxu0 %v9201
          %9669 = vmatprep.subr.bf16.mxu0 %v9206
          %9670 = vmatpush1.bf16.msra.mxu0 %v9205
          %9671 = vmatprep.subr.bf16.mxu0 %v9210
          %9672 = vmatpush1.bf16.msra.mxu0 %v9209
          %9673 = vmatprep.subr.bf16.mxu0 %v9214
          %9674 = vmatpush1.bf16.msra.mxu0 %v9213
          %9675 = vmatprep.subr.bf16.mxu0 %v9218
          %9676 = vmatpush1.bf16.msra.mxu0 %v9217
          %9677 = vmatprep.subr.bf16.mxu0 %v9222
          %9678 = vmatpush1.bf16.msra.mxu0 %v9221
          %9679 = vmatprep.subr.bf16.mxu0 %v9226
          %9680 = vmatpush1.bf16.msra.mxu0 %v9225
          %9681 = vmatprep.subr.bf16.mxu0 %v9230
          %9682 = vmatpush1.bf16.msra.mxu0 %v9229
          %9683 = vmatprep.subr.bf16.mxu0 %v9234
          %9684 = vmatpush1.bf16.msra.mxu0 %v9233
          %9685 = vmatprep.subr.bf16.mxu0 %v9238
          %9686 = vmatpush1.bf16.msra.mxu0 %v9237
          %9687 = vmatprep.subr.bf16.mxu0 %v9242
          %9688 = vmatpush1.bf16.msra.mxu0 %v9241
          %9689 = vmatprep.subr.bf16.mxu0 %v9246
          %9690 = vmatpush1.bf16.msra.mxu0 %v9245
          %9691 = vmatprep.subr.bf16.mxu0 %v9250
          %9692 = vmatpush1.bf16.msra.mxu0 %v9249
          %9693 = vmatprep.subr.bf16.mxu0 %v9254
          %9694 = vmatpush1.bf16.msra.mxu0 %v9253
          %9695 = vmatprep.subr.bf16.mxu0 %v9258
          %9696 = vmatpush1.bf16.msra.mxu0 %v9257
          %9697 = vmatprep.subr.bf16.mxu0 %v9262
          %9698 = vmatpush1.bf16.msra.mxu0 %v9261
          %9699 = vmatprep.mubr.bf16.mxu0 %v8024
          %9700 = vmatmul.mubr.bf16.gmra.mrb[0].mxu0 %v8023
          %v9701 = vpop.f32.mrb[0].mxu0
          %v9702 = vadd.f32 %v9661, %v9701
          %v9703 = vpop.f32.mrb[0].mxu0
          %v9704 = vadd.f32 %v9663, %v9703
          %v9705 = vpop.f32.mrb[0].mxu0
          %v9706 = vpop.f32.mrb[0].mxu0
          %9707 = vdwg.mxu0
          %9708 = vmatprep.subr.bf16.mxu0 %v9266
          %9709 = vmatpush1.bf16.msra.mxu0 %v9265
          %9710 = vmatprep.subr.bf16.mxu0 %v9270
          %9711 = vmatpush1.bf16.msra.mxu0 %v9269
          %9712 = vmatprep.subr.bf16.mxu0 %v9274
          %9713 = vmatpush1.bf16.msra.mxu0 %v9273
          %9714 = vmatprep.subr.bf16.mxu0 %v9278
          %9715 = vmatpush1.bf16.msra.mxu0 %v9277
          %9716 = vmatprep.subr.bf16.mxu0 %v9282
          %9717 = vmatpush1.bf16.msra.mxu0 %v9281
          %9718 = vmatprep.subr.bf16.mxu0 %v9286
          %9719 = vmatpush1.bf16.msra.mxu0 %v9285
          %9720 = vmatprep.subr.bf16.mxu0 %v9290
          %9721 = vmatpush1.bf16.msra.mxu0 %v9289
          %9722 = vmatprep.subr.bf16.mxu0 %v9294
          %9723 = vmatpush1.bf16.msra.mxu0 %v9293
          %9724 = vmatprep.subr.bf16.mxu0 %v9298
          %9725 = vmatpush1.bf16.msra.mxu0 %v9297
          %9726 = vmatprep.subr.bf16.mxu0 %v9302
          %9727 = vmatpush1.bf16.msra.mxu0 %v9301
          %9728 = vmatprep.subr.bf16.mxu0 %v9306
          %9729 = vmatpush1.bf16.msra.mxu0 %v9305
          %9730 = vmatprep.subr.bf16.mxu0 %v9310
          %9731 = vmatpush1.bf16.msra.mxu0 %v9309
          %9732 = vmatprep.subr.bf16.mxu0 %v9314
          %9733 = vmatpush1.bf16.msra.mxu0 %v9313
          %9734 = vmatprep.subr.bf16.mxu0 %v9318
          %9735 = vmatpush1.bf16.msra.mxu0 %v9317
          %9736 = vmatprep.subr.bf16.mxu0 %v9322
          %9737 = vmatpush1.bf16.msra.mxu0 %v9321
          %9738 = vmatprep.subr.bf16.mxu0 %v9326
          %9739 = vmatpush1.bf16.msra.mxu0 %v9325
          %9740 = vmatprep.mubr.bf16.mxu0 %v8026
          %9741 = vmatmul.mubr.bf16.gmra.mrb[0].mxu0 %v8025
          %v9742 = vpop.f32.mrb[0].mxu0
          %v9743 = vadd.f32 %v9702, %v9742
          %v9744 = vpop.f32.mrb[0].mxu0
          %v9745 = vadd.f32 %v9704, %v9744
          %v9746 = vpop.f32.mrb[0].mxu0
          %v9747 = vpop.f32.mrb[0].mxu0
          %9748 = vdwg.mxu0
          %9749 = vmatprep.subr.bf16.mxu0 %v9076
          %9750 = vmatpush1.bf16.msra.mxu0 %v9075
          %9751 = vmatprep.subr.bf16.mxu0 %v9080
          %9752 = vmatpush1.bf16.msra.mxu0 %v9079
          %9753 = vmatprep.subr.bf16.mxu0 %v9084
          %9754 = vmatpush1.bf16.msra.mxu0 %v9083
          %9755 = vmatprep.subr.bf16.mxu0 %v9088
          %9756 = vmatpush1.bf16.msra.mxu0 %v9087
          %9757 = vmatprep.subr.bf16.mxu0 %v9092
          %9758 = vmatpush1.bf16.msra.mxu0 %v9091
          %9759 = vmatprep.subr.bf16.mxu0 %v9096
          %9760 = vmatpush1.bf16.msra.mxu0 %v9095
          %9761 = vmatprep.subr.bf16.mxu0 %v9100
          %9762 = vmatpush1.bf16.msra.mxu0 %v9099
          %9763 = vmatprep.subr.bf16.mxu0 %v9104
          %9764 = vmatpush1.bf16.msra.mxu0 %v9103
          %9765 = vmatprep.subr.bf16.mxu0 %v9108
          %9766 = vmatpush1.bf16.msra.mxu0 %v9107
          %9767 = vmatprep.subr.bf16.mxu0 %v9112
          %9768 = vmatpush1.bf16.msra.mxu0 %v9111
          %9769 = vmatprep.subr.bf16.mxu0 %v9116
          %9770 = vmatpush1.bf16.msra.mxu0 %v9115
          %9771 = vmatprep.subr.bf16.mxu0 %v9120
          %9772 = vmatpush1.bf16.msra.mxu0 %v9119
          %9773 = vmatprep.subr.bf16.mxu0 %v9124
          %9774 = vmatpush1.bf16.msra.mxu0 %v9123
          %9775 = vmatprep.subr.bf16.mxu0 %v9128
          %9776 = vmatpush1.bf16.msra.mxu0 %v9127
          %9777 = vmatprep.subr.bf16.mxu0 %v9132
          %9778 = vmatpush1.bf16.msra.mxu0 %v9131
          %9779 = vmatprep.subr.bf16.mxu0 %v9136
          %9780 = vmatpush1.bf16.msra.mxu0 %v9135
          %9781 = vmatprep.mubr.bf16.mxu0 %v8020
          %9782 = vmatmul.mubr.bf16.gmra.mrb[0].mxu0 %v8019
          %v9783 = vpop.f32.mrb[0].mxu0
          %v9784 = vadd.f32 %v8296, %v9783
          %v9785 = vpop.f32.mrb[0].mxu0
          %v9786 = vadd.f32 %v8300, %v9785
          %v9787 = vpop.f32.mrb[0].mxu0
          %v9788 = vpop.f32.mrb[0].mxu0
          %9789 = vdwg.mxu0
          %9790 = vmatprep.subr.bf16.mxu0 %v9140
          %9791 = vmatpush1.bf16.msra.mxu0 %v9139
          %9792 = vmatprep.subr.bf16.mxu0 %v9144
          %9793 = vmatpush1.bf16.msra.mxu0 %v9143
          %9794 = vmatprep.subr.bf16.mxu0 %v9148
          %9795 = vmatpush1.bf16.msra.mxu0 %v9147
          %9796 = vmatprep.subr.bf16.mxu0 %v9152
          %9797 = vmatpush1.bf16.msra.mxu0 %v9151
          %9798 = vmatprep.subr.bf16.mxu0 %v9156
          %9799 = vmatpush1.bf16.msra.mxu0 %v9155
          %9800 = vmatprep.subr.bf16.mxu0 %v9160
          %9801 = vmatpush1.bf16.msra.mxu0 %v9159
          %9802 = vmatprep.subr.bf16.mxu0 %v9164
          %9803 = vmatpush1.bf16.msra.mxu0 %v9163
          %9804 = vmatprep.subr.bf16.mxu0 %v9168
          %9805 = vmatpush1.bf16.msra.mxu0 %v9167
          %9806 = vmatprep.subr.bf16.mxu0 %v9172
          %9807 = vmatpush1.bf16.msra.mxu0 %v9171
          %9808 = vmatprep.subr.bf16.mxu0 %v9176
          %9809 = vmatpush1.bf16.msra.mxu0 %v9175
          %9810 = vmatprep.subr.bf16.mxu0 %v9180
          %9811 = vmatpush1.bf16.msra.mxu0 %v9179
          %9812 = vmatprep.subr.bf16.mxu0 %v9184
          %9813 = vmatpush1.bf16.msra.mxu0 %v9183
          %9814 = vmatprep.subr.bf16.mxu0 %v9188
          %9815 = vmatpush1.bf16.msra.mxu0 %v9187
          %9816 = vmatprep.subr.bf16.mxu0 %v9192
          %9817 = vmatpush1.bf16.msra.mxu0 %v9191
          %9818 = vmatprep.subr.bf16.mxu0 %v9196
          %9819 = vmatpush1.bf16.msra.mxu0 %v9195
          %9820 = vmatprep.subr.bf16.mxu0 %v9200
          %9821 = vmatpush1.bf16.msra.mxu0 %v9199
          %9822 = vmatprep.mubr.bf16.mxu0 %v8022
          %9823 = vmatmul.mubr.bf16.gmra.mrb[0].mxu0 %v8021
          %v9824 = vpop.f32.mrb[0].mxu0
          %v9825 = vadd.f32 %v9784, %v9824
          %v9826 = vpop.f32.mrb[0].mxu0
          %v9827 = vadd.f32 %v9786, %v9826
          %v9828 = vpop.f32.mrb[0].mxu0
          %v9829 = vpop.f32.mrb[0].mxu0
          %9830 = vdwg.mxu0
          %9831 = vmatprep.subr.bf16.mxu0 %v9204
          %9832 = vmatpush1.bf16.msra.mxu0 %v9203
          %9833 = vmatprep.subr.bf16.mxu0 %v9208
          %9834 = vmatpush1.bf16.msra.mxu0 %v9207
          %9835 = vmatprep.subr.bf16.mxu0 %v9212
          %9836 = vmatpush1.bf16.msra.mxu0 %v9211
          %9837 = vmatprep.subr.bf16.mxu0 %v9216
          %9838 = vmatpush1.bf16.msra.mxu0 %v9215
          %9839 = vmatprep.subr.bf16.mxu0 %v9220
          %9840 = vmatpush1.bf16.msra.mxu0 %v9219
          %9841 = vmatprep.subr.bf16.mxu0 %v9224
          %9842 = vmatpush1.bf16.msra.mxu0 %v9223
          %9843 = vmatprep.subr.bf16.mxu0 %v9228
          %9844 = vmatpush1.bf16.msra.mxu0 %v9227
          %9845 = vmatprep.subr.bf16.mxu0 %v9232
          %9846 = vmatpush1.bf16.msra.mxu0 %v9231
          %9847 = vmatprep.subr.bf16.mxu0 %v9236
          %9848 = vmatpush1.bf16.msra.mxu0 %v9235
          %9849 = vmatprep.subr.bf16.mxu0 %v9240
          %9850 = vmatpush1.bf16.msra.mxu0 %v9239
          %9851 = vmatprep.subr.bf16.mxu0 %v9244
          %9852 = vmatpush1.bf16.msra.mxu0 %v9243
          %9853 = vmatprep.subr.bf16.mxu0 %v9248
          %9854 = vmatpush1.bf16.msra.mxu0 %v9247
          %9855 = vmatprep.subr.bf16.mxu0 %v9252
          %9856 = vmatpush1.bf16.msra.mxu0 %v9251
          %9857 = vmatprep.subr.bf16.mxu0 %v9256
          %9858 = vmatpush1.bf16.msra.mxu0 %v9255
          %9859 = vmatprep.subr.bf16.mxu0 %v9260
          %9860 = vmatpush1.bf16.msra.mxu0 %v9259
          %9861 = vmatprep.subr.bf16.mxu0 %v9264
          %9862 = vmatpush1.bf16.msra.mxu0 %v9263
          %9863 = vmatprep.mubr.bf16.mxu0 %v8024
          %9864 = vmatmul.mubr.bf16.gmra.mrb[0].mxu0 %v8023
          %v9865 = vpop.f32.mrb[0].mxu0
          %v9866 = vadd.f32 %v9825, %v9865
          %v9867 = vpop.f32.mrb[0].mxu0
          %v9868 = vadd.f32 %v9827, %v9867
          %v9869 = vpop.f32.mrb[0].mxu0
          %v9870 = vpop.f32.mrb[0].mxu0
          %9871 = vdwg.mxu0
          %9872 = vmatprep.subr.bf16.mxu0 %v9268
          %9873 = vmatpush1.bf16.msra.mxu0 %v9267
          %9874 = vmatprep.subr.bf16.mxu0 %v9272
          %9875 = vmatpush1.bf16.msra.mxu0 %v9271
          %9876 = vmatprep.subr.bf16.mxu0 %v9276
          %9877 = vmatpush1.bf16.msra.mxu0 %v9275
          %9878 = vmatprep.subr.bf16.mxu0 %v9280
          %9879 = vmatpush1.bf16.msra.mxu0 %v9279
          %9880 = vmatprep.subr.bf16.mxu0 %v9284
          %9881 = vmatpush1.bf16.msra.mxu0 %v9283
          %9882 = vmatprep.subr.bf16.mxu0 %v9288
          %9883 = vmatpush1.bf16.msra.mxu0 %v9287
          %9884 = vmatprep.subr.bf16.mxu0 %v9292
          %9885 = vmatpush1.bf16.msra.mxu0 %v9291
          %9886 = vmatprep.subr.bf16.mxu0 %v9296
          %9887 = vmatpush1.bf16.msra.mxu0 %v9295
          %9888 = vmatprep.subr.bf16.mxu0 %v9300
          %9889 = vmatpush1.bf16.msra.mxu0 %v9299
          %9890 = vmatprep.subr.bf16.mxu0 %v9304
          %9891 = vmatpush1.bf16.msra.mxu0 %v9303
          %9892 = vmatprep.subr.bf16.mxu0 %v9308
          %9893 = vmatpush1.bf16.msra.mxu0 %v9307
          %9894 = vmatprep.subr.bf16.mxu0 %v9312
          %9895 = vmatpush1.bf16.msra.mxu0 %v9311
          %9896 = vmatprep.subr.bf16.mxu0 %v9316
          %9897 = vmatpush1.bf16.msra.mxu0 %v9315
          %9898 = vmatprep.subr.bf16.mxu0 %v9320
          %9899 = vmatpush1.bf16.msra.mxu0 %v9319
          %9900 = vmatprep.subr.bf16.mxu0 %v9324
          %9901 = vmatpush1.bf16.msra.mxu0 %v9323
          %9902 = vmatprep.subr.bf16.mxu0 %v9328
          %9903 = vmatpush1.bf16.msra.mxu0 %v9327
          %9904 = vmatprep.mubr.bf16.mxu0 %v8026
          %9905 = vmatmul.mubr.bf16.gmra.mrb[0].mxu0 %v8025
          %v9906 = vpop.f32.mrb[0].mxu0
          %v9907 = vadd.f32 %v9866, %v9906
          %v9908 = vpop.f32.mrb[0].mxu0
          %v9909 = vadd.f32 %v9868, %v9908
          %v9910 = vpop.f32.mrb[0].mxu0
          %v9911 = vpop.f32.mrb[0].mxu0
          %9912 = vdwg.mxu0
          %v9913 = vmax.f32 %v9743, 0.0
          %v9914 = vmax.f32 %v9745, 0.0
          %v9915 = vmax.f32 %v9907, 0.0
          %v9916 = vmax.f32 %v9909, 0.0
          %v9917 = vpack.c.bf16 %v9913, %v9913
          %v9918 = vpack.c.bf16 %v9914, %v9914
          %v9919 = vpack.c.bf16 %v9915, %v9915
          %v9920 = vpack.c.bf16 %v9916, %v9916
          %v9921 = vld [vmem:[#allocation12] sm:$0xf]
          %v9922 = vld [vmem:[#allocation12 + $0x4] sm:$0xf]
          %v9923 = vld [vmem:[#allocation12 + $0x8] sm:$0xf]
          %v9924 = vld [vmem:[#allocation12 + $0xc] sm:$0xf]
          %v9925 = vld [vmem:[#allocation12 + $0x10] sm:$0xf]
          %v9926 = vld [vmem:[#allocation12 + $0x14] sm:$0xf]
          %v9927 = vld [vmem:[#allocation12 + $0x18] sm:$0xf]
          %v9928 = vld [vmem:[#allocation12 + $0x1c] sm:$0xf]
          %v9929 = vld [vmem:[#allocation12 + $0x20] sm:$0xf]
          %v9930 = vld [vmem:[#allocation12 + $0x24] sm:$0xf]
          %v9931 = vld [vmem:[#allocation12 + $0x28] sm:$0xf]
          %v9932 = vld [vmem:[#allocation12 + $0x2c] sm:$0xf]
          %v9933 = vld [vmem:[#allocation12 + $0x30] sm:$0xf]
          %v9934 = vld [vmem:[#allocation12 + $0x34] sm:$0xf]
          %v9935 = vld [vmem:[#allocation12 + $0x38] sm:$0xf]
          %v9936 = vld [vmem:[#allocation12 + $0x3c] sm:$0xf]
          %v9937 = vld [vmem:[#allocation12 + $0x40] sm:$0xf]
          %v9938 = vld [vmem:[#allocation12 + $0x44] sm:$0xf]
          %v9939 = vld [vmem:[#allocation12 + $0x48] sm:$0xf]
          %v9940 = vld [vmem:[#allocation12 + $0x4c] sm:$0xf]
          %v9941 = vld [vmem:[#allocation12 + $0x50] sm:$0xf]
          %v9942 = vld [vmem:[#allocation12 + $0x54] sm:$0xf]
          %v9943 = vld [vmem:[#allocation12 + $0x58] sm:$0xf]
          %v9944 = vld [vmem:[#allocation12 + $0x5c] sm:$0xf]
          %v9945 = vld [vmem:[#allocation12 + $0x60] sm:$0xf]
          %v9946 = vld [vmem:[#allocation12 + $0x64] sm:$0xf]
          %v9947 = vld [vmem:[#allocation12 + $0x68] sm:$0xf]
          %v9948 = vld [vmem:[#allocation12 + $0x6c] sm:$0xf]
          %v9949 = vld [vmem:[#allocation12 + $0x70] sm:$0xf]
          %v9950 = vld [vmem:[#allocation12 + $0x74] sm:$0xf]
          %v9951 = vld [vmem:[#allocation12 + $0x78] sm:$0xf]
          %v9952 = vld [vmem:[#allocation12 + $0x7c] sm:$0xf]
          %v9953 = vld [vmem:[#allocation12 + $0x80] sm:$0xf]
          %v9954 = vld [vmem:[#allocation12 + $0x84] sm:$0xf]
          %v9955 = vld [vmem:[#allocation12 + $0x88] sm:$0xf]
          %v9956 = vld [vmem:[#allocation12 + $0x8c] sm:$0xf]
          %v9957 = vld [vmem:[#allocation12 + $0x90] sm:$0xf]
          %v9958 = vld [vmem:[#allocation12 + $0x94] sm:$0xf]
          %v9959 = vld [vmem:[#allocation12 + $0x98] sm:$0xf]
          %v9960 = vld [vmem:[#allocation12 + $0x9c] sm:$0xf]
          %v9961 = vld [vmem:[#allocation12 + $0xa0] sm:$0xf]
          %v9962 = vld [vmem:[#allocation12 + $0xa4] sm:$0xf]
          %v9963 = vld [vmem:[#allocation12 + $0xa8] sm:$0xf]
          %v9964 = vld [vmem:[#allocation12 + $0xac] sm:$0xf]
          %v9965 = vld [vmem:[#allocation12 + $0xb0] sm:$0xf]
          %v9966 = vld [vmem:[#allocation12 + $0xb4] sm:$0xf]
          %v9967 = vld [vmem:[#allocation12 + $0xb8] sm:$0xf]
          %v9968 = vld [vmem:[#allocation12 + $0xbc] sm:$0xf]
          %v9969 = vld [vmem:[#allocation12 + $0xc0] sm:$0xf]
          %v9970 = vld [vmem:[#allocation12 + $0xc4] sm:$0xf]
          %v9971 = vld [vmem:[#allocation12 + $0xc8] sm:$0xf]
          %v9972 = vld [vmem:[#allocation12 + $0xcc] sm:$0xf]
          %v9973 = vld [vmem:[#allocation12 + $0xd0] sm:$0xf]
          %v9974 = vld [vmem:[#allocation12 + $0xd4] sm:$0xf]
          %v9975 = vld [vmem:[#allocation12 + $0xd8] sm:$0xf]
          %v9976 = vld [vmem:[#allocation12 + $0xdc] sm:$0xf]
          %v9977 = vld [vmem:[#allocation12 + $0xe0] sm:$0xf]
          %v9978 = vld [vmem:[#allocation12 + $0xe4] sm:$0xf]
          %v9979 = vld [vmem:[#allocation12 + $0xe8] sm:$0xf]
          %v9980 = vld [vmem:[#allocation12 + $0xec] sm:$0xf]
          %v9981 = vld [vmem:[#allocation12 + $0xf0] sm:$0xf]
          %v9982 = vld [vmem:[#allocation12 + $0xf4] sm:$0xf]
          %v9983 = vld [vmem:[#allocation12 + $0xf8] sm:$0xf]
          %v9984 = vld [vmem:[#allocation12 + $0xfc] sm:$0xf]
          %v9985 = vld [vmem:[#allocation14] sm:$0x1]
          %v9987 = vlaneseq
          %v9988 = vshrl.u32 %v9987, 7
          %v9989 = vsub.s32 0, %v9988
          %v9990 = vrot.slane %v9985, %v9989
          %v10056 = vunpack.c.l.b16 %v9921
          %v10057 = vunpack.c.l.b16 %v9922
          %v10058 = vunpack.c.l.b16 %v9923
          %v10059 = vunpack.c.l.b16 %v9924
          %v10060 = vunpack.c.l.b16 %v9925
          %v10061 = vunpack.c.l.b16 %v9926
          %v10062 = vunpack.c.l.b16 %v9927
          %v10063 = vunpack.c.l.b16 %v9928
          %v10064 = vunpack.c.l.b16 %v9929
          %v10065 = vunpack.c.l.b16 %v9930
          %v10066 = vunpack.c.l.b16 %v9931
          %v10067 = vunpack.c.l.b16 %v9932
          %v10068 = vunpack.c.l.b16 %v9933
          %v10069 = vunpack.c.l.b16 %v9934
          %v10070 = vunpack.c.l.b16 %v9935
          %v10071 = vunpack.c.l.b16 %v9936
          %v10072 = vunpack.c.l.b16 %v9937
          %v10073 = vunpack.c.l.b16 %v9938
          %v10074 = vunpack.c.l.b16 %v9939
          %v10075 = vunpack.c.l.b16 %v9940
          %v10076 = vunpack.c.l.b16 %v9941
          %v10077 = vunpack.c.l.b16 %v9942
          %v10078 = vunpack.c.l.b16 %v9943
          %v10079 = vunpack.c.l.b16 %v9944
          %v10080 = vunpack.c.l.b16 %v9945
          %v10081 = vunpack.c.l.b16 %v9946
          %v10082 = vunpack.c.l.b16 %v9947
          %v10083 = vunpack.c.l.b16 %v9948
          %v10084 = vunpack.c.l.b16 %v9949
          %v10085 = vunpack.c.l.b16 %v9950
          %v10086 = vunpack.c.l.b16 %v9951
          %v10087 = vunpack.c.l.b16 %v9952
          %v10088 = vunpack.c.l.b16 %v9953
          %v10089 = vunpack.c.l.b16 %v9954
          %v10090 = vunpack.c.l.b16 %v9955
          %v10091 = vunpack.c.l.b16 %v9956
          %v10092 = vunpack.c.l.b16 %v9957
          %v10093 = vunpack.c.l.b16 %v9958
          %v10094 = vunpack.c.l.b16 %v9959
          %v10095 = vunpack.c.l.b16 %v9960
          %v10096 = vunpack.c.l.b16 %v9961
          %v10097 = vunpack.c.l.b16 %v9962
          %v10098 = vunpack.c.l.b16 %v9963
          %v10099 = vunpack.c.l.b16 %v9964
          %v10100 = vunpack.c.l.b16 %v9965
          %v10101 = vunpack.c.l.b16 %v9966
          %v10102 = vunpack.c.l.b16 %v9967
          %v10103 = vunpack.c.l.b16 %v9968
          %v10104 = vunpack.c.l.b16 %v9969
          %v10105 = vunpack.c.l.b16 %v9970
          %v10106 = vunpack.c.l.b16 %v9971
          %v10107 = vunpack.c.l.b16 %v9972
          %v10108 = vunpack.c.l.b16 %v9973
          %v10109 = vunpack.c.l.b16 %v9974
          %v10110 = vunpack.c.l.b16 %v9975
          %v10111 = vunpack.c.l.b16 %v9976
          %v10112 = vunpack.c.l.b16 %v9977
          %v10113 = vunpack.c.l.b16 %v9978
          %v10114 = vunpack.c.l.b16 %v9979
          %v10115 = vunpack.c.l.b16 %v9980
          %v10116 = vunpack.c.l.b16 %v9981
          %v10117 = vunpack.c.l.b16 %v9982
          %v10118 = vunpack.c.l.b16 %v9983
          %v10119 = vunpack.c.l.b16 %v9984
          %v10120 = vpack.c.b16 %v10057, %v10056
          %v10121 = vpack.c.b16 %v10059, %v10058
          %v10122 = vpack.c.b16 %v10061, %v10060
          %v10123 = vpack.c.b16 %v10063, %v10062
          %v10124 = vpack.c.b16 %v10065, %v10064
          %v10125 = vpack.c.b16 %v10067, %v10066
          %v10126 = vpack.c.b16 %v10069, %v10068
          %v10127 = vpack.c.b16 %v10071, %v10070
          %v10128 = vpack.c.b16 %v10073, %v10072
          %v10129 = vpack.c.b16 %v10075, %v10074
          %v10130 = vpack.c.b16 %v10077, %v10076
          %v10131 = vpack.c.b16 %v10079, %v10078
          %v10132 = vpack.c.b16 %v10081, %v10080
          %v10133 = vpack.c.b16 %v10083, %v10082
          %v10134 = vpack.c.b16 %v10085, %v10084
          %v10135 = vpack.c.b16 %v10087, %v10086
          %v10136 = vpack.c.b16 %v10089, %v10088
          %v10137 = vpack.c.b16 %v10091, %v10090
          %v10138 = vpack.c.b16 %v10093, %v10092
          %v10139 = vpack.c.b16 %v10095, %v10094
          %v10140 = vpack.c.b16 %v10097, %v10096
          %v10141 = vpack.c.b16 %v10099, %v10098
          %v10142 = vpack.c.b16 %v10101, %v10100
          %v10143 = vpack.c.b16 %v10103, %v10102
          %v10144 = vpack.c.b16 %v10105, %v10104
          %v10145 = vpack.c.b16 %v10107, %v10106
          %v10146 = vpack.c.b16 %v10109, %v10108
          %v10147 = vpack.c.b16 %v10111, %v10110
          %v10148 = vpack.c.b16 %v10113, %v10112
          %v10149 = vpack.c.b16 %v10115, %v10114
          %v10150 = vpack.c.b16 %v10117, %v10116
          %v10151 = vpack.c.b16 %v10119, %v10118
          %10184 = vmatprep.subr.bf16.mxu0 0
          %10185 = vmatpush1.bf16.msra.mxu0 %v10120
          %10186 = vmatprep.subr.bf16.mxu0 0
          %10187 = vmatpush1.bf16.msra.mxu0 %v10121
          %10188 = vmatprep.subr.bf16.mxu0 0
          %10189 = vmatpush1.bf16.msra.mxu0 %v10122
          %10190 = vmatprep.subr.bf16.mxu0 0
          %10191 = vmatpush1.bf16.msra.mxu0 %v10123
          %10192 = vmatprep.subr.bf16.mxu0 0
          %10193 = vmatpush1.bf16.msra.mxu0 %v10124
          %10194 = vmatprep.subr.bf16.mxu0 0
          %10195 = vmatpush1.bf16.msra.mxu0 %v10125
          %10196 = vmatprep.subr.bf16.mxu0 0
          %10197 = vmatpush1.bf16.msra.mxu0 %v10126
          %10198 = vmatprep.subr.bf16.mxu0 0
          %10199 = vmatpush1.bf16.msra.mxu0 %v10127
          %10200 = vmatprep.subr.bf16.mxu0 0
          %10201 = vmatpush1.bf16.msra.mxu0 %v10128
          %10202 = vmatprep.subr.bf16.mxu0 0
          %10203 = vmatpush1.bf16.msra.mxu0 %v10129
          %10204 = vmatprep.subr.bf16.mxu0 0
          %10205 = vmatpush1.bf16.msra.mxu0 %v10130
          %10206 = vmatprep.subr.bf16.mxu0 0
          %10207 = vmatpush1.bf16.msra.mxu0 %v10131
          %10208 = vmatprep.subr.bf16.mxu0 0
          %10209 = vmatpush1.bf16.msra.mxu0 %v10132
          %10210 = vmatprep.subr.bf16.mxu0 0
          %10211 = vmatpush1.bf16.msra.mxu0 %v10133
          %10212 = vmatprep.subr.bf16.mxu0 0
          %10213 = vmatpush1.bf16.msra.mxu0 %v10134
          %10214 = vmatprep.subr.bf16.mxu0 0
          %10215 = vmatpush1.bf16.msra.mxu0 %v10135
          %10216 = vmatprep.mubr.bf16.mxu0 %v9918
          %10217 = vmatmul.mubr.bf16.gmra.mrb[0].mxu0 %v9917
          %v10218 = vpop.f32.mrb[0].mxu0
          %v10219 = vadd.f32 %v9990, %v10218
          %v10220 = vpop.f32.mrb[0].mxu0
          %v10221 = vpop.f32.mrb[0].mxu0
          %v10222 = vpop.f32.mrb[0].mxu0
          %10223 = vdwg.mxu0
          %10224 = vmatprep.subr.bf16.mxu0 0
          %10225 = vmatpush1.bf16.msra.mxu0 %v10136
          %10226 = vmatprep.subr.bf16.mxu0 0
          %10227 = vmatpush1.bf16.msra.mxu0 %v10137
          %10228 = vmatprep.subr.bf16.mxu0 0
          %10229 = vmatpush1.bf16.msra.mxu0 %v10138
          %10230 = vmatprep.subr.bf16.mxu0 0
          %10231 = vmatpush1.bf16.msra.mxu0 %v10139
          %10232 = vmatprep.subr.bf16.mxu0 0
          %10233 = vmatpush1.bf16.msra.mxu0 %v10140
          %10234 = vmatprep.subr.bf16.mxu0 0
          %10235 = vmatpush1.bf16.msra.mxu0 %v10141
          %10236 = vmatprep.subr.bf16.mxu0 0
          %10237 = vmatpush1.bf16.msra.mxu0 %v10142
          %10238 = vmatprep.subr.bf16.mxu0 0
          %10239 = vmatpush1.bf16.msra.mxu0 %v10143
          %10240 = vmatprep.subr.bf16.mxu0 0
          %10241 = vmatpush1.bf16.msra.mxu0 %v10144
          %10242 = vmatprep.subr.bf16.mxu0 0
          %10243 = vmatpush1.bf16.msra.mxu0 %v10145
          %10244 = vmatprep.subr.bf16.mxu0 0
          %10245 = vmatpush1.bf16.msra.mxu0 %v10146
          %10246 = vmatprep.subr.bf16.mxu0 0
          %10247 = vmatpush1.bf16.msra.mxu0 %v10147
          %10248 = vmatprep.subr.bf16.mxu0 0
          %10249 = vmatpush1.bf16.msra.mxu0 %v10148
          %10250 = vmatprep.subr.bf16.mxu0 0
          %10251 = vmatpush1.bf16.msra.mxu0 %v10149
          %10252 = vmatprep.subr.bf16.mxu0 0
          %10253 = vmatpush1.bf16.msra.mxu0 %v10150
          %10254 = vmatprep.subr.bf16.mxu0 0
          %10255 = vmatpush1.bf16.msra.mxu0 %v10151
          %10256 = vmatprep.mubr.bf16.mxu0 %v9920
          %10257 = vmatmul.mubr.bf16.gmra.mrb[0].mxu0 %v9919
          %v10258 = vpop.f32.mrb[0].mxu0
          %v10259 = vadd.f32 %v10219, %v10258
          %v10260 = vpop.f32.mrb[0].mxu0
          %v10261 = vpop.f32.mrb[0].mxu0
          %v10262 = vpop.f32.mrb[0].mxu0
          %10263 = vdwg.mxu0
          %10264 = vst [vmem:[#allocation15] sm:$0xff] %v10259
        $region84: #{tpu_custom_call.1} parent=47 // pred_fallthru
          _
        // Predicated region
        $region85: #{tpu_custom_call.1} parent=47 // pred_check
          %p10265 = pneg %p197
        $region86: #{tpu_custom_call.1} parent=47 // pred_check_branch
          %10267 = sbr.rel (%p10265) target = $region88
        $region87: #{tpu_custom_call.1} parent=47 // pred_region
          %s10269 = ssub.s32 128, 128
          %10270 = vsyncadd [#allocation5], %s10269
          %s10272 = sshll.u32 [#allocation15], 4
          %s10273 = int_to_ptr.vmem [resolvable:$true] %s10272
          %10275 = dma.vmem_to_hbm [thread:$0]  %s10273, 128, %s7, [#allocation5]
        $region88: #{tpu_custom_call.1} parent=47 // pred_fallthru
          _
        // Predicated region
        $region89: #{tpu_custom_call.1} parent=47 // pred_check
          %p10276 = pneg %p197
        $region90: #{tpu_custom_call.1} parent=47 // pred_check_branch
          %10278 = sbr.rel (%p10276) target = $region92
        $region91: #{tpu_custom_call.1} parent=47 // pred_region
          %10279 = dma.done [#allocation5], 128
        $region92: #{tpu_custom_call.1} parent=47 // pred_fallthru
          _
      $region48: #{tpu_custom_call.1} parent=5 // pred_fallthru
        _
      %p10280 = scmp.le.s32.totalorder 2, %s22
      // Predicated region
      $region93: #{tpu_custom_call.1} parent=5 // pred_check
        %p10281 = pneg %p10280
      $region94: #{tpu_custom_call.1} parent=5 // pred_check_branch
        %10283 = sbr.rel (%p10281) target = $region96
      $region95: #{tpu_custom_call.1} parent=5 // pred_region
        %s10284 = ssub.s32 %s22, 2
      $region96: #{tpu_custom_call.1} parent=5 // pred_fallthru
        _
    $region6: #{tpu_custom_call.1} parent=1 // loop_footer
      %s26 = sadd.s32 1, %s22
    $region7: #{tpu_custom_call.1} parent=1 // loop_footer_branch
      %21 = sbr.rel target = $region3
    $region8: #{tpu_custom_call.1} parent=1 // loop_exit
      _
    %10285 = vsyncpa [#allocation4], 1
    %s10286 = scalar_lea.sflag [#allocation4], 1
    %10287 = vsyncpa %s10286, 1
    %10288 = vsyncpa [#allocation7], 1
    %s10289 = scalar_lea.sflag [#allocation7], 1
    %10290 = vsyncpa %s10289, 1
    %10291 = vsyncpa [#allocation10], 1
    %10292 = vsyncpa [#allocation13], 1
    %10293 = vsyncpa [#allocation5], 1
    %s10294 = scalar_lea.sflag [#allocation5], 1
    %10295 = vsyncpa %s10294, 1

</llo_original>
